<compile_context>
chip_gen: v7x
topology: tpu7x:2x2x1
jax: 0.10.0
libtpu: 0.0.40
codegen_flags: <defaults>
</compile_context>

<pallas_src>
import functools

import jax
import jax.numpy as jnp
from jax import lax
from jax.experimental import pallas as pl
from jax.experimental.pallas import tpu as pltpu


# ----------------------------- in-kernel helpers -----------------------------
def _segment_index(cols, n_seg, seg_len):
    """b_idx[i] = segment (batch) index of column i (static loop; avoids int division)."""
    b_idx = jnp.zeros_like(cols)
    for bb in range(1, n_seg):
        b_idx = b_idx + jnp.where(cols >= bb * seg_len, 1, 0)
    return b_idx


def _valid_mask(length, batch, stride, valid):
    """(1, length) f32 mask: 1.0 where the within-segment position is < `valid`."""
    cols = lax.broadcasted_iota(jnp.int32, (1, length), 1)
    within = cols - _segment_index(cols, batch, stride) * stride
    return jnp.where(within < valid, 1.0, 0.0)


def _pool_selector(m_len, batch, in_stride, p):
    """(m_len, batch*p) one-hot selector: sel[i, b*p + j] = 1 iff i == b*in_stride + 2*j."""
    rows = lax.broadcasted_iota(jnp.int32, (m_len, batch * p), 0)
    cols = lax.broadcasted_iota(jnp.int32, (m_len, batch * p), 1)
    b_idx = _segment_index(cols, batch, p)
    target = b_idx * in_stride + 2 * (cols - b_idx * p)
    return jnp.where(rows == target, 1.0, 0.0)


def _bn_elu(a, gamma, beta, mask, n_valid):
    """Training-mode BatchNorm (eps = 0.0) over the mask-selected valid columns, then ELU.

    Garbage columns stay garbage but are never selected downstream."""
    inv_n = 1.0 / n_valid
    mean = jnp.sum(a * mask, axis=1, keepdims=True) * inv_n
    cen = a - mean
    cenm = cen * mask
    var = jnp.sum(cenm * cenm, axis=1, keepdims=True) * inv_n
    inv = lax.rsqrt(var)                               # eps == 0.0 (BatchNorm2d(C, False))
    y = cen * (inv * gamma) + beta
    return jnp.where(y > 0, y, jnp.exp(y) - 1.0)       # ELU (exp goes to the EUP slot)


def _im2col(a, ksize):
    """(C, L) -> (ksize*C, L - ksize + 1) via `ksize` contiguous full-width lane slices.

    No per-batch splitting: windows straddling a batch boundary become garbage columns
    that are masked out of BN stats and never selected by pooling."""
    l_out = a.shape[1] - ksize + 1
    return jnp.concatenate([a[:, k:k + l_out] for k in range(ksize)], axis=0)


def _maxpool2(a, batch, in_stride, valid):
    """MaxPool (1,2)/(1,2) with floor semantics over each segment's valid region.

    out[:, b*p + j] = max(a[:, b*in_stride + 2j], a[:, b*in_stride + 2j + 1]); compact output."""
    p = valid // 2
    m = jnp.maximum(a[:, :a.shape[1] - 1], a[:, 1:])
    sel = _pool_selector(a.shape[1] - 1, batch, in_stride, p)
    return jnp.dot(m, sel, preferred_element_type=jnp.float32)


# --------------------------------- the kernel --------------------------------
def _deepconvnet_kernel(batch,
                        x_ref,
                        weff_ref, g1_ref, be1_ref,
                        w2_ref, g2_ref, be2_ref,
                        w3_ref, g3_ref, be3_ref,
                        wfc_ref, bfc_ref,
                        out_ref):
    B = batch
    xf = x_ref[...]                                    # (Hc, B*W0), batch folded on lanes
    _, L0 = xf.shape
    W0 = L0 // B
    V1 = W0 - 4                                        # conv1 valid width per segment
    p1 = V1 // 2
    V2 = p1 - 4
    p2 = V2 // 2
    V3 = p2 - 4
    p3 = V3 // 2                                       # 46 for T = 400

    # ---- block 1: fused conv1 (1x5) o conv1_2 (Hc x 1): ONE dot with K = 5*Hc
    x1 = _im2col(xf, 5)                                # (5*Hc, B*W0 - 4), stride W0, valid V1
    c1 = jnp.dot(weff_ref[...], x1, preferred_element_type=jnp.float32)
    y1 = _bn_elu(c1, g1_ref[...], be1_ref[...],
                 _valid_mask(c1.shape[1], B, W0, V1), B * V1)
    q1 = _maxpool2(y1, B, W0, V1)                      # (25, B*p1), compact
    # TODO(synk): dropout applied as identity (stochastic torch RNG not reproducible).

    # ---- block 2: conv2 (1x5, 25->50), im2col K = 125
    x2 = _im2col(q1, 5)                                # (125, B*p1 - 4), stride p1, valid V2
    c2 = jnp.dot(w2_ref[...], x2, preferred_element_type=jnp.float32)
    y2 = _bn_elu(c2, g2_ref[...], be2_ref[...],
                 _valid_mask(c2.shape[1], B, p1, V2), B * V2)
    q2 = _maxpool2(y2, B, p1, V2)                      # (50, B*p2)

    # ---- block 3: conv3 (1x5, 50->100), im2col K = 250
    x3 = _im2col(q2, 5)                                # (250, B*p2 - 4), stride p2, valid V3
    c3 = jnp.dot(w3_ref[...], x3, preferred_element_type=jnp.float32)
    y3 = _bn_elu(c3, g3_ref[...], be3_ref[...],
                 _valid_mask(c3.shape[1], B, p2, V3), B * V3)
    q3 = _maxpool2(y3, B, p2, V3)                      # (100, B*46)

    # ---- fc1: flatten(100*46) @ W^T + b  (tiny; elementwise to avoid lane reshapes)
    wfc = wfc_ref[...]                                 # (nb, 100, 46), loaded once
    rows = []
    for b in range(B):
        s = q3[:, b * p3:(b + 1) * p3]                 # (100, 46)
        prod = wfc * s[None, :, :]
        rows.append(jnp.sum(jnp.sum(prod, axis=2), axis=1))
    out_ref[...] = jnp.stack(rows, axis=0) + bfc_ref[...]


# --------------------------------- wrapper -----------------------------------
def deepconvnet_forward(x, params):
    B, Hc, W0 = x.shape
    nb = params["bfc"].shape[0]

    # Widths after each conv/pool (floor pooling); fc1 requires the final width == 46.
    V1 = W0 - 4
    V2 = V1 // 2 - 4
    V3 = V2 // 2 - 4
    assert V3 // 2 == 46, "fc1 = Linear(100*46, nb) requires T = 400"

    # --- trace-time parameter preprocessing (plain JAX, outside the kernel) ---
    # conv1 has a single input channel -> conv1_2 o conv1 is exactly linear: fuse them.
    weff = jnp.einsum("och,ck->okh", params["w12"], params["w1"]).reshape(25, 5 * Hc)
    w2r = jnp.transpose(params["w2"], (0, 2, 1)).reshape(50, 5 * 25)   # cols: k*25 + c
    w3r = jnp.transpose(params["w3"], (0, 2, 1)).reshape(100, 5 * 50)  # cols: k*50 + c
    wfc = params["wfc"].reshape(nb, 100, 46)            # torch flatten order c*46 + t
    # NOTE: conv biases (b1/b12/b2/b3) are per-channel constants; the training-mode
    # BatchNorm immediately after each conv subtracts them exactly with the batch mean,
    # so they are dropped (no effect on the output).

    # Fold the batch onto the lane/time axis in the wrapper (layout plumbing only).
    xf = jnp.transpose(x, (1, 0, 2)).reshape(Hc, B * W0)

    col = lambda v: v[:, None]
    args = [xf,
            weff, col(params["g1"]), col(params["be1"]),
            w2r, col(params["g2"]), col(params["be2"]),
            w3r, col(params["g3"]), col(params["be3"]),
            wfc, params["bfc"][None, :]]

    vspec = pl.BlockSpec(memory_space=pltpu.MemorySpace.VMEM)
    return pl.pallas_call(
        functools.partial(_deepconvnet_kernel, B),
        out_shape=jax.ShapeDtypeStruct((B, nb), jnp.float32),
        in_specs=[vspec] * len(args),
        out_specs=vspec,
        compiler_params=pltpu.CompilerParams(vmem_limit_bytes=32 * 1024 * 1024),
    )(*args)


def init_params(key, channels=4, nb_class=4):
    """Deterministic synthetic init; layouts mirror the torch module's parameters."""
    ks = jax.random.split(key, 10)
    u = lambda k, shape, s: s * jax.random.uniform(k, shape, jnp.float32, -1.0, 1.0)
    return dict(
        w1=u(ks[0], (25, 5), 0.3),                 # conv1   (25,1,1,5)  -> (o, k)
        b1=u(ks[1], (25,), 0.1),                   # unused: absorbed by batch-stat BN
        w12=u(ks[2], (25, 25, channels), 0.2),     # conv1_2 (25,25,Hc,1)-> (o, c, h)
        b12=u(ks[3], (25,), 0.1),                  # unused: absorbed by batch-stat BN
        w2=u(ks[4], (50, 25, 5), 0.15),            # conv2   (50,25,1,5) -> (o, c, k)
        b2=u(ks[5], (50,), 0.1),                   # unused: absorbed by batch-stat BN
        w3=u(ks[6], (100, 50, 5), 0.1),            # conv3   (100,50,1,5)-> (o, c, k)
        b3=u(ks[7], (100,), 0.1),                  # unused: absorbed by batch-stat BN
        wfc=u(ks[8], (nb_class, 100 * 46), 0.02),  # fc1
        bfc=u(ks[9], (nb_class,), 0.05),
        g1=jnp.ones((25,), jnp.float32), be1=jnp.zeros((25,), jnp.float32),
        g2=jnp.ones((50,), jnp.float32), be2=jnp.zeros((50,), jnp.float32),
        g3=jnp.ones((100,), jnp.float32), be3=jnp.zeros((100,), jnp.float32))


if __name__ == "__main__":
    # fc1 = Linear(100*46, nb_class) forces T = 400 (standard for this model).
    B, channels, T, nb_class = 2, 4, 400, 4
    key = jax.random.PRNGKey(0)
    kx, kp = jax.random.split(key)
    x = jax.random.normal(kx, (B, channels, T), jnp.float32)
    params = init_params(kp, channels=channels, nb_class=nb_class)

    out = deepconvnet_forward(x, params)
    out = jax.block_until_ready(out)
    assert out.shape == (B, nb_class) and out.dtype == jnp.float32
    print("KERNEL_OK")
</pallas_src>

<mosaic_0001>
module attributes {stable_mosaic.version = 11 : i64} {
  func.func @_deepconvnet_kernel(%arg0: memref<4x800xf32, #tpu.memory_space<vmem>>, %arg1: memref<25x20xf32, #tpu.memory_space<vmem>>, %arg2: memref<25x1xf32, #tpu.memory_space<vmem>>, %arg3: memref<25x1xf32, #tpu.memory_space<vmem>>, %arg4: memref<50x125xf32, #tpu.memory_space<vmem>>, %arg5: memref<50x1xf32, #tpu.memory_space<vmem>>, %arg6: memref<50x1xf32, #tpu.memory_space<vmem>>, %arg7: memref<100x250xf32, #tpu.memory_space<vmem>>, %arg8: memref<100x1xf32, #tpu.memory_space<vmem>>, %arg9: memref<100x1xf32, #tpu.memory_space<vmem>>, %arg10: memref<4x100x46xf32, #tpu.memory_space<vmem>>, %arg11: memref<1x4xf32, #tpu.memory_space<vmem>>, %arg12: memref<2x4xf32, #tpu.memory_space<vmem>>) attributes {dimension_semantics = [], scalar_prefetch = 0 : i64, scratch_operands = 0 : i64, tpu.core_type = #tpu.core_type<tc>} {
    %c0 = arith.constant 0 : index
    %c0_0 = arith.constant 0 : index
    %0 = vector.load %arg0[%c0, %c0_0] : memref<4x800xf32, #tpu.memory_space<vmem>>, vector<4x800xf32>
    %1 = vector.extract_strided_slice %0 {offsets = [0, 0], sizes = [4, 796], strides = [1, 1]} : vector<4x800xf32> to vector<4x796xf32>
    %2 = vector.extract_strided_slice %0 {offsets = [0, 1], sizes = [4, 796], strides = [1, 1]} : vector<4x800xf32> to vector<4x796xf32>
    %3 = vector.extract_strided_slice %0 {offsets = [0, 2], sizes = [4, 796], strides = [1, 1]} : vector<4x800xf32> to vector<4x796xf32>
    %4 = vector.extract_strided_slice %0 {offsets = [0, 3], sizes = [4, 796], strides = [1, 1]} : vector<4x800xf32> to vector<4x796xf32>
    %5 = vector.extract_strided_slice %0 {offsets = [0, 4], sizes = [4, 796], strides = [1, 1]} : vector<4x800xf32> to vector<4x796xf32>
    %6 = tpu.concatenate %1, %2, %3, %4, %5 in 0 : vector<4x796xf32>, vector<4x796xf32>, vector<4x796xf32>, vector<4x796xf32>, vector<4x796xf32> -> vector<20x796xf32>
    %c0_1 = arith.constant 0 : index
    %c0_2 = arith.constant 0 : index
    %7 = vector.load %arg1[%c0_1, %c0_2] : memref<25x20xf32, #tpu.memory_space<vmem>>, vector<25x20xf32>
    %cst = arith.constant dense<0.000000e+00> : vector<25x796xf32>
    %8 = tpu.matmul %7, %6, %cst {dimension_numbers = #tpu.dot_dimension_numbers<[1], [0], [0], [1], [0, 0, 1, 1], [], []>} : vector<25x20xf32>, vector<20x796xf32>, vector<25x796xf32> -> vector<25x796xf32>
    %c0_3 = arith.constant 0 : index
    %c0_4 = arith.constant 0 : index
    %9 = vector.load %arg2[%c0_3, %c0_4] : memref<25x1xf32, #tpu.memory_space<vmem>>, vector<25x1xf32>
    %c0_5 = arith.constant 0 : index
    %c0_6 = arith.constant 0 : index
    %10 = vector.load %arg3[%c0_5, %c0_6] : memref<25x1xf32, #tpu.memory_space<vmem>>, vector<25x1xf32>
    %11 = tpu.iota {dimensions = array<i32: 1>} : vector<1x796xi32>
    %c0_i32 = arith.constant 0 : i32
    %12 = vector.broadcast %c0_i32 : i32 to vector<1x796xi32>
    %c400_i32 = arith.constant 400 : i32
    %13 = vector.broadcast %c400_i32 : i32 to vector<1x796xi32>
    %14 = arith.cmpi sge, %11, %13 : vector<1x796xi32>
    %c1_i32 = arith.constant 1 : i32
    %c0_i32_7 = arith.constant 0 : i32
    %15 = vector.broadcast %c1_i32 : i32 to vector<1x796xi32>
    %16 = vector.broadcast %c0_i32_7 : i32 to vector<1x796xi32>
    %17 = arith.select %14, %15, %16 : vector<1x796xi1>, vector<1x796xi32>
    %18 = arith.addi %12, %17 : vector<1x796xi32>
    %c400_i32_8 = arith.constant 400 : i32
    %19 = vector.broadcast %c400_i32_8 : i32 to vector<1x796xi32>
    %20 = arith.muli %18, %19 : vector<1x796xi32>
    %21 = arith.subi %11, %20 : vector<1x796xi32>
    %c396_i32 = arith.constant 396 : i32
    %22 = vector.broadcast %c396_i32 : i32 to vector<1x796xi32>
    %23 = arith.cmpi slt, %21, %22 : vector<1x796xi32>
    %cst_9 = arith.constant 1.000000e+00 : f32
    %cst_10 = arith.constant 0.000000e+00 : f32
    %24 = vector.broadcast %cst_9 : f32 to vector<1x796xf32>
    %25 = vector.broadcast %cst_10 : f32 to vector<1x796xf32>
    %26 = arith.select %23, %24, %25 : vector<1x796xi1>, vector<1x796xf32>
    %27 = vector.broadcast %26 : vector<1x796xf32> to vector<25x796xf32>
    %28 = arith.mulf %8, %27 : vector<25x796xf32>
    %cst_11 = arith.constant dense<0.000000e+00> : vector<25xf32>
    %29 = vector.multi_reduction <add>, %28, %cst_11 [1] : vector<25x796xf32> to vector<25xf32>
    %30 = vector.shape_cast %29 : vector<25xf32> to vector<25x1xf32>
    %cst_12 = arith.constant 0.00126262626 : f32
    %31 = vector.broadcast %cst_12 : f32 to vector<25x1xf32>
    %32 = arith.mulf %30, %31 : vector<25x1xf32>
    %33 = vector.broadcast %32 : vector<25x1xf32> to vector<25x796xf32>
    %34 = arith.subf %8, %33 : vector<25x796xf32>
    %35 = vector.broadcast %26 : vector<1x796xf32> to vector<25x796xf32>
    %36 = arith.mulf %34, %35 : vector<25x796xf32>
    %37 = arith.mulf %36, %36 : vector<25x796xf32>
    %cst_13 = arith.constant dense<0.000000e+00> : vector<25xf32>
    %38 = vector.multi_reduction <add>, %37, %cst_13 [1] : vector<25x796xf32> to vector<25xf32>
    %39 = vector.shape_cast %38 : vector<25xf32> to vector<25x1xf32>
    %cst_14 = arith.constant 0.00126262626 : f32
    %40 = vector.broadcast %cst_14 : f32 to vector<25x1xf32>
    %41 = arith.mulf %39, %40 : vector<25x1xf32>
    %42 = math.rsqrt %41 : vector<25x1xf32>
    %43 = arith.mulf %42, %9 : vector<25x1xf32>
    %44 = vector.broadcast %43 : vector<25x1xf32> to vector<25x796xf32>
    %45 = arith.mulf %34, %44 : vector<25x796xf32>
    %46 = vector.broadcast %10 : vector<25x1xf32> to vector<25x796xf32>
    %47 = arith.addf %45, %46 : vector<25x796xf32>
    %cst_15 = arith.constant 0.000000e+00 : f32
    %48 = vector.broadcast %cst_15 : f32 to vector<25x796xf32>
    %49 = arith.cmpf ogt, %47, %48 : vector<25x796xf32>
    %50 = math.exp %47 : vector<25x796xf32>
    %cst_16 = arith.constant 1.000000e+00 : f32
    %51 = vector.broadcast %cst_16 : f32 to vector<25x796xf32>
    %52 = arith.subf %50, %51 : vector<25x796xf32>
    %53 = arith.select %49, %47, %52 : vector<25x796xi1>, vector<25x796xf32>
    %54 = vector.extract_strided_slice %53 {offsets = [0, 0], sizes = [25, 795], strides = [1, 1]} : vector<25x796xf32> to vector<25x795xf32>
    %55 = vector.extract_strided_slice %53 {offsets = [0, 1], sizes = [25, 795], strides = [1, 1]} : vector<25x796xf32> to vector<25x795xf32>
    %56 = arith.maximumf %54, %55 : vector<25x795xf32>
    %57 = tpu.iota {dimensions = array<i32: 0>} : vector<795x396xi32>
    %58 = tpu.iota {dimensions = array<i32: 1>} : vector<795x396xi32>
    %c0_i32_17 = arith.constant 0 : i32
    %59 = vector.broadcast %c0_i32_17 : i32 to vector<795x396xi32>
    %c198_i32 = arith.constant 198 : i32
    %60 = vector.broadcast %c198_i32 : i32 to vector<795x396xi32>
    %61 = arith.cmpi sge, %58, %60 : vector<795x396xi32>
    %c1_i32_18 = arith.constant 1 : i32
    %c0_i32_19 = arith.constant 0 : i32
    %62 = vector.broadcast %c1_i32_18 : i32 to vector<795x396xi32>
    %63 = vector.broadcast %c0_i32_19 : i32 to vector<795x396xi32>
    %64 = arith.select %61, %62, %63 : vector<795x396xi1>, vector<795x396xi32>
    %65 = arith.addi %59, %64 : vector<795x396xi32>
    %c400_i32_20 = arith.constant 400 : i32
    %66 = vector.broadcast %c400_i32_20 : i32 to vector<795x396xi32>
    %67 = arith.muli %65, %66 : vector<795x396xi32>
    %c198_i32_21 = arith.constant 198 : i32
    %68 = vector.broadcast %c198_i32_21 : i32 to vector<795x396xi32>
    %69 = arith.muli %65, %68 : vector<795x396xi32>
    %70 = arith.subi %58, %69 : vector<795x396xi32>
    %c2_i32 = arith.constant 2 : i32
    %71 = vector.broadcast %c2_i32 : i32 to vector<795x396xi32>
    %72 = arith.muli %71, %70 : vector<795x396xi32>
    %73 = arith.addi %67, %72 : vector<795x396xi32>
    %74 = arith.cmpi eq, %57, %73 : vector<795x396xi32>
    %cst_22 = arith.constant 1.000000e+00 : f32
    %cst_23 = arith.constant 0.000000e+00 : f32
    %75 = vector.broadcast %cst_22 : f32 to vector<795x396xf32>
    %76 = vector.broadcast %cst_23 : f32 to vector<795x396xf32>
    %77 = arith.select %74, %75, %76 : vector<795x396xi1>, vector<795x396xf32>
    %cst_24 = arith.constant dense<0.000000e+00> : vector<25x396xf32>
    %78 = tpu.matmul %56, %77, %cst_24 {dimension_numbers = #tpu.dot_dimension_numbers<[1], [0], [0], [1], [0, 0, 1, 1], [], []>} : vector<25x795xf32>, vector<795x396xf32>, vector<25x396xf32> -> vector<25x396xf32>
    %79 = vector.extract_strided_slice %78 {offsets = [0, 0], sizes = [25, 392], strides = [1, 1]} : vector<25x396xf32> to vector<25x392xf32>
    %80 = vector.extract_strided_slice %78 {offsets = [0, 1], sizes = [25, 392], strides = [1, 1]} : vector<25x396xf32> to vector<25x392xf32>
    %81 = vector.extract_strided_slice %78 {offsets = [0, 2], sizes = [25, 392], strides = [1, 1]} : vector<25x396xf32> to vector<25x392xf32>
    %82 = vector.extract_strided_slice %78 {offsets = [0, 3], sizes = [25, 392], strides = [1, 1]} : vector<25x396xf32> to vector<25x392xf32>
    %83 = vector.extract_strided_slice %78 {offsets = [0, 4], sizes = [25, 392], strides = [1, 1]} : vector<25x396xf32> to vector<25x392xf32>
    %84 = tpu.concatenate %79, %80, %81, %82, %83 in 0 : vector<25x392xf32>, vector<25x392xf32>, vector<25x392xf32>, vector<25x392xf32>, vector<25x392xf32> -> vector<125x392xf32>
    %c0_25 = arith.constant 0 : index
    %c0_26 = arith.constant 0 : index
    %85 = vector.load %arg4[%c0_25, %c0_26] : memref<50x125xf32, #tpu.memory_space<vmem>>, vector<50x125xf32>
    %cst_27 = arith.constant dense<0.000000e+00> : vector<50x392xf32>
    %86 = tpu.matmul %85, %84, %cst_27 {dimension_numbers = #tpu.dot_dimension_numbers<[1], [0], [0], [1], [0, 0, 1, 1], [], []>} : vector<50x125xf32>, vector<125x392xf32>, vector<50x392xf32> -> vector<50x392xf32>
    %c0_28 = arith.constant 0 : index
    %c0_29 = arith.constant 0 : index
    %87 = vector.load %arg5[%c0_28, %c0_29] : memref<50x1xf32, #tpu.memory_space<vmem>>, vector<50x1xf32>
    %c0_30 = arith.constant 0 : index
    %c0_31 = arith.constant 0 : index
    %88 = vector.load %arg6[%c0_30, %c0_31] : memref<50x1xf32, #tpu.memory_space<vmem>>, vector<50x1xf32>
    %89 = tpu.iota {dimensions = array<i32: 1>} : vector<1x392xi32>
    %c0_i32_32 = arith.constant 0 : i32
    %90 = vector.broadcast %c0_i32_32 : i32 to vector<1x392xi32>
    %c198_i32_33 = arith.constant 198 : i32
    %91 = vector.broadcast %c198_i32_33 : i32 to vector<1x392xi32>
    %92 = arith.cmpi sge, %89, %91 : vector<1x392xi32>
    %c1_i32_34 = arith.constant 1 : i32
    %c0_i32_35 = arith.constant 0 : i32
    %93 = vector.broadcast %c1_i32_34 : i32 to vector<1x392xi32>
    %94 = vector.broadcast %c0_i32_35 : i32 to vector<1x392xi32>
    %95 = arith.select %92, %93, %94 : vector<1x392xi1>, vector<1x392xi32>
    %96 = arith.addi %90, %95 : vector<1x392xi32>
    %c198_i32_36 = arith.constant 198 : i32
    %97 = vector.broadcast %c198_i32_36 : i32 to vector<1x392xi32>
    %98 = arith.muli %96, %97 : vector<1x392xi32>
    %99 = arith.subi %89, %98 : vector<1x392xi32>
    %c194_i32 = arith.constant 194 : i32
    %100 = vector.broadcast %c194_i32 : i32 to vector<1x392xi32>
    %101 = arith.cmpi slt, %99, %100 : vector<1x392xi32>
    %cst_37 = arith.constant 1.000000e+00 : f32
    %cst_38 = arith.constant 0.000000e+00 : f32
    %102 = vector.broadcast %cst_37 : f32 to vector<1x392xf32>
    %103 = vector.broadcast %cst_38 : f32 to vector<1x392xf32>
    %104 = arith.select %101, %102, %103 : vector<1x392xi1>, vector<1x392xf32>
    %105 = vector.broadcast %104 : vector<1x392xf32> to vector<50x392xf32>
    %106 = arith.mulf %86, %105 : vector<50x392xf32>
    %cst_39 = arith.constant dense<0.000000e+00> : vector<50xf32>
    %107 = vector.multi_reduction <add>, %106, %cst_39 [1] : vector<50x392xf32> to vector<50xf32>
    %108 = vector.shape_cast %107 : vector<50xf32> to vector<50x1xf32>
    %cst_40 = arith.constant 0.00257731951 : f32
    %109 = vector.broadcast %cst_40 : f32 to vector<50x1xf32>
    %110 = arith.mulf %108, %109 : vector<50x1xf32>
    %111 = vector.broadcast %110 : vector<50x1xf32> to vector<50x392xf32>
    %112 = arith.subf %86, %111 : vector<50x392xf32>
    %113 = vector.broadcast %104 : vector<1x392xf32> to vector<50x392xf32>
    %114 = arith.mulf %112, %113 : vector<50x392xf32>
    %115 = arith.mulf %114, %114 : vector<50x392xf32>
    %cst_41 = arith.constant dense<0.000000e+00> : vector<50xf32>
    %116 = vector.multi_reduction <add>, %115, %cst_41 [1] : vector<50x392xf32> to vector<50xf32>
    %117 = vector.shape_cast %116 : vector<50xf32> to vector<50x1xf32>
    %cst_42 = arith.constant 0.00257731951 : f32
    %118 = vector.broadcast %cst_42 : f32 to vector<50x1xf32>
    %119 = arith.mulf %117, %118 : vector<50x1xf32>
    %120 = math.rsqrt %119 : vector<50x1xf32>
    %121 = arith.mulf %120, %87 : vector<50x1xf32>
    %122 = vector.broadcast %121 : vector<50x1xf32> to vector<50x392xf32>
    %123 = arith.mulf %112, %122 : vector<50x392xf32>
    %124 = vector.broadcast %88 : vector<50x1xf32> to vector<50x392xf32>
    %125 = arith.addf %123, %124 : vector<50x392xf32>
    %cst_43 = arith.constant 0.000000e+00 : f32
    %126 = vector.broadcast %cst_43 : f32 to vector<50x392xf32>
    %127 = arith.cmpf ogt, %125, %126 : vector<50x392xf32>
    %128 = math.exp %125 : vector<50x392xf32>
    %cst_44 = arith.constant 1.000000e+00 : f32
    %129 = vector.broadcast %cst_44 : f32 to vector<50x392xf32>
    %130 = arith.subf %128, %129 : vector<50x392xf32>
    %131 = arith.select %127, %125, %130 : vector<50x392xi1>, vector<50x392xf32>
    %132 = vector.extract_strided_slice %131 {offsets = [0, 0], sizes = [50, 391], strides = [1, 1]} : vector<50x392xf32> to vector<50x391xf32>
    %133 = vector.extract_strided_slice %131 {offsets = [0, 1], sizes = [50, 391], strides = [1, 1]} : vector<50x392xf32> to vector<50x391xf32>
    %134 = arith.maximumf %132, %133 : vector<50x391xf32>
    %135 = tpu.iota {dimensions = array<i32: 0>} : vector<391x194xi32>
    %136 = tpu.iota {dimensions = array<i32: 1>} : vector<391x194xi32>
    %c0_i32_45 = arith.constant 0 : i32
    %137 = vector.broadcast %c0_i32_45 : i32 to vector<391x194xi32>
    %c97_i32 = arith.constant 97 : i32
    %138 = vector.broadcast %c97_i32 : i32 to vector<391x194xi32>
    %139 = arith.cmpi sge, %136, %138 : vector<391x194xi32>
    %c1_i32_46 = arith.constant 1 : i32
    %c0_i32_47 = arith.constant 0 : i32
    %140 = vector.broadcast %c1_i32_46 : i32 to vector<391x194xi32>
    %141 = vector.broadcast %c0_i32_47 : i32 to vector<391x194xi32>
    %142 = arith.select %139, %140, %141 : vector<391x194xi1>, vector<391x194xi32>
    %143 = arith.addi %137, %142 : vector<391x194xi32>
    %c198_i32_48 = arith.constant 198 : i32
    %144 = vector.broadcast %c198_i32_48 : i32 to vector<391x194xi32>
    %145 = arith.muli %143, %144 : vector<391x194xi32>
    %c97_i32_49 = arith.constant 97 : i32
    %146 = vector.broadcast %c97_i32_49 : i32 to vector<391x194xi32>
    %147 = arith.muli %143, %146 : vector<391x194xi32>
    %148 = arith.subi %136, %147 : vector<391x194xi32>
    %c2_i32_50 = arith.constant 2 : i32
    %149 = vector.broadcast %c2_i32_50 : i32 to vector<391x194xi32>
    %150 = arith.muli %149, %148 : vector<391x194xi32>
    %151 = arith.addi %145, %150 : vector<391x194xi32>
    %152 = arith.cmpi eq, %135, %151 : vector<391x194xi32>
    %cst_51 = arith.constant 1.000000e+00 : f32
    %cst_52 = arith.constant 0.000000e+00 : f32
    %153 = vector.broadcast %cst_51 : f32 to vector<391x194xf32>
    %154 = vector.broadcast %cst_52 : f32 to vector<391x194xf32>
    %155 = arith.select %152, %153, %154 : vector<391x194xi1>, vector<391x194xf32>
    %cst_53 = arith.constant dense<0.000000e+00> : vector<50x194xf32>
    %156 = tpu.matmul %134, %155, %cst_53 {dimension_numbers = #tpu.dot_dimension_numbers<[1], [0], [0], [1], [0, 0, 1, 1], [], []>} : vector<50x391xf32>, vector<391x194xf32>, vector<50x194xf32> -> vector<50x194xf32>
    %157 = vector.extract_strided_slice %156 {offsets = [0, 0], sizes = [50, 190], strides = [1, 1]} : vector<50x194xf32> to vector<50x190xf32>
    %158 = vector.extract_strided_slice %156 {offsets = [0, 1], sizes = [50, 190], strides = [1, 1]} : vector<50x194xf32> to vector<50x190xf32>
    %159 = vector.extract_strided_slice %156 {offsets = [0, 2], sizes = [50, 190], strides = [1, 1]} : vector<50x194xf32> to vector<50x190xf32>
    %160 = vector.extract_strided_slice %156 {offsets = [0, 3], sizes = [50, 190], strides = [1, 1]} : vector<50x194xf32> to vector<50x190xf32>
    %161 = vector.extract_strided_slice %156 {offsets = [0, 4], sizes = [50, 190], strides = [1, 1]} : vector<50x194xf32> to vector<50x190xf32>
    %162 = tpu.concatenate %157, %158, %159, %160, %161 in 0 : vector<50x190xf32>, vector<50x190xf32>, vector<50x190xf32>, vector<50x190xf32>, vector<50x190xf32> -> vector<250x190xf32>
    %c0_54 = arith.constant 0 : index
    %c0_55 = arith.constant 0 : index
    %163 = vector.load %arg7[%c0_54, %c0_55] : memref<100x250xf32, #tpu.memory_space<vmem>>, vector<100x250xf32>
    %cst_56 = arith.constant dense<0.000000e+00> : vector<100x190xf32>
    %164 = tpu.matmul %163, %162, %cst_56 {dimension_numbers = #tpu.dot_dimension_numbers<[1], [0], [0], [1], [0, 0, 1, 1], [], []>} : vector<100x250xf32>, vector<250x190xf32>, vector<100x190xf32> -> vector<100x190xf32>
    %c0_57 = arith.constant 0 : index
    %c0_58 = arith.constant 0 : index
    %165 = vector.load %arg8[%c0_57, %c0_58] : memref<100x1xf32, #tpu.memory_space<vmem>>, vector<100x1xf32>
    %c0_59 = arith.constant 0 : index
    %c0_60 = arith.constant 0 : index
    %166 = vector.load %arg9[%c0_59, %c0_60] : memref<100x1xf32, #tpu.memory_space<vmem>>, vector<100x1xf32>
    %167 = tpu.iota {dimensions = array<i32: 1>} : vector<1x190xi32>
    %c0_i32_61 = arith.constant 0 : i32
    %168 = vector.broadcast %c0_i32_61 : i32 to vector<1x190xi32>
    %c97_i32_62 = arith.constant 97 : i32
    %169 = vector.broadcast %c97_i32_62 : i32 to vector<1x190xi32>
    %170 = arith.cmpi sge, %167, %169 : vector<1x190xi32>
    %c1_i32_63 = arith.constant 1 : i32
    %c0_i32_64 = arith.constant 0 : i32
    %171 = vector.broadcast %c1_i32_63 : i32 to vector<1x190xi32>
    %172 = vector.broadcast %c0_i32_64 : i32 to vector<1x190xi32>
    %173 = arith.select %170, %171, %172 : vector<1x190xi1>, vector<1x190xi32>
    %174 = arith.addi %168, %173 : vector<1x190xi32>
    %c97_i32_65 = arith.constant 97 : i32
    %175 = vector.broadcast %c97_i32_65 : i32 to vector<1x190xi32>
    %176 = arith.muli %174, %175 : vector<1x190xi32>
    %177 = arith.subi %167, %176 : vector<1x190xi32>
    %c93_i32 = arith.constant 93 : i32
    %178 = vector.broadcast %c93_i32 : i32 to vector<1x190xi32>
    %179 = arith.cmpi slt, %177, %178 : vector<1x190xi32>
    %cst_66 = arith.constant 1.000000e+00 : f32
    %cst_67 = arith.constant 0.000000e+00 : f32
    %180 = vector.broadcast %cst_66 : f32 to vector<1x190xf32>
    %181 = vector.broadcast %cst_67 : f32 to vector<1x190xf32>
    %182 = arith.select %179, %180, %181 : vector<1x190xi1>, vector<1x190xf32>
    %183 = vector.broadcast %182 : vector<1x190xf32> to vector<100x190xf32>
    %184 = arith.mulf %164, %183 : vector<100x190xf32>
    %cst_68 = arith.constant dense<0.000000e+00> : vector<100xf32>
    %185 = vector.multi_reduction <add>, %184, %cst_68 [1] : vector<100x190xf32> to vector<100xf32>
    %186 = vector.shape_cast %185 : vector<100xf32> to vector<100x1xf32>
    %cst_69 = arith.constant 0.00537634408 : f32
    %187 = vector.broadcast %cst_69 : f32 to vector<100x1xf32>
    %188 = arith.mulf %186, %187 : vector<100x1xf32>
    %189 = vector.broadcast %188 : vector<100x1xf32> to vector<100x190xf32>
    %190 = arith.subf %164, %189 : vector<100x190xf32>
    %191 = vector.broadcast %182 : vector<1x190xf32> to vector<100x190xf32>
    %192 = arith.mulf %190, %191 : vector<100x190xf32>
    %193 = arith.mulf %192, %192 : vector<100x190xf32>
    %cst_70 = arith.constant dense<0.000000e+00> : vector<100xf32>
    %194 = vector.multi_reduction <add>, %193, %cst_70 [1] : vector<100x190xf32> to vector<100xf32>
    %195 = vector.shape_cast %194 : vector<100xf32> to vector<100x1xf32>
    %cst_71 = arith.constant 0.00537634408 : f32
    %196 = vector.broadcast %cst_71 : f32 to vector<100x1xf32>
    %197 = arith.mulf %195, %196 : vector<100x1xf32>
    %198 = math.rsqrt %197 : vector<100x1xf32>
    %199 = arith.mulf %198, %165 : vector<100x1xf32>
    %200 = vector.broadcast %199 : vector<100x1xf32> to vector<100x190xf32>
    %201 = arith.mulf %190, %200 : vector<100x190xf32>
    %202 = vector.broadcast %166 : vector<100x1xf32> to vector<100x190xf32>
    %203 = arith.addf %201, %202 : vector<100x190xf32>
    %cst_72 = arith.constant 0.000000e+00 : f32
    %204 = vector.broadcast %cst_72 : f32 to vector<100x190xf32>
    %205 = arith.cmpf ogt, %203, %204 : vector<100x190xf32>
    %206 = math.exp %203 : vector<100x190xf32>
    %cst_73 = arith.constant 1.000000e+00 : f32
    %207 = vector.broadcast %cst_73 : f32 to vector<100x190xf32>
    %208 = arith.subf %206, %207 : vector<100x190xf32>
    %209 = arith.select %205, %203, %208 : vector<100x190xi1>, vector<100x190xf32>
    %210 = vector.extract_strided_slice %209 {offsets = [0, 0], sizes = [100, 189], strides = [1, 1]} : vector<100x190xf32> to vector<100x189xf32>
    %211 = vector.extract_strided_slice %209 {offsets = [0, 1], sizes = [100, 189], strides = [1, 1]} : vector<100x190xf32> to vector<100x189xf32>
    %212 = arith.maximumf %210, %211 : vector<100x189xf32>
    %213 = tpu.iota {dimensions = array<i32: 0>} : vector<189x92xi32>
    %214 = tpu.iota {dimensions = array<i32: 1>} : vector<189x92xi32>
    %c0_i32_74 = arith.constant 0 : i32
    %215 = vector.broadcast %c0_i32_74 : i32 to vector<189x92xi32>
    %c46_i32 = arith.constant 46 : i32
    %216 = vector.broadcast %c46_i32 : i32 to vector<189x92xi32>
    %217 = arith.cmpi sge, %214, %216 : vector<189x92xi32>
    %c1_i32_75 = arith.constant 1 : i32
    %c0_i32_76 = arith.constant 0 : i32
    %218 = vector.broadcast %c1_i32_75 : i32 to vector<189x92xi32>
    %219 = vector.broadcast %c0_i32_76 : i32 to vector<189x92xi32>
    %220 = arith.select %217, %218, %219 : vector<189x92xi1>, vector<189x92xi32>
    %221 = arith.addi %215, %220 : vector<189x92xi32>
    %c97_i32_77 = arith.constant 97 : i32
    %222 = vector.broadcast %c97_i32_77 : i32 to vector<189x92xi32>
    %223 = arith.muli %221, %222 : vector<189x92xi32>
    %c46_i32_78 = arith.constant 46 : i32
    %224 = vector.broadcast %c46_i32_78 : i32 to vector<189x92xi32>
    %225 = arith.muli %221, %224 : vector<189x92xi32>
    %226 = arith.subi %214, %225 : vector<189x92xi32>
    %c2_i32_79 = arith.constant 2 : i32
    %227 = vector.broadcast %c2_i32_79 : i32 to vector<189x92xi32>
    %228 = arith.muli %227, %226 : vector<189x92xi32>
    %229 = arith.addi %223, %228 : vector<189x92xi32>
    %230 = arith.cmpi eq, %213, %229 : vector<189x92xi32>
    %cst_80 = arith.constant 1.000000e+00 : f32
    %cst_81 = arith.constant 0.000000e+00 : f32
    %231 = vector.broadcast %cst_80 : f32 to vector<189x92xf32>
    %232 = vector.broadcast %cst_81 : f32 to vector<189x92xf32>
    %233 = arith.select %230, %231, %232 : vector<189x92xi1>, vector<189x92xf32>
    %cst_82 = arith.constant dense<0.000000e+00> : vector<100x92xf32>
    %234 = tpu.matmul %212, %233, %cst_82 {dimension_numbers = #tpu.dot_dimension_numbers<[1], [0], [0], [1], [0, 0, 1, 1], [], []>} : vector<100x189xf32>, vector<189x92xf32>, vector<100x92xf32> -> vector<100x92xf32>
    %c0_83 = arith.constant 0 : index
    %c0_84 = arith.constant 0 : index
    %c0_85 = arith.constant 0 : index
    %235 = vector.load %arg10[%c0_83, %c0_84, %c0_85] : memref<4x100x46xf32, #tpu.memory_space<vmem>>, vector<4x100x46xf32>
    %236 = vector.extract_strided_slice %234 {offsets = [0, 0], sizes = [100, 46], strides = [1, 1]} : vector<100x92xf32> to vector<100x46xf32>
    %237 = vector.shape_cast %236 : vector<100x46xf32> to vector<1x100x46xf32>
    %238 = vector.broadcast %237 : vector<1x100x46xf32> to vector<4x100x46xf32>
    %239 = arith.mulf %235, %238 : vector<4x100x46xf32>
    %cst_86 = arith.constant dense<0.000000e+00> : vector<4x100xf32>
    %240 = vector.multi_reduction <add>, %239, %cst_86 [2] : vector<4x100x46xf32> to vector<4x100xf32>
    %cst_87 = arith.constant dense<0.000000e+00> : vector<4xf32>
    %241 = vector.multi_reduction <add>, %240, %cst_87 [1] : vector<4x100xf32> to vector<4xf32>
    %242 = vector.extract_strided_slice %234 {offsets = [0, 46], sizes = [100, 46], strides = [1, 1]} : vector<100x92xf32> to vector<100x46xf32>
    %243 = vector.shape_cast %242 : vector<100x46xf32> to vector<1x100x46xf32>
    %244 = vector.broadcast %243 : vector<1x100x46xf32> to vector<4x100x46xf32>
    %245 = arith.mulf %235, %244 : vector<4x100x46xf32>
    %cst_88 = arith.constant dense<0.000000e+00> : vector<4x100xf32>
    %246 = vector.multi_reduction <add>, %245, %cst_88 [2] : vector<4x100x46xf32> to vector<4x100xf32>
    %cst_89 = arith.constant dense<0.000000e+00> : vector<4xf32>
    %247 = vector.multi_reduction <add>, %246, %cst_89 [1] : vector<4x100xf32> to vector<4xf32>
    %248 = vector.shape_cast %241 : vector<4xf32> to vector<1x4xf32>
    %249 = vector.shape_cast %247 : vector<4xf32> to vector<1x4xf32>
    %250 = tpu.concatenate %248, %249 in 0 : vector<1x4xf32>, vector<1x4xf32> -> vector<2x4xf32>
    %c0_90 = arith.constant 0 : index
    %c0_91 = arith.constant 0 : index
    %251 = vector.load %arg11[%c0_90, %c0_91] : memref<1x4xf32, #tpu.memory_space<vmem>>, vector<1x4xf32>
    %252 = vector.broadcast %251 : vector<1x4xf32> to vector<2x4xf32>
    %253 = arith.addf %250, %252 : vector<2x4xf32>
    %c0_92 = arith.constant 0 : index
    %c0_93 = arith.constant 0 : index
    %254 = vector.load %arg12[%c0_92, %c0_93] : memref<2x4xf32, #tpu.memory_space<vmem>>, vector<2x4xf32>
    tpu.vector_store %arg12[%c0_92, %c0_93], %253 {strides = array<i32>} : memref<2x4xf32, #tpu.memory_space<vmem>>, vector<2x4xf32>,
    return
  }
}

</mosaic_0001>

<llo_original>
// kernel: tpu_custom_call.1
$region0: #{tpu_custom_call.1}
  #allocation0 [shape = 'u32[]', space=smem, size = 0x4, offset = 0x4, fixed_abs, tag = 'smem constant byte address 0x4 - core index']
  #allocation1 [shape = 'u32[144,128]{1,0:T(1,128)}', space=vmem, size = 0x12000, scoped, tag = 'internal scratch']
  %s0 = inlined_call_operand.vmem [shape: f32[4,800], index: 0, kind: input, shape index: {}]
  %s1 = inlined_call_operand.vmem [shape: f32[25,20], index: 1, kind: input, shape index: {}]
  %s2 = inlined_call_operand.vmem [shape: f32[25,1], index: 2, kind: input, shape index: {}]
  %s3 = inlined_call_operand.vmem [shape: f32[25,1], index: 3, kind: input, shape index: {}]
  %s4 = inlined_call_operand.vmem [shape: f32[50,125], index: 4, kind: input, shape index: {}]
  %s5 = inlined_call_operand.vmem [shape: f32[50,1], index: 5, kind: input, shape index: {}]
  %s6 = inlined_call_operand.vmem [shape: f32[50,1], index: 6, kind: input, shape index: {}]
  %s7 = inlined_call_operand.vmem [shape: f32[100,250], index: 7, kind: input, shape index: {}]
  %s8 = inlined_call_operand.vmem [shape: f32[100,1], index: 8, kind: input, shape index: {}]
  %s9 = inlined_call_operand.vmem [shape: f32[100,1], index: 9, kind: input, shape index: {}]
  %s10 = inlined_call_operand.vmem [shape: f32[4,100,46], index: 10, kind: input, shape index: {}]
  %s11 = inlined_call_operand.vmem [shape: f32[1,4], index: 11, kind: input, shape index: {}]
  %s12 = inlined_call_operand.hbm [shape: f32[2,4], index: 12, kind: output, shape index: {}]
  %s13 = sld [smem:[#allocation0]]
  $region58: #{tpu_custom_call.1} parent=0
    _
  %s15 = ssub.s32 1, %s13
  %s16 = scalar_select 0, %s15, %s13
  $region1: #{tpu_custom_call.1} parent=0
    #allocation2 [shape = 'u8[1024]{0}', space=vmem, size = 0x400, scoped, tag = 'output window, operand 0, single buffered']
    #allocation3 [shape = 's32[1]{0}', space=sflag, size = 0x4, scoped, tag = 'scoped memory for tpu_custom_call.1']
    %17 = vsyncpa [#allocation3], 0
    // Predicated region
    $region2: #{tpu_custom_call.1} parent=1 // pred_check
      _
    $region3: #{tpu_custom_call.1} parent=1 // pred_check_branch
      %19 = sbr.rel (0) target = $region5
    $region4: #{tpu_custom_call.1} parent=1 // pred_region
      _
    $region5: #{tpu_custom_call.1} parent=1 // pred_fallthru
      _
    // Predicated region
    $region6: #{tpu_custom_call.1} parent=1 // pred_check
      _
    $region7: #{tpu_custom_call.1} parent=1 // pred_check_branch
      %21 = sbr.rel (0) target = $region9
    $region8: #{tpu_custom_call.1} parent=1 // pred_region
      _
    $region9: #{tpu_custom_call.1} parent=1 // pred_fallthru
      _
    // Predicated region
    $region10: #{tpu_custom_call.1} parent=1 // pred_check
      _
    $region11: #{tpu_custom_call.1} parent=1 // pred_check_branch
      %23 = sbr.rel (0) target = $region13
    $region12: #{tpu_custom_call.1} parent=1 // pred_region
      _
    $region13: #{tpu_custom_call.1} parent=1 // pred_fallthru
      _
    // Predicated region
    $region14: #{tpu_custom_call.1} parent=1 // pred_check
      _
    $region15: #{tpu_custom_call.1} parent=1 // pred_check_branch
      %25 = sbr.rel (0) target = $region17
    $region16: #{tpu_custom_call.1} parent=1 // pred_region
      _
    $region17: #{tpu_custom_call.1} parent=1 // pred_fallthru
      _
    // Predicated region
    $region18: #{tpu_custom_call.1} parent=1 // pred_check
      _
    $region19: #{tpu_custom_call.1} parent=1 // pred_check_branch
      %27 = sbr.rel (0) target = $region21
    $region20: #{tpu_custom_call.1} parent=1 // pred_region
      _
    $region21: #{tpu_custom_call.1} parent=1 // pred_fallthru
      _
    // Predicated region
    $region22: #{tpu_custom_call.1} parent=1 // pred_check
      _
    $region23: #{tpu_custom_call.1} parent=1 // pred_check_branch
      %29 = sbr.rel (0) target = $region25
    $region24: #{tpu_custom_call.1} parent=1 // pred_region
      _
    $region25: #{tpu_custom_call.1} parent=1 // pred_fallthru
      _
    // Predicated region
    $region26: #{tpu_custom_call.1} parent=1 // pred_check
      _
    $region27: #{tpu_custom_call.1} parent=1 // pred_check_branch
      %31 = sbr.rel (0) target = $region29
    $region28: #{tpu_custom_call.1} parent=1 // pred_region
      _
    $region29: #{tpu_custom_call.1} parent=1 // pred_fallthru
      _
    // Predicated region
    $region30: #{tpu_custom_call.1} parent=1 // pred_check
      _
    $region31: #{tpu_custom_call.1} parent=1 // pred_check_branch
      %33 = sbr.rel (0) target = $region33
    $region32: #{tpu_custom_call.1} parent=1 // pred_region
      _
    $region33: #{tpu_custom_call.1} parent=1 // pred_fallthru
      _
    // Predicated region
    $region34: #{tpu_custom_call.1} parent=1 // pred_check
      _
    $region35: #{tpu_custom_call.1} parent=1 // pred_check_branch
      %35 = sbr.rel (0) target = $region37
    $region36: #{tpu_custom_call.1} parent=1 // pred_region
      _
    $region37: #{tpu_custom_call.1} parent=1 // pred_fallthru
      _
    // Predicated region
    $region38: #{tpu_custom_call.1} parent=1 // pred_check
      _
    $region39: #{tpu_custom_call.1} parent=1 // pred_check_branch
      %37 = sbr.rel (0) target = $region41
    $region40: #{tpu_custom_call.1} parent=1 // pred_region
      _
    $region41: #{tpu_custom_call.1} parent=1 // pred_fallthru
      _
    // Predicated region
    $region42: #{tpu_custom_call.1} parent=1 // pred_check
      _
    $region43: #{tpu_custom_call.1} parent=1 // pred_check_branch
      %39 = sbr.rel (0) target = $region45
    $region44: #{tpu_custom_call.1} parent=1 // pred_region
      _
    $region45: #{tpu_custom_call.1} parent=1 // pred_fallthru
      _
    // Predicated region
    $region46: #{tpu_custom_call.1} parent=1 // pred_check
      _
    $region47: #{tpu_custom_call.1} parent=1 // pred_check_branch
      %41 = sbr.rel (0) target = $region49
    $region48: #{tpu_custom_call.1} parent=1 // pred_region
      _
    $region49: #{tpu_custom_call.1} parent=1 // pred_fallthru
      _
    %v42 = vld [vmem:[%s0] sm:$0xff]
    %v43 = vld [vmem:[%s0 + $0x8] sm:$0xff]
    %v44 = vld [vmem:[%s0 + $0x10] sm:$0xff]
    %v45 = vld [vmem:[%s0 + $0x18] sm:$0xf]
    %v50 = vcombine.high %v42, %v42
    %v51 = vcombine.high %v43, %v43
    %v52 = vcombine.high %v44, %v44
    %v56 = vcombine.low %v42, %v42
    %v57 = vcombine.low %v43, %v43
    %v58 = vcombine.low %v44, %v44
    %v59 = vcombine.low %v45, %v45
    %60 = vrot.lane.b32.xlu0 %v56, 127
    %v61 = vpop.permute.xlu0 %60
    %62 = vrot.lane.b32.xlu0 %v42, 127
    %v63 = vpop.permute.xlu0 %62
    %64 = vrot.lane.b32.xlu0 %v57, 127
    %v65 = vpop.permute.xlu0 %64
    %66 = vrot.lane.b32.xlu0 %v43, 127
    %v67 = vpop.permute.xlu0 %66
    %68 = vrot.lane.b32.xlu0 %v58, 127
    %v69 = vpop.permute.xlu0 %68
    %70 = vrot.lane.b32.xlu0 %v44, 127
    %v71 = vpop.permute.xlu0 %70
    %72 = vrot.lane.b32.xlu0 %v59, 127
    %v73 = vpop.permute.xlu0 %72
    %vm74 = vcmask 1039360
    %v75 = vsel %vm74, %v61, %v63
    %v76 = vsel %vm74, %v63, %v65
    %v77 = vsel %vm74, %v65, %v67
    %v78 = vsel %vm74, %v67, %v69
    %v79 = vsel %vm74, %v69, %v71
    %v80 = vsel %vm74, %v71, %v73
    %88 = vrot.lane.b32.xlu0 %v42, 126
    %v89 = vpop.permute.xlu0 %88
    %90 = vrot.lane.b32.xlu0 %v50, 126
    %v91 = vpop.permute.xlu0 %90
    %92 = vrot.lane.b32.xlu0 %v43, 126
    %v93 = vpop.permute.xlu0 %92
    %94 = vrot.lane.b32.xlu0 %v51, 126
    %v95 = vpop.permute.xlu0 %94
    %96 = vrot.lane.b32.xlu0 %v44, 126
    %v97 = vpop.permute.xlu0 %96
    %98 = vrot.lane.b32.xlu0 %v52, 126
    %v99 = vpop.permute.xlu0 %98
    %100 = vrot.lane.b32.xlu0 %v45, 126
    %v101 = vpop.permute.xlu0 %100
    %vm102 = vcmask 1031168
    %v103 = vsel %vm102, %v89, %v91
    %v104 = vsel %vm102, %v91, %v93
    %v105 = vsel %vm102, %v93, %v95
    %v106 = vsel %vm102, %v95, %v97
    %v107 = vsel %vm102, %v97, %v99
    %v108 = vsel %vm102, %v99, %v101
    %116 = vrot.lane.b32.xlu0 %v56, 125
    %v117 = vpop.permute.xlu0 %116
    %118 = vrot.lane.b32.xlu0 %v42, 125
    %v119 = vpop.permute.xlu0 %118
    %120 = vrot.lane.b32.xlu0 %v57, 125
    %v121 = vpop.permute.xlu0 %120
    %122 = vrot.lane.b32.xlu0 %v43, 125
    %v123 = vpop.permute.xlu0 %122
    %124 = vrot.lane.b32.xlu0 %v58, 125
    %v125 = vpop.permute.xlu0 %124
    %126 = vrot.lane.b32.xlu0 %v44, 125
    %v127 = vpop.permute.xlu0 %126
    %128 = vrot.lane.b32.xlu0 %v59, 125
    %v129 = vpop.permute.xlu0 %128
    %vm130 = vcmask 1022976
    %v131 = vsel %vm130, %v117, %v119
    %v132 = vsel %vm130, %v119, %v121
    %v133 = vsel %vm130, %v121, %v123
    %v134 = vsel %vm130, %v123, %v125
    %v135 = vsel %vm130, %v125, %v127
    %v136 = vsel %vm130, %v127, %v129
    %144 = vrot.lane.b32.xlu0 %v42, 124
    %v145 = vpop.permute.xlu0 %144
    %146 = vrot.lane.b32.xlu0 %v50, 124
    %v147 = vpop.permute.xlu0 %146
    %148 = vrot.lane.b32.xlu0 %v43, 124
    %v149 = vpop.permute.xlu0 %148
    %150 = vrot.lane.b32.xlu0 %v51, 124
    %v151 = vpop.permute.xlu0 %150
    %152 = vrot.lane.b32.xlu0 %v44, 124
    %v153 = vpop.permute.xlu0 %152
    %154 = vrot.lane.b32.xlu0 %v52, 124
    %v155 = vpop.permute.xlu0 %154
    %156 = vrot.lane.b32.xlu0 %v45, 124
    %v157 = vpop.permute.xlu0 %156
    %vm158 = vcmask 1014784
    %v159 = vsel %vm158, %v145, %v147
    %v160 = vsel %vm158, %v147, %v149
    %v161 = vsel %vm158, %v149, %v151
    %v162 = vsel %vm158, %v151, %v153
    %v163 = vsel %vm158, %v153, %v155
    %v164 = vsel %vm158, %v155, %v157
    %vm165 = vcmask 1043456
    %v166 = vsel %vm165, %v42, %v75
    %v167 = vsel %vm165, %v50, %v76
    %v168 = vsel %vm165, %v43, %v77
    %v169 = vsel %vm165, %v51, %v78
    %v170 = vsel %vm165, %v44, %v79
    %v171 = vsel %vm165, %v52, %v80
    %v172 = vsel %vm165, %v45, %v73
    %v173 = vsel %vm165, %v103, %v131
    %v174 = vsel %vm165, %v104, %v132
    %v175 = vsel %vm165, %v105, %v133
    %v176 = vsel %vm165, %v106, %v134
    %v177 = vsel %vm165, %v107, %v135
    %v178 = vsel %vm165, %v108, %v136
    %v179 = vsel %vm165, %v101, %v129
    %v180 = vld [vmem:[%s1] sm:$0xff]
    %v181 = vld [vmem:[%s1 + $0x8] sm:$0xff]
    %v182 = vld [vmem:[%s1 + $0x10] sm:$0xff]
    %v183 = vld [vmem:[%s1 + $0x18] sm:$0x1]
    %vm184 = vcmask 162816
    %v186 = vsel %vm184, %v180, 0
    %v189 = vsel %vm184, %v181, 0
    %v192 = vsel %vm184, %v182, 0
    %v195 = vsel %vm184, %v183, 0
    %v197 = vsel %vm165, %v159, 0
    %v199 = vsel %vm165, %v160, 0
    %v201 = vsel %vm165, %v161, 0
    %v203 = vsel %vm165, %v162, 0
    %v205 = vsel %vm165, %v163, 0
    %v207 = vsel %vm165, %v164, 0
    %v209 = vsel %vm165, %v157, 0
    %211 = vmatprep.subr.mxu0 %v167
    %212 = vmatpush1.msra.mxu0 %v166
    %213 = vmatprep.subr.mxu0 %v174
    %214 = vmatpush1.msra.mxu0 %v173
    %215 = vmatprep.subr.mxu0 %v199
    %216 = vmatpush1.msra.mxu0 %v197
    %217 = vmatprep.subr.mxu0 0.0
    %218 = vmatpush1.msra.mxu0 0.0
    %219 = vmatprep.subr.mxu0 0.0
    %220 = vmatpush1.msra.mxu0 0.0
    %221 = vmatprep.subr.mxu0 0.0
    %222 = vmatpush1.msra.mxu0 0.0
    %223 = vmatprep.subr.mxu0 0.0
    %224 = vmatpush1.msra.mxu0 0.0
    %225 = vmatprep.subr.mxu0 0.0
    %226 = vmatpush1.msra.mxu0 0.0
    %227 = vmatprep.subr.mxu0 0.0
    %228 = vmatpush1.msra.mxu0 0.0
    %229 = vmatprep.subr.mxu0 0.0
    %230 = vmatpush1.msra.mxu0 0.0
    %231 = vmatprep.subr.mxu0 0.0
    %232 = vmatpush1.msra.mxu0 0.0
    %233 = vmatprep.subr.mxu0 0.0
    %234 = vmatpush1.msra.mxu0 0.0
    %235 = vmatprep.subr.mxu0 0.0
    %236 = vmatpush1.msra.mxu0 0.0
    %237 = vmatprep.subr.mxu0 0.0
    %238 = vmatpush1.msra.mxu0 0.0
    %239 = vmatprep.subr.mxu0 0.0
    %240 = vmatpush1.msra.mxu0 0.0
    %241 = vmatprep.subr.mxu0 0.0
    %242 = vmatpush1.msra.mxu0 0.0
    %243 = vmatprep.subr.mxu0 0.0
    %244 = vmatpush1.msra.mxu0 0.0
    %245 = vmatprep.subr.mxu0 0.0
    %246 = vmatpush1.msra.mxu0 0.0
    %247 = vmatprep.subr.mxu0 0.0
    %248 = vmatpush1.msra.mxu0 0.0
    %249 = vmatprep.subr.mxu0 0.0
    %250 = vmatpush1.msra.mxu0 0.0
    %251 = vmatprep.subr.mxu0 0.0
    %252 = vmatpush1.msra.mxu0 0.0
    %253 = vmatprep.subr.mxu0 0.0
    %254 = vmatpush1.msra.mxu0 0.0
    %255 = vmatprep.subr.mxu0 0.0
    %256 = vmatpush1.msra.mxu0 0.0
    %257 = vmatprep.subr.mxu0 0.0
    %258 = vmatpush1.msra.mxu0 0.0
    %259 = vmatprep.subr.mxu0 0.0
    %260 = vmatpush1.msra.mxu0 0.0
    %261 = vmatprep.subr.mxu0 0.0
    %262 = vmatpush1.msra.mxu0 0.0
    %263 = vmatprep.subr.mxu0 0.0
    %264 = vmatpush1.msra.mxu0 0.0
    %265 = vmatprep.subr.mxu0 0.0
    %266 = vmatpush1.msra.mxu0 0.0
    %267 = vmatprep.subr.mxu0 0.0
    %268 = vmatpush1.msra.mxu0 0.0
    %269 = vmatprep.subr.mxu0 0.0
    %270 = vmatpush1.msra.mxu0 0.0
    %271 = vmatprep.subr.mxu0 0.0
    %272 = vmatpush1.msra.mxu0 0.0
    %273 = vmatprep.subr.mxu0 0.0
    %274 = vmatpush1.msra.mxu0 0.0
    %275 = vmatprep.mubr.f32.mxu0 0.0
    %276 = vmatmul.mubr.f32.gmra.mrb[0].mxu0 %v186
    %v277 = vpop.f32.mrb[0].mxu0
    %v278 = vadd.f32 0.0, %v277
    %v279 = vpop.f32.mrb[0].mxu0
    %v280 = vadd.f32 0.0, %v279
    %281 = vmatprep.mubr.f32.mxu0 0.0
    %282 = vmatmul.mubr.f32.gmra.mrb[0].mxu0 %v189
    %v283 = vpop.f32.mrb[0].mxu0
    %v284 = vadd.f32 0.0, %v283
    %v285 = vpop.f32.mrb[0].mxu0
    %v286 = vadd.f32 0.0, %v285
    %287 = vmatprep.mubr.f32.mxu0 0.0
    %288 = vmatmul.mubr.f32.gmra.mrb[0].mxu0 %v192
    %v289 = vpop.f32.mrb[0].mxu0
    %v290 = vadd.f32 0.0, %v289
    %v291 = vpop.f32.mrb[0].mxu0
    %v292 = vadd.f32 0.0, %v291
    %293 = vmatprep.mubr.f32.mxu0 0.0
    %294 = vmatmul.mubr.f32.gmra.mrb[0].mxu0 %v195
    %v295 = vpop.f32.mrb[0].mxu0
    %v296 = vadd.f32 0.0, %v295
    %v297 = vpop.f32.mrb[0].mxu0
    %v298 = vadd.f32 0.0, %v297
    %299 = vdwg.mxu0
    %300 = vmatprep.subr.mxu0 %v169
    %301 = vmatpush1.msra.mxu0 %v168
    %302 = vmatprep.subr.mxu0 %v176
    %303 = vmatpush1.msra.mxu0 %v175
    %304 = vmatprep.subr.mxu0 %v203
    %305 = vmatpush1.msra.mxu0 %v201
    %306 = vmatprep.subr.mxu0 0.0
    %307 = vmatpush1.msra.mxu0 0.0
    %308 = vmatprep.subr.mxu0 0.0
    %309 = vmatpush1.msra.mxu0 0.0
    %310 = vmatprep.subr.mxu0 0.0
    %311 = vmatpush1.msra.mxu0 0.0
    %312 = vmatprep.subr.mxu0 0.0
    %313 = vmatpush1.msra.mxu0 0.0
    %314 = vmatprep.subr.mxu0 0.0
    %315 = vmatpush1.msra.mxu0 0.0
    %316 = vmatprep.subr.mxu0 0.0
    %317 = vmatpush1.msra.mxu0 0.0
    %318 = vmatprep.subr.mxu0 0.0
    %319 = vmatpush1.msra.mxu0 0.0
    %320 = vmatprep.subr.mxu0 0.0
    %321 = vmatpush1.msra.mxu0 0.0
    %322 = vmatprep.subr.mxu0 0.0
    %323 = vmatpush1.msra.mxu0 0.0
    %324 = vmatprep.subr.mxu0 0.0
    %325 = vmatpush1.msra.mxu0 0.0
    %326 = vmatprep.subr.mxu0 0.0
    %327 = vmatpush1.msra.mxu0 0.0
    %328 = vmatprep.subr.mxu0 0.0
    %329 = vmatpush1.msra.mxu0 0.0
    %330 = vmatprep.subr.mxu0 0.0
    %331 = vmatpush1.msra.mxu0 0.0
    %332 = vmatprep.subr.mxu0 0.0
    %333 = vmatpush1.msra.mxu0 0.0
    %334 = vmatprep.subr.mxu0 0.0
    %335 = vmatpush1.msra.mxu0 0.0
    %336 = vmatprep.subr.mxu0 0.0
    %337 = vmatpush1.msra.mxu0 0.0
    %338 = vmatprep.subr.mxu0 0.0
    %339 = vmatpush1.msra.mxu0 0.0
    %340 = vmatprep.subr.mxu0 0.0
    %341 = vmatpush1.msra.mxu0 0.0
    %342 = vmatprep.subr.mxu0 0.0
    %343 = vmatpush1.msra.mxu0 0.0
    %344 = vmatprep.subr.mxu0 0.0
    %345 = vmatpush1.msra.mxu0 0.0
    %346 = vmatprep.subr.mxu0 0.0
    %347 = vmatpush1.msra.mxu0 0.0
    %348 = vmatprep.subr.mxu0 0.0
    %349 = vmatpush1.msra.mxu0 0.0
    %350 = vmatprep.subr.mxu0 0.0
    %351 = vmatpush1.msra.mxu0 0.0
    %352 = vmatprep.subr.mxu0 0.0
    %353 = vmatpush1.msra.mxu0 0.0
    %354 = vmatprep.subr.mxu0 0.0
    %355 = vmatpush1.msra.mxu0 0.0
    %356 = vmatprep.subr.mxu0 0.0
    %357 = vmatpush1.msra.mxu0 0.0
    %358 = vmatprep.subr.mxu0 0.0
    %359 = vmatpush1.msra.mxu0 0.0
    %360 = vmatprep.subr.mxu0 0.0
    %361 = vmatpush1.msra.mxu0 0.0
    %362 = vmatprep.subr.mxu0 0.0
    %363 = vmatpush1.msra.mxu0 0.0
    %364 = vmatprep.mubr.f32.mxu0 0.0
    %365 = vmatmul.mubr.f32.gmra.mrb[0].mxu0 %v186
    %v366 = vpop.f32.mrb[0].mxu0
    %v367 = vadd.f32 0.0, %v366
    %v368 = vpop.f32.mrb[0].mxu0
    %v369 = vadd.f32 0.0, %v368
    %370 = vmatprep.mubr.f32.mxu0 0.0
    %371 = vmatmul.mubr.f32.gmra.mrb[0].mxu0 %v189
    %v372 = vpop.f32.mrb[0].mxu0
    %v373 = vadd.f32 0.0, %v372
    %v374 = vpop.f32.mrb[0].mxu0
    %v375 = vadd.f32 0.0, %v374
    %376 = vmatprep.mubr.f32.mxu0 0.0
    %377 = vmatmul.mubr.f32.gmra.mrb[0].mxu0 %v192
    %v378 = vpop.f32.mrb[0].mxu0
    %v379 = vadd.f32 0.0, %v378
    %v380 = vpop.f32.mrb[0].mxu0
    %v381 = vadd.f32 0.0, %v380
    %382 = vmatprep.mubr.f32.mxu0 0.0
    %383 = vmatmul.mubr.f32.gmra.mrb[0].mxu0 %v195
    %v384 = vpop.f32.mrb[0].mxu0
    %v385 = vadd.f32 0.0, %v384
    %v386 = vpop.f32.mrb[0].mxu0
    %v387 = vadd.f32 0.0, %v386
    %388 = vdwg.mxu0
    %389 = vmatprep.subr.mxu0 %v171
    %390 = vmatpush1.msra.mxu0 %v170
    %391 = vmatprep.subr.mxu0 %v178
    %392 = vmatpush1.msra.mxu0 %v177
    %393 = vmatprep.subr.mxu0 %v207
    %394 = vmatpush1.msra.mxu0 %v205
    %395 = vmatprep.subr.mxu0 0.0
    %396 = vmatpush1.msra.mxu0 0.0
    %397 = vmatprep.subr.mxu0 0.0
    %398 = vmatpush1.msra.mxu0 0.0
    %399 = vmatprep.subr.mxu0 0.0
    %400 = vmatpush1.msra.mxu0 0.0
    %401 = vmatprep.subr.mxu0 0.0
    %402 = vmatpush1.msra.mxu0 0.0
    %403 = vmatprep.subr.mxu0 0.0
    %404 = vmatpush1.msra.mxu0 0.0
    %405 = vmatprep.subr.mxu0 0.0
    %406 = vmatpush1.msra.mxu0 0.0
    %407 = vmatprep.subr.mxu0 0.0
    %408 = vmatpush1.msra.mxu0 0.0
    %409 = vmatprep.subr.mxu0 0.0
    %410 = vmatpush1.msra.mxu0 0.0
    %411 = vmatprep.subr.mxu0 0.0
    %412 = vmatpush1.msra.mxu0 0.0
    %413 = vmatprep.subr.mxu0 0.0
    %414 = vmatpush1.msra.mxu0 0.0
    %415 = vmatprep.subr.mxu0 0.0
    %416 = vmatpush1.msra.mxu0 0.0
    %417 = vmatprep.subr.mxu0 0.0
    %418 = vmatpush1.msra.mxu0 0.0
    %419 = vmatprep.subr.mxu0 0.0
    %420 = vmatpush1.msra.mxu0 0.0
    %421 = vmatprep.subr.mxu0 0.0
    %422 = vmatpush1.msra.mxu0 0.0
    %423 = vmatprep.subr.mxu0 0.0
    %424 = vmatpush1.msra.mxu0 0.0
    %425 = vmatprep.subr.mxu0 0.0
    %426 = vmatpush1.msra.mxu0 0.0
    %427 = vmatprep.subr.mxu0 0.0
    %428 = vmatpush1.msra.mxu0 0.0
    %429 = vmatprep.subr.mxu0 0.0
    %430 = vmatpush1.msra.mxu0 0.0
    %431 = vmatprep.subr.mxu0 0.0
    %432 = vmatpush1.msra.mxu0 0.0
    %433 = vmatprep.subr.mxu0 0.0
    %434 = vmatpush1.msra.mxu0 0.0
    %435 = vmatprep.subr.mxu0 0.0
    %436 = vmatpush1.msra.mxu0 0.0
    %437 = vmatprep.subr.mxu0 0.0
    %438 = vmatpush1.msra.mxu0 0.0
    %439 = vmatprep.subr.mxu0 0.0
    %440 = vmatpush1.msra.mxu0 0.0
    %441 = vmatprep.subr.mxu0 0.0
    %442 = vmatpush1.msra.mxu0 0.0
    %443 = vmatprep.subr.mxu0 0.0
    %444 = vmatpush1.msra.mxu0 0.0
    %445 = vmatprep.subr.mxu0 0.0
    %446 = vmatpush1.msra.mxu0 0.0
    %447 = vmatprep.subr.mxu0 0.0
    %448 = vmatpush1.msra.mxu0 0.0
    %449 = vmatprep.subr.mxu0 0.0
    %450 = vmatpush1.msra.mxu0 0.0
    %451 = vmatprep.subr.mxu0 0.0
    %452 = vmatpush1.msra.mxu0 0.0
    %453 = vmatprep.mubr.f32.mxu0 0.0
    %454 = vmatmul.mubr.f32.gmra.mrb[0].mxu0 %v186
    %v455 = vpop.f32.mrb[0].mxu0
    %v456 = vadd.f32 0.0, %v455
    %v457 = vpop.f32.mrb[0].mxu0
    %v458 = vadd.f32 0.0, %v457
    %459 = vmatprep.mubr.f32.mxu0 0.0
    %460 = vmatmul.mubr.f32.gmra.mrb[0].mxu0 %v189
    %v461 = vpop.f32.mrb[0].mxu0
    %v462 = vadd.f32 0.0, %v461
    %v463 = vpop.f32.mrb[0].mxu0
    %v464 = vadd.f32 0.0, %v463
    %465 = vmatprep.mubr.f32.mxu0 0.0
    %466 = vmatmul.mubr.f32.gmra.mrb[0].mxu0 %v192
    %v467 = vpop.f32.mrb[0].mxu0
    %v468 = vadd.f32 0.0, %v467
    %v469 = vpop.f32.mrb[0].mxu0
    %v470 = vadd.f32 0.0, %v469
    %471 = vmatprep.mubr.f32.mxu0 0.0
    %472 = vmatmul.mubr.f32.gmra.mrb[0].mxu0 %v195
    %v473 = vpop.f32.mrb[0].mxu0
    %v474 = vadd.f32 0.0, %v473
    %v475 = vpop.f32.mrb[0].mxu0
    %v476 = vadd.f32 0.0, %v475
    %477 = vdwg.mxu0
    %478 = vmatprep.subr.mxu0 0.0
    %479 = vmatpush1.msra.mxu0 %v172
    %480 = vmatprep.subr.mxu0 0.0
    %481 = vmatpush1.msra.mxu0 %v179
    %482 = vmatprep.subr.mxu0 0.0
    %483 = vmatpush1.msra.mxu0 %v209
    %484 = vmatprep.subr.mxu0 0.0
    %485 = vmatpush1.msra.mxu0 0.0
    %486 = vmatprep.subr.mxu0 0.0
    %487 = vmatpush1.msra.mxu0 0.0
    %488 = vmatprep.subr.mxu0 0.0
    %489 = vmatpush1.msra.mxu0 0.0
    %490 = vmatprep.subr.mxu0 0.0
    %491 = vmatpush1.msra.mxu0 0.0
    %492 = vmatprep.subr.mxu0 0.0
    %493 = vmatpush1.msra.mxu0 0.0
    %494 = vmatprep.subr.mxu0 0.0
    %495 = vmatpush1.msra.mxu0 0.0
    %496 = vmatprep.subr.mxu0 0.0
    %497 = vmatpush1.msra.mxu0 0.0
    %498 = vmatprep.subr.mxu0 0.0
    %499 = vmatpush1.msra.mxu0 0.0
    %500 = vmatprep.subr.mxu0 0.0
    %501 = vmatpush1.msra.mxu0 0.0
    %502 = vmatprep.subr.mxu0 0.0
    %503 = vmatpush1.msra.mxu0 0.0
    %504 = vmatprep.subr.mxu0 0.0
    %505 = vmatpush1.msra.mxu0 0.0
    %506 = vmatprep.subr.mxu0 0.0
    %507 = vmatpush1.msra.mxu0 0.0
    %508 = vmatprep.subr.mxu0 0.0
    %509 = vmatpush1.msra.mxu0 0.0
    %510 = vmatprep.subr.mxu0 0.0
    %511 = vmatpush1.msra.mxu0 0.0
    %512 = vmatprep.subr.mxu0 0.0
    %513 = vmatpush1.msra.mxu0 0.0
    %514 = vmatprep.subr.mxu0 0.0
    %515 = vmatpush1.msra.mxu0 0.0
    %516 = vmatprep.subr.mxu0 0.0
    %517 = vmatpush1.msra.mxu0 0.0
    %518 = vmatprep.subr.mxu0 0.0
    %519 = vmatpush1.msra.mxu0 0.0
    %520 = vmatprep.subr.mxu0 0.0
    %521 = vmatpush1.msra.mxu0 0.0
    %522 = vmatprep.subr.mxu0 0.0
    %523 = vmatpush1.msra.mxu0 0.0
    %524 = vmatprep.subr.mxu0 0.0
    %525 = vmatpush1.msra.mxu0 0.0
    %526 = vmatprep.subr.mxu0 0.0
    %527 = vmatpush1.msra.mxu0 0.0
    %528 = vmatprep.subr.mxu0 0.0
    %529 = vmatpush1.msra.mxu0 0.0
    %530 = vmatprep.subr.mxu0 0.0
    %531 = vmatpush1.msra.mxu0 0.0
    %532 = vmatprep.subr.mxu0 0.0
    %533 = vmatpush1.msra.mxu0 0.0
    %534 = vmatprep.subr.mxu0 0.0
    %535 = vmatpush1.msra.mxu0 0.0
    %536 = vmatprep.subr.mxu0 0.0
    %537 = vmatpush1.msra.mxu0 0.0
    %538 = vmatprep.subr.mxu0 0.0
    %539 = vmatpush1.msra.mxu0 0.0
    %540 = vmatprep.subr.mxu0 0.0
    %541 = vmatpush1.msra.mxu0 0.0
    %542 = vmatprep.mubr.f32.mxu0 0.0
    %543 = vmatmul.mubr.f32.gmra.mrb[0].mxu0 %v186
    %v544 = vpop.f32.mrb[0].mxu0
    %v545 = vadd.f32 0.0, %v544
    %v546 = vpop.f32.mrb[0].mxu0
    %547 = vmatprep.mubr.f32.mxu0 0.0
    %548 = vmatmul.mubr.f32.gmra.mrb[0].mxu0 %v189
    %v549 = vpop.f32.mrb[0].mxu0
    %v550 = vadd.f32 0.0, %v549
    %v551 = vpop.f32.mrb[0].mxu0
    %552 = vmatprep.mubr.f32.mxu0 0.0
    %553 = vmatmul.mubr.f32.gmra.mrb[0].mxu0 %v192
    %v554 = vpop.f32.mrb[0].mxu0
    %v555 = vadd.f32 0.0, %v554
    %v556 = vpop.f32.mrb[0].mxu0
    %557 = vmatprep.mubr.f32.mxu0 0.0
    %558 = vmatmul.mubr.f32.gmra.mrb[0].mxu0 %v195
    %v559 = vpop.f32.mrb[0].mxu0
    %v560 = vadd.f32 0.0, %v559
    %v561 = vpop.f32.mrb[0].mxu0
    %562 = vdwg.mxu0
    %v563 = vld [vmem:[%s2] sm:$0xff]
    %v564 = vld [vmem:[%s2 + $0x8] sm:$0xff]
    %v565 = vld [vmem:[%s2 + $0x10] sm:$0xff]
    %v566 = vld [vmem:[%s2 + $0x18] sm:$0x1]
    %v567 = vld [vmem:[%s3] sm:$0xff]
    %v568 = vld [vmem:[%s3 + $0x8] sm:$0xff]
    %v569 = vld [vmem:[%s3 + $0x10] sm:$0xff]
    %v570 = vld [vmem:[%s3 + $0x18] sm:$0x1]
    %v571 = vlaneseq
    %v572 = vand.u32 %v571, 127
    %v573 = vadd.s32 %v572, 128
    %v574 = vadd.s32 %v572, 256
    %v575 = vadd.s32 %v572, 384
    %v576 = vadd.s32 %v572, 512
    %v577 = vadd.s32 %v572, 640
    %v578 = vadd.s32 %v572, 768
    %vm579 = vcmp.ge.s32.totalorder %v572, 400
    %vm580 = vcmp.ge.s32.totalorder %v573, 400
    %vm581 = vcmp.ge.s32.totalorder %v574, 400
    %vm582 = vcmp.ge.s32.totalorder %v575, 400
    %vm583 = vcmp.ge.s32.totalorder %v576, 400
    %vm584 = vcmp.ge.s32.totalorder %v577, 400
    %vm585 = vcmp.ge.s32.totalorder %v578, 400
    %v586 = vsel %vm579, 1, 0
    %v587 = vsel %vm580, 1, 0
    %v588 = vsel %vm581, 1, 0
    %v589 = vsel %vm582, 1, 0
    %v590 = vsel %vm583, 1, 0
    %v591 = vsel %vm584, 1, 0
    %v592 = vsel %vm585, 1, 0
    %v593 = vmul.u32 %v586, 400
    %v594 = vmul.u32 %v587, 400
    %v595 = vmul.u32 %v588, 400
    %v596 = vmul.u32 %v589, 400
    %v597 = vmul.u32 %v590, 400
    %v598 = vmul.u32 %v591, 400
    %v599 = vmul.u32 %v592, 400
    %v600 = vsub.s32 %v572, %v593
    %v601 = vsub.s32 %v573, %v594
    %v602 = vsub.s32 %v574, %v595
    %v603 = vsub.s32 %v575, %v596
    %v604 = vsub.s32 %v576, %v597
    %v605 = vsub.s32 %v577, %v598
    %v606 = vsub.s32 %v578, %v599
    %vm607 = vcmp.lt.s32.totalorder %v600, 396
    %vm608 = vcmp.lt.s32.totalorder %v601, 396
    %vm609 = vcmp.lt.s32.totalorder %v602, 396
    %vm610 = vcmp.lt.s32.totalorder %v603, 396
    %vm611 = vcmp.lt.s32.totalorder %v604, 396
    %vm612 = vcmp.lt.s32.totalorder %v605, 396
    %vm613 = vcmp.lt.s32.totalorder %v606, 396
    %v614 = vsel %vm607, 1.0, 0.0
    %v615 = vsel %vm608, 1.0, 0.0
    %v616 = vsel %vm609, 1.0, 0.0
    %v617 = vsel %vm610, 1.0, 0.0
    %v618 = vsel %vm611, 1.0, 0.0
    %v619 = vsel %vm612, 1.0, 0.0
    %v620 = vsel %vm613, 1.0, 0.0
    %v621 = vmul.f32 %v278, %v614
    %v622 = vmul.f32 %v280, %v615
    %v623 = vmul.f32 %v367, %v616
    %v624 = vmul.f32 %v369, %v617
    %v625 = vmul.f32 %v456, %v618
    %v626 = vmul.f32 %v458, %v619
    %v627 = vmul.f32 %v545, %v620
    %v628 = vmul.f32 %v284, %v614
    %v629 = vmul.f32 %v286, %v615
    %v630 = vmul.f32 %v373, %v616
    %v631 = vmul.f32 %v375, %v617
    %v632 = vmul.f32 %v462, %v618
    %v633 = vmul.f32 %v464, %v619
    %v634 = vmul.f32 %v550, %v620
    %v635 = vmul.f32 %v290, %v614
    %v636 = vmul.f32 %v292, %v615
    %v637 = vmul.f32 %v379, %v616
    %v638 = vmul.f32 %v381, %v617
    %v639 = vmul.f32 %v468, %v618
    %v640 = vmul.f32 %v470, %v619
    %v641 = vmul.f32 %v555, %v620
    %v642 = vmul.f32 %v296, %v614
    %v643 = vmul.f32 %v298, %v615
    %v644 = vmul.f32 %v385, %v616
    %v645 = vmul.f32 %v387, %v617
    %v646 = vmul.f32 %v474, %v618
    %v647 = vmul.f32 %v476, %v619
    %v648 = vmul.f32 %v560, %v620
    %v649 = vadd.f32 %v621, %v622
    %v650 = vadd.f32 %v649, %v623
    %v651 = vadd.f32 %v650, %v624
    %v652 = vadd.f32 %v651, %v625
    %v653 = vadd.f32 %v652, %v626
    %vm654 = vcmask 228352
    %v655 = vsel %vm654, %v627, 0.0
    %v656 = vadd.f32 %v653, %v655
    %657 = vadd.xlane.f32.xlu0 %v656
    %v658 = vpop.xlane.xlu0 %657
    %v659 = vadd.f32 %v628, %v629
    %v660 = vadd.f32 %v659, %v630
    %v661 = vadd.f32 %v660, %v631
    %v662 = vadd.f32 %v661, %v632
    %v663 = vadd.f32 %v662, %v633
    %v664 = vsel %vm654, %v634, 0.0
    %v665 = vadd.f32 %v663, %v664
    %666 = vadd.xlane.f32.xlu0 %v665
    %v667 = vpop.xlane.xlu0 %666
    %v668 = vadd.f32 %v635, %v636
    %v669 = vadd.f32 %v668, %v637
    %v670 = vadd.f32 %v669, %v638
    %v671 = vadd.f32 %v670, %v639
    %v672 = vadd.f32 %v671, %v640
    %v673 = vsel %vm654, %v641, 0.0
    %v674 = vadd.f32 %v672, %v673
    %675 = vadd.xlane.f32.xlu0 %v674
    %v676 = vpop.xlane.xlu0 %675
    %vm677 = vcmask 1040384
    %v678 = vsel %vm677, %v642, 0.0
    %v679 = vsel %vm677, %v643, 0.0
    %v680 = vadd.f32 %v678, %v679
    %v681 = vsel %vm677, %v644, 0.0
    %v682 = vadd.f32 %v680, %v681
    %v683 = vsel %vm677, %v645, 0.0
    %v684 = vadd.f32 %v682, %v683
    %v685 = vsel %vm677, %v646, 0.0
    %v686 = vadd.f32 %v684, %v685
    %v687 = vsel %vm677, %v647, 0.0
    %v688 = vadd.f32 %v686, %v687
    %vm689 = vcmask 221184
    %v690 = vsel %vm689, %v648, 0.0
    %v691 = vadd.f32 %v688, %v690
    %692 = vadd.xlane.f32.xlu0 %v691
    %v693 = vpop.xlane.xlu0 %692
    %v694 = vmul.f32 %v658, 0.0012626263
    %v695 = vmul.f32 %v667, 0.0012626263
    %v696 = vmul.f32 %v676, 0.0012626263
    %v697 = vmul.f32 %v693, 0.0012626263
    %v698 = vsub.f32 %v278, %v694
    %v699 = vsub.f32 %v280, %v694
    %v700 = vsub.f32 %v367, %v694
    %v701 = vsub.f32 %v369, %v694
    %v702 = vsub.f32 %v456, %v694
    %v703 = vsub.f32 %v458, %v694
    %v704 = vsub.f32 %v545, %v694
    %v705 = vsub.f32 %v284, %v695
    %v706 = vsub.f32 %v286, %v695
    %v707 = vsub.f32 %v373, %v695
    %v708 = vsub.f32 %v375, %v695
    %v709 = vsub.f32 %v462, %v695
    %v710 = vsub.f32 %v464, %v695
    %v711 = vsub.f32 %v550, %v695
    %v712 = vsub.f32 %v290, %v696
    %v713 = vsub.f32 %v292, %v696
    %v714 = vsub.f32 %v379, %v696
    %v715 = vsub.f32 %v381, %v696
    %v716 = vsub.f32 %v468, %v696
    %v717 = vsub.f32 %v470, %v696
    %v718 = vsub.f32 %v555, %v696
    %v719 = vsub.f32 %v296, %v697
    %v720 = vsub.f32 %v298, %v697
    %v721 = vsub.f32 %v385, %v697
    %v722 = vsub.f32 %v387, %v697
    %v723 = vsub.f32 %v474, %v697
    %v724 = vsub.f32 %v476, %v697
    %v725 = vsub.f32 %v560, %v697
    %v726 = vmul.f32 %v698, %v614
    %v727 = vmul.f32 %v699, %v615
    %v728 = vmul.f32 %v700, %v616
    %v729 = vmul.f32 %v701, %v617
    %v730 = vmul.f32 %v702, %v618
    %v731 = vmul.f32 %v703, %v619
    %v732 = vmul.f32 %v704, %v620
    %v733 = vmul.f32 %v705, %v614
    %v734 = vmul.f32 %v706, %v615
    %v735 = vmul.f32 %v707, %v616
    %v736 = vmul.f32 %v708, %v617
    %v737 = vmul.f32 %v709, %v618
    %v738 = vmul.f32 %v710, %v619
    %v739 = vmul.f32 %v711, %v620
    %v740 = vmul.f32 %v712, %v614
    %v741 = vmul.f32 %v713, %v615
    %v742 = vmul.f32 %v714, %v616
    %v743 = vmul.f32 %v715, %v617
    %v744 = vmul.f32 %v716, %v618
    %v745 = vmul.f32 %v717, %v619
    %v746 = vmul.f32 %v718, %v620
    %v747 = vmul.f32 %v719, %v614
    %v748 = vmul.f32 %v720, %v615
    %v749 = vmul.f32 %v721, %v616
    %v750 = vmul.f32 %v722, %v617
    %v751 = vmul.f32 %v723, %v618
    %v752 = vmul.f32 %v724, %v619
    %v753 = vmul.f32 %v725, %v620
    %v754 = vmul.f32 %v726, %v726
    %v755 = vmul.f32 %v727, %v727
    %v756 = vmul.f32 %v728, %v728
    %v757 = vmul.f32 %v729, %v729
    %v758 = vmul.f32 %v730, %v730
    %v759 = vmul.f32 %v731, %v731
    %v760 = vmul.f32 %v732, %v732
    %v761 = vmul.f32 %v733, %v733
    %v762 = vmul.f32 %v734, %v734
    %v763 = vmul.f32 %v735, %v735
    %v764 = vmul.f32 %v736, %v736
    %v765 = vmul.f32 %v737, %v737
    %v766 = vmul.f32 %v738, %v738
    %v767 = vmul.f32 %v739, %v739
    %v768 = vmul.f32 %v740, %v740
    %v769 = vmul.f32 %v741, %v741
    %v770 = vmul.f32 %v742, %v742
    %v771 = vmul.f32 %v743, %v743
    %v772 = vmul.f32 %v744, %v744
    %v773 = vmul.f32 %v745, %v745
    %v774 = vmul.f32 %v746, %v746
    %v775 = vmul.f32 %v747, %v747
    %v776 = vmul.f32 %v748, %v748
    %v777 = vmul.f32 %v749, %v749
    %v778 = vmul.f32 %v750, %v750
    %v779 = vmul.f32 %v751, %v751
    %v780 = vmul.f32 %v752, %v752
    %v781 = vmul.f32 %v753, %v753
    %v782 = vadd.f32 %v754, %v755
    %v783 = vadd.f32 %v782, %v756
    %v784 = vadd.f32 %v783, %v757
    %v785 = vadd.f32 %v784, %v758
    %v786 = vadd.f32 %v785, %v759
    %v787 = vsel %vm654, %v760, 0.0
    %v788 = vadd.f32 %v786, %v787
    %789 = vadd.xlane.f32.xlu0 %v788
    %v790 = vpop.xlane.xlu0 %789
    %v791 = vadd.f32 %v761, %v762
    %v792 = vadd.f32 %v791, %v763
    %v793 = vadd.f32 %v792, %v764
    %v794 = vadd.f32 %v793, %v765
    %v795 = vadd.f32 %v794, %v766
    %v796 = vsel %vm654, %v767, 0.0
    %v797 = vadd.f32 %v795, %v796
    %798 = vadd.xlane.f32.xlu0 %v797
    %v799 = vpop.xlane.xlu0 %798
    %v800 = vadd.f32 %v768, %v769
    %v801 = vadd.f32 %v800, %v770
    %v802 = vadd.f32 %v801, %v771
    %v803 = vadd.f32 %v802, %v772
    %v804 = vadd.f32 %v803, %v773
    %v805 = vsel %vm654, %v774, 0.0
    %v806 = vadd.f32 %v804, %v805
    %807 = vadd.xlane.f32.xlu0 %v806
    %v808 = vpop.xlane.xlu0 %807
    %v809 = vsel %vm677, %v775, 0.0
    %v810 = vsel %vm677, %v776, 0.0
    %v811 = vadd.f32 %v809, %v810
    %v812 = vsel %vm677, %v777, 0.0
    %v813 = vadd.f32 %v811, %v812
    %v814 = vsel %vm677, %v778, 0.0
    %v815 = vadd.f32 %v813, %v814
    %v816 = vsel %vm677, %v779, 0.0
    %v817 = vadd.f32 %v815, %v816
    %v818 = vsel %vm677, %v780, 0.0
    %v819 = vadd.f32 %v817, %v818
    %v820 = vsel %vm689, %v781, 0.0
    %v821 = vadd.f32 %v819, %v820
    %822 = vadd.xlane.f32.xlu0 %v821
    %v823 = vpop.xlane.xlu0 %822
    %v824 = vmul.f32 %v790, 0.0012626263
    %v825 = vmul.f32 %v799, 0.0012626263
    %v826 = vmul.f32 %v808, 0.0012626263
    %v827 = vmul.f32 %v823, 0.0012626263
    %v828 = vrsqrt.pop %v824
    %v829 = vrsqrt.pop %v825
    %v830 = vrsqrt.pop %v826
    %v831 = vrsqrt.pop %v827
    %v832 = vmul.f32 %v828, %v563
    %v833 = vmul.f32 %v829, %v564
    %v834 = vmul.f32 %v830, %v565
    %v835 = vmul.f32 %v831, %v566
    %837 = vset.pattern.permute.xlu0 0
    %838 = vperm.xlu0 %837, %v832
    %v839 = vpop.permute.xlu0 %838
    %842 = vset.pattern.permute.xlu0 0
    %843 = vperm.xlu0 %842, %v833
    %v844 = vpop.permute.xlu0 %843
    %847 = vset.pattern.permute.xlu0 0
    %848 = vperm.xlu0 %847, %v834
    %v849 = vpop.permute.xlu0 %848
    %852 = vset.pattern.permute.xlu0 0
    %853 = vperm.xlu0 %852, %v835
    %v854 = vpop.permute.xlu0 %853
    %v856 = vmul.f32 %v698, %v839
    %v857 = vmul.f32 %v699, %v839
    %v858 = vmul.f32 %v700, %v839
    %v859 = vmul.f32 %v701, %v839
    %v860 = vmul.f32 %v702, %v839
    %v861 = vmul.f32 %v703, %v839
    %v862 = vmul.f32 %v704, %v839
    %v863 = vmul.f32 %v705, %v844
    %v864 = vmul.f32 %v706, %v844
    %v865 = vmul.f32 %v707, %v844
    %v866 = vmul.f32 %v708, %v844
    %v867 = vmul.f32 %v709, %v844
    %v868 = vmul.f32 %v710, %v844
    %v869 = vmul.f32 %v711, %v844
    %v870 = vmul.f32 %v712, %v849
    %v871 = vmul.f32 %v713, %v849
    %v872 = vmul.f32 %v714, %v849
    %v873 = vmul.f32 %v715, %v849
    %v874 = vmul.f32 %v716, %v849
    %v875 = vmul.f32 %v717, %v849
    %v876 = vmul.f32 %v718, %v849
    %v877 = vmul.f32 %v719, %v854
    %v878 = vmul.f32 %v720, %v854
    %v879 = vmul.f32 %v721, %v854
    %v880 = vmul.f32 %v722, %v854
    %v881 = vmul.f32 %v723, %v854
    %v882 = vmul.f32 %v724, %v854
    %v883 = vmul.f32 %v725, %v854
    %885 = vset.pattern.permute.xlu0 0
    %886 = vperm.xlu0 %885, %v567
    %v887 = vpop.permute.xlu0 %886
    %890 = vset.pattern.permute.xlu0 0
    %891 = vperm.xlu0 %890, %v568
    %v892 = vpop.permute.xlu0 %891
    %895 = vset.pattern.permute.xlu0 0
    %896 = vperm.xlu0 %895, %v569
    %v897 = vpop.permute.xlu0 %896
    %900 = vset.pattern.permute.xlu0 0
    %901 = vperm.xlu0 %900, %v570
    %v902 = vpop.permute.xlu0 %901
    %v904 = vadd.f32 %v856, %v887
    %v905 = vadd.f32 %v857, %v887
    %v906 = vadd.f32 %v858, %v887
    %v907 = vadd.f32 %v859, %v887
    %v908 = vadd.f32 %v860, %v887
    %v909 = vadd.f32 %v861, %v887
    %v910 = vadd.f32 %v862, %v887
    %v911 = vadd.f32 %v863, %v892
    %v912 = vadd.f32 %v864, %v892
    %v913 = vadd.f32 %v865, %v892
    %v914 = vadd.f32 %v866, %v892
    %v915 = vadd.f32 %v867, %v892
    %v916 = vadd.f32 %v868, %v892
    %v917 = vadd.f32 %v869, %v892
    %v918 = vadd.f32 %v870, %v897
    %v919 = vadd.f32 %v871, %v897
    %v920 = vadd.f32 %v872, %v897
    %v921 = vadd.f32 %v873, %v897
    %v922 = vadd.f32 %v874, %v897
    %v923 = vadd.f32 %v875, %v897
    %v924 = vadd.f32 %v876, %v897
    %v925 = vadd.f32 %v877, %v902
    %v926 = vadd.f32 %v878, %v902
    %v927 = vadd.f32 %v879, %v902
    %v928 = vadd.f32 %v880, %v902
    %v929 = vadd.f32 %v881, %v902
    %v930 = vadd.f32 %v882, %v902
    %v931 = vadd.f32 %v883, %v902
    %vm932 = vcmp.gt.f32.partialorder %v904, 0.0
    %vm933 = vcmp.gt.f32.partialorder %v905, 0.0
    %vm934 = vcmp.gt.f32.partialorder %v906, 0.0
    %vm935 = vcmp.gt.f32.partialorder %v907, 0.0
    %vm936 = vcmp.gt.f32.partialorder %v908, 0.0
    %vm937 = vcmp.gt.f32.partialorder %v909, 0.0
    %vm938 = vcmp.gt.f32.partialorder %v910, 0.0
    %vm939 = vcmp.gt.f32.partialorder %v911, 0.0
    %vm940 = vcmp.gt.f32.partialorder %v912, 0.0
    %vm941 = vcmp.gt.f32.partialorder %v913, 0.0
    %vm942 = vcmp.gt.f32.partialorder %v914, 0.0
    %vm943 = vcmp.gt.f32.partialorder %v915, 0.0
    %vm944 = vcmp.gt.f32.partialorder %v916, 0.0
    %vm945 = vcmp.gt.f32.partialorder %v917, 0.0
    %vm946 = vcmp.gt.f32.partialorder %v918, 0.0
    %vm947 = vcmp.gt.f32.partialorder %v919, 0.0
    %vm948 = vcmp.gt.f32.partialorder %v920, 0.0
    %vm949 = vcmp.gt.f32.partialorder %v921, 0.0
    %vm950 = vcmp.gt.f32.partialorder %v922, 0.0
    %vm951 = vcmp.gt.f32.partialorder %v923, 0.0
    %vm952 = vcmp.gt.f32.partialorder %v924, 0.0
    %vm953 = vcmp.gt.f32.partialorder %v925, 0.0
    %vm954 = vcmp.gt.f32.partialorder %v926, 0.0
    %vm955 = vcmp.gt.f32.partialorder %v927, 0.0
    %vm956 = vcmp.gt.f32.partialorder %v928, 0.0
    %vm957 = vcmp.gt.f32.partialorder %v929, 0.0
    %vm958 = vcmp.gt.f32.partialorder %v930, 0.0
    %vm959 = vcmp.gt.f32.partialorder %v931, 0.0
    %v960 = vmul.f32 %v904, 1.442695
    %v961 = vpow.pop %v960
    %v962 = vmul.f32 %v905, 1.442695
    %v963 = vpow.pop %v962
    %v964 = vmul.f32 %v906, 1.442695
    %v965 = vpow.pop %v964
    %v966 = vmul.f32 %v907, 1.442695
    %v967 = vpow.pop %v966
    %v968 = vmul.f32 %v908, 1.442695
    %v969 = vpow.pop %v968
    %v970 = vmul.f32 %v909, 1.442695
    %v971 = vpow.pop %v970
    %v972 = vmul.f32 %v910, 1.442695
    %v973 = vpow.pop %v972
    %v974 = vmul.f32 %v911, 1.442695
    %v975 = vpow.pop %v974
    %v976 = vmul.f32 %v912, 1.442695
    %v977 = vpow.pop %v976
    %v978 = vmul.f32 %v913, 1.442695
    %v979 = vpow.pop %v978
    %v980 = vmul.f32 %v914, 1.442695
    %v981 = vpow.pop %v980
    %v982 = vmul.f32 %v915, 1.442695
    %v983 = vpow.pop %v982
    %v984 = vmul.f32 %v916, 1.442695
    %v985 = vpow.pop %v984
    %v986 = vmul.f32 %v917, 1.442695
    %v987 = vpow.pop %v986
    %v988 = vmul.f32 %v918, 1.442695
    %v989 = vpow.pop %v988
    %v990 = vmul.f32 %v919, 1.442695
    %v991 = vpow.pop %v990
    %v992 = vmul.f32 %v920, 1.442695
    %v993 = vpow.pop %v992
    %v994 = vmul.f32 %v921, 1.442695
    %v995 = vpow.pop %v994
    %v996 = vmul.f32 %v922, 1.442695
    %v997 = vpow.pop %v996
    %v998 = vmul.f32 %v923, 1.442695
    %v999 = vpow.pop %v998
    %v1000 = vmul.f32 %v924, 1.442695
    %v1001 = vpow.pop %v1000
    %v1002 = vmul.f32 %v925, 1.442695
    %v1003 = vpow.pop %v1002
    %v1004 = vmul.f32 %v926, 1.442695
    %v1005 = vpow.pop %v1004
    %v1006 = vmul.f32 %v927, 1.442695
    %v1007 = vpow.pop %v1006
    %v1008 = vmul.f32 %v928, 1.442695
    %v1009 = vpow.pop %v1008
    %v1010 = vmul.f32 %v929, 1.442695
    %v1011 = vpow.pop %v1010
    %v1012 = vmul.f32 %v930, 1.442695
    %v1013 = vpow.pop %v1012
    %v1014 = vmul.f32 %v931, 1.442695
    %v1015 = vpow.pop %v1014
    %v1016 = vsub.f32 %v961, 1.0
    %v1017 = vsub.f32 %v963, 1.0
    %v1018 = vsub.f32 %v965, 1.0
    %v1019 = vsub.f32 %v967, 1.0
    %v1020 = vsub.f32 %v969, 1.0
    %v1021 = vsub.f32 %v971, 1.0
    %v1022 = vsub.f32 %v973, 1.0
    %v1023 = vsub.f32 %v975, 1.0
    %v1024 = vsub.f32 %v977, 1.0
    %v1025 = vsub.f32 %v979, 1.0
    %v1026 = vsub.f32 %v981, 1.0
    %v1027 = vsub.f32 %v983, 1.0
    %v1028 = vsub.f32 %v985, 1.0
    %v1029 = vsub.f32 %v987, 1.0
    %v1030 = vsub.f32 %v989, 1.0
    %v1031 = vsub.f32 %v991, 1.0
    %v1032 = vsub.f32 %v993, 1.0
    %v1033 = vsub.f32 %v995, 1.0
    %v1034 = vsub.f32 %v997, 1.0
    %v1035 = vsub.f32 %v999, 1.0
    %v1036 = vsub.f32 %v1001, 1.0
    %v1037 = vsub.f32 %v1003, 1.0
    %v1038 = vsub.f32 %v1005, 1.0
    %v1039 = vsub.f32 %v1007, 1.0
    %v1040 = vsub.f32 %v1009, 1.0
    %v1041 = vsub.f32 %v1011, 1.0
    %v1042 = vsub.f32 %v1013, 1.0
    %v1043 = vsub.f32 %v1015, 1.0
    %v1044 = vsel %vm932, %v904, %v1016
    %v1045 = vsel %vm933, %v905, %v1017
    %v1046 = vsel %vm934, %v906, %v1018
    %v1047 = vsel %vm935, %v907, %v1019
    %v1048 = vsel %vm936, %v908, %v1020
    %v1049 = vsel %vm937, %v909, %v1021
    %v1050 = vsel %vm938, %v910, %v1022
    %v1051 = vsel %vm939, %v911, %v1023
    %v1052 = vsel %vm940, %v912, %v1024
    %v1053 = vsel %vm941, %v913, %v1025
    %v1054 = vsel %vm942, %v914, %v1026
    %v1055 = vsel %vm943, %v915, %v1027
    %v1056 = vsel %vm944, %v916, %v1028
    %v1057 = vsel %vm945, %v917, %v1029
    %v1058 = vsel %vm946, %v918, %v1030
    %v1059 = vsel %vm947, %v919, %v1031
    %v1060 = vsel %vm948, %v920, %v1032
    %v1061 = vsel %vm949, %v921, %v1033
    %v1062 = vsel %vm950, %v922, %v1034
    %v1063 = vsel %vm951, %v923, %v1035
    %v1064 = vsel %vm952, %v924, %v1036
    %v1065 = vsel %vm953, %v925, %v1037
    %v1066 = vsel %vm954, %v926, %v1038
    %v1067 = vsel %vm955, %v927, %v1039
    %v1068 = vsel %vm956, %v928, %v1040
    %v1069 = vsel %vm957, %v929, %v1041
    %v1070 = vsel %vm958, %v930, %v1042
    %v1071 = vsel %vm959, %v931, %v1043
    %1100 = vrot.lane.b32.xlu0 %v1044, 127
    %v1101 = vpop.permute.xlu0 %1100
    %1102 = vrot.lane.b32.xlu0 %v1045, 127
    %v1103 = vpop.permute.xlu0 %1102
    %1104 = vrot.lane.b32.xlu0 %v1046, 127
    %v1105 = vpop.permute.xlu0 %1104
    %1106 = vrot.lane.b32.xlu0 %v1047, 127
    %v1107 = vpop.permute.xlu0 %1106
    %1108 = vrot.lane.b32.xlu0 %v1048, 127
    %v1109 = vpop.permute.xlu0 %1108
    %1110 = vrot.lane.b32.xlu0 %v1049, 127
    %v1111 = vpop.permute.xlu0 %1110
    %1112 = vrot.lane.b32.xlu0 %v1050, 127
    %v1113 = vpop.permute.xlu0 %1112
    %1114 = vrot.lane.b32.xlu0 %v1051, 127
    %v1115 = vpop.permute.xlu0 %1114
    %1116 = vrot.lane.b32.xlu0 %v1052, 127
    %v1117 = vpop.permute.xlu0 %1116
    %1118 = vrot.lane.b32.xlu0 %v1053, 127
    %v1119 = vpop.permute.xlu0 %1118
    %1120 = vrot.lane.b32.xlu0 %v1054, 127
    %v1121 = vpop.permute.xlu0 %1120
    %1122 = vrot.lane.b32.xlu0 %v1055, 127
    %v1123 = vpop.permute.xlu0 %1122
    %1124 = vrot.lane.b32.xlu0 %v1056, 127
    %v1125 = vpop.permute.xlu0 %1124
    %1126 = vrot.lane.b32.xlu0 %v1057, 127
    %v1127 = vpop.permute.xlu0 %1126
    %1128 = vrot.lane.b32.xlu0 %v1058, 127
    %v1129 = vpop.permute.xlu0 %1128
    %1130 = vrot.lane.b32.xlu0 %v1059, 127
    %v1131 = vpop.permute.xlu0 %1130
    %1132 = vrot.lane.b32.xlu0 %v1060, 127
    %v1133 = vpop.permute.xlu0 %1132
    %1134 = vrot.lane.b32.xlu0 %v1061, 127
    %v1135 = vpop.permute.xlu0 %1134
    %1136 = vrot.lane.b32.xlu0 %v1062, 127
    %v1137 = vpop.permute.xlu0 %1136
    %1138 = vrot.lane.b32.xlu0 %v1063, 127
    %v1139 = vpop.permute.xlu0 %1138
    %1140 = vrot.lane.b32.xlu0 %v1064, 127
    %v1141 = vpop.permute.xlu0 %1140
    %1142 = vrot.lane.b32.xlu0 %v1065, 127
    %v1143 = vpop.permute.xlu0 %1142
    %1144 = vrot.lane.b32.xlu0 %v1066, 127
    %v1145 = vpop.permute.xlu0 %1144
    %1146 = vrot.lane.b32.xlu0 %v1067, 127
    %v1147 = vpop.permute.xlu0 %1146
    %1148 = vrot.lane.b32.xlu0 %v1068, 127
    %v1149 = vpop.permute.xlu0 %1148
    %1150 = vrot.lane.b32.xlu0 %v1069, 127
    %v1151 = vpop.permute.xlu0 %1150
    %1152 = vrot.lane.b32.xlu0 %v1070, 127
    %v1153 = vpop.permute.xlu0 %1152
    %1154 = vrot.lane.b32.xlu0 %v1071, 127
    %v1155 = vpop.permute.xlu0 %1154
    %v1156 = vsel %vm74, %v1101, %v1103
    %v1157 = vsel %vm74, %v1103, %v1105
    %v1158 = vsel %vm74, %v1105, %v1107
    %v1159 = vsel %vm74, %v1107, %v1109
    %v1160 = vsel %vm74, %v1109, %v1111
    %v1161 = vsel %vm74, %v1111, %v1113
    %v1162 = vsel %vm74, %v1115, %v1117
    %v1163 = vsel %vm74, %v1117, %v1119
    %v1164 = vsel %vm74, %v1119, %v1121
    %v1165 = vsel %vm74, %v1121, %v1123
    %v1166 = vsel %vm74, %v1123, %v1125
    %v1167 = vsel %vm74, %v1125, %v1127
    %v1168 = vsel %vm74, %v1129, %v1131
    %v1169 = vsel %vm74, %v1131, %v1133
    %v1170 = vsel %vm74, %v1133, %v1135
    %v1171 = vsel %vm74, %v1135, %v1137
    %v1172 = vsel %vm74, %v1137, %v1139
    %v1173 = vsel %vm74, %v1139, %v1141
    %v1174 = vsel %vm74, %v1143, %v1145
    %v1175 = vsel %vm74, %v1145, %v1147
    %v1176 = vsel %vm74, %v1147, %v1149
    %v1177 = vsel %vm74, %v1149, %v1151
    %v1178 = vsel %vm74, %v1151, %v1153
    %v1179 = vsel %vm74, %v1153, %v1155
    %v1208 = vmax.f32 %v1044, %v1156
    %v1209 = vmax.f32 %v1045, %v1157
    %v1210 = vmax.f32 %v1046, %v1158
    %v1211 = vmax.f32 %v1047, %v1159
    %v1212 = vmax.f32 %v1048, %v1160
    %v1213 = vmax.f32 %v1049, %v1161
    %v1214 = vmax.f32 %v1050, %v1113
    %v1215 = vmax.f32 %v1051, %v1162
    %v1216 = vmax.f32 %v1052, %v1163
    %v1217 = vmax.f32 %v1053, %v1164
    %v1218 = vmax.f32 %v1054, %v1165
    %v1219 = vmax.f32 %v1055, %v1166
    %v1220 = vmax.f32 %v1056, %v1167
    %v1221 = vmax.f32 %v1057, %v1127
    %v1222 = vmax.f32 %v1058, %v1168
    %v1223 = vmax.f32 %v1059, %v1169
    %v1224 = vmax.f32 %v1060, %v1170
    %v1225 = vmax.f32 %v1061, %v1171
    %v1226 = vmax.f32 %v1062, %v1172
    %v1227 = vmax.f32 %v1063, %v1173
    %v1228 = vmax.f32 %v1064, %v1141
    %v1229 = vmax.f32 %v1065, %v1174
    %v1230 = vmax.f32 %v1066, %v1175
    %v1231 = vmax.f32 %v1067, %v1176
    %v1232 = vmax.f32 %v1068, %v1177
    %v1233 = vmax.f32 %v1069, %v1178
    %v1234 = vmax.f32 %v1070, %v1179
    %v1235 = vmax.f32 %v1071, %v1155
    %v1236 = vlaneseq
    %v1237 = vshrl.u32 %v1236, 7
    %v1238 = vadd.s32 %v1237, 8
    %v1239 = vadd.s32 %v1237, 16
    %v1240 = vadd.s32 %v1237, 24
    %v1241 = vadd.s32 %v1237, 32
    %v1242 = vadd.s32 %v1237, 40
    %v1243 = vadd.s32 %v1237, 48
    %v1244 = vadd.s32 %v1237, 56
    %v1245 = vadd.s32 %v1237, 64
    %v1246 = vadd.s32 %v1237, 72
    %v1247 = vadd.s32 %v1237, 80
    %v1248 = vadd.s32 %v1237, 88
    %v1249 = vadd.s32 %v1237, 96
    %v1250 = vadd.s32 %v1237, 104
    %v1251 = vadd.s32 %v1237, 112
    %v1252 = vadd.s32 %v1237, 120
    %v1253 = vadd.s32 %v1237, 128
    %v1254 = vadd.s32 %v1237, 136
    %v1255 = vadd.s32 %v1237, 144
    %v1256 = vadd.s32 %v1237, 152
    %v1257 = vadd.s32 %v1237, 160
    %v1258 = vadd.s32 %v1237, 168
    %v1259 = vadd.s32 %v1237, 176
    %v1260 = vadd.s32 %v1237, 184
    %v1261 = vadd.s32 %v1237, 192
    %v1262 = vadd.s32 %v1237, 200
    %v1263 = vadd.s32 %v1237, 208
    %v1264 = vadd.s32 %v1237, 216
    %v1265 = vadd.s32 %v1237, 224
    %v1266 = vadd.s32 %v1237, 232
    %v1267 = vadd.s32 %v1237, 240
    %v1268 = vadd.s32 %v1237, 248
    %v1269 = vadd.s32 %v1237, 256
    %v1270 = vadd.s32 %v1237, 264
    %v1271 = vadd.s32 %v1237, 272
    %v1272 = vadd.s32 %v1237, 280
    %v1273 = vadd.s32 %v1237, 288
    %v1274 = vadd.s32 %v1237, 296
    %v1275 = vadd.s32 %v1237, 304
    %v1276 = vadd.s32 %v1237, 312
    %v1277 = vadd.s32 %v1237, 320
    %v1278 = vadd.s32 %v1237, 328
    %v1279 = vadd.s32 %v1237, 336
    %v1280 = vadd.s32 %v1237, 344
    %v1281 = vadd.s32 %v1237, 352
    %v1282 = vadd.s32 %v1237, 360
    %v1283 = vadd.s32 %v1237, 368
    %v1284 = vadd.s32 %v1237, 376
    %v1285 = vadd.s32 %v1237, 384
    %v1286 = vadd.s32 %v1237, 392
    %v1287 = vadd.s32 %v1237, 400
    %v1288 = vadd.s32 %v1237, 408
    %v1289 = vadd.s32 %v1237, 416
    %v1290 = vadd.s32 %v1237, 424
    %v1291 = vadd.s32 %v1237, 432
    %v1292 = vadd.s32 %v1237, 440
    %v1293 = vadd.s32 %v1237, 448
    %v1294 = vadd.s32 %v1237, 456
    %v1295 = vadd.s32 %v1237, 464
    %v1296 = vadd.s32 %v1237, 472
    %v1297 = vadd.s32 %v1237, 480
    %v1298 = vadd.s32 %v1237, 488
    %v1299 = vadd.s32 %v1237, 496
    %v1300 = vadd.s32 %v1237, 504
    %v1301 = vadd.s32 %v1237, 512
    %v1302 = vadd.s32 %v1237, 520
    %v1303 = vadd.s32 %v1237, 528
    %v1304 = vadd.s32 %v1237, 536
    %v1305 = vadd.s32 %v1237, 544
    %v1306 = vadd.s32 %v1237, 552
    %v1307 = vadd.s32 %v1237, 560
    %v1308 = vadd.s32 %v1237, 568
    %v1309 = vadd.s32 %v1237, 576
    %v1310 = vadd.s32 %v1237, 584
    %v1311 = vadd.s32 %v1237, 592
    %v1312 = vadd.s32 %v1237, 600
    %v1313 = vadd.s32 %v1237, 608
    %v1314 = vadd.s32 %v1237, 616
    %v1315 = vadd.s32 %v1237, 624
    %v1316 = vadd.s32 %v1237, 632
    %v1317 = vadd.s32 %v1237, 640
    %v1318 = vadd.s32 %v1237, 648
    %v1319 = vadd.s32 %v1237, 656
    %v1320 = vadd.s32 %v1237, 664
    %v1321 = vadd.s32 %v1237, 672
    %v1322 = vadd.s32 %v1237, 680
    %v1323 = vadd.s32 %v1237, 688
    %v1324 = vadd.s32 %v1237, 696
    %v1325 = vadd.s32 %v1237, 704
    %v1326 = vadd.s32 %v1237, 712
    %v1327 = vadd.s32 %v1237, 720
    %v1328 = vadd.s32 %v1237, 728
    %v1329 = vadd.s32 %v1237, 736
    %v1330 = vadd.s32 %v1237, 744
    %v1331 = vadd.s32 %v1237, 752
    %v1332 = vadd.s32 %v1237, 760
    %v1333 = vadd.s32 %v1237, 768
    %v1334 = vadd.s32 %v1237, 776
    %v1335 = vadd.s32 %v1237, 784
    %v1336 = vadd.s32 %v1237, 792
    %vm1337 = vcmp.ge.s32.totalorder %v572, 198
    %vm1338 = vcmp.ge.s32.totalorder %v573, 198
    %vm1339 = vcmp.ge.s32.totalorder %v574, 198
    %vm1340 = vcmp.ge.s32.totalorder %v575, 198
    %v1341 = vsel %vm1337, 1, 0
    %v1342 = vsel %vm1338, 1, 0
    %v1343 = vsel %vm1339, 1, 0
    %v1344 = vsel %vm1340, 1, 0
    %v1345 = vmul.u32 %v1341, 400
    %v1346 = vmul.u32 %v1342, 400
    %v1347 = vmul.u32 %v1343, 400
    %v1348 = vmul.u32 %v1344, 400
    %v1349 = vmul.u32 %v1341, 198
    %v1350 = vmul.u32 %v1342, 198
    %v1351 = vmul.u32 %v1343, 198
    %v1352 = vmul.u32 %v1344, 198
    %v1353 = vsub.s32 %v572, %v1349
    %v1354 = vsub.s32 %v573, %v1350
    %v1355 = vsub.s32 %v574, %v1351
    %v1356 = vsub.s32 %v575, %v1352
    %v1357 = vmul.u32 %v1353, 2
    %v1358 = vmul.u32 %v1354, 2
    %v1359 = vmul.u32 %v1355, 2
    %v1360 = vmul.u32 %v1356, 2
    %v1361 = vadd.s32 %v1345, %v1357
    %v1362 = vadd.s32 %v1346, %v1358
    %v1363 = vadd.s32 %v1347, %v1359
    %v1364 = vadd.s32 %v1348, %v1360
    %vm1365 = vcmp.eq.s32.totalorder %v1237, %v1361
    %vm1366 = vcmp.eq.s32.totalorder %v1237, %v1362
    %vm1367 = vcmp.eq.s32.totalorder %v1237, %v1363
    %vm1368 = vcmp.eq.s32.totalorder %v1237, %v1364
    %vm1369 = vcmp.eq.s32.totalorder %v1238, %v1361
    %vm1370 = vcmp.eq.s32.totalorder %v1238, %v1362
    %vm1371 = vcmp.eq.s32.totalorder %v1238, %v1363
    %vm1372 = vcmp.eq.s32.totalorder %v1238, %v1364
    %vm1373 = vcmp.eq.s32.totalorder %v1239, %v1361
    %vm1374 = vcmp.eq.s32.totalorder %v1239, %v1362
    %vm1375 = vcmp.eq.s32.totalorder %v1239, %v1363
    %vm1376 = vcmp.eq.s32.totalorder %v1239, %v1364
    %vm1377 = vcmp.eq.s32.totalorder %v1240, %v1361
    %vm1378 = vcmp.eq.s32.totalorder %v1240, %v1362
    %vm1379 = vcmp.eq.s32.totalorder %v1240, %v1363
    %vm1380 = vcmp.eq.s32.totalorder %v1240, %v1364
    %vm1381 = vcmp.eq.s32.totalorder %v1241, %v1361
    %vm1382 = vcmp.eq.s32.totalorder %v1241, %v1362
    %vm1383 = vcmp.eq.s32.totalorder %v1241, %v1363
    %vm1384 = vcmp.eq.s32.totalorder %v1241, %v1364
    %vm1385 = vcmp.eq.s32.totalorder %v1242, %v1361
    %vm1386 = vcmp.eq.s32.totalorder %v1242, %v1362
    %vm1387 = vcmp.eq.s32.totalorder %v1242, %v1363
    %vm1388 = vcmp.eq.s32.totalorder %v1242, %v1364
    %vm1389 = vcmp.eq.s32.totalorder %v1243, %v1361
    %vm1390 = vcmp.eq.s32.totalorder %v1243, %v1362
    %vm1391 = vcmp.eq.s32.totalorder %v1243, %v1363
    %vm1392 = vcmp.eq.s32.totalorder %v1243, %v1364
    %vm1393 = vcmp.eq.s32.totalorder %v1244, %v1361
    %vm1394 = vcmp.eq.s32.totalorder %v1244, %v1362
    %vm1395 = vcmp.eq.s32.totalorder %v1244, %v1363
    %vm1396 = vcmp.eq.s32.totalorder %v1244, %v1364
    %vm1397 = vcmp.eq.s32.totalorder %v1245, %v1361
    %vm1398 = vcmp.eq.s32.totalorder %v1245, %v1362
    %vm1399 = vcmp.eq.s32.totalorder %v1245, %v1363
    %vm1400 = vcmp.eq.s32.totalorder %v1245, %v1364
    %vm1401 = vcmp.eq.s32.totalorder %v1246, %v1361
    %vm1402 = vcmp.eq.s32.totalorder %v1246, %v1362
    %vm1403 = vcmp.eq.s32.totalorder %v1246, %v1363
    %vm1404 = vcmp.eq.s32.totalorder %v1246, %v1364
    %vm1405 = vcmp.eq.s32.totalorder %v1247, %v1361
    %vm1406 = vcmp.eq.s32.totalorder %v1247, %v1362
    %vm1407 = vcmp.eq.s32.totalorder %v1247, %v1363
    %vm1408 = vcmp.eq.s32.totalorder %v1247, %v1364
    %vm1409 = vcmp.eq.s32.totalorder %v1248, %v1361
    %vm1410 = vcmp.eq.s32.totalorder %v1248, %v1362
    %vm1411 = vcmp.eq.s32.totalorder %v1248, %v1363
    %vm1412 = vcmp.eq.s32.totalorder %v1248, %v1364
    %vm1413 = vcmp.eq.s32.totalorder %v1249, %v1361
    %vm1414 = vcmp.eq.s32.totalorder %v1249, %v1362
    %vm1415 = vcmp.eq.s32.totalorder %v1249, %v1363
    %vm1416 = vcmp.eq.s32.totalorder %v1249, %v1364
    %vm1417 = vcmp.eq.s32.totalorder %v1250, %v1361
    %vm1418 = vcmp.eq.s32.totalorder %v1250, %v1362
    %vm1419 = vcmp.eq.s32.totalorder %v1250, %v1363
    %vm1420 = vcmp.eq.s32.totalorder %v1250, %v1364
    %vm1421 = vcmp.eq.s32.totalorder %v1251, %v1361
    %vm1422 = vcmp.eq.s32.totalorder %v1251, %v1362
    %vm1423 = vcmp.eq.s32.totalorder %v1251, %v1363
    %vm1424 = vcmp.eq.s32.totalorder %v1251, %v1364
    %vm1425 = vcmp.eq.s32.totalorder %v1252, %v1361
    %vm1426 = vcmp.eq.s32.totalorder %v1252, %v1362
    %vm1427 = vcmp.eq.s32.totalorder %v1252, %v1363
    %vm1428 = vcmp.eq.s32.totalorder %v1252, %v1364
    %vm1429 = vcmp.eq.s32.totalorder %v1253, %v1361
    %vm1430 = vcmp.eq.s32.totalorder %v1253, %v1362
    %vm1431 = vcmp.eq.s32.totalorder %v1253, %v1363
    %vm1432 = vcmp.eq.s32.totalorder %v1253, %v1364
    %vm1433 = vcmp.eq.s32.totalorder %v1254, %v1361
    %vm1434 = vcmp.eq.s32.totalorder %v1254, %v1362
    %vm1435 = vcmp.eq.s32.totalorder %v1254, %v1363
    %vm1436 = vcmp.eq.s32.totalorder %v1254, %v1364
    %vm1437 = vcmp.eq.s32.totalorder %v1255, %v1361
    %vm1438 = vcmp.eq.s32.totalorder %v1255, %v1362
    %vm1439 = vcmp.eq.s32.totalorder %v1255, %v1363
    %vm1440 = vcmp.eq.s32.totalorder %v1255, %v1364
    %vm1441 = vcmp.eq.s32.totalorder %v1256, %v1361
    %vm1442 = vcmp.eq.s32.totalorder %v1256, %v1362
    %vm1443 = vcmp.eq.s32.totalorder %v1256, %v1363
    %vm1444 = vcmp.eq.s32.totalorder %v1256, %v1364
    %vm1445 = vcmp.eq.s32.totalorder %v1257, %v1361
    %vm1446 = vcmp.eq.s32.totalorder %v1257, %v1362
    %vm1447 = vcmp.eq.s32.totalorder %v1257, %v1363
    %vm1448 = vcmp.eq.s32.totalorder %v1257, %v1364
    %vm1449 = vcmp.eq.s32.totalorder %v1258, %v1361
    %vm1450 = vcmp.eq.s32.totalorder %v1258, %v1362
    %vm1451 = vcmp.eq.s32.totalorder %v1258, %v1363
    %vm1452 = vcmp.eq.s32.totalorder %v1258, %v1364
    %vm1453 = vcmp.eq.s32.totalorder %v1259, %v1361
    %vm1454 = vcmp.eq.s32.totalorder %v1259, %v1362
    %vm1455 = vcmp.eq.s32.totalorder %v1259, %v1363
    %vm1456 = vcmp.eq.s32.totalorder %v1259, %v1364
    %vm1457 = vcmp.eq.s32.totalorder %v1260, %v1361
    %vm1458 = vcmp.eq.s32.totalorder %v1260, %v1362
    %vm1459 = vcmp.eq.s32.totalorder %v1260, %v1363
    %vm1460 = vcmp.eq.s32.totalorder %v1260, %v1364
    %vm1461 = vcmp.eq.s32.totalorder %v1261, %v1361
    %vm1462 = vcmp.eq.s32.totalorder %v1261, %v1362
    %vm1463 = vcmp.eq.s32.totalorder %v1261, %v1363
    %vm1464 = vcmp.eq.s32.totalorder %v1261, %v1364
    %vm1465 = vcmp.eq.s32.totalorder %v1262, %v1361
    %vm1466 = vcmp.eq.s32.totalorder %v1262, %v1362
    %vm1467 = vcmp.eq.s32.totalorder %v1262, %v1363
    %vm1468 = vcmp.eq.s32.totalorder %v1262, %v1364
    %vm1469 = vcmp.eq.s32.totalorder %v1263, %v1361
    %vm1470 = vcmp.eq.s32.totalorder %v1263, %v1362
    %vm1471 = vcmp.eq.s32.totalorder %v1263, %v1363
    %vm1472 = vcmp.eq.s32.totalorder %v1263, %v1364
    %vm1473 = vcmp.eq.s32.totalorder %v1264, %v1361
    %vm1474 = vcmp.eq.s32.totalorder %v1264, %v1362
    %vm1475 = vcmp.eq.s32.totalorder %v1264, %v1363
    %vm1476 = vcmp.eq.s32.totalorder %v1264, %v1364
    %vm1477 = vcmp.eq.s32.totalorder %v1265, %v1361
    %vm1478 = vcmp.eq.s32.totalorder %v1265, %v1362
    %vm1479 = vcmp.eq.s32.totalorder %v1265, %v1363
    %vm1480 = vcmp.eq.s32.totalorder %v1265, %v1364
    %vm1481 = vcmp.eq.s32.totalorder %v1266, %v1361
    %vm1482 = vcmp.eq.s32.totalorder %v1266, %v1362
    %vm1483 = vcmp.eq.s32.totalorder %v1266, %v1363
    %vm1484 = vcmp.eq.s32.totalorder %v1266, %v1364
    %vm1485 = vcmp.eq.s32.totalorder %v1267, %v1361
    %vm1486 = vcmp.eq.s32.totalorder %v1267, %v1362
    %vm1487 = vcmp.eq.s32.totalorder %v1267, %v1363
    %vm1488 = vcmp.eq.s32.totalorder %v1267, %v1364
    %vm1489 = vcmp.eq.s32.totalorder %v1268, %v1361
    %vm1490 = vcmp.eq.s32.totalorder %v1268, %v1362
    %vm1491 = vcmp.eq.s32.totalorder %v1268, %v1363
    %vm1492 = vcmp.eq.s32.totalorder %v1268, %v1364
    %vm1493 = vcmp.eq.s32.totalorder %v1269, %v1361
    %vm1494 = vcmp.eq.s32.totalorder %v1269, %v1362
    %vm1495 = vcmp.eq.s32.totalorder %v1269, %v1363
    %vm1496 = vcmp.eq.s32.totalorder %v1269, %v1364
    %vm1497 = vcmp.eq.s32.totalorder %v1270, %v1361
    %vm1498 = vcmp.eq.s32.totalorder %v1270, %v1362
    %vm1499 = vcmp.eq.s32.totalorder %v1270, %v1363
    %vm1500 = vcmp.eq.s32.totalorder %v1270, %v1364
    %vm1501 = vcmp.eq.s32.totalorder %v1271, %v1361
    %vm1502 = vcmp.eq.s32.totalorder %v1271, %v1362
    %vm1503 = vcmp.eq.s32.totalorder %v1271, %v1363
    %vm1504 = vcmp.eq.s32.totalorder %v1271, %v1364
    %vm1505 = vcmp.eq.s32.totalorder %v1272, %v1361
    %vm1506 = vcmp.eq.s32.totalorder %v1272, %v1362
    %vm1507 = vcmp.eq.s32.totalorder %v1272, %v1363
    %vm1508 = vcmp.eq.s32.totalorder %v1272, %v1364
    %vm1509 = vcmp.eq.s32.totalorder %v1273, %v1361
    %vm1510 = vcmp.eq.s32.totalorder %v1273, %v1362
    %vm1511 = vcmp.eq.s32.totalorder %v1273, %v1363
    %vm1512 = vcmp.eq.s32.totalorder %v1273, %v1364
    %vm1513 = vcmp.eq.s32.totalorder %v1274, %v1361
    %vm1514 = vcmp.eq.s32.totalorder %v1274, %v1362
    %vm1515 = vcmp.eq.s32.totalorder %v1274, %v1363
    %vm1516 = vcmp.eq.s32.totalorder %v1274, %v1364
    %vm1517 = vcmp.eq.s32.totalorder %v1275, %v1361
    %vm1518 = vcmp.eq.s32.totalorder %v1275, %v1362
    %vm1519 = vcmp.eq.s32.totalorder %v1275, %v1363
    %vm1520 = vcmp.eq.s32.totalorder %v1275, %v1364
    %vm1521 = vcmp.eq.s32.totalorder %v1276, %v1361
    %vm1522 = vcmp.eq.s32.totalorder %v1276, %v1362
    %vm1523 = vcmp.eq.s32.totalorder %v1276, %v1363
    %vm1524 = vcmp.eq.s32.totalorder %v1276, %v1364
    %vm1525 = vcmp.eq.s32.totalorder %v1277, %v1361
    %vm1526 = vcmp.eq.s32.totalorder %v1277, %v1362
    %vm1527 = vcmp.eq.s32.totalorder %v1277, %v1363
    %vm1528 = vcmp.eq.s32.totalorder %v1277, %v1364
    %vm1529 = vcmp.eq.s32.totalorder %v1278, %v1361
    %vm1530 = vcmp.eq.s32.totalorder %v1278, %v1362
    %vm1531 = vcmp.eq.s32.totalorder %v1278, %v1363
    %vm1532 = vcmp.eq.s32.totalorder %v1278, %v1364
    %vm1533 = vcmp.eq.s32.totalorder %v1279, %v1361
    %vm1534 = vcmp.eq.s32.totalorder %v1279, %v1362
    %vm1535 = vcmp.eq.s32.totalorder %v1279, %v1363
    %vm1536 = vcmp.eq.s32.totalorder %v1279, %v1364
    %vm1537 = vcmp.eq.s32.totalorder %v1280, %v1361
    %vm1538 = vcmp.eq.s32.totalorder %v1280, %v1362
    %vm1539 = vcmp.eq.s32.totalorder %v1280, %v1363
    %vm1540 = vcmp.eq.s32.totalorder %v1280, %v1364
    %vm1541 = vcmp.eq.s32.totalorder %v1281, %v1361
    %vm1542 = vcmp.eq.s32.totalorder %v1281, %v1362
    %vm1543 = vcmp.eq.s32.totalorder %v1281, %v1363
    %vm1544 = vcmp.eq.s32.totalorder %v1281, %v1364
    %vm1545 = vcmp.eq.s32.totalorder %v1282, %v1361
    %vm1546 = vcmp.eq.s32.totalorder %v1282, %v1362
    %vm1547 = vcmp.eq.s32.totalorder %v1282, %v1363
    %vm1548 = vcmp.eq.s32.totalorder %v1282, %v1364
    %vm1549 = vcmp.eq.s32.totalorder %v1283, %v1361
    %vm1550 = vcmp.eq.s32.totalorder %v1283, %v1362
    %vm1551 = vcmp.eq.s32.totalorder %v1283, %v1363
    %vm1552 = vcmp.eq.s32.totalorder %v1283, %v1364
    %vm1553 = vcmp.eq.s32.totalorder %v1284, %v1361
    %vm1554 = vcmp.eq.s32.totalorder %v1284, %v1362
    %vm1555 = vcmp.eq.s32.totalorder %v1284, %v1363
    %vm1556 = vcmp.eq.s32.totalorder %v1284, %v1364
    %vm1557 = vcmp.eq.s32.totalorder %v1285, %v1361
    %vm1558 = vcmp.eq.s32.totalorder %v1285, %v1362
    %vm1559 = vcmp.eq.s32.totalorder %v1285, %v1363
    %vm1560 = vcmp.eq.s32.totalorder %v1285, %v1364
    %vm1561 = vcmp.eq.s32.totalorder %v1286, %v1361
    %vm1562 = vcmp.eq.s32.totalorder %v1286, %v1362
    %vm1563 = vcmp.eq.s32.totalorder %v1286, %v1363
    %vm1564 = vcmp.eq.s32.totalorder %v1286, %v1364
    %vm1565 = vcmp.eq.s32.totalorder %v1287, %v1361
    %vm1566 = vcmp.eq.s32.totalorder %v1287, %v1362
    %vm1567 = vcmp.eq.s32.totalorder %v1287, %v1363
    %vm1568 = vcmp.eq.s32.totalorder %v1287, %v1364
    %vm1569 = vcmp.eq.s32.totalorder %v1288, %v1361
    %vm1570 = vcmp.eq.s32.totalorder %v1288, %v1362
    %vm1571 = vcmp.eq.s32.totalorder %v1288, %v1363
    %vm1572 = vcmp.eq.s32.totalorder %v1288, %v1364
    %vm1573 = vcmp.eq.s32.totalorder %v1289, %v1361
    %vm1574 = vcmp.eq.s32.totalorder %v1289, %v1362
    %vm1575 = vcmp.eq.s32.totalorder %v1289, %v1363
    %vm1576 = vcmp.eq.s32.totalorder %v1289, %v1364
    %vm1577 = vcmp.eq.s32.totalorder %v1290, %v1361
    %vm1578 = vcmp.eq.s32.totalorder %v1290, %v1362
    %vm1579 = vcmp.eq.s32.totalorder %v1290, %v1363
    %vm1580 = vcmp.eq.s32.totalorder %v1290, %v1364
    %vm1581 = vcmp.eq.s32.totalorder %v1291, %v1361
    %vm1582 = vcmp.eq.s32.totalorder %v1291, %v1362
    %vm1583 = vcmp.eq.s32.totalorder %v1291, %v1363
    %vm1584 = vcmp.eq.s32.totalorder %v1291, %v1364
    %vm1585 = vcmp.eq.s32.totalorder %v1292, %v1361
    %vm1586 = vcmp.eq.s32.totalorder %v1292, %v1362
    %vm1587 = vcmp.eq.s32.totalorder %v1292, %v1363
    %vm1588 = vcmp.eq.s32.totalorder %v1292, %v1364
    %vm1589 = vcmp.eq.s32.totalorder %v1293, %v1361
    %vm1590 = vcmp.eq.s32.totalorder %v1293, %v1362
    %vm1591 = vcmp.eq.s32.totalorder %v1293, %v1363
    %vm1592 = vcmp.eq.s32.totalorder %v1293, %v1364
    %vm1593 = vcmp.eq.s32.totalorder %v1294, %v1361
    %vm1594 = vcmp.eq.s32.totalorder %v1294, %v1362
    %vm1595 = vcmp.eq.s32.totalorder %v1294, %v1363
    %vm1596 = vcmp.eq.s32.totalorder %v1294, %v1364
    %vm1597 = vcmp.eq.s32.totalorder %v1295, %v1361
    %vm1598 = vcmp.eq.s32.totalorder %v1295, %v1362
    %vm1599 = vcmp.eq.s32.totalorder %v1295, %v1363
    %vm1600 = vcmp.eq.s32.totalorder %v1295, %v1364
    %vm1601 = vcmp.eq.s32.totalorder %v1296, %v1361
    %vm1602 = vcmp.eq.s32.totalorder %v1296, %v1362
    %vm1603 = vcmp.eq.s32.totalorder %v1296, %v1363
    %vm1604 = vcmp.eq.s32.totalorder %v1296, %v1364
    %vm1605 = vcmp.eq.s32.totalorder %v1297, %v1361
    %vm1606 = vcmp.eq.s32.totalorder %v1297, %v1362
    %vm1607 = vcmp.eq.s32.totalorder %v1297, %v1363
    %vm1608 = vcmp.eq.s32.totalorder %v1297, %v1364
    %vm1609 = vcmp.eq.s32.totalorder %v1298, %v1361
    %vm1610 = vcmp.eq.s32.totalorder %v1298, %v1362
    %vm1611 = vcmp.eq.s32.totalorder %v1298, %v1363
    %vm1612 = vcmp.eq.s32.totalorder %v1298, %v1364
    %vm1613 = vcmp.eq.s32.totalorder %v1299, %v1361
    %vm1614 = vcmp.eq.s32.totalorder %v1299, %v1362
    %vm1615 = vcmp.eq.s32.totalorder %v1299, %v1363
    %vm1616 = vcmp.eq.s32.totalorder %v1299, %v1364
    %vm1617 = vcmp.eq.s32.totalorder %v1300, %v1361
    %vm1618 = vcmp.eq.s32.totalorder %v1300, %v1362
    %vm1619 = vcmp.eq.s32.totalorder %v1300, %v1363
    %vm1620 = vcmp.eq.s32.totalorder %v1300, %v1364
    %vm1621 = vcmp.eq.s32.totalorder %v1301, %v1361
    %vm1622 = vcmp.eq.s32.totalorder %v1301, %v1362
    %vm1623 = vcmp.eq.s32.totalorder %v1301, %v1363
    %vm1624 = vcmp.eq.s32.totalorder %v1301, %v1364
    %vm1625 = vcmp.eq.s32.totalorder %v1302, %v1361
    %vm1626 = vcmp.eq.s32.totalorder %v1302, %v1362
    %vm1627 = vcmp.eq.s32.totalorder %v1302, %v1363
    %vm1628 = vcmp.eq.s32.totalorder %v1302, %v1364
    %vm1629 = vcmp.eq.s32.totalorder %v1303, %v1361
    %vm1630 = vcmp.eq.s32.totalorder %v1303, %v1362
    %vm1631 = vcmp.eq.s32.totalorder %v1303, %v1363
    %vm1632 = vcmp.eq.s32.totalorder %v1303, %v1364
    %vm1633 = vcmp.eq.s32.totalorder %v1304, %v1361
    %vm1634 = vcmp.eq.s32.totalorder %v1304, %v1362
    %vm1635 = vcmp.eq.s32.totalorder %v1304, %v1363
    %vm1636 = vcmp.eq.s32.totalorder %v1304, %v1364
    %vm1637 = vcmp.eq.s32.totalorder %v1305, %v1361
    %vm1638 = vcmp.eq.s32.totalorder %v1305, %v1362
    %vm1639 = vcmp.eq.s32.totalorder %v1305, %v1363
    %vm1640 = vcmp.eq.s32.totalorder %v1305, %v1364
    %vm1641 = vcmp.eq.s32.totalorder %v1306, %v1361
    %vm1642 = vcmp.eq.s32.totalorder %v1306, %v1362
    %vm1643 = vcmp.eq.s32.totalorder %v1306, %v1363
    %vm1644 = vcmp.eq.s32.totalorder %v1306, %v1364
    %vm1645 = vcmp.eq.s32.totalorder %v1307, %v1361
    %vm1646 = vcmp.eq.s32.totalorder %v1307, %v1362
    %vm1647 = vcmp.eq.s32.totalorder %v1307, %v1363
    %vm1648 = vcmp.eq.s32.totalorder %v1307, %v1364
    %vm1649 = vcmp.eq.s32.totalorder %v1308, %v1361
    %vm1650 = vcmp.eq.s32.totalorder %v1308, %v1362
    %vm1651 = vcmp.eq.s32.totalorder %v1308, %v1363
    %vm1652 = vcmp.eq.s32.totalorder %v1308, %v1364
    %vm1653 = vcmp.eq.s32.totalorder %v1309, %v1361
    %vm1654 = vcmp.eq.s32.totalorder %v1309, %v1362
    %vm1655 = vcmp.eq.s32.totalorder %v1309, %v1363
    %vm1656 = vcmp.eq.s32.totalorder %v1309, %v1364
    %vm1657 = vcmp.eq.s32.totalorder %v1310, %v1361
    %vm1658 = vcmp.eq.s32.totalorder %v1310, %v1362
    %vm1659 = vcmp.eq.s32.totalorder %v1310, %v1363
    %vm1660 = vcmp.eq.s32.totalorder %v1310, %v1364
    %vm1661 = vcmp.eq.s32.totalorder %v1311, %v1361
    %vm1662 = vcmp.eq.s32.totalorder %v1311, %v1362
    %vm1663 = vcmp.eq.s32.totalorder %v1311, %v1363
    %vm1664 = vcmp.eq.s32.totalorder %v1311, %v1364
    %vm1665 = vcmp.eq.s32.totalorder %v1312, %v1361
    %vm1666 = vcmp.eq.s32.totalorder %v1312, %v1362
    %vm1667 = vcmp.eq.s32.totalorder %v1312, %v1363
    %vm1668 = vcmp.eq.s32.totalorder %v1312, %v1364
    %vm1669 = vcmp.eq.s32.totalorder %v1313, %v1361
    %vm1670 = vcmp.eq.s32.totalorder %v1313, %v1362
    %vm1671 = vcmp.eq.s32.totalorder %v1313, %v1363
    %vm1672 = vcmp.eq.s32.totalorder %v1313, %v1364
    %vm1673 = vcmp.eq.s32.totalorder %v1314, %v1361
    %vm1674 = vcmp.eq.s32.totalorder %v1314, %v1362
    %vm1675 = vcmp.eq.s32.totalorder %v1314, %v1363
    %vm1676 = vcmp.eq.s32.totalorder %v1314, %v1364
    %vm1677 = vcmp.eq.s32.totalorder %v1315, %v1361
    %vm1678 = vcmp.eq.s32.totalorder %v1315, %v1362
    %vm1679 = vcmp.eq.s32.totalorder %v1315, %v1363
    %vm1680 = vcmp.eq.s32.totalorder %v1315, %v1364
    %vm1681 = vcmp.eq.s32.totalorder %v1316, %v1361
    %vm1682 = vcmp.eq.s32.totalorder %v1316, %v1362
    %vm1683 = vcmp.eq.s32.totalorder %v1316, %v1363
    %vm1684 = vcmp.eq.s32.totalorder %v1316, %v1364
    %vm1685 = vcmp.eq.s32.totalorder %v1317, %v1361
    %vm1686 = vcmp.eq.s32.totalorder %v1317, %v1362
    %vm1687 = vcmp.eq.s32.totalorder %v1317, %v1363
    %vm1688 = vcmp.eq.s32.totalorder %v1317, %v1364
    %vm1689 = vcmp.eq.s32.totalorder %v1318, %v1361
    %vm1690 = vcmp.eq.s32.totalorder %v1318, %v1362
    %vm1691 = vcmp.eq.s32.totalorder %v1318, %v1363
    %vm1692 = vcmp.eq.s32.totalorder %v1318, %v1364
    %vm1693 = vcmp.eq.s32.totalorder %v1319, %v1361
    %vm1694 = vcmp.eq.s32.totalorder %v1319, %v1362
    %vm1695 = vcmp.eq.s32.totalorder %v1319, %v1363
    %vm1696 = vcmp.eq.s32.totalorder %v1319, %v1364
    %vm1697 = vcmp.eq.s32.totalorder %v1320, %v1361
    %vm1698 = vcmp.eq.s32.totalorder %v1320, %v1362
    %vm1699 = vcmp.eq.s32.totalorder %v1320, %v1363
    %vm1700 = vcmp.eq.s32.totalorder %v1320, %v1364
    %vm1701 = vcmp.eq.s32.totalorder %v1321, %v1361
    %vm1702 = vcmp.eq.s32.totalorder %v1321, %v1362
    %vm1703 = vcmp.eq.s32.totalorder %v1321, %v1363
    %vm1704 = vcmp.eq.s32.totalorder %v1321, %v1364
    %vm1705 = vcmp.eq.s32.totalorder %v1322, %v1361
    %vm1706 = vcmp.eq.s32.totalorder %v1322, %v1362
    %vm1707 = vcmp.eq.s32.totalorder %v1322, %v1363
    %vm1708 = vcmp.eq.s32.totalorder %v1322, %v1364
    %vm1709 = vcmp.eq.s32.totalorder %v1323, %v1361
    %vm1710 = vcmp.eq.s32.totalorder %v1323, %v1362
    %vm1711 = vcmp.eq.s32.totalorder %v1323, %v1363
    %vm1712 = vcmp.eq.s32.totalorder %v1323, %v1364
    %vm1713 = vcmp.eq.s32.totalorder %v1324, %v1361
    %vm1714 = vcmp.eq.s32.totalorder %v1324, %v1362
    %vm1715 = vcmp.eq.s32.totalorder %v1324, %v1363
    %vm1716 = vcmp.eq.s32.totalorder %v1324, %v1364
    %vm1717 = vcmp.eq.s32.totalorder %v1325, %v1361
    %vm1718 = vcmp.eq.s32.totalorder %v1325, %v1362
    %vm1719 = vcmp.eq.s32.totalorder %v1325, %v1363
    %vm1720 = vcmp.eq.s32.totalorder %v1325, %v1364
    %vm1721 = vcmp.eq.s32.totalorder %v1326, %v1361
    %vm1722 = vcmp.eq.s32.totalorder %v1326, %v1362
    %vm1723 = vcmp.eq.s32.totalorder %v1326, %v1363
    %vm1724 = vcmp.eq.s32.totalorder %v1326, %v1364
    %vm1725 = vcmp.eq.s32.totalorder %v1327, %v1361
    %vm1726 = vcmp.eq.s32.totalorder %v1327, %v1362
    %vm1727 = vcmp.eq.s32.totalorder %v1327, %v1363
    %vm1728 = vcmp.eq.s32.totalorder %v1327, %v1364
    %vm1729 = vcmp.eq.s32.totalorder %v1328, %v1361
    %vm1730 = vcmp.eq.s32.totalorder %v1328, %v1362
    %vm1731 = vcmp.eq.s32.totalorder %v1328, %v1363
    %vm1732 = vcmp.eq.s32.totalorder %v1328, %v1364
    %vm1733 = vcmp.eq.s32.totalorder %v1329, %v1361
    %vm1734 = vcmp.eq.s32.totalorder %v1329, %v1362
    %vm1735 = vcmp.eq.s32.totalorder %v1329, %v1363
    %vm1736 = vcmp.eq.s32.totalorder %v1329, %v1364
    %vm1737 = vcmp.eq.s32.totalorder %v1330, %v1361
    %vm1738 = vcmp.eq.s32.totalorder %v1330, %v1362
    %vm1739 = vcmp.eq.s32.totalorder %v1330, %v1363
    %vm1740 = vcmp.eq.s32.totalorder %v1330, %v1364
    %vm1741 = vcmp.eq.s32.totalorder %v1331, %v1361
    %vm1742 = vcmp.eq.s32.totalorder %v1331, %v1362
    %vm1743 = vcmp.eq.s32.totalorder %v1331, %v1363
    %vm1744 = vcmp.eq.s32.totalorder %v1331, %v1364
    %vm1745 = vcmp.eq.s32.totalorder %v1332, %v1361
    %vm1746 = vcmp.eq.s32.totalorder %v1332, %v1362
    %vm1747 = vcmp.eq.s32.totalorder %v1332, %v1363
    %vm1748 = vcmp.eq.s32.totalorder %v1332, %v1364
    %vm1749 = vcmp.eq.s32.totalorder %v1333, %v1361
    %vm1750 = vcmp.eq.s32.totalorder %v1333, %v1362
    %vm1751 = vcmp.eq.s32.totalorder %v1333, %v1363
    %vm1752 = vcmp.eq.s32.totalorder %v1333, %v1364
    %vm1753 = vcmp.eq.s32.totalorder %v1334, %v1361
    %vm1754 = vcmp.eq.s32.totalorder %v1334, %v1362
    %vm1755 = vcmp.eq.s32.totalorder %v1334, %v1363
    %vm1756 = vcmp.eq.s32.totalorder %v1334, %v1364
    %vm1757 = vcmp.eq.s32.totalorder %v1335, %v1361
    %vm1758 = vcmp.eq.s32.totalorder %v1335, %v1362
    %vm1759 = vcmp.eq.s32.totalorder %v1335, %v1363
    %vm1760 = vcmp.eq.s32.totalorder %v1335, %v1364
    %vm1761 = vcmp.eq.s32.totalorder %v1336, %v1361
    %vm1762 = vcmp.eq.s32.totalorder %v1336, %v1362
    %vm1763 = vcmp.eq.s32.totalorder %v1336, %v1363
    %vm1764 = vcmp.eq.s32.totalorder %v1336, %v1364
    %v1765 = vsel %vm1365, 1.0, 0.0
    %v1766 = vsel %vm1366, 1.0, 0.0
    %v1767 = vsel %vm1367, 1.0, 0.0
    %v1768 = vsel %vm1368, 1.0, 0.0
    %v1769 = vsel %vm1369, 1.0, 0.0
    %v1770 = vsel %vm1370, 1.0, 0.0
    %v1771 = vsel %vm1371, 1.0, 0.0
    %v1772 = vsel %vm1372, 1.0, 0.0
    %v1773 = vsel %vm1373, 1.0, 0.0
    %v1774 = vsel %vm1374, 1.0, 0.0
    %v1775 = vsel %vm1375, 1.0, 0.0
    %v1776 = vsel %vm1376, 1.0, 0.0
    %v1777 = vsel %vm1377, 1.0, 0.0
    %v1778 = vsel %vm1378, 1.0, 0.0
    %v1779 = vsel %vm1379, 1.0, 0.0
    %v1780 = vsel %vm1380, 1.0, 0.0
    %v1781 = vsel %vm1381, 1.0, 0.0
    %v1782 = vsel %vm1382, 1.0, 0.0
    %v1783 = vsel %vm1383, 1.0, 0.0
    %v1784 = vsel %vm1384, 1.0, 0.0
    %v1785 = vsel %vm1385, 1.0, 0.0
    %v1786 = vsel %vm1386, 1.0, 0.0
    %v1787 = vsel %vm1387, 1.0, 0.0
    %v1788 = vsel %vm1388, 1.0, 0.0
    %v1789 = vsel %vm1389, 1.0, 0.0
    %v1790 = vsel %vm1390, 1.0, 0.0
    %v1791 = vsel %vm1391, 1.0, 0.0
    %v1792 = vsel %vm1392, 1.0, 0.0
    %v1793 = vsel %vm1393, 1.0, 0.0
    %v1794 = vsel %vm1394, 1.0, 0.0
    %v1795 = vsel %vm1395, 1.0, 0.0
    %v1796 = vsel %vm1396, 1.0, 0.0
    %v1797 = vsel %vm1397, 1.0, 0.0
    %v1798 = vsel %vm1398, 1.0, 0.0
    %v1799 = vsel %vm1399, 1.0, 0.0
    %v1800 = vsel %vm1400, 1.0, 0.0
    %v1801 = vsel %vm1401, 1.0, 0.0
    %v1802 = vsel %vm1402, 1.0, 0.0
    %v1803 = vsel %vm1403, 1.0, 0.0
    %v1804 = vsel %vm1404, 1.0, 0.0
    %v1805 = vsel %vm1405, 1.0, 0.0
    %v1806 = vsel %vm1406, 1.0, 0.0
    %v1807 = vsel %vm1407, 1.0, 0.0
    %v1808 = vsel %vm1408, 1.0, 0.0
    %v1809 = vsel %vm1409, 1.0, 0.0
    %v1810 = vsel %vm1410, 1.0, 0.0
    %v1811 = vsel %vm1411, 1.0, 0.0
    %v1812 = vsel %vm1412, 1.0, 0.0
    %v1813 = vsel %vm1413, 1.0, 0.0
    %v1814 = vsel %vm1414, 1.0, 0.0
    %v1815 = vsel %vm1415, 1.0, 0.0
    %v1816 = vsel %vm1416, 1.0, 0.0
    %v1817 = vsel %vm1417, 1.0, 0.0
    %v1818 = vsel %vm1418, 1.0, 0.0
    %v1819 = vsel %vm1419, 1.0, 0.0
    %v1820 = vsel %vm1420, 1.0, 0.0
    %v1821 = vsel %vm1421, 1.0, 0.0
    %v1822 = vsel %vm1422, 1.0, 0.0
    %v1823 = vsel %vm1423, 1.0, 0.0
    %v1824 = vsel %vm1424, 1.0, 0.0
    %v1825 = vsel %vm1425, 1.0, 0.0
    %v1826 = vsel %vm1426, 1.0, 0.0
    %v1827 = vsel %vm1427, 1.0, 0.0
    %v1828 = vsel %vm1428, 1.0, 0.0
    %v1829 = vsel %vm1429, 1.0, 0.0
    %v1830 = vsel %vm1430, 1.0, 0.0
    %v1831 = vsel %vm1431, 1.0, 0.0
    %v1832 = vsel %vm1432, 1.0, 0.0
    %v1833 = vsel %vm1433, 1.0, 0.0
    %v1834 = vsel %vm1434, 1.0, 0.0
    %v1835 = vsel %vm1435, 1.0, 0.0
    %v1836 = vsel %vm1436, 1.0, 0.0
    %v1837 = vsel %vm1437, 1.0, 0.0
    %v1838 = vsel %vm1438, 1.0, 0.0
    %v1839 = vsel %vm1439, 1.0, 0.0
    %v1840 = vsel %vm1440, 1.0, 0.0
    %v1841 = vsel %vm1441, 1.0, 0.0
    %v1842 = vsel %vm1442, 1.0, 0.0
    %v1843 = vsel %vm1443, 1.0, 0.0
    %v1844 = vsel %vm1444, 1.0, 0.0
    %v1845 = vsel %vm1445, 1.0, 0.0
    %v1846 = vsel %vm1446, 1.0, 0.0
    %v1847 = vsel %vm1447, 1.0, 0.0
    %v1848 = vsel %vm1448, 1.0, 0.0
    %v1849 = vsel %vm1449, 1.0, 0.0
    %v1850 = vsel %vm1450, 1.0, 0.0
    %v1851 = vsel %vm1451, 1.0, 0.0
    %v1852 = vsel %vm1452, 1.0, 0.0
    %v1853 = vsel %vm1453, 1.0, 0.0
    %v1854 = vsel %vm1454, 1.0, 0.0
    %v1855 = vsel %vm1455, 1.0, 0.0
    %v1856 = vsel %vm1456, 1.0, 0.0
    %v1857 = vsel %vm1457, 1.0, 0.0
    %v1858 = vsel %vm1458, 1.0, 0.0
    %v1859 = vsel %vm1459, 1.0, 0.0
    %v1860 = vsel %vm1460, 1.0, 0.0
    %v1861 = vsel %vm1461, 1.0, 0.0
    %v1862 = vsel %vm1462, 1.0, 0.0
    %v1863 = vsel %vm1463, 1.0, 0.0
    %v1864 = vsel %vm1464, 1.0, 0.0
    %v1865 = vsel %vm1465, 1.0, 0.0
    %v1866 = vsel %vm1466, 1.0, 0.0
    %v1867 = vsel %vm1467, 1.0, 0.0
    %v1868 = vsel %vm1468, 1.0, 0.0
    %v1869 = vsel %vm1469, 1.0, 0.0
    %v1870 = vsel %vm1470, 1.0, 0.0
    %v1871 = vsel %vm1471, 1.0, 0.0
    %v1872 = vsel %vm1472, 1.0, 0.0
    %v1873 = vsel %vm1473, 1.0, 0.0
    %v1874 = vsel %vm1474, 1.0, 0.0
    %v1875 = vsel %vm1475, 1.0, 0.0
    %v1876 = vsel %vm1476, 1.0, 0.0
    %v1877 = vsel %vm1477, 1.0, 0.0
    %v1878 = vsel %vm1478, 1.0, 0.0
    %v1879 = vsel %vm1479, 1.0, 0.0
    %v1880 = vsel %vm1480, 1.0, 0.0
    %v1881 = vsel %vm1481, 1.0, 0.0
    %v1882 = vsel %vm1482, 1.0, 0.0
    %v1883 = vsel %vm1483, 1.0, 0.0
    %v1884 = vsel %vm1484, 1.0, 0.0
    %v1885 = vsel %vm1485, 1.0, 0.0
    %v1886 = vsel %vm1486, 1.0, 0.0
    %v1887 = vsel %vm1487, 1.0, 0.0
    %v1888 = vsel %vm1488, 1.0, 0.0
    %v1889 = vsel %vm1489, 1.0, 0.0
    %v1890 = vsel %vm1490, 1.0, 0.0
    %v1891 = vsel %vm1491, 1.0, 0.0
    %v1892 = vsel %vm1492, 1.0, 0.0
    %v1893 = vsel %vm1493, 1.0, 0.0
    %v1894 = vsel %vm1494, 1.0, 0.0
    %v1895 = vsel %vm1495, 1.0, 0.0
    %v1896 = vsel %vm1496, 1.0, 0.0
    %v1897 = vsel %vm1497, 1.0, 0.0
    %v1898 = vsel %vm1498, 1.0, 0.0
    %v1899 = vsel %vm1499, 1.0, 0.0
    %v1900 = vsel %vm1500, 1.0, 0.0
    %v1901 = vsel %vm1501, 1.0, 0.0
    %v1902 = vsel %vm1502, 1.0, 0.0
    %v1903 = vsel %vm1503, 1.0, 0.0
    %v1904 = vsel %vm1504, 1.0, 0.0
    %v1905 = vsel %vm1505, 1.0, 0.0
    %v1906 = vsel %vm1506, 1.0, 0.0
    %v1907 = vsel %vm1507, 1.0, 0.0
    %v1908 = vsel %vm1508, 1.0, 0.0
    %v1909 = vsel %vm1509, 1.0, 0.0
    %v1910 = vsel %vm1510, 1.0, 0.0
    %v1911 = vsel %vm1511, 1.0, 0.0
    %v1912 = vsel %vm1512, 1.0, 0.0
    %v1913 = vsel %vm1513, 1.0, 0.0
    %v1914 = vsel %vm1514, 1.0, 0.0
    %v1915 = vsel %vm1515, 1.0, 0.0
    %v1916 = vsel %vm1516, 1.0, 0.0
    %v1917 = vsel %vm1517, 1.0, 0.0
    %v1918 = vsel %vm1518, 1.0, 0.0
    %v1919 = vsel %vm1519, 1.0, 0.0
    %v1920 = vsel %vm1520, 1.0, 0.0
    %v1921 = vsel %vm1521, 1.0, 0.0
    %v1922 = vsel %vm1522, 1.0, 0.0
    %v1923 = vsel %vm1523, 1.0, 0.0
    %v1924 = vsel %vm1524, 1.0, 0.0
    %v1925 = vsel %vm1525, 1.0, 0.0
    %v1926 = vsel %vm1526, 1.0, 0.0
    %v1927 = vsel %vm1527, 1.0, 0.0
    %v1928 = vsel %vm1528, 1.0, 0.0
    %v1929 = vsel %vm1529, 1.0, 0.0
    %v1930 = vsel %vm1530, 1.0, 0.0
    %v1931 = vsel %vm1531, 1.0, 0.0
    %v1932 = vsel %vm1532, 1.0, 0.0
    %v1933 = vsel %vm1533, 1.0, 0.0
    %v1934 = vsel %vm1534, 1.0, 0.0
    %v1935 = vsel %vm1535, 1.0, 0.0
    %v1936 = vsel %vm1536, 1.0, 0.0
    %v1937 = vsel %vm1537, 1.0, 0.0
    %v1938 = vsel %vm1538, 1.0, 0.0
    %v1939 = vsel %vm1539, 1.0, 0.0
    %v1940 = vsel %vm1540, 1.0, 0.0
    %v1941 = vsel %vm1541, 1.0, 0.0
    %v1942 = vsel %vm1542, 1.0, 0.0
    %v1943 = vsel %vm1543, 1.0, 0.0
    %v1944 = vsel %vm1544, 1.0, 0.0
    %v1945 = vsel %vm1545, 1.0, 0.0
    %v1946 = vsel %vm1546, 1.0, 0.0
    %v1947 = vsel %vm1547, 1.0, 0.0
    %v1948 = vsel %vm1548, 1.0, 0.0
    %v1949 = vsel %vm1549, 1.0, 0.0
    %v1950 = vsel %vm1550, 1.0, 0.0
    %v1951 = vsel %vm1551, 1.0, 0.0
    %v1952 = vsel %vm1552, 1.0, 0.0
    %v1953 = vsel %vm1553, 1.0, 0.0
    %v1954 = vsel %vm1554, 1.0, 0.0
    %v1955 = vsel %vm1555, 1.0, 0.0
    %v1956 = vsel %vm1556, 1.0, 0.0
    %v1957 = vsel %vm1557, 1.0, 0.0
    %v1958 = vsel %vm1558, 1.0, 0.0
    %v1959 = vsel %vm1559, 1.0, 0.0
    %v1960 = vsel %vm1560, 1.0, 0.0
    %v1961 = vsel %vm1561, 1.0, 0.0
    %v1962 = vsel %vm1562, 1.0, 0.0
    %v1963 = vsel %vm1563, 1.0, 0.0
    %v1964 = vsel %vm1564, 1.0, 0.0
    %v1965 = vsel %vm1565, 1.0, 0.0
    %v1966 = vsel %vm1566, 1.0, 0.0
    %v1967 = vsel %vm1567, 1.0, 0.0
    %v1968 = vsel %vm1568, 1.0, 0.0
    %v1969 = vsel %vm1569, 1.0, 0.0
    %v1970 = vsel %vm1570, 1.0, 0.0
    %v1971 = vsel %vm1571, 1.0, 0.0
    %v1972 = vsel %vm1572, 1.0, 0.0
    %v1973 = vsel %vm1573, 1.0, 0.0
    %v1974 = vsel %vm1574, 1.0, 0.0
    %v1975 = vsel %vm1575, 1.0, 0.0
    %v1976 = vsel %vm1576, 1.0, 0.0
    %v1977 = vsel %vm1577, 1.0, 0.0
    %v1978 = vsel %vm1578, 1.0, 0.0
    %v1979 = vsel %vm1579, 1.0, 0.0
    %v1980 = vsel %vm1580, 1.0, 0.0
    %v1981 = vsel %vm1581, 1.0, 0.0
    %v1982 = vsel %vm1582, 1.0, 0.0
    %v1983 = vsel %vm1583, 1.0, 0.0
    %v1984 = vsel %vm1584, 1.0, 0.0
    %v1985 = vsel %vm1585, 1.0, 0.0
    %v1986 = vsel %vm1586, 1.0, 0.0
    %v1987 = vsel %vm1587, 1.0, 0.0
    %v1988 = vsel %vm1588, 1.0, 0.0
    %v1989 = vsel %vm1589, 1.0, 0.0
    %v1990 = vsel %vm1590, 1.0, 0.0
    %v1991 = vsel %vm1591, 1.0, 0.0
    %v1992 = vsel %vm1592, 1.0, 0.0
    %v1993 = vsel %vm1593, 1.0, 0.0
    %v1994 = vsel %vm1594, 1.0, 0.0
    %v1995 = vsel %vm1595, 1.0, 0.0
    %v1996 = vsel %vm1596, 1.0, 0.0
    %v1997 = vsel %vm1597, 1.0, 0.0
    %v1998 = vsel %vm1598, 1.0, 0.0
    %v1999 = vsel %vm1599, 1.0, 0.0
    %v2000 = vsel %vm1600, 1.0, 0.0
    %v2001 = vsel %vm1601, 1.0, 0.0
    %v2002 = vsel %vm1602, 1.0, 0.0
    %v2003 = vsel %vm1603, 1.0, 0.0
    %v2004 = vsel %vm1604, 1.0, 0.0
    %v2005 = vsel %vm1605, 1.0, 0.0
    %v2006 = vsel %vm1606, 1.0, 0.0
    %v2007 = vsel %vm1607, 1.0, 0.0
    %v2008 = vsel %vm1608, 1.0, 0.0
    %v2009 = vsel %vm1609, 1.0, 0.0
    %v2010 = vsel %vm1610, 1.0, 0.0
    %v2011 = vsel %vm1611, 1.0, 0.0
    %v2012 = vsel %vm1612, 1.0, 0.0
    %v2013 = vsel %vm1613, 1.0, 0.0
    %v2014 = vsel %vm1614, 1.0, 0.0
    %v2015 = vsel %vm1615, 1.0, 0.0
    %v2016 = vsel %vm1616, 1.0, 0.0
    %v2017 = vsel %vm1617, 1.0, 0.0
    %v2018 = vsel %vm1618, 1.0, 0.0
    %v2019 = vsel %vm1619, 1.0, 0.0
    %v2020 = vsel %vm1620, 1.0, 0.0
    %v2021 = vsel %vm1621, 1.0, 0.0
    %v2022 = vsel %vm1622, 1.0, 0.0
    %v2023 = vsel %vm1623, 1.0, 0.0
    %v2024 = vsel %vm1624, 1.0, 0.0
    %v2025 = vsel %vm1625, 1.0, 0.0
    %v2026 = vsel %vm1626, 1.0, 0.0
    %v2027 = vsel %vm1627, 1.0, 0.0
    %v2028 = vsel %vm1628, 1.0, 0.0
    %v2029 = vsel %vm1629, 1.0, 0.0
    %v2030 = vsel %vm1630, 1.0, 0.0
    %v2031 = vsel %vm1631, 1.0, 0.0
    %v2032 = vsel %vm1632, 1.0, 0.0
    %v2033 = vsel %vm1633, 1.0, 0.0
    %v2034 = vsel %vm1634, 1.0, 0.0
    %v2035 = vsel %vm1635, 1.0, 0.0
    %v2036 = vsel %vm1636, 1.0, 0.0
    %v2037 = vsel %vm1637, 1.0, 0.0
    %v2038 = vsel %vm1638, 1.0, 0.0
    %v2039 = vsel %vm1639, 1.0, 0.0
    %v2040 = vsel %vm1640, 1.0, 0.0
    %v2041 = vsel %vm1641, 1.0, 0.0
    %v2042 = vsel %vm1642, 1.0, 0.0
    %v2043 = vsel %vm1643, 1.0, 0.0
    %v2044 = vsel %vm1644, 1.0, 0.0
    %v2045 = vsel %vm1645, 1.0, 0.0
    %v2046 = vsel %vm1646, 1.0, 0.0
    %v2047 = vsel %vm1647, 1.0, 0.0
    %v2048 = vsel %vm1648, 1.0, 0.0
    %v2049 = vsel %vm1649, 1.0, 0.0
    %v2050 = vsel %vm1650, 1.0, 0.0
    %v2051 = vsel %vm1651, 1.0, 0.0
    %v2052 = vsel %vm1652, 1.0, 0.0
    %v2053 = vsel %vm1653, 1.0, 0.0
    %v2054 = vsel %vm1654, 1.0, 0.0
    %v2055 = vsel %vm1655, 1.0, 0.0
    %v2056 = vsel %vm1656, 1.0, 0.0
    %v2057 = vsel %vm1657, 1.0, 0.0
    %v2058 = vsel %vm1658, 1.0, 0.0
    %v2059 = vsel %vm1659, 1.0, 0.0
    %v2060 = vsel %vm1660, 1.0, 0.0
    %v2061 = vsel %vm1661, 1.0, 0.0
    %v2062 = vsel %vm1662, 1.0, 0.0
    %v2063 = vsel %vm1663, 1.0, 0.0
    %v2064 = vsel %vm1664, 1.0, 0.0
    %v2065 = vsel %vm1665, 1.0, 0.0
    %v2066 = vsel %vm1666, 1.0, 0.0
    %v2067 = vsel %vm1667, 1.0, 0.0
    %v2068 = vsel %vm1668, 1.0, 0.0
    %v2069 = vsel %vm1669, 1.0, 0.0
    %v2070 = vsel %vm1670, 1.0, 0.0
    %v2071 = vsel %vm1671, 1.0, 0.0
    %v2072 = vsel %vm1672, 1.0, 0.0
    %v2073 = vsel %vm1673, 1.0, 0.0
    %v2074 = vsel %vm1674, 1.0, 0.0
    %v2075 = vsel %vm1675, 1.0, 0.0
    %v2076 = vsel %vm1676, 1.0, 0.0
    %v2077 = vsel %vm1677, 1.0, 0.0
    %v2078 = vsel %vm1678, 1.0, 0.0
    %v2079 = vsel %vm1679, 1.0, 0.0
    %v2080 = vsel %vm1680, 1.0, 0.0
    %v2081 = vsel %vm1681, 1.0, 0.0
    %v2082 = vsel %vm1682, 1.0, 0.0
    %v2083 = vsel %vm1683, 1.0, 0.0
    %v2084 = vsel %vm1684, 1.0, 0.0
    %v2085 = vsel %vm1685, 1.0, 0.0
    %v2086 = vsel %vm1686, 1.0, 0.0
    %v2087 = vsel %vm1687, 1.0, 0.0
    %v2088 = vsel %vm1688, 1.0, 0.0
    %v2089 = vsel %vm1689, 1.0, 0.0
    %v2090 = vsel %vm1690, 1.0, 0.0
    %v2091 = vsel %vm1691, 1.0, 0.0
    %v2092 = vsel %vm1692, 1.0, 0.0
    %v2093 = vsel %vm1693, 1.0, 0.0
    %v2094 = vsel %vm1694, 1.0, 0.0
    %v2095 = vsel %vm1695, 1.0, 0.0
    %v2096 = vsel %vm1696, 1.0, 0.0
    %v2097 = vsel %vm1697, 1.0, 0.0
    %v2098 = vsel %vm1698, 1.0, 0.0
    %v2099 = vsel %vm1699, 1.0, 0.0
    %v2100 = vsel %vm1700, 1.0, 0.0
    %v2101 = vsel %vm1701, 1.0, 0.0
    %v2102 = vsel %vm1702, 1.0, 0.0
    %v2103 = vsel %vm1703, 1.0, 0.0
    %v2104 = vsel %vm1704, 1.0, 0.0
    %v2105 = vsel %vm1705, 1.0, 0.0
    %v2106 = vsel %vm1706, 1.0, 0.0
    %v2107 = vsel %vm1707, 1.0, 0.0
    %v2108 = vsel %vm1708, 1.0, 0.0
    %v2109 = vsel %vm1709, 1.0, 0.0
    %v2110 = vsel %vm1710, 1.0, 0.0
    %v2111 = vsel %vm1711, 1.0, 0.0
    %v2112 = vsel %vm1712, 1.0, 0.0
    %v2113 = vsel %vm1713, 1.0, 0.0
    %v2114 = vsel %vm1714, 1.0, 0.0
    %v2115 = vsel %vm1715, 1.0, 0.0
    %v2116 = vsel %vm1716, 1.0, 0.0
    %v2117 = vsel %vm1717, 1.0, 0.0
    %v2118 = vsel %vm1718, 1.0, 0.0
    %v2119 = vsel %vm1719, 1.0, 0.0
    %v2120 = vsel %vm1720, 1.0, 0.0
    %v2121 = vsel %vm1721, 1.0, 0.0
    %v2122 = vsel %vm1722, 1.0, 0.0
    %v2123 = vsel %vm1723, 1.0, 0.0
    %v2124 = vsel %vm1724, 1.0, 0.0
    %v2125 = vsel %vm1725, 1.0, 0.0
    %v2126 = vsel %vm1726, 1.0, 0.0
    %v2127 = vsel %vm1727, 1.0, 0.0
    %v2128 = vsel %vm1728, 1.0, 0.0
    %v2129 = vsel %vm1729, 1.0, 0.0
    %v2130 = vsel %vm1730, 1.0, 0.0
    %v2131 = vsel %vm1731, 1.0, 0.0
    %v2132 = vsel %vm1732, 1.0, 0.0
    %v2133 = vsel %vm1733, 1.0, 0.0
    %v2134 = vsel %vm1734, 1.0, 0.0
    %v2135 = vsel %vm1735, 1.0, 0.0
    %v2136 = vsel %vm1736, 1.0, 0.0
    %v2137 = vsel %vm1737, 1.0, 0.0
    %v2138 = vsel %vm1738, 1.0, 0.0
    %v2139 = vsel %vm1739, 1.0, 0.0
    %v2140 = vsel %vm1740, 1.0, 0.0
    %v2141 = vsel %vm1741, 1.0, 0.0
    %v2142 = vsel %vm1742, 1.0, 0.0
    %v2143 = vsel %vm1743, 1.0, 0.0
    %v2144 = vsel %vm1744, 1.0, 0.0
    %v2145 = vsel %vm1745, 1.0, 0.0
    %v2146 = vsel %vm1746, 1.0, 0.0
    %v2147 = vsel %vm1747, 1.0, 0.0
    %v2148 = vsel %vm1748, 1.0, 0.0
    %v2149 = vsel %vm1749, 1.0, 0.0
    %v2150 = vsel %vm1750, 1.0, 0.0
    %v2151 = vsel %vm1751, 1.0, 0.0
    %v2152 = vsel %vm1752, 1.0, 0.0
    %v2153 = vsel %vm1753, 1.0, 0.0
    %v2154 = vsel %vm1754, 1.0, 0.0
    %v2155 = vsel %vm1755, 1.0, 0.0
    %v2156 = vsel %vm1756, 1.0, 0.0
    %v2157 = vsel %vm1757, 1.0, 0.0
    %v2158 = vsel %vm1758, 1.0, 0.0
    %v2159 = vsel %vm1759, 1.0, 0.0
    %v2160 = vsel %vm1760, 1.0, 0.0
    %v2161 = vsel %vm1761, 1.0, 0.0
    %v2162 = vsel %vm1762, 1.0, 0.0
    %v2163 = vsel %vm1763, 1.0, 0.0
    %v2164 = vsel %vm1764, 1.0, 0.0
    %vm2165 = vcmask 220160
    %v2167 = vsel %vm2165, %v1214, 0
    %v2170 = vsel %vm2165, %v1221, 0
    %v2173 = vsel %vm2165, %v1228, 0
    %v2176 = vsel %vm2165, %v1235, 0
    %vm2178 = vcmask 1042432
    %v2180 = vsel %vm2178, %v2161, 0
    %v2183 = vsel %vm2178, %v2162, 0
    %v2186 = vsel %vm2178, %v2163, 0
    %v2189 = vsel %vm2178, %v2164, 0
    %2191 = vmatprep.subr.mxu0 %v1766
    %2192 = vmatpush1.msra.mxu0 %v1765
    %2193 = vmatprep.subr.mxu0 %v1770
    %2194 = vmatpush1.msra.mxu0 %v1769
    %2195 = vmatprep.subr.mxu0 %v1774
    %2196 = vmatpush1.msra.mxu0 %v1773
    %2197 = vmatprep.subr.mxu0 %v1778
    %2198 = vmatpush1.msra.mxu0 %v1777
    %2199 = vmatprep.subr.mxu0 %v1782
    %2200 = vmatpush1.msra.mxu0 %v1781
    %2201 = vmatprep.subr.mxu0 %v1786
    %2202 = vmatpush1.msra.mxu0 %v1785
    %2203 = vmatprep.subr.mxu0 %v1790
    %2204 = vmatpush1.msra.mxu0 %v1789
    %2205 = vmatprep.subr.mxu0 %v1794
    %2206 = vmatpush1.msra.mxu0 %v1793
    %2207 = vmatprep.subr.mxu0 %v1798
    %2208 = vmatpush1.msra.mxu0 %v1797
    %2209 = vmatprep.subr.mxu0 %v1802
    %2210 = vmatpush1.msra.mxu0 %v1801
    %2211 = vmatprep.subr.mxu0 %v1806
    %2212 = vmatpush1.msra.mxu0 %v1805
    %2213 = vmatprep.subr.mxu0 %v1810
    %2214 = vmatpush1.msra.mxu0 %v1809
    %2215 = vmatprep.subr.mxu0 %v1814
    %2216 = vmatpush1.msra.mxu0 %v1813
    %2217 = vmatprep.subr.mxu0 %v1818
    %2218 = vmatpush1.msra.mxu0 %v1817
    %2219 = vmatprep.subr.mxu0 %v1822
    %2220 = vmatpush1.msra.mxu0 %v1821
    %2221 = vmatprep.subr.mxu0 %v1826
    %2222 = vmatpush1.msra.mxu0 %v1825
    %2223 = vmatprep.subr.mxu0 %v1830
    %2224 = vmatpush1.msra.mxu0 %v1829
    %2225 = vmatprep.subr.mxu0 %v1834
    %2226 = vmatpush1.msra.mxu0 %v1833
    %2227 = vmatprep.subr.mxu0 %v1838
    %2228 = vmatpush1.msra.mxu0 %v1837
    %2229 = vmatprep.subr.mxu0 %v1842
    %2230 = vmatpush1.msra.mxu0 %v1841
    %2231 = vmatprep.subr.mxu0 %v1846
    %2232 = vmatpush1.msra.mxu0 %v1845
    %2233 = vmatprep.subr.mxu0 %v1850
    %2234 = vmatpush1.msra.mxu0 %v1849
    %2235 = vmatprep.subr.mxu0 %v1854
    %2236 = vmatpush1.msra.mxu0 %v1853
    %2237 = vmatprep.subr.mxu0 %v1858
    %2238 = vmatpush1.msra.mxu0 %v1857
    %2239 = vmatprep.subr.mxu0 %v1862
    %2240 = vmatpush1.msra.mxu0 %v1861
    %2241 = vmatprep.subr.mxu0 %v1866
    %2242 = vmatpush1.msra.mxu0 %v1865
    %2243 = vmatprep.subr.mxu0 %v1870
    %2244 = vmatpush1.msra.mxu0 %v1869
    %2245 = vmatprep.subr.mxu0 %v1874
    %2246 = vmatpush1.msra.mxu0 %v1873
    %2247 = vmatprep.subr.mxu0 %v1878
    %2248 = vmatpush1.msra.mxu0 %v1877
    %2249 = vmatprep.subr.mxu0 %v1882
    %2250 = vmatpush1.msra.mxu0 %v1881
    %2251 = vmatprep.subr.mxu0 %v1886
    %2252 = vmatpush1.msra.mxu0 %v1885
    %2253 = vmatprep.subr.mxu0 %v1890
    %2254 = vmatpush1.msra.mxu0 %v1889
    %2255 = vmatprep.mubr.f32.mxu0 %v1209
    %2256 = vmatmul.mubr.f32.gmra.mrb[0].mxu0 %v1208
    %v2257 = vpop.f32.mrb[0].mxu0
    %v2258 = vadd.f32 0.0, %v2257
    %v2259 = vpop.f32.mrb[0].mxu0
    %v2260 = vadd.f32 0.0, %v2259
    %2261 = vmatprep.mubr.f32.mxu0 %v1216
    %2262 = vmatmul.mubr.f32.gmra.mrb[0].mxu0 %v1215
    %v2263 = vpop.f32.mrb[0].mxu0
    %v2264 = vadd.f32 0.0, %v2263
    %v2265 = vpop.f32.mrb[0].mxu0
    %v2266 = vadd.f32 0.0, %v2265
    %2267 = vmatprep.mubr.f32.mxu0 %v1223
    %2268 = vmatmul.mubr.f32.gmra.mrb[0].mxu0 %v1222
    %v2269 = vpop.f32.mrb[0].mxu0
    %v2270 = vadd.f32 0.0, %v2269
    %v2271 = vpop.f32.mrb[0].mxu0
    %v2272 = vadd.f32 0.0, %v2271
    %2273 = vmatprep.mubr.f32.mxu0 %v1230
    %2274 = vmatmul.mubr.f32.gmra.mrb[0].mxu0 %v1229
    %v2275 = vpop.f32.mrb[0].mxu0
    %v2276 = vadd.f32 0.0, %v2275
    %v2277 = vpop.f32.mrb[0].mxu0
    %v2278 = vadd.f32 0.0, %v2277
    %2279 = vdwg.mxu0
    %2280 = vmatprep.subr.mxu0 %v1894
    %2281 = vmatpush1.msra.mxu0 %v1893
    %2282 = vmatprep.subr.mxu0 %v1898
    %2283 = vmatpush1.msra.mxu0 %v1897
    %2284 = vmatprep.subr.mxu0 %v1902
    %2285 = vmatpush1.msra.mxu0 %v1901
    %2286 = vmatprep.subr.mxu0 %v1906
    %2287 = vmatpush1.msra.mxu0 %v1905
    %2288 = vmatprep.subr.mxu0 %v1910
    %2289 = vmatpush1.msra.mxu0 %v1909
    %2290 = vmatprep.subr.mxu0 %v1914
    %2291 = vmatpush1.msra.mxu0 %v1913
    %2292 = vmatprep.subr.mxu0 %v1918
    %2293 = vmatpush1.msra.mxu0 %v1917
    %2294 = vmatprep.subr.mxu0 %v1922
    %2295 = vmatpush1.msra.mxu0 %v1921
    %2296 = vmatprep.subr.mxu0 %v1926
    %2297 = vmatpush1.msra.mxu0 %v1925
    %2298 = vmatprep.subr.mxu0 %v1930
    %2299 = vmatpush1.msra.mxu0 %v1929
    %2300 = vmatprep.subr.mxu0 %v1934
    %2301 = vmatpush1.msra.mxu0 %v1933
    %2302 = vmatprep.subr.mxu0 %v1938
    %2303 = vmatpush1.msra.mxu0 %v1937
    %2304 = vmatprep.subr.mxu0 %v1942
    %2305 = vmatpush1.msra.mxu0 %v1941
    %2306 = vmatprep.subr.mxu0 %v1946
    %2307 = vmatpush1.msra.mxu0 %v1945
    %2308 = vmatprep.subr.mxu0 %v1950
    %2309 = vmatpush1.msra.mxu0 %v1949
    %2310 = vmatprep.subr.mxu0 %v1954
    %2311 = vmatpush1.msra.mxu0 %v1953
    %2312 = vmatprep.subr.mxu0 %v1958
    %2313 = vmatpush1.msra.mxu0 %v1957
    %2314 = vmatprep.subr.mxu0 %v1962
    %2315 = vmatpush1.msra.mxu0 %v1961
    %2316 = vmatprep.subr.mxu0 %v1966
    %2317 = vmatpush1.msra.mxu0 %v1965
    %2318 = vmatprep.subr.mxu0 %v1970
    %2319 = vmatpush1.msra.mxu0 %v1969
    %2320 = vmatprep.subr.mxu0 %v1974
    %2321 = vmatpush1.msra.mxu0 %v1973
    %2322 = vmatprep.subr.mxu0 %v1978
    %2323 = vmatpush1.msra.mxu0 %v1977
    %2324 = vmatprep.subr.mxu0 %v1982
    %2325 = vmatpush1.msra.mxu0 %v1981
    %2326 = vmatprep.subr.mxu0 %v1986
    %2327 = vmatpush1.msra.mxu0 %v1985
    %2328 = vmatprep.subr.mxu0 %v1990
    %2329 = vmatpush1.msra.mxu0 %v1989
    %2330 = vmatprep.subr.mxu0 %v1994
    %2331 = vmatpush1.msra.mxu0 %v1993
    %2332 = vmatprep.subr.mxu0 %v1998
    %2333 = vmatpush1.msra.mxu0 %v1997
    %2334 = vmatprep.subr.mxu0 %v2002
    %2335 = vmatpush1.msra.mxu0 %v2001
    %2336 = vmatprep.subr.mxu0 %v2006
    %2337 = vmatpush1.msra.mxu0 %v2005
    %2338 = vmatprep.subr.mxu0 %v2010
    %2339 = vmatpush1.msra.mxu0 %v2009
    %2340 = vmatprep.subr.mxu0 %v2014
    %2341 = vmatpush1.msra.mxu0 %v2013
    %2342 = vmatprep.subr.mxu0 %v2018
    %2343 = vmatpush1.msra.mxu0 %v2017
    %2344 = vmatprep.mubr.f32.mxu0 %v1211
    %2345 = vmatmul.mubr.f32.gmra.mrb[0].mxu0 %v1210
    %v2346 = vpop.f32.mrb[0].mxu0
    %v2347 = vadd.f32 %v2258, %v2346
    %v2348 = vpop.f32.mrb[0].mxu0
    %v2349 = vadd.f32 %v2260, %v2348
    %2350 = vmatprep.mubr.f32.mxu0 %v1218
    %2351 = vmatmul.mubr.f32.gmra.mrb[0].mxu0 %v1217
    %v2352 = vpop.f32.mrb[0].mxu0
    %v2353 = vadd.f32 %v2264, %v2352
    %v2354 = vpop.f32.mrb[0].mxu0
    %v2355 = vadd.f32 %v2266, %v2354
    %2356 = vmatprep.mubr.f32.mxu0 %v1225
    %2357 = vmatmul.mubr.f32.gmra.mrb[0].mxu0 %v1224
    %v2358 = vpop.f32.mrb[0].mxu0
    %v2359 = vadd.f32 %v2270, %v2358
    %v2360 = vpop.f32.mrb[0].mxu0
    %v2361 = vadd.f32 %v2272, %v2360
    %2362 = vmatprep.mubr.f32.mxu0 %v1232
    %2363 = vmatmul.mubr.f32.gmra.mrb[0].mxu0 %v1231
    %v2364 = vpop.f32.mrb[0].mxu0
    %v2365 = vadd.f32 %v2276, %v2364
    %v2366 = vpop.f32.mrb[0].mxu0
    %v2367 = vadd.f32 %v2278, %v2366
    %2368 = vdwg.mxu0
    %2369 = vmatprep.subr.mxu0 %v2022
    %2370 = vmatpush1.msra.mxu0 %v2021
    %2371 = vmatprep.subr.mxu0 %v2026
    %2372 = vmatpush1.msra.mxu0 %v2025
    %2373 = vmatprep.subr.mxu0 %v2030
    %2374 = vmatpush1.msra.mxu0 %v2029
    %2375 = vmatprep.subr.mxu0 %v2034
    %2376 = vmatpush1.msra.mxu0 %v2033
    %2377 = vmatprep.subr.mxu0 %v2038
    %2378 = vmatpush1.msra.mxu0 %v2037
    %2379 = vmatprep.subr.mxu0 %v2042
    %2380 = vmatpush1.msra.mxu0 %v2041
    %2381 = vmatprep.subr.mxu0 %v2046
    %2382 = vmatpush1.msra.mxu0 %v2045
    %2383 = vmatprep.subr.mxu0 %v2050
    %2384 = vmatpush1.msra.mxu0 %v2049
    %2385 = vmatprep.subr.mxu0 %v2054
    %2386 = vmatpush1.msra.mxu0 %v2053
    %2387 = vmatprep.subr.mxu0 %v2058
    %2388 = vmatpush1.msra.mxu0 %v2057
    %2389 = vmatprep.subr.mxu0 %v2062
    %2390 = vmatpush1.msra.mxu0 %v2061
    %2391 = vmatprep.subr.mxu0 %v2066
    %2392 = vmatpush1.msra.mxu0 %v2065
    %2393 = vmatprep.subr.mxu0 %v2070
    %2394 = vmatpush1.msra.mxu0 %v2069
    %2395 = vmatprep.subr.mxu0 %v2074
    %2396 = vmatpush1.msra.mxu0 %v2073
    %2397 = vmatprep.subr.mxu0 %v2078
    %2398 = vmatpush1.msra.mxu0 %v2077
    %2399 = vmatprep.subr.mxu0 %v2082
    %2400 = vmatpush1.msra.mxu0 %v2081
    %2401 = vmatprep.subr.mxu0 %v2086
    %2402 = vmatpush1.msra.mxu0 %v2085
    %2403 = vmatprep.subr.mxu0 %v2090
    %2404 = vmatpush1.msra.mxu0 %v2089
    %2405 = vmatprep.subr.mxu0 %v2094
    %2406 = vmatpush1.msra.mxu0 %v2093
    %2407 = vmatprep.subr.mxu0 %v2098
    %2408 = vmatpush1.msra.mxu0 %v2097
    %2409 = vmatprep.subr.mxu0 %v2102
    %2410 = vmatpush1.msra.mxu0 %v2101
    %2411 = vmatprep.subr.mxu0 %v2106
    %2412 = vmatpush1.msra.mxu0 %v2105
    %2413 = vmatprep.subr.mxu0 %v2110
    %2414 = vmatpush1.msra.mxu0 %v2109
    %2415 = vmatprep.subr.mxu0 %v2114
    %2416 = vmatpush1.msra.mxu0 %v2113
    %2417 = vmatprep.subr.mxu0 %v2118
    %2418 = vmatpush1.msra.mxu0 %v2117
    %2419 = vmatprep.subr.mxu0 %v2122
    %2420 = vmatpush1.msra.mxu0 %v2121
    %2421 = vmatprep.subr.mxu0 %v2126
    %2422 = vmatpush1.msra.mxu0 %v2125
    %2423 = vmatprep.subr.mxu0 %v2130
    %2424 = vmatpush1.msra.mxu0 %v2129
    %2425 = vmatprep.subr.mxu0 %v2134
    %2426 = vmatpush1.msra.mxu0 %v2133
    %2427 = vmatprep.subr.mxu0 %v2138
    %2428 = vmatpush1.msra.mxu0 %v2137
    %2429 = vmatprep.subr.mxu0 %v2142
    %2430 = vmatpush1.msra.mxu0 %v2141
    %2431 = vmatprep.subr.mxu0 %v2146
    %2432 = vmatpush1.msra.mxu0 %v2145
    %2433 = vmatprep.mubr.f32.mxu0 %v1213
    %2434 = vmatmul.mubr.f32.gmra.mrb[0].mxu0 %v1212
    %v2435 = vpop.f32.mrb[0].mxu0
    %v2436 = vadd.f32 %v2347, %v2435
    %v2437 = vpop.f32.mrb[0].mxu0
    %v2438 = vadd.f32 %v2349, %v2437
    %2439 = vmatprep.mubr.f32.mxu0 %v1220
    %2440 = vmatmul.mubr.f32.gmra.mrb[0].mxu0 %v1219
    %v2441 = vpop.f32.mrb[0].mxu0
    %v2442 = vadd.f32 %v2353, %v2441
    %v2443 = vpop.f32.mrb[0].mxu0
    %v2444 = vadd.f32 %v2355, %v2443
    %2445 = vmatprep.mubr.f32.mxu0 %v1227
    %2446 = vmatmul.mubr.f32.gmra.mrb[0].mxu0 %v1226
    %v2447 = vpop.f32.mrb[0].mxu0
    %v2448 = vadd.f32 %v2359, %v2447
    %v2449 = vpop.f32.mrb[0].mxu0
    %v2450 = vadd.f32 %v2361, %v2449
    %2451 = vmatprep.mubr.f32.mxu0 %v1234
    %2452 = vmatmul.mubr.f32.gmra.mrb[0].mxu0 %v1233
    %v2453 = vpop.f32.mrb[0].mxu0
    %v2454 = vadd.f32 %v2365, %v2453
    %v2455 = vpop.f32.mrb[0].mxu0
    %v2456 = vadd.f32 %v2367, %v2455
    %2457 = vdwg.mxu0
    %2458 = vmatprep.subr.mxu0 %v2150
    %2459 = vmatpush1.msra.mxu0 %v2149
    %2460 = vmatprep.subr.mxu0 %v2154
    %2461 = vmatpush1.msra.mxu0 %v2153
    %2462 = vmatprep.subr.mxu0 %v2158
    %2463 = vmatpush1.msra.mxu0 %v2157
    %2464 = vmatprep.subr.mxu0 %v2183
    %2465 = vmatpush1.msra.mxu0 %v2180
    %2466 = vmatprep.subr.mxu0 0.0
    %2467 = vmatpush1.msra.mxu0 0.0
    %2468 = vmatprep.subr.mxu0 0.0
    %2469 = vmatpush1.msra.mxu0 0.0
    %2470 = vmatprep.subr.mxu0 0.0
    %2471 = vmatpush1.msra.mxu0 0.0
    %2472 = vmatprep.subr.mxu0 0.0
    %2473 = vmatpush1.msra.mxu0 0.0
    %2474 = vmatprep.subr.mxu0 0.0
    %2475 = vmatpush1.msra.mxu0 0.0
    %2476 = vmatprep.subr.mxu0 0.0
    %2477 = vmatpush1.msra.mxu0 0.0
    %2478 = vmatprep.subr.mxu0 0.0
    %2479 = vmatpush1.msra.mxu0 0.0
    %2480 = vmatprep.subr.mxu0 0.0
    %2481 = vmatpush1.msra.mxu0 0.0
    %2482 = vmatprep.subr.mxu0 0.0
    %2483 = vmatpush1.msra.mxu0 0.0
    %2484 = vmatprep.subr.mxu0 0.0
    %2485 = vmatpush1.msra.mxu0 0.0
    %2486 = vmatprep.subr.mxu0 0.0
    %2487 = vmatpush1.msra.mxu0 0.0
    %2488 = vmatprep.subr.mxu0 0.0
    %2489 = vmatpush1.msra.mxu0 0.0
    %2490 = vmatprep.subr.mxu0 0.0
    %2491 = vmatpush1.msra.mxu0 0.0
    %2492 = vmatprep.subr.mxu0 0.0
    %2493 = vmatpush1.msra.mxu0 0.0
    %2494 = vmatprep.subr.mxu0 0.0
    %2495 = vmatpush1.msra.mxu0 0.0
    %2496 = vmatprep.subr.mxu0 0.0
    %2497 = vmatpush1.msra.mxu0 0.0
    %2498 = vmatprep.subr.mxu0 0.0
    %2499 = vmatpush1.msra.mxu0 0.0
    %2500 = vmatprep.subr.mxu0 0.0
    %2501 = vmatpush1.msra.mxu0 0.0
    %2502 = vmatprep.subr.mxu0 0.0
    %2503 = vmatpush1.msra.mxu0 0.0
    %2504 = vmatprep.subr.mxu0 0.0
    %2505 = vmatpush1.msra.mxu0 0.0
    %2506 = vmatprep.subr.mxu0 0.0
    %2507 = vmatpush1.msra.mxu0 0.0
    %2508 = vmatprep.subr.mxu0 0.0
    %2509 = vmatpush1.msra.mxu0 0.0
    %2510 = vmatprep.subr.mxu0 0.0
    %2511 = vmatpush1.msra.mxu0 0.0
    %2512 = vmatprep.subr.mxu0 0.0
    %2513 = vmatpush1.msra.mxu0 0.0
    %2514 = vmatprep.subr.mxu0 0.0
    %2515 = vmatpush1.msra.mxu0 0.0
    %2516 = vmatprep.subr.mxu0 0.0
    %2517 = vmatpush1.msra.mxu0 0.0
    %2518 = vmatprep.subr.mxu0 0.0
    %2519 = vmatpush1.msra.mxu0 0.0
    %2520 = vmatprep.subr.mxu0 0.0
    %2521 = vmatpush1.msra.mxu0 0.0
    %2522 = vmatprep.mubr.f32.mxu0 0.0
    %2523 = vmatmul.mubr.f32.gmra.mrb[0].mxu0 %v2167
    %v2524 = vpop.f32.mrb[0].mxu0
    %v2525 = vadd.f32 %v2436, %v2524
    %v2526 = vpop.f32.mrb[0].mxu0
    %v2527 = vadd.f32 %v2438, %v2526
    %2528 = vmatprep.mubr.f32.mxu0 0.0
    %2529 = vmatmul.mubr.f32.gmra.mrb[0].mxu0 %v2170
    %v2530 = vpop.f32.mrb[0].mxu0
    %v2531 = vadd.f32 %v2442, %v2530
    %v2532 = vpop.f32.mrb[0].mxu0
    %v2533 = vadd.f32 %v2444, %v2532
    %2534 = vmatprep.mubr.f32.mxu0 0.0
    %2535 = vmatmul.mubr.f32.gmra.mrb[0].mxu0 %v2173
    %v2536 = vpop.f32.mrb[0].mxu0
    %v2537 = vadd.f32 %v2448, %v2536
    %v2538 = vpop.f32.mrb[0].mxu0
    %v2539 = vadd.f32 %v2450, %v2538
    %2540 = vmatprep.mubr.f32.mxu0 0.0
    %2541 = vmatmul.mubr.f32.gmra.mrb[0].mxu0 %v2176
    %v2542 = vpop.f32.mrb[0].mxu0
    %v2543 = vadd.f32 %v2454, %v2542
    %v2544 = vpop.f32.mrb[0].mxu0
    %v2545 = vadd.f32 %v2456, %v2544
    %2546 = vdwg.mxu0
    %2547 = vmatprep.subr.mxu0 %v1768
    %2548 = vmatpush1.msra.mxu0 %v1767
    %2549 = vmatprep.subr.mxu0 %v1772
    %2550 = vmatpush1.msra.mxu0 %v1771
    %2551 = vmatprep.subr.mxu0 %v1776
    %2552 = vmatpush1.msra.mxu0 %v1775
    %2553 = vmatprep.subr.mxu0 %v1780
    %2554 = vmatpush1.msra.mxu0 %v1779
    %2555 = vmatprep.subr.mxu0 %v1784
    %2556 = vmatpush1.msra.mxu0 %v1783
    %2557 = vmatprep.subr.mxu0 %v1788
    %2558 = vmatpush1.msra.mxu0 %v1787
    %2559 = vmatprep.subr.mxu0 %v1792
    %2560 = vmatpush1.msra.mxu0 %v1791
    %2561 = vmatprep.subr.mxu0 %v1796
    %2562 = vmatpush1.msra.mxu0 %v1795
    %2563 = vmatprep.subr.mxu0 %v1800
    %2564 = vmatpush1.msra.mxu0 %v1799
    %2565 = vmatprep.subr.mxu0 %v1804
    %2566 = vmatpush1.msra.mxu0 %v1803
    %2567 = vmatprep.subr.mxu0 %v1808
    %2568 = vmatpush1.msra.mxu0 %v1807
    %2569 = vmatprep.subr.mxu0 %v1812
    %2570 = vmatpush1.msra.mxu0 %v1811
    %2571 = vmatprep.subr.mxu0 %v1816
    %2572 = vmatpush1.msra.mxu0 %v1815
    %2573 = vmatprep.subr.mxu0 %v1820
    %2574 = vmatpush1.msra.mxu0 %v1819
    %2575 = vmatprep.subr.mxu0 %v1824
    %2576 = vmatpush1.msra.mxu0 %v1823
    %2577 = vmatprep.subr.mxu0 %v1828
    %2578 = vmatpush1.msra.mxu0 %v1827
    %2579 = vmatprep.subr.mxu0 %v1832
    %2580 = vmatpush1.msra.mxu0 %v1831
    %2581 = vmatprep.subr.mxu0 %v1836
    %2582 = vmatpush1.msra.mxu0 %v1835
    %2583 = vmatprep.subr.mxu0 %v1840
    %2584 = vmatpush1.msra.mxu0 %v1839
    %2585 = vmatprep.subr.mxu0 %v1844
    %2586 = vmatpush1.msra.mxu0 %v1843
    %2587 = vmatprep.subr.mxu0 %v1848
    %2588 = vmatpush1.msra.mxu0 %v1847
    %2589 = vmatprep.subr.mxu0 %v1852
    %2590 = vmatpush1.msra.mxu0 %v1851
    %2591 = vmatprep.subr.mxu0 %v1856
    %2592 = vmatpush1.msra.mxu0 %v1855
    %2593 = vmatprep.subr.mxu0 %v1860
    %2594 = vmatpush1.msra.mxu0 %v1859
    %2595 = vmatprep.subr.mxu0 %v1864
    %2596 = vmatpush1.msra.mxu0 %v1863
    %2597 = vmatprep.subr.mxu0 %v1868
    %2598 = vmatpush1.msra.mxu0 %v1867
    %2599 = vmatprep.subr.mxu0 %v1872
    %2600 = vmatpush1.msra.mxu0 %v1871
    %2601 = vmatprep.subr.mxu0 %v1876
    %2602 = vmatpush1.msra.mxu0 %v1875
    %2603 = vmatprep.subr.mxu0 %v1880
    %2604 = vmatpush1.msra.mxu0 %v1879
    %2605 = vmatprep.subr.mxu0 %v1884
    %2606 = vmatpush1.msra.mxu0 %v1883
    %2607 = vmatprep.subr.mxu0 %v1888
    %2608 = vmatpush1.msra.mxu0 %v1887
    %2609 = vmatprep.subr.mxu0 %v1892
    %2610 = vmatpush1.msra.mxu0 %v1891
    %2611 = vmatprep.mubr.f32.mxu0 %v1209
    %2612 = vmatmul.mubr.f32.gmra.mrb[0].mxu0 %v1208
    %v2613 = vpop.f32.mrb[0].mxu0
    %v2614 = vadd.f32 0.0, %v2613
    %v2615 = vpop.f32.mrb[0].mxu0
    %v2616 = vadd.f32 0.0, %v2615
    %2617 = vmatprep.mubr.f32.mxu0 %v1216
    %2618 = vmatmul.mubr.f32.gmra.mrb[0].mxu0 %v1215
    %v2619 = vpop.f32.mrb[0].mxu0
    %v2620 = vadd.f32 0.0, %v2619
    %v2621 = vpop.f32.mrb[0].mxu0
    %v2622 = vadd.f32 0.0, %v2621
    %2623 = vmatprep.mubr.f32.mxu0 %v1223
    %2624 = vmatmul.mubr.f32.gmra.mrb[0].mxu0 %v1222
    %v2625 = vpop.f32.mrb[0].mxu0
    %v2626 = vadd.f32 0.0, %v2625
    %v2627 = vpop.f32.mrb[0].mxu0
    %v2628 = vadd.f32 0.0, %v2627
    %2629 = vmatprep.mubr.f32.mxu0 %v1230
    %2630 = vmatmul.mubr.f32.gmra.mrb[0].mxu0 %v1229
    %v2631 = vpop.f32.mrb[0].mxu0
    %v2632 = vadd.f32 0.0, %v2631
    %v2633 = vpop.f32.mrb[0].mxu0
    %v2634 = vadd.f32 0.0, %v2633
    %2635 = vdwg.mxu0
    %2636 = vmatprep.subr.mxu0 %v1896
    %2637 = vmatpush1.msra.mxu0 %v1895
    %2638 = vmatprep.subr.mxu0 %v1900
    %2639 = vmatpush1.msra.mxu0 %v1899
    %2640 = vmatprep.subr.mxu0 %v1904
    %2641 = vmatpush1.msra.mxu0 %v1903
    %2642 = vmatprep.subr.mxu0 %v1908
    %2643 = vmatpush1.msra.mxu0 %v1907
    %2644 = vmatprep.subr.mxu0 %v1912
    %2645 = vmatpush1.msra.mxu0 %v1911
    %2646 = vmatprep.subr.mxu0 %v1916
    %2647 = vmatpush1.msra.mxu0 %v1915
    %2648 = vmatprep.subr.mxu0 %v1920
    %2649 = vmatpush1.msra.mxu0 %v1919
    %2650 = vmatprep.subr.mxu0 %v1924
    %2651 = vmatpush1.msra.mxu0 %v1923
    %2652 = vmatprep.subr.mxu0 %v1928
    %2653 = vmatpush1.msra.mxu0 %v1927
    %2654 = vmatprep.subr.mxu0 %v1932
    %2655 = vmatpush1.msra.mxu0 %v1931
    %2656 = vmatprep.subr.mxu0 %v1936
    %2657 = vmatpush1.msra.mxu0 %v1935
    %2658 = vmatprep.subr.mxu0 %v1940
    %2659 = vmatpush1.msra.mxu0 %v1939
    %2660 = vmatprep.subr.mxu0 %v1944
    %2661 = vmatpush1.msra.mxu0 %v1943
    %2662 = vmatprep.subr.mxu0 %v1948
    %2663 = vmatpush1.msra.mxu0 %v1947
    %2664 = vmatprep.subr.mxu0 %v1952
    %2665 = vmatpush1.msra.mxu0 %v1951
    %2666 = vmatprep.subr.mxu0 %v1956
    %2667 = vmatpush1.msra.mxu0 %v1955
    %2668 = vmatprep.subr.mxu0 %v1960
    %2669 = vmatpush1.msra.mxu0 %v1959
    %2670 = vmatprep.subr.mxu0 %v1964
    %2671 = vmatpush1.msra.mxu0 %v1963
    %2672 = vmatprep.subr.mxu0 %v1968
    %2673 = vmatpush1.msra.mxu0 %v1967
    %2674 = vmatprep.subr.mxu0 %v1972
    %2675 = vmatpush1.msra.mxu0 %v1971
    %2676 = vmatprep.subr.mxu0 %v1976
    %2677 = vmatpush1.msra.mxu0 %v1975
    %2678 = vmatprep.subr.mxu0 %v1980
    %2679 = vmatpush1.msra.mxu0 %v1979
    %2680 = vmatprep.subr.mxu0 %v1984
    %2681 = vmatpush1.msra.mxu0 %v1983
    %2682 = vmatprep.subr.mxu0 %v1988
    %2683 = vmatpush1.msra.mxu0 %v1987
    %2684 = vmatprep.subr.mxu0 %v1992
    %2685 = vmatpush1.msra.mxu0 %v1991
    %2686 = vmatprep.subr.mxu0 %v1996
    %2687 = vmatpush1.msra.mxu0 %v1995
    %2688 = vmatprep.subr.mxu0 %v2000
    %2689 = vmatpush1.msra.mxu0 %v1999
    %2690 = vmatprep.subr.mxu0 %v2004
    %2691 = vmatpush1.msra.mxu0 %v2003
    %2692 = vmatprep.subr.mxu0 %v2008
    %2693 = vmatpush1.msra.mxu0 %v2007
    %2694 = vmatprep.subr.mxu0 %v2012
    %2695 = vmatpush1.msra.mxu0 %v2011
    %2696 = vmatprep.subr.mxu0 %v2016
    %2697 = vmatpush1.msra.mxu0 %v2015
    %2698 = vmatprep.subr.mxu0 %v2020
    %2699 = vmatpush1.msra.mxu0 %v2019
    %2700 = vmatprep.mubr.f32.mxu0 %v1211
    %2701 = vmatmul.mubr.f32.gmra.mrb[0].mxu0 %v1210
    %v2702 = vpop.f32.mrb[0].mxu0
    %v2703 = vadd.f32 %v2614, %v2702
    %v2704 = vpop.f32.mrb[0].mxu0
    %v2705 = vadd.f32 %v2616, %v2704
    %2706 = vmatprep.mubr.f32.mxu0 %v1218
    %2707 = vmatmul.mubr.f32.gmra.mrb[0].mxu0 %v1217
    %v2708 = vpop.f32.mrb[0].mxu0
    %v2709 = vadd.f32 %v2620, %v2708
    %v2710 = vpop.f32.mrb[0].mxu0
    %v2711 = vadd.f32 %v2622, %v2710
    %2712 = vmatprep.mubr.f32.mxu0 %v1225
    %2713 = vmatmul.mubr.f32.gmra.mrb[0].mxu0 %v1224
    %v2714 = vpop.f32.mrb[0].mxu0
    %v2715 = vadd.f32 %v2626, %v2714
    %v2716 = vpop.f32.mrb[0].mxu0
    %v2717 = vadd.f32 %v2628, %v2716
    %2718 = vmatprep.mubr.f32.mxu0 %v1232
    %2719 = vmatmul.mubr.f32.gmra.mrb[0].mxu0 %v1231
    %v2720 = vpop.f32.mrb[0].mxu0
    %v2721 = vadd.f32 %v2632, %v2720
    %v2722 = vpop.f32.mrb[0].mxu0
    %v2723 = vadd.f32 %v2634, %v2722
    %2724 = vdwg.mxu0
    %2725 = vmatprep.subr.mxu0 %v2024
    %2726 = vmatpush1.msra.mxu0 %v2023
    %2727 = vmatprep.subr.mxu0 %v2028
    %2728 = vmatpush1.msra.mxu0 %v2027
    %2729 = vmatprep.subr.mxu0 %v2032
    %2730 = vmatpush1.msra.mxu0 %v2031
    %2731 = vmatprep.subr.mxu0 %v2036
    %2732 = vmatpush1.msra.mxu0 %v2035
    %2733 = vmatprep.subr.mxu0 %v2040
    %2734 = vmatpush1.msra.mxu0 %v2039
    %2735 = vmatprep.subr.mxu0 %v2044
    %2736 = vmatpush1.msra.mxu0 %v2043
    %2737 = vmatprep.subr.mxu0 %v2048
    %2738 = vmatpush1.msra.mxu0 %v2047
    %2739 = vmatprep.subr.mxu0 %v2052
    %2740 = vmatpush1.msra.mxu0 %v2051
    %2741 = vmatprep.subr.mxu0 %v2056
    %2742 = vmatpush1.msra.mxu0 %v2055
    %2743 = vmatprep.subr.mxu0 %v2060
    %2744 = vmatpush1.msra.mxu0 %v2059
    %2745 = vmatprep.subr.mxu0 %v2064
    %2746 = vmatpush1.msra.mxu0 %v2063
    %2747 = vmatprep.subr.mxu0 %v2068
    %2748 = vmatpush1.msra.mxu0 %v2067
    %2749 = vmatprep.subr.mxu0 %v2072
    %2750 = vmatpush1.msra.mxu0 %v2071
    %2751 = vmatprep.subr.mxu0 %v2076
    %2752 = vmatpush1.msra.mxu0 %v2075
    %2753 = vmatprep.subr.mxu0 %v2080
    %2754 = vmatpush1.msra.mxu0 %v2079
    %2755 = vmatprep.subr.mxu0 %v2084
    %2756 = vmatpush1.msra.mxu0 %v2083
    %2757 = vmatprep.subr.mxu0 %v2088
    %2758 = vmatpush1.msra.mxu0 %v2087
    %2759 = vmatprep.subr.mxu0 %v2092
    %2760 = vmatpush1.msra.mxu0 %v2091
    %2761 = vmatprep.subr.mxu0 %v2096
    %2762 = vmatpush1.msra.mxu0 %v2095
    %2763 = vmatprep.subr.mxu0 %v2100
    %2764 = vmatpush1.msra.mxu0 %v2099
    %2765 = vmatprep.subr.mxu0 %v2104
    %2766 = vmatpush1.msra.mxu0 %v2103
    %2767 = vmatprep.subr.mxu0 %v2108
    %2768 = vmatpush1.msra.mxu0 %v2107
    %2769 = vmatprep.subr.mxu0 %v2112
    %2770 = vmatpush1.msra.mxu0 %v2111
    %2771 = vmatprep.subr.mxu0 %v2116
    %2772 = vmatpush1.msra.mxu0 %v2115
    %2773 = vmatprep.subr.mxu0 %v2120
    %2774 = vmatpush1.msra.mxu0 %v2119
    %2775 = vmatprep.subr.mxu0 %v2124
    %2776 = vmatpush1.msra.mxu0 %v2123
    %2777 = vmatprep.subr.mxu0 %v2128
    %2778 = vmatpush1.msra.mxu0 %v2127
    %2779 = vmatprep.subr.mxu0 %v2132
    %2780 = vmatpush1.msra.mxu0 %v2131
    %2781 = vmatprep.subr.mxu0 %v2136
    %2782 = vmatpush1.msra.mxu0 %v2135
    %2783 = vmatprep.subr.mxu0 %v2140
    %2784 = vmatpush1.msra.mxu0 %v2139
    %2785 = vmatprep.subr.mxu0 %v2144
    %2786 = vmatpush1.msra.mxu0 %v2143
    %2787 = vmatprep.subr.mxu0 %v2148
    %2788 = vmatpush1.msra.mxu0 %v2147
    %2789 = vmatprep.mubr.f32.mxu0 %v1213
    %2790 = vmatmul.mubr.f32.gmra.mrb[0].mxu0 %v1212
    %v2791 = vpop.f32.mrb[0].mxu0
    %v2792 = vadd.f32 %v2703, %v2791
    %v2793 = vpop.f32.mrb[0].mxu0
    %v2794 = vadd.f32 %v2705, %v2793
    %2795 = vmatprep.mubr.f32.mxu0 %v1220
    %2796 = vmatmul.mubr.f32.gmra.mrb[0].mxu0 %v1219
    %v2797 = vpop.f32.mrb[0].mxu0
    %v2798 = vadd.f32 %v2709, %v2797
    %v2799 = vpop.f32.mrb[0].mxu0
    %v2800 = vadd.f32 %v2711, %v2799
    %2801 = vmatprep.mubr.f32.mxu0 %v1227
    %2802 = vmatmul.mubr.f32.gmra.mrb[0].mxu0 %v1226
    %v2803 = vpop.f32.mrb[0].mxu0
    %v2804 = vadd.f32 %v2715, %v2803
    %v2805 = vpop.f32.mrb[0].mxu0
    %v2806 = vadd.f32 %v2717, %v2805
    %2807 = vmatprep.mubr.f32.mxu0 %v1234
    %2808 = vmatmul.mubr.f32.gmra.mrb[0].mxu0 %v1233
    %v2809 = vpop.f32.mrb[0].mxu0
    %v2810 = vadd.f32 %v2721, %v2809
    %v2811 = vpop.f32.mrb[0].mxu0
    %v2812 = vadd.f32 %v2723, %v2811
    %2813 = vdwg.mxu0
    %2814 = vmatprep.subr.mxu0 %v2152
    %2815 = vmatpush1.msra.mxu0 %v2151
    %2816 = vmatprep.subr.mxu0 %v2156
    %2817 = vmatpush1.msra.mxu0 %v2155
    %2818 = vmatprep.subr.mxu0 %v2160
    %2819 = vmatpush1.msra.mxu0 %v2159
    %2820 = vmatprep.subr.mxu0 %v2189
    %2821 = vmatpush1.msra.mxu0 %v2186
    %2822 = vmatprep.subr.mxu0 0.0
    %2823 = vmatpush1.msra.mxu0 0.0
    %2824 = vmatprep.subr.mxu0 0.0
    %2825 = vmatpush1.msra.mxu0 0.0
    %2826 = vmatprep.subr.mxu0 0.0
    %2827 = vmatpush1.msra.mxu0 0.0
    %2828 = vmatprep.subr.mxu0 0.0
    %2829 = vmatpush1.msra.mxu0 0.0
    %2830 = vmatprep.subr.mxu0 0.0
    %2831 = vmatpush1.msra.mxu0 0.0
    %2832 = vmatprep.subr.mxu0 0.0
    %2833 = vmatpush1.msra.mxu0 0.0
    %2834 = vmatprep.subr.mxu0 0.0
    %2835 = vmatpush1.msra.mxu0 0.0
    %2836 = vmatprep.subr.mxu0 0.0
    %2837 = vmatpush1.msra.mxu0 0.0
    %2838 = vmatprep.subr.mxu0 0.0
    %2839 = vmatpush1.msra.mxu0 0.0
    %2840 = vmatprep.subr.mxu0 0.0
    %2841 = vmatpush1.msra.mxu0 0.0
    %2842 = vmatprep.subr.mxu0 0.0
    %2843 = vmatpush1.msra.mxu0 0.0
    %2844 = vmatprep.subr.mxu0 0.0
    %2845 = vmatpush1.msra.mxu0 0.0
    %2846 = vmatprep.subr.mxu0 0.0
    %2847 = vmatpush1.msra.mxu0 0.0
    %2848 = vmatprep.subr.mxu0 0.0
    %2849 = vmatpush1.msra.mxu0 0.0
    %2850 = vmatprep.subr.mxu0 0.0
    %2851 = vmatpush1.msra.mxu0 0.0
    %2852 = vmatprep.subr.mxu0 0.0
    %2853 = vmatpush1.msra.mxu0 0.0
    %2854 = vmatprep.subr.mxu0 0.0
    %2855 = vmatpush1.msra.mxu0 0.0
    %2856 = vmatprep.subr.mxu0 0.0
    %2857 = vmatpush1.msra.mxu0 0.0
    %2858 = vmatprep.subr.mxu0 0.0
    %2859 = vmatpush1.msra.mxu0 0.0
    %2860 = vmatprep.subr.mxu0 0.0
    %2861 = vmatpush1.msra.mxu0 0.0
    %2862 = vmatprep.subr.mxu0 0.0
    %2863 = vmatpush1.msra.mxu0 0.0
    %2864 = vmatprep.subr.mxu0 0.0
    %2865 = vmatpush1.msra.mxu0 0.0
    %2866 = vmatprep.subr.mxu0 0.0
    %2867 = vmatpush1.msra.mxu0 0.0
    %2868 = vmatprep.subr.mxu0 0.0
    %2869 = vmatpush1.msra.mxu0 0.0
    %2870 = vmatprep.subr.mxu0 0.0
    %2871 = vmatpush1.msra.mxu0 0.0
    %2872 = vmatprep.subr.mxu0 0.0
    %2873 = vmatpush1.msra.mxu0 0.0
    %2874 = vmatprep.subr.mxu0 0.0
    %2875 = vmatpush1.msra.mxu0 0.0
    %2876 = vmatprep.subr.mxu0 0.0
    %2877 = vmatpush1.msra.mxu0 0.0
    %2878 = vmatprep.mubr.f32.mxu0 0.0
    %2879 = vmatmul.mubr.f32.gmra.mrb[0].mxu0 %v2167
    %v2880 = vpop.f32.mrb[0].mxu0
    %v2881 = vadd.f32 %v2792, %v2880
    %v2882 = vpop.f32.mrb[0].mxu0
    %v2883 = vadd.f32 %v2794, %v2882
    %2884 = vmatprep.mubr.f32.mxu0 0.0
    %2885 = vmatmul.mubr.f32.gmra.mrb[0].mxu0 %v2170
    %v2886 = vpop.f32.mrb[0].mxu0
    %v2887 = vadd.f32 %v2798, %v2886
    %v2888 = vpop.f32.mrb[0].mxu0
    %v2889 = vadd.f32 %v2800, %v2888
    %2890 = vmatprep.mubr.f32.mxu0 0.0
    %2891 = vmatmul.mubr.f32.gmra.mrb[0].mxu0 %v2173
    %v2892 = vpop.f32.mrb[0].mxu0
    %v2893 = vadd.f32 %v2804, %v2892
    %v2894 = vpop.f32.mrb[0].mxu0
    %v2895 = vadd.f32 %v2806, %v2894
    %2896 = vmatprep.mubr.f32.mxu0 0.0
    %2897 = vmatmul.mubr.f32.gmra.mrb[0].mxu0 %v2176
    %v2898 = vpop.f32.mrb[0].mxu0
    %v2899 = vadd.f32 %v2810, %v2898
    %v2900 = vpop.f32.mrb[0].mxu0
    %v2901 = vadd.f32 %v2812, %v2900
    %2902 = vdwg.mxu0
    %v2919 = vrot.slane %v2525, 7
    %v2920 = vrot.slane %v2527, 7
    %v2921 = vrot.slane %v2881, 7
    %v2922 = vrot.slane %v2883, 7
    %v2923 = vrot.slane %v2531, 7
    %v2924 = vsel %vm677, %v2919, %v2923
    %v2925 = vrot.slane %v2533, 7
    %v2926 = vsel %vm677, %v2920, %v2925
    %v2927 = vrot.slane %v2887, 7
    %v2928 = vsel %vm677, %v2921, %v2927
    %v2929 = vrot.slane %v2889, 7
    %v2930 = vsel %vm677, %v2922, %v2929
    %v2931 = vrot.slane %v2537, 7
    %v2932 = vsel %vm677, %v2923, %v2931
    %v2933 = vrot.slane %v2539, 7
    %v2934 = vsel %vm677, %v2925, %v2933
    %v2935 = vrot.slane %v2893, 7
    %v2936 = vsel %vm677, %v2927, %v2935
    %v2937 = vrot.slane %v2895, 7
    %v2938 = vsel %vm677, %v2929, %v2937
    %v2939 = vrot.slane %v2543, 7
    %v2940 = vsel %vm677, %v2931, %v2939
    %v2941 = vrot.slane %v2545, 7
    %v2942 = vsel %vm677, %v2933, %v2941
    %v2943 = vrot.slane %v2899, 7
    %v2944 = vsel %vm677, %v2935, %v2943
    %v2945 = vrot.slane %v2901, 7
    %v2946 = vsel %vm677, %v2937, %v2945
    %2947 = vrot.lane.b32.xlu0 %v2919, 127
    %v2948 = vpop.permute.xlu0 %2947
    %2949 = vrot.lane.b32.xlu0 %v2920, 127
    %v2950 = vpop.permute.xlu0 %2949
    %2951 = vrot.lane.b32.xlu0 %v2921, 127
    %v2952 = vpop.permute.xlu0 %2951
    %2953 = vrot.lane.b32.xlu0 %v2922, 127
    %v2954 = vpop.permute.xlu0 %2953
    %2955 = vrot.lane.b32.xlu0 %v2924, 127
    %v2956 = vpop.permute.xlu0 %2955
    %2957 = vrot.lane.b32.xlu0 %v2926, 127
    %v2958 = vpop.permute.xlu0 %2957
    %2959 = vrot.lane.b32.xlu0 %v2928, 127
    %v2960 = vpop.permute.xlu0 %2959
    %2961 = vrot.lane.b32.xlu0 %v2930, 127
    %v2962 = vpop.permute.xlu0 %2961
    %2963 = vrot.lane.b32.xlu0 %v2932, 127
    %v2964 = vpop.permute.xlu0 %2963
    %2965 = vrot.lane.b32.xlu0 %v2934, 127
    %v2966 = vpop.permute.xlu0 %2965
    %2967 = vrot.lane.b32.xlu0 %v2936, 127
    %v2968 = vpop.permute.xlu0 %2967
    %2969 = vrot.lane.b32.xlu0 %v2938, 127
    %v2970 = vpop.permute.xlu0 %2969
    %2971 = vrot.lane.b32.xlu0 %v2940, 127
    %v2972 = vpop.permute.xlu0 %2971
    %2973 = vrot.lane.b32.xlu0 %v2942, 127
    %v2974 = vpop.permute.xlu0 %2973
    %2975 = vrot.lane.b32.xlu0 %v2944, 127
    %v2976 = vpop.permute.xlu0 %2975
    %2977 = vrot.lane.b32.xlu0 %v2946, 127
    %v2978 = vpop.permute.xlu0 %2977
    %v2979 = vsel %vm74, %v2948, %v2950
    %v2980 = vsel %vm74, %v2950, %v2952
    %v2981 = vsel %vm74, %v2952, %v2954
    %v2982 = vsel %vm74, %v2956, %v2958
    %v2983 = vsel %vm74, %v2958, %v2960
    %v2984 = vsel %vm74, %v2960, %v2962
    %v2985 = vsel %vm74, %v2964, %v2966
    %v2986 = vsel %vm74, %v2966, %v2968
    %v2987 = vsel %vm74, %v2968, %v2970
    %v2988 = vsel %vm74, %v2972, %v2974
    %v2989 = vsel %vm74, %v2974, %v2976
    %v2990 = vsel %vm74, %v2976, %v2978
    %vm3007 = vcmask 1041408
    %v3008 = vrot.slane %v2525, 6
    %v3009 = vrot.slane %v2527, 6
    %v3010 = vrot.slane %v2881, 6
    %v3011 = vrot.slane %v2883, 6
    %v3012 = vrot.slane %v2531, 6
    %v3013 = vsel %vm3007, %v3008, %v3012
    %v3014 = vrot.slane %v2533, 6
    %v3015 = vsel %vm3007, %v3009, %v3014
    %v3016 = vrot.slane %v2887, 6
    %v3017 = vsel %vm3007, %v3010, %v3016
    %v3018 = vrot.slane %v2889, 6
    %v3019 = vsel %vm3007, %v3011, %v3018
    %v3020 = vrot.slane %v2537, 6
    %v3021 = vsel %vm3007, %v3012, %v3020
    %v3022 = vrot.slane %v2539, 6
    %v3023 = vsel %vm3007, %v3014, %v3022
    %v3024 = vrot.slane %v2893, 6
    %v3025 = vsel %vm3007, %v3016, %v3024
    %v3026 = vrot.slane %v2895, 6
    %v3027 = vsel %vm3007, %v3018, %v3026
    %v3028 = vrot.slane %v2543, 6
    %v3029 = vsel %vm3007, %v3020, %v3028
    %v3030 = vrot.slane %v2545, 6
    %v3031 = vsel %vm3007, %v3022, %v3030
    %v3032 = vrot.slane %v2899, 6
    %v3033 = vsel %vm3007, %v3024, %v3032
    %v3034 = vrot.slane %v2901, 6
    %v3035 = vsel %vm3007, %v3026, %v3034
    %3036 = vrot.lane.b32.xlu0 %v3008, 126
    %v3037 = vpop.permute.xlu0 %3036
    %3038 = vrot.lane.b32.xlu0 %v3009, 126
    %v3039 = vpop.permute.xlu0 %3038
    %3040 = vrot.lane.b32.xlu0 %v3010, 126
    %v3041 = vpop.permute.xlu0 %3040
    %3042 = vrot.lane.b32.xlu0 %v3011, 126
    %v3043 = vpop.permute.xlu0 %3042
    %3044 = vrot.lane.b32.xlu0 %v3013, 126
    %v3045 = vpop.permute.xlu0 %3044
    %3046 = vrot.lane.b32.xlu0 %v3015, 126
    %v3047 = vpop.permute.xlu0 %3046
    %3048 = vrot.lane.b32.xlu0 %v3017, 126
    %v3049 = vpop.permute.xlu0 %3048
    %3050 = vrot.lane.b32.xlu0 %v3019, 126
    %v3051 = vpop.permute.xlu0 %3050
    %3052 = vrot.lane.b32.xlu0 %v3021, 126
    %v3053 = vpop.permute.xlu0 %3052
    %3054 = vrot.lane.b32.xlu0 %v3023, 126
    %v3055 = vpop.permute.xlu0 %3054
    %3056 = vrot.lane.b32.xlu0 %v3025, 126
    %v3057 = vpop.permute.xlu0 %3056
    %3058 = vrot.lane.b32.xlu0 %v3027, 126
    %v3059 = vpop.permute.xlu0 %3058
    %3060 = vrot.lane.b32.xlu0 %v3029, 126
    %v3061 = vpop.permute.xlu0 %3060
    %3062 = vrot.lane.b32.xlu0 %v3031, 126
    %v3063 = vpop.permute.xlu0 %3062
    %3064 = vrot.lane.b32.xlu0 %v3033, 126
    %v3065 = vpop.permute.xlu0 %3064
    %3066 = vrot.lane.b32.xlu0 %v3035, 126
    %v3067 = vpop.permute.xlu0 %3066
    %v3068 = vsel %vm102, %v3037, %v3039
    %v3069 = vsel %vm102, %v3039, %v3041
    %v3070 = vsel %vm102, %v3041, %v3043
    %v3071 = vsel %vm102, %v3045, %v3047
    %v3072 = vsel %vm102, %v3047, %v3049
    %v3073 = vsel %vm102, %v3049, %v3051
    %v3074 = vsel %vm102, %v3053, %v3055
    %v3075 = vsel %vm102, %v3055, %v3057
    %v3076 = vsel %vm102, %v3057, %v3059
    %v3077 = vsel %vm102, %v3061, %v3063
    %v3078 = vsel %vm102, %v3063, %v3065
    %v3079 = vsel %vm102, %v3065, %v3067
    %v3096 = vrot.slane %v2525, 5
    %v3097 = vrot.slane %v2527, 5
    %v3098 = vrot.slane %v2881, 5
    %v3099 = vrot.slane %v2883, 5
    %v3100 = vrot.slane %v2531, 5
    %v3101 = vsel %vm2178, %v3096, %v3100
    %v3102 = vrot.slane %v2533, 5
    %v3103 = vsel %vm2178, %v3097, %v3102
    %v3104 = vrot.slane %v2887, 5
    %v3105 = vsel %vm2178, %v3098, %v3104
    %v3106 = vrot.slane %v2889, 5
    %v3107 = vsel %vm2178, %v3099, %v3106
    %v3108 = vrot.slane %v2537, 5
    %v3109 = vsel %vm2178, %v3100, %v3108
    %v3110 = vrot.slane %v2539, 5
    %v3111 = vsel %vm2178, %v3102, %v3110
    %v3112 = vrot.slane %v2893, 5
    %v3113 = vsel %vm2178, %v3104, %v3112
    %v3114 = vrot.slane %v2895, 5
    %v3115 = vsel %vm2178, %v3106, %v3114
    %v3116 = vrot.slane %v2543, 5
    %v3117 = vsel %vm2178, %v3108, %v3116
    %v3118 = vrot.slane %v2545, 5
    %v3119 = vsel %vm2178, %v3110, %v3118
    %v3120 = vrot.slane %v2899, 5
    %v3121 = vsel %vm2178, %v3112, %v3120
    %v3122 = vrot.slane %v2901, 5
    %v3123 = vsel %vm2178, %v3114, %v3122
    %3124 = vrot.lane.b32.xlu0 %v3096, 125
    %v3125 = vpop.permute.xlu0 %3124
    %3126 = vrot.lane.b32.xlu0 %v3097, 125
    %v3127 = vpop.permute.xlu0 %3126
    %3128 = vrot.lane.b32.xlu0 %v3098, 125
    %v3129 = vpop.permute.xlu0 %3128
    %3130 = vrot.lane.b32.xlu0 %v3099, 125
    %v3131 = vpop.permute.xlu0 %3130
    %3132 = vrot.lane.b32.xlu0 %v3101, 125
    %v3133 = vpop.permute.xlu0 %3132
    %3134 = vrot.lane.b32.xlu0 %v3103, 125
    %v3135 = vpop.permute.xlu0 %3134
    %3136 = vrot.lane.b32.xlu0 %v3105, 125
    %v3137 = vpop.permute.xlu0 %3136
    %3138 = vrot.lane.b32.xlu0 %v3107, 125
    %v3139 = vpop.permute.xlu0 %3138
    %3140 = vrot.lane.b32.xlu0 %v3109, 125
    %v3141 = vpop.permute.xlu0 %3140
    %3142 = vrot.lane.b32.xlu0 %v3111, 125
    %v3143 = vpop.permute.xlu0 %3142
    %3144 = vrot.lane.b32.xlu0 %v3113, 125
    %v3145 = vpop.permute.xlu0 %3144
    %3146 = vrot.lane.b32.xlu0 %v3115, 125
    %v3147 = vpop.permute.xlu0 %3146
    %3148 = vrot.lane.b32.xlu0 %v3117, 125
    %v3149 = vpop.permute.xlu0 %3148
    %3150 = vrot.lane.b32.xlu0 %v3119, 125
    %v3151 = vpop.permute.xlu0 %3150
    %3152 = vrot.lane.b32.xlu0 %v3121, 125
    %v3153 = vpop.permute.xlu0 %3152
    %3154 = vrot.lane.b32.xlu0 %v3123, 125
    %v3155 = vpop.permute.xlu0 %3154
    %v3156 = vsel %vm130, %v3125, %v3127
    %v3157 = vsel %vm130, %v3127, %v3129
    %v3158 = vsel %vm130, %v3129, %v3131
    %v3159 = vsel %vm130, %v3133, %v3135
    %v3160 = vsel %vm130, %v3135, %v3137
    %v3161 = vsel %vm130, %v3137, %v3139
    %v3162 = vsel %vm130, %v3141, %v3143
    %v3163 = vsel %vm130, %v3143, %v3145
    %v3164 = vsel %vm130, %v3145, %v3147
    %v3165 = vsel %vm130, %v3149, %v3151
    %v3166 = vsel %vm130, %v3151, %v3153
    %v3167 = vsel %vm130, %v3153, %v3155
    %v3184 = vrot.slane %v2525, 4
    %v3185 = vrot.slane %v2527, 4
    %v3186 = vrot.slane %v2881, 4
    %v3187 = vrot.slane %v2883, 4
    %v3188 = vrot.slane %v2531, 4
    %v3189 = vsel %vm165, %v3184, %v3188
    %v3190 = vrot.slane %v2533, 4
    %v3191 = vsel %vm165, %v3185, %v3190
    %v3192 = vrot.slane %v2887, 4
    %v3193 = vsel %vm165, %v3186, %v3192
    %v3194 = vrot.slane %v2889, 4
    %v3195 = vsel %vm165, %v3187, %v3194
    %v3196 = vrot.slane %v2537, 4
    %v3197 = vsel %vm165, %v3188, %v3196
    %v3198 = vrot.slane %v2539, 4
    %v3199 = vsel %vm165, %v3190, %v3198
    %v3200 = vrot.slane %v2893, 4
    %v3201 = vsel %vm165, %v3192, %v3200
    %v3202 = vrot.slane %v2895, 4
    %v3203 = vsel %vm165, %v3194, %v3202
    %v3204 = vrot.slane %v2543, 4
    %v3205 = vsel %vm165, %v3196, %v3204
    %v3206 = vrot.slane %v2545, 4
    %v3207 = vsel %vm165, %v3198, %v3206
    %v3208 = vrot.slane %v2899, 4
    %v3209 = vsel %vm165, %v3200, %v3208
    %v3210 = vrot.slane %v2901, 4
    %v3211 = vsel %vm165, %v3202, %v3210
    %3212 = vrot.lane.b32.xlu0 %v3184, 124
    %v3213 = vpop.permute.xlu0 %3212
    %3214 = vrot.lane.b32.xlu0 %v3185, 124
    %v3215 = vpop.permute.xlu0 %3214
    %3216 = vrot.lane.b32.xlu0 %v3186, 124
    %v3217 = vpop.permute.xlu0 %3216
    %3218 = vrot.lane.b32.xlu0 %v3187, 124
    %v3219 = vpop.permute.xlu0 %3218
    %3220 = vrot.lane.b32.xlu0 %v3189, 124
    %v3221 = vpop.permute.xlu0 %3220
    %3222 = vrot.lane.b32.xlu0 %v3191, 124
    %v3223 = vpop.permute.xlu0 %3222
    %3224 = vrot.lane.b32.xlu0 %v3193, 124
    %v3225 = vpop.permute.xlu0 %3224
    %3226 = vrot.lane.b32.xlu0 %v3195, 124
    %v3227 = vpop.permute.xlu0 %3226
    %3228 = vrot.lane.b32.xlu0 %v3197, 124
    %v3229 = vpop.permute.xlu0 %3228
    %3230 = vrot.lane.b32.xlu0 %v3199, 124
    %v3231 = vpop.permute.xlu0 %3230
    %3232 = vrot.lane.b32.xlu0 %v3201, 124
    %v3233 = vpop.permute.xlu0 %3232
    %3234 = vrot.lane.b32.xlu0 %v3203, 124
    %v3235 = vpop.permute.xlu0 %3234
    %3236 = vrot.lane.b32.xlu0 %v3205, 124
    %v3237 = vpop.permute.xlu0 %3236
    %3238 = vrot.lane.b32.xlu0 %v3207, 124
    %v3239 = vpop.permute.xlu0 %3238
    %3240 = vrot.lane.b32.xlu0 %v3209, 124
    %v3241 = vpop.permute.xlu0 %3240
    %3242 = vrot.lane.b32.xlu0 %v3211, 124
    %v3243 = vpop.permute.xlu0 %3242
    %v3244 = vsel %vm158, %v3213, %v3215
    %v3245 = vsel %vm158, %v3215, %v3217
    %v3246 = vsel %vm158, %v3217, %v3219
    %v3247 = vsel %vm158, %v3221, %v3223
    %v3248 = vsel %vm158, %v3223, %v3225
    %v3249 = vsel %vm158, %v3225, %v3227
    %v3250 = vsel %vm158, %v3229, %v3231
    %v3251 = vsel %vm158, %v3231, %v3233
    %v3252 = vsel %vm158, %v3233, %v3235
    %v3253 = vsel %vm158, %v3237, %v3239
    %v3254 = vsel %vm158, %v3239, %v3241
    %v3255 = vsel %vm158, %v3241, %v3243
    %v3268 = vsel %vm677, %v2543, %v2979
    %v3269 = vsel %vm677, %v2545, %v2980
    %v3270 = vsel %vm677, %v2899, %v2981
    %v3271 = vsel %vm677, %v2901, %v2954
    %v3272 = vsel %vm3007, %v2988, %v3068
    %v3273 = vsel %vm3007, %v2989, %v3069
    %v3274 = vsel %vm3007, %v2990, %v3070
    %v3275 = vsel %vm3007, %v2978, %v3043
    %v3276 = vsel %vm2178, %v3077, %v3156
    %v3277 = vsel %vm2178, %v3078, %v3157
    %v3278 = vsel %vm2178, %v3079, %v3158
    %v3279 = vsel %vm2178, %v3067, %v3131
    %v3280 = vsel %vm165, %v3165, %v3244
    %v3281 = vsel %vm165, %v3166, %v3245
    %v3282 = vsel %vm165, %v3167, %v3246
    %v3283 = vsel %vm165, %v3155, %v3219
    %v3284 = vld [vmem:[%s4] sm:$0xff]
    %v3285 = vld [vmem:[%s4 + $0x8] sm:$0xff]
    %v3286 = vld [vmem:[%s4 + $0x10] sm:$0xff]
    %v3287 = vld [vmem:[%s4 + $0x18] sm:$0xff]
    %v3288 = vld [vmem:[%s4 + $0x20] sm:$0xff]
    %v3289 = vld [vmem:[%s4 + $0x28] sm:$0xff]
    %v3290 = vld [vmem:[%s4 + $0x30] sm:$0x3]
    %v3292 = vsel %vm130, %v3284, 0
    %v3295 = vsel %vm130, %v3285, 0
    %v3298 = vsel %vm130, %v3286, 0
    %v3301 = vsel %vm130, %v3287, 0
    %v3304 = vsel %vm130, %v3288, 0
    %v3307 = vsel %vm130, %v3289, 0
    %v3310 = vsel %vm130, %v3290, 0
    %vm3312 = vcmask 1044480
    %v3313 = vsel %vm3312, %v3253, 0
    %v3315 = vsel %vm3312, %v3254, 0
    %v3317 = vsel %vm3312, %v3255, 0
    %v3319 = vsel %vm3312, %v3243, 0
    %3321 = vmatprep.subr.mxu0 %v2527
    %3322 = vmatpush1.msra.mxu0 %v2525
    %3323 = vmatprep.subr.mxu0 %v2533
    %3324 = vmatpush1.msra.mxu0 %v2531
    %3325 = vmatprep.subr.mxu0 %v2539
    %3326 = vmatpush1.msra.mxu0 %v2537
    %3327 = vmatprep.subr.mxu0 %v3269
    %3328 = vmatpush1.msra.mxu0 %v3268
    %3329 = vmatprep.subr.mxu0 %v2983
    %3330 = vmatpush1.msra.mxu0 %v2982
    %3331 = vmatprep.subr.mxu0 %v2986
    %3332 = vmatpush1.msra.mxu0 %v2985
    %3333 = vmatprep.subr.mxu0 %v3273
    %3334 = vmatpush1.msra.mxu0 %v3272
    %3335 = vmatprep.subr.mxu0 %v3072
    %3336 = vmatpush1.msra.mxu0 %v3071
    %3337 = vmatprep.subr.mxu0 %v3075
    %3338 = vmatpush1.msra.mxu0 %v3074
    %3339 = vmatprep.subr.mxu0 %v3277
    %3340 = vmatpush1.msra.mxu0 %v3276
    %3341 = vmatprep.subr.mxu0 %v3160
    %3342 = vmatpush1.msra.mxu0 %v3159
    %3343 = vmatprep.subr.mxu0 %v3163
    %3344 = vmatpush1.msra.mxu0 %v3162
    %3345 = vmatprep.subr.mxu0 %v3281
    %3346 = vmatpush1.msra.mxu0 %v3280
    %3347 = vmatprep.subr.mxu0 %v3248
    %3348 = vmatpush1.msra.mxu0 %v3247
    %3349 = vmatprep.subr.mxu0 %v3251
    %3350 = vmatpush1.msra.mxu0 %v3250
    %3351 = vmatprep.subr.mxu0 %v3315
    %3352 = vmatpush1.msra.mxu0 %v3313
    %3353 = vmatprep.subr.mxu0 0.0
    %3354 = vmatpush1.msra.mxu0 0.0
    %3355 = vmatprep.subr.mxu0 0.0
    %3356 = vmatpush1.msra.mxu0 0.0
    %3357 = vmatprep.subr.mxu0 0.0
    %3358 = vmatpush1.msra.mxu0 0.0
    %3359 = vmatprep.subr.mxu0 0.0
    %3360 = vmatpush1.msra.mxu0 0.0
    %3361 = vmatprep.subr.mxu0 0.0
    %3362 = vmatpush1.msra.mxu0 0.0
    %3363 = vmatprep.subr.mxu0 0.0
    %3364 = vmatpush1.msra.mxu0 0.0
    %3365 = vmatprep.subr.mxu0 0.0
    %3366 = vmatpush1.msra.mxu0 0.0
    %3367 = vmatprep.subr.mxu0 0.0
    %3368 = vmatpush1.msra.mxu0 0.0
    %3369 = vmatprep.subr.mxu0 0.0
    %3370 = vmatpush1.msra.mxu0 0.0
    %3371 = vmatprep.subr.mxu0 0.0
    %3372 = vmatpush1.msra.mxu0 0.0
    %3373 = vmatprep.subr.mxu0 0.0
    %3374 = vmatpush1.msra.mxu0 0.0
    %3375 = vmatprep.subr.mxu0 0.0
    %3376 = vmatpush1.msra.mxu0 0.0
    %3377 = vmatprep.subr.mxu0 0.0
    %3378 = vmatpush1.msra.mxu0 0.0
    %3379 = vmatprep.subr.mxu0 0.0
    %3380 = vmatpush1.msra.mxu0 0.0
    %3381 = vmatprep.subr.mxu0 0.0
    %3382 = vmatpush1.msra.mxu0 0.0
    %3383 = vmatprep.subr.mxu0 0.0
    %3384 = vmatpush1.msra.mxu0 0.0
    %3385 = vmatprep.mubr.f32.mxu0 0.0
    %3386 = vmatmul.mubr.f32.gmra.mrb[0].mxu0 %v3292
    %v3387 = vpop.f32.mrb[0].mxu0
    %v3388 = vadd.f32 0.0, %v3387
    %v3389 = vpop.f32.mrb[0].mxu0
    %v3390 = vadd.f32 0.0, %v3389
    %3391 = vmatprep.mubr.f32.mxu0 0.0
    %3392 = vmatmul.mubr.f32.gmra.mrb[0].mxu0 %v3295
    %v3393 = vpop.f32.mrb[0].mxu0
    %v3394 = vadd.f32 0.0, %v3393
    %v3395 = vpop.f32.mrb[0].mxu0
    %v3396 = vadd.f32 0.0, %v3395
    %3397 = vmatprep.mubr.f32.mxu0 0.0
    %3398 = vmatmul.mubr.f32.gmra.mrb[0].mxu0 %v3298
    %v3399 = vpop.f32.mrb[0].mxu0
    %v3400 = vadd.f32 0.0, %v3399
    %v3401 = vpop.f32.mrb[0].mxu0
    %v3402 = vadd.f32 0.0, %v3401
    %3403 = vmatprep.mubr.f32.mxu0 0.0
    %3404 = vmatmul.mubr.f32.gmra.mrb[0].mxu0 %v3301
    %v3405 = vpop.f32.mrb[0].mxu0
    %v3406 = vadd.f32 0.0, %v3405
    %v3407 = vpop.f32.mrb[0].mxu0
    %v3408 = vadd.f32 0.0, %v3407
    %3409 = vmatprep.mubr.f32.mxu0 0.0
    %3410 = vmatmul.mubr.f32.gmra.mrb[0].mxu0 %v3304
    %v3411 = vpop.f32.mrb[0].mxu0
    %v3412 = vadd.f32 0.0, %v3411
    %v3413 = vpop.f32.mrb[0].mxu0
    %v3414 = vadd.f32 0.0, %v3413
    %3415 = vmatprep.mubr.f32.mxu0 0.0
    %3416 = vmatmul.mubr.f32.gmra.mrb[0].mxu0 %v3307
    %v3417 = vpop.f32.mrb[0].mxu0
    %v3418 = vadd.f32 0.0, %v3417
    %v3419 = vpop.f32.mrb[0].mxu0
    %v3420 = vadd.f32 0.0, %v3419
    %3421 = vmatprep.mubr.f32.mxu0 0.0
    %3422 = vmatmul.mubr.f32.gmra.mrb[0].mxu0 %v3310
    %v3423 = vpop.f32.mrb[0].mxu0
    %v3424 = vadd.f32 0.0, %v3423
    %v3425 = vpop.f32.mrb[0].mxu0
    %v3426 = vadd.f32 0.0, %v3425
    %3427 = vdwg.mxu0
    %3428 = vmatprep.subr.mxu0 %v2883
    %3429 = vmatpush1.msra.mxu0 %v2881
    %3430 = vmatprep.subr.mxu0 %v2889
    %3431 = vmatpush1.msra.mxu0 %v2887
    %3432 = vmatprep.subr.mxu0 %v2895
    %3433 = vmatpush1.msra.mxu0 %v2893
    %3434 = vmatprep.subr.mxu0 %v3271
    %3435 = vmatpush1.msra.mxu0 %v3270
    %3436 = vmatprep.subr.mxu0 %v2962
    %3437 = vmatpush1.msra.mxu0 %v2984
    %3438 = vmatprep.subr.mxu0 %v2970
    %3439 = vmatpush1.msra.mxu0 %v2987
    %3440 = vmatprep.subr.mxu0 %v3275
    %3441 = vmatpush1.msra.mxu0 %v3274
    %3442 = vmatprep.subr.mxu0 %v3051
    %3443 = vmatpush1.msra.mxu0 %v3073
    %3444 = vmatprep.subr.mxu0 %v3059
    %3445 = vmatpush1.msra.mxu0 %v3076
    %3446 = vmatprep.subr.mxu0 %v3279
    %3447 = vmatpush1.msra.mxu0 %v3278
    %3448 = vmatprep.subr.mxu0 %v3139
    %3449 = vmatpush1.msra.mxu0 %v3161
    %3450 = vmatprep.subr.mxu0 %v3147
    %3451 = vmatpush1.msra.mxu0 %v3164
    %3452 = vmatprep.subr.mxu0 %v3283
    %3453 = vmatpush1.msra.mxu0 %v3282
    %3454 = vmatprep.subr.mxu0 %v3227
    %3455 = vmatpush1.msra.mxu0 %v3249
    %3456 = vmatprep.subr.mxu0 %v3235
    %3457 = vmatpush1.msra.mxu0 %v3252
    %3458 = vmatprep.subr.mxu0 %v3319
    %3459 = vmatpush1.msra.mxu0 %v3317
    %3460 = vmatprep.subr.mxu0 0.0
    %3461 = vmatpush1.msra.mxu0 0.0
    %3462 = vmatprep.subr.mxu0 0.0
    %3463 = vmatpush1.msra.mxu0 0.0
    %3464 = vmatprep.subr.mxu0 0.0
    %3465 = vmatpush1.msra.mxu0 0.0
    %3466 = vmatprep.subr.mxu0 0.0
    %3467 = vmatpush1.msra.mxu0 0.0
    %3468 = vmatprep.subr.mxu0 0.0
    %3469 = vmatpush1.msra.mxu0 0.0
    %3470 = vmatprep.subr.mxu0 0.0
    %3471 = vmatpush1.msra.mxu0 0.0
    %3472 = vmatprep.subr.mxu0 0.0
    %3473 = vmatpush1.msra.mxu0 0.0
    %3474 = vmatprep.subr.mxu0 0.0
    %3475 = vmatpush1.msra.mxu0 0.0
    %3476 = vmatprep.subr.mxu0 0.0
    %3477 = vmatpush1.msra.mxu0 0.0
    %3478 = vmatprep.subr.mxu0 0.0
    %3479 = vmatpush1.msra.mxu0 0.0
    %3480 = vmatprep.subr.mxu0 0.0
    %3481 = vmatpush1.msra.mxu0 0.0
    %3482 = vmatprep.subr.mxu0 0.0
    %3483 = vmatpush1.msra.mxu0 0.0
    %3484 = vmatprep.subr.mxu0 0.0
    %3485 = vmatpush1.msra.mxu0 0.0
    %3486 = vmatprep.subr.mxu0 0.0
    %3487 = vmatpush1.msra.mxu0 0.0
    %3488 = vmatprep.subr.mxu0 0.0
    %3489 = vmatpush1.msra.mxu0 0.0
    %3490 = vmatprep.subr.mxu0 0.0
    %3491 = vmatpush1.msra.mxu0 0.0
    %3492 = vmatprep.mubr.f32.mxu0 0.0
    %3493 = vmatmul.mubr.f32.gmra.mrb[0].mxu0 %v3292
    %v3494 = vpop.f32.mrb[0].mxu0
    %v3495 = vadd.f32 0.0, %v3494
    %v3496 = vpop.f32.mrb[0].mxu0
    %v3497 = vadd.f32 0.0, %v3496
    %3498 = vmatprep.mubr.f32.mxu0 0.0
    %3499 = vmatmul.mubr.f32.gmra.mrb[0].mxu0 %v3295
    %v3500 = vpop.f32.mrb[0].mxu0
    %v3501 = vadd.f32 0.0, %v3500
    %v3502 = vpop.f32.mrb[0].mxu0
    %v3503 = vadd.f32 0.0, %v3502
    %3504 = vmatprep.mubr.f32.mxu0 0.0
    %3505 = vmatmul.mubr.f32.gmra.mrb[0].mxu0 %v3298
    %v3506 = vpop.f32.mrb[0].mxu0
    %v3507 = vadd.f32 0.0, %v3506
    %v3508 = vpop.f32.mrb[0].mxu0
    %v3509 = vadd.f32 0.0, %v3508
    %3510 = vmatprep.mubr.f32.mxu0 0.0
    %3511 = vmatmul.mubr.f32.gmra.mrb[0].mxu0 %v3301
    %v3512 = vpop.f32.mrb[0].mxu0
    %v3513 = vadd.f32 0.0, %v3512
    %v3514 = vpop.f32.mrb[0].mxu0
    %v3515 = vadd.f32 0.0, %v3514
    %3516 = vmatprep.mubr.f32.mxu0 0.0
    %3517 = vmatmul.mubr.f32.gmra.mrb[0].mxu0 %v3304
    %v3518 = vpop.f32.mrb[0].mxu0
    %v3519 = vadd.f32 0.0, %v3518
    %v3520 = vpop.f32.mrb[0].mxu0
    %v3521 = vadd.f32 0.0, %v3520
    %3522 = vmatprep.mubr.f32.mxu0 0.0
    %3523 = vmatmul.mubr.f32.gmra.mrb[0].mxu0 %v3307
    %v3524 = vpop.f32.mrb[0].mxu0
    %v3525 = vadd.f32 0.0, %v3524
    %v3526 = vpop.f32.mrb[0].mxu0
    %v3527 = vadd.f32 0.0, %v3526
    %3528 = vmatprep.mubr.f32.mxu0 0.0
    %3529 = vmatmul.mubr.f32.gmra.mrb[0].mxu0 %v3310
    %v3530 = vpop.f32.mrb[0].mxu0
    %v3531 = vadd.f32 0.0, %v3530
    %v3532 = vpop.f32.mrb[0].mxu0
    %v3533 = vadd.f32 0.0, %v3532
    %3534 = vdwg.mxu0
    %v3535 = vld [vmem:[%s5] sm:$0xff]
    %v3536 = vld [vmem:[%s5 + $0x8] sm:$0xff]
    %v3537 = vld [vmem:[%s5 + $0x10] sm:$0xff]
    %v3538 = vld [vmem:[%s5 + $0x18] sm:$0xff]
    %v3539 = vld [vmem:[%s5 + $0x20] sm:$0xff]
    %v3540 = vld [vmem:[%s5 + $0x28] sm:$0xff]
    %v3541 = vld [vmem:[%s5 + $0x30] sm:$0x3]
    %v3542 = vld [vmem:[%s6] sm:$0xff]
    %v3543 = vld [vmem:[%s6 + $0x8] sm:$0xff]
    %v3544 = vld [vmem:[%s6 + $0x10] sm:$0xff]
    %v3545 = vld [vmem:[%s6 + $0x18] sm:$0xff]
    %v3546 = vld [vmem:[%s6 + $0x20] sm:$0xff]
    %v3547 = vld [vmem:[%s6 + $0x28] sm:$0xff]
    %v3548 = vld [vmem:[%s6 + $0x30] sm:$0x3]
    %vm3549 = vcmp.lt.s32.totalorder %v1353, 194
    %vm3550 = vcmp.lt.s32.totalorder %v1354, 194
    %vm3551 = vcmp.lt.s32.totalorder %v1355, 194
    %vm3552 = vcmp.lt.s32.totalorder %v1356, 194
    %v3553 = vsel %vm3549, 1.0, 0.0
    %v3554 = vsel %vm3550, 1.0, 0.0
    %v3555 = vsel %vm3551, 1.0, 0.0
    %v3556 = vsel %vm3552, 1.0, 0.0
    %v3557 = vmul.f32 %v3388, %v3553
    %v3558 = vmul.f32 %v3390, %v3554
    %v3559 = vmul.f32 %v3495, %v3555
    %v3560 = vmul.f32 %v3497, %v3556
    %v3561 = vmul.f32 %v3394, %v3553
    %v3562 = vmul.f32 %v3396, %v3554
    %v3563 = vmul.f32 %v3501, %v3555
    %v3564 = vmul.f32 %v3503, %v3556
    %v3565 = vmul.f32 %v3400, %v3553
    %v3566 = vmul.f32 %v3402, %v3554
    %v3567 = vmul.f32 %v3507, %v3555
    %v3568 = vmul.f32 %v3509, %v3556
    %v3569 = vmul.f32 %v3406, %v3553
    %v3570 = vmul.f32 %v3408, %v3554
    %v3571 = vmul.f32 %v3513, %v3555
    %v3572 = vmul.f32 %v3515, %v3556
    %v3573 = vmul.f32 %v3412, %v3553
    %v3574 = vmul.f32 %v3414, %v3554
    %v3575 = vmul.f32 %v3519, %v3555
    %v3576 = vmul.f32 %v3521, %v3556
    %v3577 = vmul.f32 %v3418, %v3553
    %v3578 = vmul.f32 %v3420, %v3554
    %v3579 = vmul.f32 %v3525, %v3555
    %v3580 = vmul.f32 %v3527, %v3556
    %v3581 = vmul.f32 %v3424, %v3553
    %v3582 = vmul.f32 %v3426, %v3554
    %v3583 = vmul.f32 %v3531, %v3555
    %v3584 = vmul.f32 %v3533, %v3556
    %v3585 = vadd.f32 %v3557, %v3558
    %v3586 = vadd.f32 %v3585, %v3559
    %vm3587 = vcmask 64512
    %v3588 = vsel %vm3587, %v3560, 0.0
    %v3589 = vadd.f32 %v3586, %v3588
    %3590 = vadd.xlane.f32.xlu0 %v3589
    %v3591 = vpop.xlane.xlu0 %3590
    %v3592 = vadd.f32 %v3561, %v3562
    %v3593 = vadd.f32 %v3592, %v3563
    %v3594 = vsel %vm3587, %v3564, 0.0
    %v3595 = vadd.f32 %v3593, %v3594
    %3596 = vadd.xlane.f32.xlu0 %v3595
    %v3597 = vpop.xlane.xlu0 %3596
    %v3598 = vadd.f32 %v3565, %v3566
    %v3599 = vadd.f32 %v3598, %v3567
    %v3600 = vsel %vm3587, %v3568, 0.0
    %v3601 = vadd.f32 %v3599, %v3600
    %3602 = vadd.xlane.f32.xlu0 %v3601
    %v3603 = vpop.xlane.xlu0 %3602
    %v3604 = vadd.f32 %v3569, %v3570
    %v3605 = vadd.f32 %v3604, %v3571
    %v3606 = vsel %vm3587, %v3572, 0.0
    %v3607 = vadd.f32 %v3605, %v3606
    %3608 = vadd.xlane.f32.xlu0 %v3607
    %v3609 = vpop.xlane.xlu0 %3608
    %v3610 = vadd.f32 %v3573, %v3574
    %v3611 = vadd.f32 %v3610, %v3575
    %v3612 = vsel %vm3587, %v3576, 0.0
    %v3613 = vadd.f32 %v3611, %v3612
    %3614 = vadd.xlane.f32.xlu0 %v3613
    %v3615 = vpop.xlane.xlu0 %3614
    %v3616 = vadd.f32 %v3577, %v3578
    %v3617 = vadd.f32 %v3616, %v3579
    %v3618 = vsel %vm3587, %v3580, 0.0
    %v3619 = vadd.f32 %v3617, %v3618
    %3620 = vadd.xlane.f32.xlu0 %v3619
    %v3621 = vpop.xlane.xlu0 %3620
    %v3622 = vsel %vm3007, %v3581, 0.0
    %v3623 = vsel %vm3007, %v3582, 0.0
    %v3624 = vadd.f32 %v3622, %v3623
    %v3625 = vsel %vm3007, %v3583, 0.0
    %v3626 = vadd.f32 %v3624, %v3625
    %vm3627 = vcmask 58368
    %v3628 = vsel %vm3627, %v3584, 0.0
    %v3629 = vadd.f32 %v3626, %v3628
    %3630 = vadd.xlane.f32.xlu0 %v3629
    %v3631 = vpop.xlane.xlu0 %3630
    %v3632 = vmul.f32 %v3591, 0.0025773195
    %v3633 = vmul.f32 %v3597, 0.0025773195
    %v3634 = vmul.f32 %v3603, 0.0025773195
    %v3635 = vmul.f32 %v3609, 0.0025773195
    %v3636 = vmul.f32 %v3615, 0.0025773195
    %v3637 = vmul.f32 %v3621, 0.0025773195
    %v3638 = vmul.f32 %v3631, 0.0025773195
    %v3639 = vsub.f32 %v3388, %v3632
    %v3640 = vsub.f32 %v3390, %v3632
    %v3641 = vsub.f32 %v3495, %v3632
    %v3642 = vsub.f32 %v3497, %v3632
    %v3643 = vsub.f32 %v3394, %v3633
    %v3644 = vsub.f32 %v3396, %v3633
    %v3645 = vsub.f32 %v3501, %v3633
    %v3646 = vsub.f32 %v3503, %v3633
    %v3647 = vsub.f32 %v3400, %v3634
    %v3648 = vsub.f32 %v3402, %v3634
    %v3649 = vsub.f32 %v3507, %v3634
    %v3650 = vsub.f32 %v3509, %v3634
    %v3651 = vsub.f32 %v3406, %v3635
    %v3652 = vsub.f32 %v3408, %v3635
    %v3653 = vsub.f32 %v3513, %v3635
    %v3654 = vsub.f32 %v3515, %v3635
    %v3655 = vsub.f32 %v3412, %v3636
    %v3656 = vsub.f32 %v3414, %v3636
    %v3657 = vsub.f32 %v3519, %v3636
    %v3658 = vsub.f32 %v3521, %v3636
    %v3659 = vsub.f32 %v3418, %v3637
    %v3660 = vsub.f32 %v3420, %v3637
    %v3661 = vsub.f32 %v3525, %v3637
    %v3662 = vsub.f32 %v3527, %v3637
    %v3663 = vsub.f32 %v3424, %v3638
    %v3664 = vsub.f32 %v3426, %v3638
    %v3665 = vsub.f32 %v3531, %v3638
    %v3666 = vsub.f32 %v3533, %v3638
    %v3667 = vmul.f32 %v3639, %v3553
    %v3668 = vmul.f32 %v3640, %v3554
    %v3669 = vmul.f32 %v3641, %v3555
    %v3670 = vmul.f32 %v3642, %v3556
    %v3671 = vmul.f32 %v3643, %v3553
    %v3672 = vmul.f32 %v3644, %v3554
    %v3673 = vmul.f32 %v3645, %v3555
    %v3674 = vmul.f32 %v3646, %v3556
    %v3675 = vmul.f32 %v3647, %v3553
    %v3676 = vmul.f32 %v3648, %v3554
    %v3677 = vmul.f32 %v3649, %v3555
    %v3678 = vmul.f32 %v3650, %v3556
    %v3679 = vmul.f32 %v3651, %v3553
    %v3680 = vmul.f32 %v3652, %v3554
    %v3681 = vmul.f32 %v3653, %v3555
    %v3682 = vmul.f32 %v3654, %v3556
    %v3683 = vmul.f32 %v3655, %v3553
    %v3684 = vmul.f32 %v3656, %v3554
    %v3685 = vmul.f32 %v3657, %v3555
    %v3686 = vmul.f32 %v3658, %v3556
    %v3687 = vmul.f32 %v3659, %v3553
    %v3688 = vmul.f32 %v3660, %v3554
    %v3689 = vmul.f32 %v3661, %v3555
    %v3690 = vmul.f32 %v3662, %v3556
    %v3691 = vmul.f32 %v3663, %v3553
    %v3692 = vmul.f32 %v3664, %v3554
    %v3693 = vmul.f32 %v3665, %v3555
    %v3694 = vmul.f32 %v3666, %v3556
    %v3695 = vmul.f32 %v3667, %v3667
    %v3696 = vmul.f32 %v3668, %v3668
    %v3697 = vmul.f32 %v3669, %v3669
    %v3698 = vmul.f32 %v3670, %v3670
    %v3699 = vmul.f32 %v3671, %v3671
    %v3700 = vmul.f32 %v3672, %v3672
    %v3701 = vmul.f32 %v3673, %v3673
    %v3702 = vmul.f32 %v3674, %v3674
    %v3703 = vmul.f32 %v3675, %v3675
    %v3704 = vmul.f32 %v3676, %v3676
    %v3705 = vmul.f32 %v3677, %v3677
    %v3706 = vmul.f32 %v3678, %v3678
    %v3707 = vmul.f32 %v3679, %v3679
    %v3708 = vmul.f32 %v3680, %v3680
    %v3709 = vmul.f32 %v3681, %v3681
    %v3710 = vmul.f32 %v3682, %v3682
    %v3711 = vmul.f32 %v3683, %v3683
    %v3712 = vmul.f32 %v3684, %v3684
    %v3713 = vmul.f32 %v3685, %v3685
    %v3714 = vmul.f32 %v3686, %v3686
    %v3715 = vmul.f32 %v3687, %v3687
    %v3716 = vmul.f32 %v3688, %v3688
    %v3717 = vmul.f32 %v3689, %v3689
    %v3718 = vmul.f32 %v3690, %v3690
    %v3719 = vmul.f32 %v3691, %v3691
    %v3720 = vmul.f32 %v3692, %v3692
    %v3721 = vmul.f32 %v3693, %v3693
    %v3722 = vmul.f32 %v3694, %v3694
    %v3723 = vadd.f32 %v3695, %v3696
    %v3724 = vadd.f32 %v3723, %v3697
    %v3725 = vsel %vm3587, %v3698, 0.0
    %v3726 = vadd.f32 %v3724, %v3725
    %3727 = vadd.xlane.f32.xlu0 %v3726
    %v3728 = vpop.xlane.xlu0 %3727
    %v3729 = vadd.f32 %v3699, %v3700
    %v3730 = vadd.f32 %v3729, %v3701
    %v3731 = vsel %vm3587, %v3702, 0.0
    %v3732 = vadd.f32 %v3730, %v3731
    %3733 = vadd.xlane.f32.xlu0 %v3732
    %v3734 = vpop.xlane.xlu0 %3733
    %v3735 = vadd.f32 %v3703, %v3704
    %v3736 = vadd.f32 %v3735, %v3705
    %v3737 = vsel %vm3587, %v3706, 0.0
    %v3738 = vadd.f32 %v3736, %v3737
    %3739 = vadd.xlane.f32.xlu0 %v3738
    %v3740 = vpop.xlane.xlu0 %3739
    %v3741 = vadd.f32 %v3707, %v3708
    %v3742 = vadd.f32 %v3741, %v3709
    %v3743 = vsel %vm3587, %v3710, 0.0
    %v3744 = vadd.f32 %v3742, %v3743
    %3745 = vadd.xlane.f32.xlu0 %v3744
    %v3746 = vpop.xlane.xlu0 %3745
    %v3747 = vadd.f32 %v3711, %v3712
    %v3748 = vadd.f32 %v3747, %v3713
    %v3749 = vsel %vm3587, %v3714, 0.0
    %v3750 = vadd.f32 %v3748, %v3749
    %3751 = vadd.xlane.f32.xlu0 %v3750
    %v3752 = vpop.xlane.xlu0 %3751
    %v3753 = vadd.f32 %v3715, %v3716
    %v3754 = vadd.f32 %v3753, %v3717
    %v3755 = vsel %vm3587, %v3718, 0.0
    %v3756 = vadd.f32 %v3754, %v3755
    %3757 = vadd.xlane.f32.xlu0 %v3756
    %v3758 = vpop.xlane.xlu0 %3757
    %v3759 = vsel %vm3007, %v3719, 0.0
    %v3760 = vsel %vm3007, %v3720, 0.0
    %v3761 = vadd.f32 %v3759, %v3760
    %v3762 = vsel %vm3007, %v3721, 0.0
    %v3763 = vadd.f32 %v3761, %v3762
    %v3764 = vsel %vm3627, %v3722, 0.0
    %v3765 = vadd.f32 %v3763, %v3764
    %3766 = vadd.xlane.f32.xlu0 %v3765
    %v3767 = vpop.xlane.xlu0 %3766
    %v3768 = vmul.f32 %v3728, 0.0025773195
    %v3769 = vmul.f32 %v3734, 0.0025773195
    %v3770 = vmul.f32 %v3740, 0.0025773195
    %v3771 = vmul.f32 %v3746, 0.0025773195
    %v3772 = vmul.f32 %v3752, 0.0025773195
    %v3773 = vmul.f32 %v3758, 0.0025773195
    %v3774 = vmul.f32 %v3767, 0.0025773195
    %v3775 = vrsqrt.pop %v3768
    %v3776 = vrsqrt.pop %v3769
    %v3777 = vrsqrt.pop %v3770
    %v3778 = vrsqrt.pop %v3771
    %v3779 = vrsqrt.pop %v3772
    %v3780 = vrsqrt.pop %v3773
    %v3781 = vrsqrt.pop %v3774
    %v3782 = vmul.f32 %v3775, %v3535
    %v3783 = vmul.f32 %v3776, %v3536
    %v3784 = vmul.f32 %v3777, %v3537
    %v3785 = vmul.f32 %v3778, %v3538
    %v3786 = vmul.f32 %v3779, %v3539
    %v3787 = vmul.f32 %v3780, %v3540
    %v3788 = vmul.f32 %v3781, %v3541
    %3790 = vset.pattern.permute.xlu0 0
    %3791 = vperm.xlu0 %3790, %v3782
    %v3792 = vpop.permute.xlu0 %3791
    %3795 = vset.pattern.permute.xlu0 0
    %3796 = vperm.xlu0 %3795, %v3783
    %v3797 = vpop.permute.xlu0 %3796
    %3800 = vset.pattern.permute.xlu0 0
    %3801 = vperm.xlu0 %3800, %v3784
    %v3802 = vpop.permute.xlu0 %3801
    %3805 = vset.pattern.permute.xlu0 0
    %3806 = vperm.xlu0 %3805, %v3785
    %v3807 = vpop.permute.xlu0 %3806
    %3810 = vset.pattern.permute.xlu0 0
    %3811 = vperm.xlu0 %3810, %v3786
    %v3812 = vpop.permute.xlu0 %3811
    %3815 = vset.pattern.permute.xlu0 0
    %3816 = vperm.xlu0 %3815, %v3787
    %v3817 = vpop.permute.xlu0 %3816
    %3820 = vset.pattern.permute.xlu0 0
    %3821 = vperm.xlu0 %3820, %v3788
    %v3822 = vpop.permute.xlu0 %3821
    %v3824 = vmul.f32 %v3639, %v3792
    %v3825 = vmul.f32 %v3640, %v3792
    %v3826 = vmul.f32 %v3641, %v3792
    %v3827 = vmul.f32 %v3642, %v3792
    %v3828 = vmul.f32 %v3643, %v3797
    %v3829 = vmul.f32 %v3644, %v3797
    %v3830 = vmul.f32 %v3645, %v3797
    %v3831 = vmul.f32 %v3646, %v3797
    %v3832 = vmul.f32 %v3647, %v3802
    %v3833 = vmul.f32 %v3648, %v3802
    %v3834 = vmul.f32 %v3649, %v3802
    %v3835 = vmul.f32 %v3650, %v3802
    %v3836 = vmul.f32 %v3651, %v3807
    %v3837 = vmul.f32 %v3652, %v3807
    %v3838 = vmul.f32 %v3653, %v3807
    %v3839 = vmul.f32 %v3654, %v3807
    %v3840 = vmul.f32 %v3655, %v3812
    %v3841 = vmul.f32 %v3656, %v3812
    %v3842 = vmul.f32 %v3657, %v3812
    %v3843 = vmul.f32 %v3658, %v3812
    %v3844 = vmul.f32 %v3659, %v3817
    %v3845 = vmul.f32 %v3660, %v3817
    %v3846 = vmul.f32 %v3661, %v3817
    %v3847 = vmul.f32 %v3662, %v3817
    %v3848 = vmul.f32 %v3663, %v3822
    %v3849 = vmul.f32 %v3664, %v3822
    %v3850 = vmul.f32 %v3665, %v3822
    %v3851 = vmul.f32 %v3666, %v3822
    %3853 = vset.pattern.permute.xlu0 0
    %3854 = vperm.xlu0 %3853, %v3542
    %v3855 = vpop.permute.xlu0 %3854
    %3858 = vset.pattern.permute.xlu0 0
    %3859 = vperm.xlu0 %3858, %v3543
    %v3860 = vpop.permute.xlu0 %3859
    %3863 = vset.pattern.permute.xlu0 0
    %3864 = vperm.xlu0 %3863, %v3544
    %v3865 = vpop.permute.xlu0 %3864
    %3868 = vset.pattern.permute.xlu0 0
    %3869 = vperm.xlu0 %3868, %v3545
    %v3870 = vpop.permute.xlu0 %3869
    %3873 = vset.pattern.permute.xlu0 0
    %3874 = vperm.xlu0 %3873, %v3546
    %v3875 = vpop.permute.xlu0 %3874
    %3878 = vset.pattern.permute.xlu0 0
    %3879 = vperm.xlu0 %3878, %v3547
    %v3880 = vpop.permute.xlu0 %3879
    %3883 = vset.pattern.permute.xlu0 0
    %3884 = vperm.xlu0 %3883, %v3548
    %v3885 = vpop.permute.xlu0 %3884
    %v3887 = vadd.f32 %v3824, %v3855
    %v3888 = vadd.f32 %v3825, %v3855
    %v3889 = vadd.f32 %v3826, %v3855
    %v3890 = vadd.f32 %v3827, %v3855
    %v3891 = vadd.f32 %v3828, %v3860
    %v3892 = vadd.f32 %v3829, %v3860
    %v3893 = vadd.f32 %v3830, %v3860
    %v3894 = vadd.f32 %v3831, %v3860
    %v3895 = vadd.f32 %v3832, %v3865
    %v3896 = vadd.f32 %v3833, %v3865
    %v3897 = vadd.f32 %v3834, %v3865
    %v3898 = vadd.f32 %v3835, %v3865
    %v3899 = vadd.f32 %v3836, %v3870
    %v3900 = vadd.f32 %v3837, %v3870
    %v3901 = vadd.f32 %v3838, %v3870
    %v3902 = vadd.f32 %v3839, %v3870
    %v3903 = vadd.f32 %v3840, %v3875
    %v3904 = vadd.f32 %v3841, %v3875
    %v3905 = vadd.f32 %v3842, %v3875
    %v3906 = vadd.f32 %v3843, %v3875
    %v3907 = vadd.f32 %v3844, %v3880
    %v3908 = vadd.f32 %v3845, %v3880
    %v3909 = vadd.f32 %v3846, %v3880
    %v3910 = vadd.f32 %v3847, %v3880
    %v3911 = vadd.f32 %v3848, %v3885
    %v3912 = vadd.f32 %v3849, %v3885
    %v3913 = vadd.f32 %v3850, %v3885
    %v3914 = vadd.f32 %v3851, %v3885
    %vm3915 = vcmp.gt.f32.partialorder %v3887, 0.0
    %vm3916 = vcmp.gt.f32.partialorder %v3888, 0.0
    %vm3917 = vcmp.gt.f32.partialorder %v3889, 0.0
    %vm3918 = vcmp.gt.f32.partialorder %v3890, 0.0
    %vm3919 = vcmp.gt.f32.partialorder %v3891, 0.0
    %vm3920 = vcmp.gt.f32.partialorder %v3892, 0.0
    %vm3921 = vcmp.gt.f32.partialorder %v3893, 0.0
    %vm3922 = vcmp.gt.f32.partialorder %v3894, 0.0
    %vm3923 = vcmp.gt.f32.partialorder %v3895, 0.0
    %vm3924 = vcmp.gt.f32.partialorder %v3896, 0.0
    %vm3925 = vcmp.gt.f32.partialorder %v3897, 0.0
    %vm3926 = vcmp.gt.f32.partialorder %v3898, 0.0
    %vm3927 = vcmp.gt.f32.partialorder %v3899, 0.0
    %vm3928 = vcmp.gt.f32.partialorder %v3900, 0.0
    %vm3929 = vcmp.gt.f32.partialorder %v3901, 0.0
    %vm3930 = vcmp.gt.f32.partialorder %v3902, 0.0
    %vm3931 = vcmp.gt.f32.partialorder %v3903, 0.0
    %vm3932 = vcmp.gt.f32.partialorder %v3904, 0.0
    %vm3933 = vcmp.gt.f32.partialorder %v3905, 0.0
    %vm3934 = vcmp.gt.f32.partialorder %v3906, 0.0
    %vm3935 = vcmp.gt.f32.partialorder %v3907, 0.0
    %vm3936 = vcmp.gt.f32.partialorder %v3908, 0.0
    %vm3937 = vcmp.gt.f32.partialorder %v3909, 0.0
    %vm3938 = vcmp.gt.f32.partialorder %v3910, 0.0
    %vm3939 = vcmp.gt.f32.partialorder %v3911, 0.0
    %vm3940 = vcmp.gt.f32.partialorder %v3912, 0.0
    %vm3941 = vcmp.gt.f32.partialorder %v3913, 0.0
    %vm3942 = vcmp.gt.f32.partialorder %v3914, 0.0
    %v3943 = vmul.f32 %v3887, 1.442695
    %v3944 = vpow.pop %v3943
    %v3945 = vmul.f32 %v3888, 1.442695
    %v3946 = vpow.pop %v3945
    %v3947 = vmul.f32 %v3889, 1.442695
    %v3948 = vpow.pop %v3947
    %v3949 = vmul.f32 %v3890, 1.442695
    %v3950 = vpow.pop %v3949
    %v3951 = vmul.f32 %v3891, 1.442695
    %v3952 = vpow.pop %v3951
    %v3953 = vmul.f32 %v3892, 1.442695
    %v3954 = vpow.pop %v3953
    %v3955 = vmul.f32 %v3893, 1.442695
    %v3956 = vpow.pop %v3955
    %v3957 = vmul.f32 %v3894, 1.442695
    %v3958 = vpow.pop %v3957
    %v3959 = vmul.f32 %v3895, 1.442695
    %v3960 = vpow.pop %v3959
    %v3961 = vmul.f32 %v3896, 1.442695
    %v3962 = vpow.pop %v3961
    %v3963 = vmul.f32 %v3897, 1.442695
    %v3964 = vpow.pop %v3963
    %v3965 = vmul.f32 %v3898, 1.442695
    %v3966 = vpow.pop %v3965
    %v3967 = vmul.f32 %v3899, 1.442695
    %v3968 = vpow.pop %v3967
    %v3969 = vmul.f32 %v3900, 1.442695
    %v3970 = vpow.pop %v3969
    %v3971 = vmul.f32 %v3901, 1.442695
    %v3972 = vpow.pop %v3971
    %v3973 = vmul.f32 %v3902, 1.442695
    %v3974 = vpow.pop %v3973
    %v3975 = vmul.f32 %v3903, 1.442695
    %v3976 = vpow.pop %v3975
    %v3977 = vmul.f32 %v3904, 1.442695
    %v3978 = vpow.pop %v3977
    %v3979 = vmul.f32 %v3905, 1.442695
    %v3980 = vpow.pop %v3979
    %v3981 = vmul.f32 %v3906, 1.442695
    %v3982 = vpow.pop %v3981
    %v3983 = vmul.f32 %v3907, 1.442695
    %v3984 = vpow.pop %v3983
    %v3985 = vmul.f32 %v3908, 1.442695
    %v3986 = vpow.pop %v3985
    %v3987 = vmul.f32 %v3909, 1.442695
    %v3988 = vpow.pop %v3987
    %v3989 = vmul.f32 %v3910, 1.442695
    %v3990 = vpow.pop %v3989
    %v3991 = vmul.f32 %v3911, 1.442695
    %v3992 = vpow.pop %v3991
    %v3993 = vmul.f32 %v3912, 1.442695
    %v3994 = vpow.pop %v3993
    %v3995 = vmul.f32 %v3913, 1.442695
    %v3996 = vpow.pop %v3995
    %v3997 = vmul.f32 %v3914, 1.442695
    %v3998 = vpow.pop %v3997
    %v3999 = vsub.f32 %v3944, 1.0
    %v4000 = vsub.f32 %v3946, 1.0
    %v4001 = vsub.f32 %v3948, 1.0
    %v4002 = vsub.f32 %v3950, 1.0
    %v4003 = vsub.f32 %v3952, 1.0
    %v4004 = vsub.f32 %v3954, 1.0
    %v4005 = vsub.f32 %v3956, 1.0
    %v4006 = vsub.f32 %v3958, 1.0
    %v4007 = vsub.f32 %v3960, 1.0
    %v4008 = vsub.f32 %v3962, 1.0
    %v4009 = vsub.f32 %v3964, 1.0
    %v4010 = vsub.f32 %v3966, 1.0
    %v4011 = vsub.f32 %v3968, 1.0
    %v4012 = vsub.f32 %v3970, 1.0
    %v4013 = vsub.f32 %v3972, 1.0
    %v4014 = vsub.f32 %v3974, 1.0
    %v4015 = vsub.f32 %v3976, 1.0
    %v4016 = vsub.f32 %v3978, 1.0
    %v4017 = vsub.f32 %v3980, 1.0
    %v4018 = vsub.f32 %v3982, 1.0
    %v4019 = vsub.f32 %v3984, 1.0
    %v4020 = vsub.f32 %v3986, 1.0
    %v4021 = vsub.f32 %v3988, 1.0
    %v4022 = vsub.f32 %v3990, 1.0
    %v4023 = vsub.f32 %v3992, 1.0
    %v4024 = vsub.f32 %v3994, 1.0
    %v4025 = vsub.f32 %v3996, 1.0
    %v4026 = vsub.f32 %v3998, 1.0
    %v4027 = vsel %vm3915, %v3887, %v3999
    %v4028 = vsel %vm3916, %v3888, %v4000
    %v4029 = vsel %vm3917, %v3889, %v4001
    %v4030 = vsel %vm3918, %v3890, %v4002
    %v4031 = vsel %vm3919, %v3891, %v4003
    %v4032 = vsel %vm3920, %v3892, %v4004
    %v4033 = vsel %vm3921, %v3893, %v4005
    %v4034 = vsel %vm3922, %v3894, %v4006
    %v4035 = vsel %vm3923, %v3895, %v4007
    %v4036 = vsel %vm3924, %v3896, %v4008
    %v4037 = vsel %vm3925, %v3897, %v4009
    %v4038 = vsel %vm3926, %v3898, %v4010
    %v4039 = vsel %vm3927, %v3899, %v4011
    %v4040 = vsel %vm3928, %v3900, %v4012
    %v4041 = vsel %vm3929, %v3901, %v4013
    %v4042 = vsel %vm3930, %v3902, %v4014
    %v4043 = vsel %vm3931, %v3903, %v4015
    %v4044 = vsel %vm3932, %v3904, %v4016
    %v4045 = vsel %vm3933, %v3905, %v4017
    %v4046 = vsel %vm3934, %v3906, %v4018
    %v4047 = vsel %vm3935, %v3907, %v4019
    %v4048 = vsel %vm3936, %v3908, %v4020
    %v4049 = vsel %vm3937, %v3909, %v4021
    %v4050 = vsel %vm3938, %v3910, %v4022
    %v4051 = vsel %vm3939, %v3911, %v4023
    %v4052 = vsel %vm3940, %v3912, %v4024
    %v4053 = vsel %vm3941, %v3913, %v4025
    %v4054 = vsel %vm3942, %v3914, %v4026
    %4083 = vrot.lane.b32.xlu0 %v4027, 127
    %v4084 = vpop.permute.xlu0 %4083
    %4085 = vrot.lane.b32.xlu0 %v4028, 127
    %v4086 = vpop.permute.xlu0 %4085
    %4087 = vrot.lane.b32.xlu0 %v4029, 127
    %v4088 = vpop.permute.xlu0 %4087
    %4089 = vrot.lane.b32.xlu0 %v4030, 127
    %v4090 = vpop.permute.xlu0 %4089
    %4091 = vrot.lane.b32.xlu0 %v4031, 127
    %v4092 = vpop.permute.xlu0 %4091
    %4093 = vrot.lane.b32.xlu0 %v4032, 127
    %v4094 = vpop.permute.xlu0 %4093
    %4095 = vrot.lane.b32.xlu0 %v4033, 127
    %v4096 = vpop.permute.xlu0 %4095
    %4097 = vrot.lane.b32.xlu0 %v4034, 127
    %v4098 = vpop.permute.xlu0 %4097
    %4099 = vrot.lane.b32.xlu0 %v4035, 127
    %v4100 = vpop.permute.xlu0 %4099
    %4101 = vrot.lane.b32.xlu0 %v4036, 127
    %v4102 = vpop.permute.xlu0 %4101
    %4103 = vrot.lane.b32.xlu0 %v4037, 127
    %v4104 = vpop.permute.xlu0 %4103
    %4105 = vrot.lane.b32.xlu0 %v4038, 127
    %v4106 = vpop.permute.xlu0 %4105
    %4107 = vrot.lane.b32.xlu0 %v4039, 127
    %v4108 = vpop.permute.xlu0 %4107
    %4109 = vrot.lane.b32.xlu0 %v4040, 127
    %v4110 = vpop.permute.xlu0 %4109
    %4111 = vrot.lane.b32.xlu0 %v4041, 127
    %v4112 = vpop.permute.xlu0 %4111
    %4113 = vrot.lane.b32.xlu0 %v4042, 127
    %v4114 = vpop.permute.xlu0 %4113
    %4115 = vrot.lane.b32.xlu0 %v4043, 127
    %v4116 = vpop.permute.xlu0 %4115
    %4117 = vrot.lane.b32.xlu0 %v4044, 127
    %v4118 = vpop.permute.xlu0 %4117
    %4119 = vrot.lane.b32.xlu0 %v4045, 127
    %v4120 = vpop.permute.xlu0 %4119
    %4121 = vrot.lane.b32.xlu0 %v4046, 127
    %v4122 = vpop.permute.xlu0 %4121
    %4123 = vrot.lane.b32.xlu0 %v4047, 127
    %v4124 = vpop.permute.xlu0 %4123
    %4125 = vrot.lane.b32.xlu0 %v4048, 127
    %v4126 = vpop.permute.xlu0 %4125
    %4127 = vrot.lane.b32.xlu0 %v4049, 127
    %v4128 = vpop.permute.xlu0 %4127
    %4129 = vrot.lane.b32.xlu0 %v4050, 127
    %v4130 = vpop.permute.xlu0 %4129
    %4131 = vrot.lane.b32.xlu0 %v4051, 127
    %v4132 = vpop.permute.xlu0 %4131
    %4133 = vrot.lane.b32.xlu0 %v4052, 127
    %v4134 = vpop.permute.xlu0 %4133
    %4135 = vrot.lane.b32.xlu0 %v4053, 127
    %v4136 = vpop.permute.xlu0 %4135
    %4137 = vrot.lane.b32.xlu0 %v4054, 127
    %v4138 = vpop.permute.xlu0 %4137
    %v4139 = vsel %vm74, %v4084, %v4086
    %v4140 = vsel %vm74, %v4086, %v4088
    %v4141 = vsel %vm74, %v4088, %v4090
    %v4142 = vsel %vm74, %v4092, %v4094
    %v4143 = vsel %vm74, %v4094, %v4096
    %v4144 = vsel %vm74, %v4096, %v4098
    %v4145 = vsel %vm74, %v4100, %v4102
    %v4146 = vsel %vm74, %v4102, %v4104
    %v4147 = vsel %vm74, %v4104, %v4106
    %v4148 = vsel %vm74, %v4108, %v4110
    %v4149 = vsel %vm74, %v4110, %v4112
    %v4150 = vsel %vm74, %v4112, %v4114
    %v4151 = vsel %vm74, %v4116, %v4118
    %v4152 = vsel %vm74, %v4118, %v4120
    %v4153 = vsel %vm74, %v4120, %v4122
    %v4154 = vsel %vm74, %v4124, %v4126
    %v4155 = vsel %vm74, %v4126, %v4128
    %v4156 = vsel %vm74, %v4128, %v4130
    %v4157 = vsel %vm74, %v4132, %v4134
    %v4158 = vsel %vm74, %v4134, %v4136
    %v4159 = vsel %vm74, %v4136, %v4138
    %v4188 = vmax.f32 %v4027, %v4139
    %v4189 = vmax.f32 %v4028, %v4140
    %v4190 = vmax.f32 %v4029, %v4141
    %v4191 = vmax.f32 %v4030, %v4090
    %v4192 = vmax.f32 %v4031, %v4142
    %v4193 = vmax.f32 %v4032, %v4143
    %v4194 = vmax.f32 %v4033, %v4144
    %v4195 = vmax.f32 %v4034, %v4098
    %v4196 = vmax.f32 %v4035, %v4145
    %v4197 = vmax.f32 %v4036, %v4146
    %v4198 = vmax.f32 %v4037, %v4147
    %v4199 = vmax.f32 %v4038, %v4106
    %v4200 = vmax.f32 %v4039, %v4148
    %v4201 = vmax.f32 %v4040, %v4149
    %v4202 = vmax.f32 %v4041, %v4150
    %v4203 = vmax.f32 %v4042, %v4114
    %v4204 = vmax.f32 %v4043, %v4151
    %v4205 = vmax.f32 %v4044, %v4152
    %v4206 = vmax.f32 %v4045, %v4153
    %v4207 = vmax.f32 %v4046, %v4122
    %v4208 = vmax.f32 %v4047, %v4154
    %v4209 = vmax.f32 %v4048, %v4155
    %v4210 = vmax.f32 %v4049, %v4156
    %v4211 = vmax.f32 %v4050, %v4130
    %v4212 = vmax.f32 %v4051, %v4157
    %v4213 = vmax.f32 %v4052, %v4158
    %v4214 = vmax.f32 %v4053, %v4159
    %v4215 = vmax.f32 %v4054, %v4138
    %vm4216 = vcmp.ge.s32.totalorder %v572, 97
    %vm4217 = vcmp.ge.s32.totalorder %v573, 97
    %v4218 = vsel %vm4216, 1, 0
    %v4219 = vsel %vm4217, 1, 0
    %v4220 = vmul.u32 %v4218, 198
    %v4221 = vmul.u32 %v4219, 198
    %v4222 = vmul.u32 %v4218, 97
    %v4223 = vmul.u32 %v4219, 97
    %v4224 = vsub.s32 %v572, %v4222
    %v4225 = vsub.s32 %v573, %v4223
    %v4226 = vmul.u32 %v4224, 2
    %v4227 = vmul.u32 %v4225, 2
    %v4228 = vadd.s32 %v4220, %v4226
    %v4229 = vadd.s32 %v4221, %v4227
    %vm4230 = vcmp.eq.s32.totalorder %v1237, %v4228
    %vm4231 = vcmp.eq.s32.totalorder %v1237, %v4229
    %vm4232 = vcmp.eq.s32.totalorder %v1238, %v4228
    %vm4233 = vcmp.eq.s32.totalorder %v1238, %v4229
    %vm4234 = vcmp.eq.s32.totalorder %v1239, %v4228
    %vm4235 = vcmp.eq.s32.totalorder %v1239, %v4229
    %vm4236 = vcmp.eq.s32.totalorder %v1240, %v4228
    %vm4237 = vcmp.eq.s32.totalorder %v1240, %v4229
    %vm4238 = vcmp.eq.s32.totalorder %v1241, %v4228
    %vm4239 = vcmp.eq.s32.totalorder %v1241, %v4229
    %vm4240 = vcmp.eq.s32.totalorder %v1242, %v4228
    %vm4241 = vcmp.eq.s32.totalorder %v1242, %v4229
    %vm4242 = vcmp.eq.s32.totalorder %v1243, %v4228
    %vm4243 = vcmp.eq.s32.totalorder %v1243, %v4229
    %vm4244 = vcmp.eq.s32.totalorder %v1244, %v4228
    %vm4245 = vcmp.eq.s32.totalorder %v1244, %v4229
    %vm4246 = vcmp.eq.s32.totalorder %v1245, %v4228
    %vm4247 = vcmp.eq.s32.totalorder %v1245, %v4229
    %vm4248 = vcmp.eq.s32.totalorder %v1246, %v4228
    %vm4249 = vcmp.eq.s32.totalorder %v1246, %v4229
    %vm4250 = vcmp.eq.s32.totalorder %v1247, %v4228
    %vm4251 = vcmp.eq.s32.totalorder %v1247, %v4229
    %vm4252 = vcmp.eq.s32.totalorder %v1248, %v4228
    %vm4253 = vcmp.eq.s32.totalorder %v1248, %v4229
    %vm4254 = vcmp.eq.s32.totalorder %v1249, %v4228
    %vm4255 = vcmp.eq.s32.totalorder %v1249, %v4229
    %vm4256 = vcmp.eq.s32.totalorder %v1250, %v4228
    %vm4257 = vcmp.eq.s32.totalorder %v1250, %v4229
    %vm4258 = vcmp.eq.s32.totalorder %v1251, %v4228
    %vm4259 = vcmp.eq.s32.totalorder %v1251, %v4229
    %vm4260 = vcmp.eq.s32.totalorder %v1252, %v4228
    %vm4261 = vcmp.eq.s32.totalorder %v1252, %v4229
    %vm4262 = vcmp.eq.s32.totalorder %v1253, %v4228
    %vm4263 = vcmp.eq.s32.totalorder %v1253, %v4229
    %vm4264 = vcmp.eq.s32.totalorder %v1254, %v4228
    %vm4265 = vcmp.eq.s32.totalorder %v1254, %v4229
    %vm4266 = vcmp.eq.s32.totalorder %v1255, %v4228
    %vm4267 = vcmp.eq.s32.totalorder %v1255, %v4229
    %vm4268 = vcmp.eq.s32.totalorder %v1256, %v4228
    %vm4269 = vcmp.eq.s32.totalorder %v1256, %v4229
    %vm4270 = vcmp.eq.s32.totalorder %v1257, %v4228
    %vm4271 = vcmp.eq.s32.totalorder %v1257, %v4229
    %vm4272 = vcmp.eq.s32.totalorder %v1258, %v4228
    %vm4273 = vcmp.eq.s32.totalorder %v1258, %v4229
    %vm4274 = vcmp.eq.s32.totalorder %v1259, %v4228
    %vm4275 = vcmp.eq.s32.totalorder %v1259, %v4229
    %vm4276 = vcmp.eq.s32.totalorder %v1260, %v4228
    %vm4277 = vcmp.eq.s32.totalorder %v1260, %v4229
    %vm4278 = vcmp.eq.s32.totalorder %v1261, %v4228
    %vm4279 = vcmp.eq.s32.totalorder %v1261, %v4229
    %vm4280 = vcmp.eq.s32.totalorder %v1262, %v4228
    %vm4281 = vcmp.eq.s32.totalorder %v1262, %v4229
    %vm4282 = vcmp.eq.s32.totalorder %v1263, %v4228
    %vm4283 = vcmp.eq.s32.totalorder %v1263, %v4229
    %vm4284 = vcmp.eq.s32.totalorder %v1264, %v4228
    %vm4285 = vcmp.eq.s32.totalorder %v1264, %v4229
    %vm4286 = vcmp.eq.s32.totalorder %v1265, %v4228
    %vm4287 = vcmp.eq.s32.totalorder %v1265, %v4229
    %vm4288 = vcmp.eq.s32.totalorder %v1266, %v4228
    %vm4289 = vcmp.eq.s32.totalorder %v1266, %v4229
    %vm4290 = vcmp.eq.s32.totalorder %v1267, %v4228
    %vm4291 = vcmp.eq.s32.totalorder %v1267, %v4229
    %vm4292 = vcmp.eq.s32.totalorder %v1268, %v4228
    %vm4293 = vcmp.eq.s32.totalorder %v1268, %v4229
    %vm4294 = vcmp.eq.s32.totalorder %v1269, %v4228
    %vm4295 = vcmp.eq.s32.totalorder %v1269, %v4229
    %vm4296 = vcmp.eq.s32.totalorder %v1270, %v4228
    %vm4297 = vcmp.eq.s32.totalorder %v1270, %v4229
    %vm4298 = vcmp.eq.s32.totalorder %v1271, %v4228
    %vm4299 = vcmp.eq.s32.totalorder %v1271, %v4229
    %vm4300 = vcmp.eq.s32.totalorder %v1272, %v4228
    %vm4301 = vcmp.eq.s32.totalorder %v1272, %v4229
    %vm4302 = vcmp.eq.s32.totalorder %v1273, %v4228
    %vm4303 = vcmp.eq.s32.totalorder %v1273, %v4229
    %vm4304 = vcmp.eq.s32.totalorder %v1274, %v4228
    %vm4305 = vcmp.eq.s32.totalorder %v1274, %v4229
    %vm4306 = vcmp.eq.s32.totalorder %v1275, %v4228
    %vm4307 = vcmp.eq.s32.totalorder %v1275, %v4229
    %vm4308 = vcmp.eq.s32.totalorder %v1276, %v4228
    %vm4309 = vcmp.eq.s32.totalorder %v1276, %v4229
    %vm4310 = vcmp.eq.s32.totalorder %v1277, %v4228
    %vm4311 = vcmp.eq.s32.totalorder %v1277, %v4229
    %vm4312 = vcmp.eq.s32.totalorder %v1278, %v4228
    %vm4313 = vcmp.eq.s32.totalorder %v1278, %v4229
    %vm4314 = vcmp.eq.s32.totalorder %v1279, %v4228
    %vm4315 = vcmp.eq.s32.totalorder %v1279, %v4229
    %vm4316 = vcmp.eq.s32.totalorder %v1280, %v4228
    %vm4317 = vcmp.eq.s32.totalorder %v1280, %v4229
    %vm4318 = vcmp.eq.s32.totalorder %v1281, %v4228
    %vm4319 = vcmp.eq.s32.totalorder %v1281, %v4229
    %vm4320 = vcmp.eq.s32.totalorder %v1282, %v4228
    %vm4321 = vcmp.eq.s32.totalorder %v1282, %v4229
    %vm4322 = vcmp.eq.s32.totalorder %v1283, %v4228
    %vm4323 = vcmp.eq.s32.totalorder %v1283, %v4229
    %vm4324 = vcmp.eq.s32.totalorder %v1284, %v4228
    %vm4325 = vcmp.eq.s32.totalorder %v1284, %v4229
    %vm4326 = vcmp.eq.s32.totalorder %v1285, %v4228
    %vm4327 = vcmp.eq.s32.totalorder %v1285, %v4229
    %v4328 = vsel %vm4230, 1.0, 0.0
    %v4329 = vsel %vm4231, 1.0, 0.0
    %v4330 = vsel %vm4232, 1.0, 0.0
    %v4331 = vsel %vm4233, 1.0, 0.0
    %v4332 = vsel %vm4234, 1.0, 0.0
    %v4333 = vsel %vm4235, 1.0, 0.0
    %v4334 = vsel %vm4236, 1.0, 0.0
    %v4335 = vsel %vm4237, 1.0, 0.0
    %v4336 = vsel %vm4238, 1.0, 0.0
    %v4337 = vsel %vm4239, 1.0, 0.0
    %v4338 = vsel %vm4240, 1.0, 0.0
    %v4339 = vsel %vm4241, 1.0, 0.0
    %v4340 = vsel %vm4242, 1.0, 0.0
    %v4341 = vsel %vm4243, 1.0, 0.0
    %v4342 = vsel %vm4244, 1.0, 0.0
    %v4343 = vsel %vm4245, 1.0, 0.0
    %v4344 = vsel %vm4246, 1.0, 0.0
    %v4345 = vsel %vm4247, 1.0, 0.0
    %v4346 = vsel %vm4248, 1.0, 0.0
    %v4347 = vsel %vm4249, 1.0, 0.0
    %v4348 = vsel %vm4250, 1.0, 0.0
    %v4349 = vsel %vm4251, 1.0, 0.0
    %v4350 = vsel %vm4252, 1.0, 0.0
    %v4351 = vsel %vm4253, 1.0, 0.0
    %v4352 = vsel %vm4254, 1.0, 0.0
    %v4353 = vsel %vm4255, 1.0, 0.0
    %v4354 = vsel %vm4256, 1.0, 0.0
    %v4355 = vsel %vm4257, 1.0, 0.0
    %v4356 = vsel %vm4258, 1.0, 0.0
    %v4357 = vsel %vm4259, 1.0, 0.0
    %v4358 = vsel %vm4260, 1.0, 0.0
    %v4359 = vsel %vm4261, 1.0, 0.0
    %v4360 = vsel %vm4262, 1.0, 0.0
    %v4361 = vsel %vm4263, 1.0, 0.0
    %v4362 = vsel %vm4264, 1.0, 0.0
    %v4363 = vsel %vm4265, 1.0, 0.0
    %v4364 = vsel %vm4266, 1.0, 0.0
    %v4365 = vsel %vm4267, 1.0, 0.0
    %v4366 = vsel %vm4268, 1.0, 0.0
    %v4367 = vsel %vm4269, 1.0, 0.0
    %v4368 = vsel %vm4270, 1.0, 0.0
    %v4369 = vsel %vm4271, 1.0, 0.0
    %v4370 = vsel %vm4272, 1.0, 0.0
    %v4371 = vsel %vm4273, 1.0, 0.0
    %v4372 = vsel %vm4274, 1.0, 0.0
    %v4373 = vsel %vm4275, 1.0, 0.0
    %v4374 = vsel %vm4276, 1.0, 0.0
    %v4375 = vsel %vm4277, 1.0, 0.0
    %v4376 = vsel %vm4278, 1.0, 0.0
    %v4377 = vsel %vm4279, 1.0, 0.0
    %v4378 = vsel %vm4280, 1.0, 0.0
    %v4379 = vsel %vm4281, 1.0, 0.0
    %v4380 = vsel %vm4282, 1.0, 0.0
    %v4381 = vsel %vm4283, 1.0, 0.0
    %v4382 = vsel %vm4284, 1.0, 0.0
    %v4383 = vsel %vm4285, 1.0, 0.0
    %v4384 = vsel %vm4286, 1.0, 0.0
    %v4385 = vsel %vm4287, 1.0, 0.0
    %v4386 = vsel %vm4288, 1.0, 0.0
    %v4387 = vsel %vm4289, 1.0, 0.0
    %v4388 = vsel %vm4290, 1.0, 0.0
    %v4389 = vsel %vm4291, 1.0, 0.0
    %v4390 = vsel %vm4292, 1.0, 0.0
    %v4391 = vsel %vm4293, 1.0, 0.0
    %v4392 = vsel %vm4294, 1.0, 0.0
    %v4393 = vsel %vm4295, 1.0, 0.0
    %v4394 = vsel %vm4296, 1.0, 0.0
    %v4395 = vsel %vm4297, 1.0, 0.0
    %v4396 = vsel %vm4298, 1.0, 0.0
    %v4397 = vsel %vm4299, 1.0, 0.0
    %v4398 = vsel %vm4300, 1.0, 0.0
    %v4399 = vsel %vm4301, 1.0, 0.0
    %v4400 = vsel %vm4302, 1.0, 0.0
    %v4401 = vsel %vm4303, 1.0, 0.0
    %v4402 = vsel %vm4304, 1.0, 0.0
    %v4403 = vsel %vm4305, 1.0, 0.0
    %v4404 = vsel %vm4306, 1.0, 0.0
    %v4405 = vsel %vm4307, 1.0, 0.0
    %v4406 = vsel %vm4308, 1.0, 0.0
    %v4407 = vsel %vm4309, 1.0, 0.0
    %v4408 = vsel %vm4310, 1.0, 0.0
    %v4409 = vsel %vm4311, 1.0, 0.0
    %v4410 = vsel %vm4312, 1.0, 0.0
    %v4411 = vsel %vm4313, 1.0, 0.0
    %v4412 = vsel %vm4314, 1.0, 0.0
    %v4413 = vsel %vm4315, 1.0, 0.0
    %v4414 = vsel %vm4316, 1.0, 0.0
    %v4415 = vsel %vm4317, 1.0, 0.0
    %v4416 = vsel %vm4318, 1.0, 0.0
    %v4417 = vsel %vm4319, 1.0, 0.0
    %v4418 = vsel %vm4320, 1.0, 0.0
    %v4419 = vsel %vm4321, 1.0, 0.0
    %v4420 = vsel %vm4322, 1.0, 0.0
    %v4421 = vsel %vm4323, 1.0, 0.0
    %v4422 = vsel %vm4324, 1.0, 0.0
    %v4423 = vsel %vm4325, 1.0, 0.0
    %v4424 = vsel %vm4326, 1.0, 0.0
    %v4425 = vsel %vm4327, 1.0, 0.0
    %vm4426 = vcmask 56320
    %v4428 = vsel %vm4426, %v4191, 0
    %v4431 = vsel %vm4426, %v4195, 0
    %v4434 = vsel %vm4426, %v4199, 0
    %v4437 = vsel %vm4426, %v4203, 0
    %v4440 = vsel %vm4426, %v4207, 0
    %v4443 = vsel %vm4426, %v4211, 0
    %v4446 = vsel %vm4426, %v4215, 0
    %vm4448 = vcmask 1046528
    %v4450 = vsel %vm4448, %v4424, 0
    %v4453 = vsel %vm4448, %v4425, 0
    %4455 = vmatprep.subr.mxu0 %v4329
    %4456 = vmatpush1.msra.mxu0 %v4328
    %4457 = vmatprep.subr.mxu0 %v4331
    %4458 = vmatpush1.msra.mxu0 %v4330
    %4459 = vmatprep.subr.mxu0 %v4333
    %4460 = vmatpush1.msra.mxu0 %v4332
    %4461 = vmatprep.subr.mxu0 %v4335
    %4462 = vmatpush1.msra.mxu0 %v4334
    %4463 = vmatprep.subr.mxu0 %v4337
    %4464 = vmatpush1.msra.mxu0 %v4336
    %4465 = vmatprep.subr.mxu0 %v4339
    %4466 = vmatpush1.msra.mxu0 %v4338
    %4467 = vmatprep.subr.mxu0 %v4341
    %4468 = vmatpush1.msra.mxu0 %v4340
    %4469 = vmatprep.subr.mxu0 %v4343
    %4470 = vmatpush1.msra.mxu0 %v4342
    %4471 = vmatprep.subr.mxu0 %v4345
    %4472 = vmatpush1.msra.mxu0 %v4344
    %4473 = vmatprep.subr.mxu0 %v4347
    %4474 = vmatpush1.msra.mxu0 %v4346
    %4475 = vmatprep.subr.mxu0 %v4349
    %4476 = vmatpush1.msra.mxu0 %v4348
    %4477 = vmatprep.subr.mxu0 %v4351
    %4478 = vmatpush1.msra.mxu0 %v4350
    %4479 = vmatprep.subr.mxu0 %v4353
    %4480 = vmatpush1.msra.mxu0 %v4352
    %4481 = vmatprep.subr.mxu0 %v4355
    %4482 = vmatpush1.msra.mxu0 %v4354
    %4483 = vmatprep.subr.mxu0 %v4357
    %4484 = vmatpush1.msra.mxu0 %v4356
    %4485 = vmatprep.subr.mxu0 %v4359
    %4486 = vmatpush1.msra.mxu0 %v4358
    %4487 = vmatprep.subr.mxu0 %v4361
    %4488 = vmatpush1.msra.mxu0 %v4360
    %4489 = vmatprep.subr.mxu0 %v4363
    %4490 = vmatpush1.msra.mxu0 %v4362
    %4491 = vmatprep.subr.mxu0 %v4365
    %4492 = vmatpush1.msra.mxu0 %v4364
    %4493 = vmatprep.subr.mxu0 %v4367
    %4494 = vmatpush1.msra.mxu0 %v4366
    %4495 = vmatprep.subr.mxu0 %v4369
    %4496 = vmatpush1.msra.mxu0 %v4368
    %4497 = vmatprep.subr.mxu0 %v4371
    %4498 = vmatpush1.msra.mxu0 %v4370
    %4499 = vmatprep.subr.mxu0 %v4373
    %4500 = vmatpush1.msra.mxu0 %v4372
    %4501 = vmatprep.subr.mxu0 %v4375
    %4502 = vmatpush1.msra.mxu0 %v4374
    %4503 = vmatprep.subr.mxu0 %v4377
    %4504 = vmatpush1.msra.mxu0 %v4376
    %4505 = vmatprep.subr.mxu0 %v4379
    %4506 = vmatpush1.msra.mxu0 %v4378
    %4507 = vmatprep.subr.mxu0 %v4381
    %4508 = vmatpush1.msra.mxu0 %v4380
    %4509 = vmatprep.subr.mxu0 %v4383
    %4510 = vmatpush1.msra.mxu0 %v4382
    %4511 = vmatprep.subr.mxu0 %v4385
    %4512 = vmatpush1.msra.mxu0 %v4384
    %4513 = vmatprep.subr.mxu0 %v4387
    %4514 = vmatpush1.msra.mxu0 %v4386
    %4515 = vmatprep.subr.mxu0 %v4389
    %4516 = vmatpush1.msra.mxu0 %v4388
    %4517 = vmatprep.subr.mxu0 %v4391
    %4518 = vmatpush1.msra.mxu0 %v4390
    %4519 = vmatprep.mubr.f32.mxu0 %v4189
    %4520 = vmatmul.mubr.f32.gmra.mrb[0].mxu0 %v4188
    %v4521 = vpop.f32.mrb[0].mxu0
    %v4522 = vadd.f32 0.0, %v4521
    %v4523 = vpop.f32.mrb[0].mxu0
    %v4524 = vadd.f32 0.0, %v4523
    %4525 = vmatprep.mubr.f32.mxu0 %v4193
    %4526 = vmatmul.mubr.f32.gmra.mrb[0].mxu0 %v4192
    %v4527 = vpop.f32.mrb[0].mxu0
    %v4528 = vadd.f32 0.0, %v4527
    %v4529 = vpop.f32.mrb[0].mxu0
    %v4530 = vadd.f32 0.0, %v4529
    %4531 = vmatprep.mubr.f32.mxu0 %v4197
    %4532 = vmatmul.mubr.f32.gmra.mrb[0].mxu0 %v4196
    %v4533 = vpop.f32.mrb[0].mxu0
    %v4534 = vadd.f32 0.0, %v4533
    %v4535 = vpop.f32.mrb[0].mxu0
    %v4536 = vadd.f32 0.0, %v4535
    %4537 = vmatprep.mubr.f32.mxu0 %v4201
    %4538 = vmatmul.mubr.f32.gmra.mrb[0].mxu0 %v4200
    %v4539 = vpop.f32.mrb[0].mxu0
    %v4540 = vadd.f32 0.0, %v4539
    %v4541 = vpop.f32.mrb[0].mxu0
    %v4542 = vadd.f32 0.0, %v4541
    %4543 = vmatprep.mubr.f32.mxu0 %v4205
    %4544 = vmatmul.mubr.f32.gmra.mrb[0].mxu0 %v4204
    %v4545 = vpop.f32.mrb[0].mxu0
    %v4546 = vadd.f32 0.0, %v4545
    %v4547 = vpop.f32.mrb[0].mxu0
    %v4548 = vadd.f32 0.0, %v4547
    %4549 = vmatprep.mubr.f32.mxu0 %v4209
    %4550 = vmatmul.mubr.f32.gmra.mrb[0].mxu0 %v4208
    %v4551 = vpop.f32.mrb[0].mxu0
    %v4552 = vadd.f32 0.0, %v4551
    %v4553 = vpop.f32.mrb[0].mxu0
    %v4554 = vadd.f32 0.0, %v4553
    %4555 = vmatprep.mubr.f32.mxu0 %v4213
    %4556 = vmatmul.mubr.f32.gmra.mrb[0].mxu0 %v4212
    %v4557 = vpop.f32.mrb[0].mxu0
    %v4558 = vadd.f32 0.0, %v4557
    %v4559 = vpop.f32.mrb[0].mxu0
    %v4560 = vadd.f32 0.0, %v4559
    %4561 = vdwg.mxu0
    %4562 = vmatprep.subr.mxu0 %v4393
    %4563 = vmatpush1.msra.mxu0 %v4392
    %4564 = vmatprep.subr.mxu0 %v4395
    %4565 = vmatpush1.msra.mxu0 %v4394
    %4566 = vmatprep.subr.mxu0 %v4397
    %4567 = vmatpush1.msra.mxu0 %v4396
    %4568 = vmatprep.subr.mxu0 %v4399
    %4569 = vmatpush1.msra.mxu0 %v4398
    %4570 = vmatprep.subr.mxu0 %v4401
    %4571 = vmatpush1.msra.mxu0 %v4400
    %4572 = vmatprep.subr.mxu0 %v4403
    %4573 = vmatpush1.msra.mxu0 %v4402
    %4574 = vmatprep.subr.mxu0 %v4405
    %4575 = vmatpush1.msra.mxu0 %v4404
    %4576 = vmatprep.subr.mxu0 %v4407
    %4577 = vmatpush1.msra.mxu0 %v4406
    %4578 = vmatprep.subr.mxu0 %v4409
    %4579 = vmatpush1.msra.mxu0 %v4408
    %4580 = vmatprep.subr.mxu0 %v4411
    %4581 = vmatpush1.msra.mxu0 %v4410
    %4582 = vmatprep.subr.mxu0 %v4413
    %4583 = vmatpush1.msra.mxu0 %v4412
    %4584 = vmatprep.subr.mxu0 %v4415
    %4585 = vmatpush1.msra.mxu0 %v4414
    %4586 = vmatprep.subr.mxu0 %v4417
    %4587 = vmatpush1.msra.mxu0 %v4416
    %4588 = vmatprep.subr.mxu0 %v4419
    %4589 = vmatpush1.msra.mxu0 %v4418
    %4590 = vmatprep.subr.mxu0 %v4421
    %4591 = vmatpush1.msra.mxu0 %v4420
    %4592 = vmatprep.subr.mxu0 %v4423
    %4593 = vmatpush1.msra.mxu0 %v4422
    %4594 = vmatprep.subr.mxu0 %v4453
    %4595 = vmatpush1.msra.mxu0 %v4450
    %4596 = vmatprep.subr.mxu0 0.0
    %4597 = vmatpush1.msra.mxu0 0.0
    %4598 = vmatprep.subr.mxu0 0.0
    %4599 = vmatpush1.msra.mxu0 0.0
    %4600 = vmatprep.subr.mxu0 0.0
    %4601 = vmatpush1.msra.mxu0 0.0
    %4602 = vmatprep.subr.mxu0 0.0
    %4603 = vmatpush1.msra.mxu0 0.0
    %4604 = vmatprep.subr.mxu0 0.0
    %4605 = vmatpush1.msra.mxu0 0.0
    %4606 = vmatprep.subr.mxu0 0.0
    %4607 = vmatpush1.msra.mxu0 0.0
    %4608 = vmatprep.subr.mxu0 0.0
    %4609 = vmatpush1.msra.mxu0 0.0
    %4610 = vmatprep.subr.mxu0 0.0
    %4611 = vmatpush1.msra.mxu0 0.0
    %4612 = vmatprep.subr.mxu0 0.0
    %4613 = vmatpush1.msra.mxu0 0.0
    %4614 = vmatprep.subr.mxu0 0.0
    %4615 = vmatpush1.msra.mxu0 0.0
    %4616 = vmatprep.subr.mxu0 0.0
    %4617 = vmatpush1.msra.mxu0 0.0
    %4618 = vmatprep.subr.mxu0 0.0
    %4619 = vmatpush1.msra.mxu0 0.0
    %4620 = vmatprep.subr.mxu0 0.0
    %4621 = vmatpush1.msra.mxu0 0.0
    %4622 = vmatprep.subr.mxu0 0.0
    %4623 = vmatpush1.msra.mxu0 0.0
    %4624 = vmatprep.subr.mxu0 0.0
    %4625 = vmatpush1.msra.mxu0 0.0
    %4626 = vmatprep.mubr.f32.mxu0 %v4428
    %4627 = vmatmul.mubr.f32.gmra.mrb[0].mxu0 %v4190
    %v4628 = vpop.f32.mrb[0].mxu0
    %v4629 = vadd.f32 %v4522, %v4628
    %v4630 = vpop.f32.mrb[0].mxu0
    %v4631 = vadd.f32 %v4524, %v4630
    %4632 = vmatprep.mubr.f32.mxu0 %v4431
    %4633 = vmatmul.mubr.f32.gmra.mrb[0].mxu0 %v4194
    %v4634 = vpop.f32.mrb[0].mxu0
    %v4635 = vadd.f32 %v4528, %v4634
    %v4636 = vpop.f32.mrb[0].mxu0
    %v4637 = vadd.f32 %v4530, %v4636
    %4638 = vmatprep.mubr.f32.mxu0 %v4434
    %4639 = vmatmul.mubr.f32.gmra.mrb[0].mxu0 %v4198
    %v4640 = vpop.f32.mrb[0].mxu0
    %v4641 = vadd.f32 %v4534, %v4640
    %v4642 = vpop.f32.mrb[0].mxu0
    %v4643 = vadd.f32 %v4536, %v4642
    %4644 = vmatprep.mubr.f32.mxu0 %v4437
    %4645 = vmatmul.mubr.f32.gmra.mrb[0].mxu0 %v4202
    %v4646 = vpop.f32.mrb[0].mxu0
    %v4647 = vadd.f32 %v4540, %v4646
    %v4648 = vpop.f32.mrb[0].mxu0
    %v4649 = vadd.f32 %v4542, %v4648
    %4650 = vmatprep.mubr.f32.mxu0 %v4440
    %4651 = vmatmul.mubr.f32.gmra.mrb[0].mxu0 %v4206
    %v4652 = vpop.f32.mrb[0].mxu0
    %v4653 = vadd.f32 %v4546, %v4652
    %v4654 = vpop.f32.mrb[0].mxu0
    %v4655 = vadd.f32 %v4548, %v4654
    %4656 = vmatprep.mubr.f32.mxu0 %v4443
    %4657 = vmatmul.mubr.f32.gmra.mrb[0].mxu0 %v4210
    %v4658 = vpop.f32.mrb[0].mxu0
    %v4659 = vadd.f32 %v4552, %v4658
    %v4660 = vpop.f32.mrb[0].mxu0
    %v4661 = vadd.f32 %v4554, %v4660
    %4662 = vmatprep.mubr.f32.mxu0 %v4446
    %4663 = vmatmul.mubr.f32.gmra.mrb[0].mxu0 %v4214
    %v4664 = vpop.f32.mrb[0].mxu0
    %v4665 = vadd.f32 %v4558, %v4664
    %v4666 = vpop.f32.mrb[0].mxu0
    %v4667 = vadd.f32 %v4560, %v4666
    %4668 = vdwg.mxu0
    %v4683 = vrot.slane %v4629, 6
    %v4684 = vrot.slane %v4631, 6
    %v4685 = vrot.slane %v4635, 6
    %v4686 = vsel %vm3007, %v4683, %v4685
    %v4687 = vrot.slane %v4637, 6
    %v4688 = vsel %vm3007, %v4684, %v4687
    %v4689 = vrot.slane %v4641, 6
    %v4690 = vsel %vm3007, %v4685, %v4689
    %v4691 = vrot.slane %v4643, 6
    %v4692 = vsel %vm3007, %v4687, %v4691
    %v4693 = vrot.slane %v4647, 6
    %v4694 = vsel %vm3007, %v4689, %v4693
    %v4695 = vrot.slane %v4649, 6
    %v4696 = vsel %vm3007, %v4691, %v4695
    %v4697 = vrot.slane %v4653, 6
    %v4698 = vsel %vm3007, %v4693, %v4697
    %v4699 = vrot.slane %v4655, 6
    %v4700 = vsel %vm3007, %v4695, %v4699
    %v4701 = vrot.slane %v4659, 6
    %v4702 = vsel %vm3007, %v4697, %v4701
    %v4703 = vrot.slane %v4661, 6
    %v4704 = vsel %vm3007, %v4699, %v4703
    %v4705 = vrot.slane %v4665, 6
    %v4706 = vsel %vm3007, %v4701, %v4705
    %v4707 = vrot.slane %v4667, 6
    %v4708 = vsel %vm3007, %v4703, %v4707
    %4709 = vrot.lane.b32.xlu0 %v4683, 127
    %v4710 = vpop.permute.xlu0 %4709
    %4711 = vrot.lane.b32.xlu0 %v4684, 127
    %v4712 = vpop.permute.xlu0 %4711
    %4713 = vrot.lane.b32.xlu0 %v4686, 127
    %v4714 = vpop.permute.xlu0 %4713
    %4715 = vrot.lane.b32.xlu0 %v4688, 127
    %v4716 = vpop.permute.xlu0 %4715
    %4717 = vrot.lane.b32.xlu0 %v4690, 127
    %v4718 = vpop.permute.xlu0 %4717
    %4719 = vrot.lane.b32.xlu0 %v4692, 127
    %v4720 = vpop.permute.xlu0 %4719
    %4721 = vrot.lane.b32.xlu0 %v4694, 127
    %v4722 = vpop.permute.xlu0 %4721
    %4723 = vrot.lane.b32.xlu0 %v4696, 127
    %v4724 = vpop.permute.xlu0 %4723
    %4725 = vrot.lane.b32.xlu0 %v4698, 127
    %v4726 = vpop.permute.xlu0 %4725
    %4727 = vrot.lane.b32.xlu0 %v4700, 127
    %v4728 = vpop.permute.xlu0 %4727
    %4729 = vrot.lane.b32.xlu0 %v4702, 127
    %v4730 = vpop.permute.xlu0 %4729
    %4731 = vrot.lane.b32.xlu0 %v4704, 127
    %v4732 = vpop.permute.xlu0 %4731
    %4733 = vrot.lane.b32.xlu0 %v4706, 127
    %v4734 = vpop.permute.xlu0 %4733
    %4735 = vrot.lane.b32.xlu0 %v4708, 127
    %v4736 = vpop.permute.xlu0 %4735
    %v4737 = vsel %vm74, %v4710, %v4712
    %v4738 = vsel %vm74, %v4714, %v4716
    %v4739 = vsel %vm74, %v4718, %v4720
    %v4740 = vsel %vm74, %v4722, %v4724
    %v4741 = vsel %vm74, %v4726, %v4728
    %v4742 = vsel %vm74, %v4730, %v4732
    %v4743 = vsel %vm74, %v4734, %v4736
    %v4758 = vrot.slane %v4629, 4
    %v4759 = vrot.slane %v4631, 4
    %v4760 = vrot.slane %v4635, 4
    %v4761 = vsel %vm165, %v4758, %v4760
    %v4762 = vrot.slane %v4637, 4
    %v4763 = vsel %vm165, %v4759, %v4762
    %v4764 = vrot.slane %v4641, 4
    %v4765 = vsel %vm165, %v4760, %v4764
    %v4766 = vrot.slane %v4643, 4
    %v4767 = vsel %vm165, %v4762, %v4766
    %v4768 = vrot.slane %v4647, 4
    %v4769 = vsel %vm165, %v4764, %v4768
    %v4770 = vrot.slane %v4649, 4
    %v4771 = vsel %vm165, %v4766, %v4770
    %v4772 = vrot.slane %v4653, 4
    %v4773 = vsel %vm165, %v4768, %v4772
    %v4774 = vrot.slane %v4655, 4
    %v4775 = vsel %vm165, %v4770, %v4774
    %v4776 = vrot.slane %v4659, 4
    %v4777 = vsel %vm165, %v4772, %v4776
    %v4778 = vrot.slane %v4661, 4
    %v4779 = vsel %vm165, %v4774, %v4778
    %v4780 = vrot.slane %v4665, 4
    %v4781 = vsel %vm165, %v4776, %v4780
    %v4782 = vrot.slane %v4667, 4
    %v4783 = vsel %vm165, %v4778, %v4782
    %4784 = vrot.lane.b32.xlu0 %v4758, 126
    %v4785 = vpop.permute.xlu0 %4784
    %4786 = vrot.lane.b32.xlu0 %v4759, 126
    %v4787 = vpop.permute.xlu0 %4786
    %4788 = vrot.lane.b32.xlu0 %v4761, 126
    %v4789 = vpop.permute.xlu0 %4788
    %4790 = vrot.lane.b32.xlu0 %v4763, 126
    %v4791 = vpop.permute.xlu0 %4790
    %4792 = vrot.lane.b32.xlu0 %v4765, 126
    %v4793 = vpop.permute.xlu0 %4792
    %4794 = vrot.lane.b32.xlu0 %v4767, 126
    %v4795 = vpop.permute.xlu0 %4794
    %4796 = vrot.lane.b32.xlu0 %v4769, 126
    %v4797 = vpop.permute.xlu0 %4796
    %4798 = vrot.lane.b32.xlu0 %v4771, 126
    %v4799 = vpop.permute.xlu0 %4798
    %4800 = vrot.lane.b32.xlu0 %v4773, 126
    %v4801 = vpop.permute.xlu0 %4800
    %4802 = vrot.lane.b32.xlu0 %v4775, 126
    %v4803 = vpop.permute.xlu0 %4802
    %4804 = vrot.lane.b32.xlu0 %v4777, 126
    %v4805 = vpop.permute.xlu0 %4804
    %4806 = vrot.lane.b32.xlu0 %v4779, 126
    %v4807 = vpop.permute.xlu0 %4806
    %4808 = vrot.lane.b32.xlu0 %v4781, 126
    %v4809 = vpop.permute.xlu0 %4808
    %4810 = vrot.lane.b32.xlu0 %v4783, 126
    %v4811 = vpop.permute.xlu0 %4810
    %v4812 = vsel %vm102, %v4785, %v4787
    %v4813 = vsel %vm102, %v4789, %v4791
    %v4814 = vsel %vm102, %v4793, %v4795
    %v4815 = vsel %vm102, %v4797, %v4799
    %v4816 = vsel %vm102, %v4801, %v4803
    %v4817 = vsel %vm102, %v4805, %v4807
    %v4818 = vsel %vm102, %v4809, %v4811
    %vm4833 = vcmask 1045504
    %v4834 = vrot.slane %v4629, 2
    %v4835 = vrot.slane %v4631, 2
    %v4836 = vrot.slane %v4635, 2
    %v4837 = vsel %vm4833, %v4834, %v4836
    %v4838 = vrot.slane %v4637, 2
    %v4839 = vsel %vm4833, %v4835, %v4838
    %v4840 = vrot.slane %v4641, 2
    %v4841 = vsel %vm4833, %v4836, %v4840
    %v4842 = vrot.slane %v4643, 2
    %v4843 = vsel %vm4833, %v4838, %v4842
    %v4844 = vrot.slane %v4647, 2
    %v4845 = vsel %vm4833, %v4840, %v4844
    %v4846 = vrot.slane %v4649, 2
    %v4847 = vsel %vm4833, %v4842, %v4846
    %v4848 = vrot.slane %v4653, 2
    %v4849 = vsel %vm4833, %v4844, %v4848
    %v4850 = vrot.slane %v4655, 2
    %v4851 = vsel %vm4833, %v4846, %v4850
    %v4852 = vrot.slane %v4659, 2
    %v4853 = vsel %vm4833, %v4848, %v4852
    %v4854 = vrot.slane %v4661, 2
    %v4855 = vsel %vm4833, %v4850, %v4854
    %v4856 = vrot.slane %v4665, 2
    %v4857 = vsel %vm4833, %v4852, %v4856
    %v4858 = vrot.slane %v4667, 2
    %v4859 = vsel %vm4833, %v4854, %v4858
    %4860 = vrot.lane.b32.xlu0 %v4834, 125
    %v4861 = vpop.permute.xlu0 %4860
    %4862 = vrot.lane.b32.xlu0 %v4835, 125
    %v4863 = vpop.permute.xlu0 %4862
    %4864 = vrot.lane.b32.xlu0 %v4837, 125
    %v4865 = vpop.permute.xlu0 %4864
    %4866 = vrot.lane.b32.xlu0 %v4839, 125
    %v4867 = vpop.permute.xlu0 %4866
    %4868 = vrot.lane.b32.xlu0 %v4841, 125
    %v4869 = vpop.permute.xlu0 %4868
    %4870 = vrot.lane.b32.xlu0 %v4843, 125
    %v4871 = vpop.permute.xlu0 %4870
    %4872 = vrot.lane.b32.xlu0 %v4845, 125
    %v4873 = vpop.permute.xlu0 %4872
    %4874 = vrot.lane.b32.xlu0 %v4847, 125
    %v4875 = vpop.permute.xlu0 %4874
    %4876 = vrot.lane.b32.xlu0 %v4849, 125
    %v4877 = vpop.permute.xlu0 %4876
    %4878 = vrot.lane.b32.xlu0 %v4851, 125
    %v4879 = vpop.permute.xlu0 %4878
    %4880 = vrot.lane.b32.xlu0 %v4853, 125
    %v4881 = vpop.permute.xlu0 %4880
    %4882 = vrot.lane.b32.xlu0 %v4855, 125
    %v4883 = vpop.permute.xlu0 %4882
    %4884 = vrot.lane.b32.xlu0 %v4857, 125
    %v4885 = vpop.permute.xlu0 %4884
    %4886 = vrot.lane.b32.xlu0 %v4859, 125
    %v4887 = vpop.permute.xlu0 %4886
    %v4888 = vsel %vm130, %v4861, %v4863
    %v4889 = vsel %vm130, %v4865, %v4867
    %v4890 = vsel %vm130, %v4869, %v4871
    %v4891 = vsel %vm130, %v4873, %v4875
    %v4892 = vsel %vm130, %v4877, %v4879
    %v4893 = vsel %vm130, %v4881, %v4883
    %v4894 = vsel %vm130, %v4885, %v4887
    %4909 = vrot.lane.b32.xlu0 %v4629, 124
    %v4910 = vpop.permute.xlu0 %4909
    %4911 = vrot.lane.b32.xlu0 %v4631, 124
    %v4912 = vpop.permute.xlu0 %4911
    %4913 = vrot.lane.b32.xlu0 %v4635, 124
    %v4914 = vpop.permute.xlu0 %4913
    %4915 = vrot.lane.b32.xlu0 %v4637, 124
    %v4916 = vpop.permute.xlu0 %4915
    %4917 = vrot.lane.b32.xlu0 %v4641, 124
    %v4918 = vpop.permute.xlu0 %4917
    %4919 = vrot.lane.b32.xlu0 %v4643, 124
    %v4920 = vpop.permute.xlu0 %4919
    %4921 = vrot.lane.b32.xlu0 %v4647, 124
    %v4922 = vpop.permute.xlu0 %4921
    %4923 = vrot.lane.b32.xlu0 %v4649, 124
    %v4924 = vpop.permute.xlu0 %4923
    %4925 = vrot.lane.b32.xlu0 %v4653, 124
    %v4926 = vpop.permute.xlu0 %4925
    %4927 = vrot.lane.b32.xlu0 %v4655, 124
    %v4928 = vpop.permute.xlu0 %4927
    %4929 = vrot.lane.b32.xlu0 %v4659, 124
    %v4930 = vpop.permute.xlu0 %4929
    %4931 = vrot.lane.b32.xlu0 %v4661, 124
    %v4932 = vpop.permute.xlu0 %4931
    %4933 = vrot.lane.b32.xlu0 %v4665, 124
    %v4934 = vpop.permute.xlu0 %4933
    %4935 = vrot.lane.b32.xlu0 %v4667, 124
    %v4936 = vpop.permute.xlu0 %4935
    %v4937 = vsel %vm158, %v4910, %v4912
    %v4938 = vsel %vm158, %v4914, %v4916
    %v4939 = vsel %vm158, %v4918, %v4920
    %v4940 = vsel %vm158, %v4922, %v4924
    %v4941 = vsel %vm158, %v4926, %v4928
    %v4942 = vsel %vm158, %v4930, %v4932
    %v4943 = vsel %vm158, %v4934, %v4936
    %v4956 = vsel %vm3007, %v4665, %v4737
    %v4957 = vsel %vm3007, %v4667, %v4712
    %v4958 = vsel %vm165, %v4743, %v4812
    %v4959 = vsel %vm165, %v4736, %v4787
    %v4960 = vsel %vm4833, %v4818, %v4888
    %v4961 = vsel %vm4833, %v4811, %v4863
    %v4962 = vld [vmem:[%s7] sm:$0xff]
    %v4963 = vld [vmem:[%s7 + $0x8] sm:$0xff]
    %v4964 = vld [vmem:[%s7 + $0x10] sm:$0xff]
    %v4965 = vld [vmem:[%s7 + $0x18] sm:$0xff]
    %v4966 = vld [vmem:[%s7 + $0x20] sm:$0xff]
    %v4967 = vld [vmem:[%s7 + $0x28] sm:$0xff]
    %v4968 = vld [vmem:[%s7 + $0x30] sm:$0xff]
    %v4969 = vld [vmem:[%s7 + $0x38] sm:$0xff]
    %v4970 = vld [vmem:[%s7 + $0x40] sm:$0xff]
    %v4971 = vld [vmem:[%s7 + $0x48] sm:$0xff]
    %v4972 = vld [vmem:[%s7 + $0x50] sm:$0xff]
    %v4973 = vld [vmem:[%s7 + $0x58] sm:$0xff]
    %v4974 = vld [vmem:[%s7 + $0x60] sm:$0xff]
    %v4975 = vld [vmem:[%s7 + $0x68] sm:$0xff]
    %v4976 = vld [vmem:[%s7 + $0x70] sm:$0xff]
    %v4977 = vld [vmem:[%s7 + $0x78] sm:$0xff]
    %v4978 = vld [vmem:[%s7 + $0x80] sm:$0xff]
    %v4979 = vld [vmem:[%s7 + $0x88] sm:$0xff]
    %v4980 = vld [vmem:[%s7 + $0x90] sm:$0xff]
    %v4981 = vld [vmem:[%s7 + $0x98] sm:$0xff]
    %v4982 = vld [vmem:[%s7 + $0xa0] sm:$0xff]
    %v4983 = vld [vmem:[%s7 + $0xa8] sm:$0xff]
    %v4984 = vld [vmem:[%s7 + $0xb0] sm:$0xff]
    %v4985 = vld [vmem:[%s7 + $0xb8] sm:$0xff]
    %v4986 = vld [vmem:[%s7 + $0xc0] sm:$0xf]
    %v4987 = vld [vmem:[%s7 + $0xc8] sm:$0xf]
    %vm4988 = vcmask 998400
    %v4990 = vsel %vm4988, %v4963, 0
    %v4993 = vsel %vm4988, %v4965, 0
    %v4996 = vsel %vm4988, %v4967, 0
    %v4999 = vsel %vm4988, %v4969, 0
    %v5002 = vsel %vm4988, %v4971, 0
    %v5005 = vsel %vm4988, %v4973, 0
    %v5008 = vsel %vm4988, %v4975, 0
    %v5011 = vsel %vm4988, %v4977, 0
    %v5014 = vsel %vm4988, %v4979, 0
    %v5017 = vsel %vm4988, %v4981, 0
    %v5020 = vsel %vm4988, %v4983, 0
    %v5023 = vsel %vm4988, %v4985, 0
    %v5026 = vsel %vm4988, %v4987, 0
    %v5028 = vsel %vm3007, %v4943, 0
    %v5030 = vsel %vm3007, %v4936, 0
    %5032 = vmatprep.subr.mxu0 %v4631
    %5033 = vmatpush1.msra.mxu0 %v4629
    %5034 = vmatprep.subr.mxu0 %v4637
    %5035 = vmatpush1.msra.mxu0 %v4635
    %5036 = vmatprep.subr.mxu0 %v4643
    %5037 = vmatpush1.msra.mxu0 %v4641
    %5038 = vmatprep.subr.mxu0 %v4649
    %5039 = vmatpush1.msra.mxu0 %v4647
    %5040 = vmatprep.subr.mxu0 %v4655
    %5041 = vmatpush1.msra.mxu0 %v4653
    %5042 = vmatprep.subr.mxu0 %v4661
    %5043 = vmatpush1.msra.mxu0 %v4659
    %5044 = vmatprep.subr.mxu0 %v4957
    %5045 = vmatpush1.msra.mxu0 %v4956
    %5046 = vmatprep.subr.mxu0 %v4716
    %5047 = vmatpush1.msra.mxu0 %v4738
    %5048 = vmatprep.subr.mxu0 %v4720
    %5049 = vmatpush1.msra.mxu0 %v4739
    %5050 = vmatprep.subr.mxu0 %v4724
    %5051 = vmatpush1.msra.mxu0 %v4740
    %5052 = vmatprep.subr.mxu0 %v4728
    %5053 = vmatpush1.msra.mxu0 %v4741
    %5054 = vmatprep.subr.mxu0 %v4732
    %5055 = vmatpush1.msra.mxu0 %v4742
    %5056 = vmatprep.subr.mxu0 %v4959
    %5057 = vmatpush1.msra.mxu0 %v4958
    %5058 = vmatprep.subr.mxu0 %v4791
    %5059 = vmatpush1.msra.mxu0 %v4813
    %5060 = vmatprep.subr.mxu0 %v4795
    %5061 = vmatpush1.msra.mxu0 %v4814
    %5062 = vmatprep.subr.mxu0 %v4799
    %5063 = vmatpush1.msra.mxu0 %v4815
    %5064 = vmatprep.subr.mxu0 %v4803
    %5065 = vmatpush1.msra.mxu0 %v4816
    %5066 = vmatprep.subr.mxu0 %v4807
    %5067 = vmatpush1.msra.mxu0 %v4817
    %5068 = vmatprep.subr.mxu0 %v4961
    %5069 = vmatpush1.msra.mxu0 %v4960
    %5070 = vmatprep.subr.mxu0 %v4867
    %5071 = vmatpush1.msra.mxu0 %v4889
    %5072 = vmatprep.subr.mxu0 %v4871
    %5073 = vmatpush1.msra.mxu0 %v4890
    %5074 = vmatprep.subr.mxu0 %v4875
    %5075 = vmatpush1.msra.mxu0 %v4891
    %5076 = vmatprep.subr.mxu0 %v4879
    %5077 = vmatpush1.msra.mxu0 %v4892
    %5078 = vmatprep.subr.mxu0 %v4883
    %5079 = vmatpush1.msra.mxu0 %v4893
    %5080 = vmatprep.subr.mxu0 %v4887
    %5081 = vmatpush1.msra.mxu0 %v4894
    %5082 = vmatprep.subr.mxu0 %v4912
    %5083 = vmatpush1.msra.mxu0 %v4937
    %5084 = vmatprep.subr.mxu0 %v4916
    %5085 = vmatpush1.msra.mxu0 %v4938
    %5086 = vmatprep.subr.mxu0 %v4920
    %5087 = vmatpush1.msra.mxu0 %v4939
    %5088 = vmatprep.subr.mxu0 %v4924
    %5089 = vmatpush1.msra.mxu0 %v4940
    %5090 = vmatprep.subr.mxu0 %v4928
    %5091 = vmatpush1.msra.mxu0 %v4941
    %5092 = vmatprep.subr.mxu0 %v4932
    %5093 = vmatpush1.msra.mxu0 %v4942
    %5094 = vmatprep.subr.mxu0 %v5030
    %5095 = vmatpush1.msra.mxu0 %v5028
    %5096 = vmatprep.mubr.f32.mxu0 %v4990
    %5097 = vmatmul.mubr.f32.gmra.mrb[0].mxu0 %v4962
    %v5098 = vpop.f32.mrb[0].mxu0
    %v5099 = vadd.f32 0.0, %v5098
    %v5100 = vpop.f32.mrb[0].mxu0
    %v5101 = vadd.f32 0.0, %v5100
    %5102 = vmatprep.mubr.f32.mxu0 %v4993
    %5103 = vmatmul.mubr.f32.gmra.mrb[0].mxu0 %v4964
    %v5104 = vpop.f32.mrb[0].mxu0
    %v5105 = vadd.f32 0.0, %v5104
    %v5106 = vpop.f32.mrb[0].mxu0
    %v5107 = vadd.f32 0.0, %v5106
    %5108 = vmatprep.mubr.f32.mxu0 %v4996
    %5109 = vmatmul.mubr.f32.gmra.mrb[0].mxu0 %v4966
    %v5110 = vpop.f32.mrb[0].mxu0
    %v5111 = vadd.f32 0.0, %v5110
    %v5112 = vpop.f32.mrb[0].mxu0
    %v5113 = vadd.f32 0.0, %v5112
    %5114 = vmatprep.mubr.f32.mxu0 %v4999
    %5115 = vmatmul.mubr.f32.gmra.mrb[0].mxu0 %v4968
    %v5116 = vpop.f32.mrb[0].mxu0
    %v5117 = vadd.f32 0.0, %v5116
    %v5118 = vpop.f32.mrb[0].mxu0
    %v5119 = vadd.f32 0.0, %v5118
    %5120 = vmatprep.mubr.f32.mxu0 %v5002
    %5121 = vmatmul.mubr.f32.gmra.mrb[0].mxu0 %v4970
    %v5122 = vpop.f32.mrb[0].mxu0
    %v5123 = vadd.f32 0.0, %v5122
    %v5124 = vpop.f32.mrb[0].mxu0
    %v5125 = vadd.f32 0.0, %v5124
    %5126 = vmatprep.mubr.f32.mxu0 %v5005
    %5127 = vmatmul.mubr.f32.gmra.mrb[0].mxu0 %v4972
    %v5128 = vpop.f32.mrb[0].mxu0
    %v5129 = vadd.f32 0.0, %v5128
    %v5130 = vpop.f32.mrb[0].mxu0
    %v5131 = vadd.f32 0.0, %v5130
    %5132 = vmatprep.mubr.f32.mxu0 %v5008
    %5133 = vmatmul.mubr.f32.gmra.mrb[0].mxu0 %v4974
    %v5134 = vpop.f32.mrb[0].mxu0
    %v5135 = vadd.f32 0.0, %v5134
    %v5136 = vpop.f32.mrb[0].mxu0
    %v5137 = vadd.f32 0.0, %v5136
    %5138 = vmatprep.mubr.f32.mxu0 %v5011
    %5139 = vmatmul.mubr.f32.gmra.mrb[0].mxu0 %v4976
    %v5140 = vpop.f32.mrb[0].mxu0
    %v5141 = vadd.f32 0.0, %v5140
    %v5142 = vpop.f32.mrb[0].mxu0
    %v5143 = vadd.f32 0.0, %v5142
    %5144 = vmatprep.mubr.f32.mxu0 %v5014
    %5145 = vmatmul.mubr.f32.gmra.mrb[0].mxu0 %v4978
    %v5146 = vpop.f32.mrb[0].mxu0
    %v5147 = vadd.f32 0.0, %v5146
    %v5148 = vpop.f32.mrb[0].mxu0
    %v5149 = vadd.f32 0.0, %v5148
    %5150 = vmatprep.mubr.f32.mxu0 %v5017
    %5151 = vmatmul.mubr.f32.gmra.mrb[0].mxu0 %v4980
    %v5152 = vpop.f32.mrb[0].mxu0
    %v5153 = vadd.f32 0.0, %v5152
    %v5154 = vpop.f32.mrb[0].mxu0
    %v5155 = vadd.f32 0.0, %v5154
    %5156 = vmatprep.mubr.f32.mxu0 %v5020
    %5157 = vmatmul.mubr.f32.gmra.mrb[0].mxu0 %v4982
    %v5158 = vpop.f32.mrb[0].mxu0
    %v5159 = vadd.f32 0.0, %v5158
    %v5160 = vpop.f32.mrb[0].mxu0
    %v5161 = vadd.f32 0.0, %v5160
    %5162 = vmatprep.mubr.f32.mxu0 %v5023
    %5163 = vmatmul.mubr.f32.gmra.mrb[0].mxu0 %v4984
    %v5164 = vpop.f32.mrb[0].mxu0
    %v5165 = vadd.f32 0.0, %v5164
    %v5166 = vpop.f32.mrb[0].mxu0
    %v5167 = vadd.f32 0.0, %v5166
    %5168 = vmatprep.mubr.f32.mxu0 %v5026
    %5169 = vmatmul.mubr.f32.gmra.mrb[0].mxu0 %v4986
    %v5170 = vpop.f32.mrb[0].mxu0
    %v5171 = vadd.f32 0.0, %v5170
    %v5172 = vpop.f32.mrb[0].mxu0
    %v5173 = vadd.f32 0.0, %v5172
    %5174 = vdwg.mxu0
    %v5175 = vld [vmem:[%s8] sm:$0xff]
    %v5176 = vld [vmem:[%s8 + $0x8] sm:$0xff]
    %v5177 = vld [vmem:[%s8 + $0x10] sm:$0xff]
    %v5178 = vld [vmem:[%s8 + $0x18] sm:$0xff]
    %v5179 = vld [vmem:[%s8 + $0x20] sm:$0xff]
    %v5180 = vld [vmem:[%s8 + $0x28] sm:$0xff]
    %v5181 = vld [vmem:[%s8 + $0x30] sm:$0xff]
    %v5182 = vld [vmem:[%s8 + $0x38] sm:$0xff]
    %v5183 = vld [vmem:[%s8 + $0x40] sm:$0xff]
    %v5184 = vld [vmem:[%s8 + $0x48] sm:$0xff]
    %v5185 = vld [vmem:[%s8 + $0x50] sm:$0xff]
    %v5186 = vld [vmem:[%s8 + $0x58] sm:$0xff]
    %v5187 = vld [vmem:[%s8 + $0x60] sm:$0xf]
    %v5188 = vld [vmem:[%s9] sm:$0xff]
    %v5189 = vld [vmem:[%s9 + $0x8] sm:$0xff]
    %v5190 = vld [vmem:[%s9 + $0x10] sm:$0xff]
    %v5191 = vld [vmem:[%s9 + $0x18] sm:$0xff]
    %v5192 = vld [vmem:[%s9 + $0x20] sm:$0xff]
    %v5193 = vld [vmem:[%s9 + $0x28] sm:$0xff]
    %v5194 = vld [vmem:[%s9 + $0x30] sm:$0xff]
    %v5195 = vld [vmem:[%s9 + $0x38] sm:$0xff]
    %v5196 = vld [vmem:[%s9 + $0x40] sm:$0xff]
    %v5197 = vld [vmem:[%s9 + $0x48] sm:$0xff]
    %v5198 = vld [vmem:[%s9 + $0x50] sm:$0xff]
    %v5199 = vld [vmem:[%s9 + $0x58] sm:$0xff]
    %v5200 = vld [vmem:[%s9 + $0x60] sm:$0xf]
    %vm5201 = vcmp.lt.s32.totalorder %v4224, 93
    %vm5202 = vcmp.lt.s32.totalorder %v4225, 93
    %v5203 = vsel %vm5201, 1.0, 0.0
    %v5204 = vsel %vm5202, 1.0, 0.0
    %v5205 = vmul.f32 %v5099, %v5203
    %v5206 = vmul.f32 %v5101, %v5204
    %v5207 = vmul.f32 %v5105, %v5203
    %v5208 = vmul.f32 %v5107, %v5204
    %v5209 = vmul.f32 %v5111, %v5203
    %v5210 = vmul.f32 %v5113, %v5204
    %v5211 = vmul.f32 %v5117, %v5203
    %v5212 = vmul.f32 %v5119, %v5204
    %v5213 = vmul.f32 %v5123, %v5203
    %v5214 = vmul.f32 %v5125, %v5204
    %v5215 = vmul.f32 %v5129, %v5203
    %v5216 = vmul.f32 %v5131, %v5204
    %v5217 = vmul.f32 %v5135, %v5203
    %v5218 = vmul.f32 %v5137, %v5204
    %v5219 = vmul.f32 %v5141, %v5203
    %v5220 = vmul.f32 %v5143, %v5204
    %v5221 = vmul.f32 %v5147, %v5203
    %v5222 = vmul.f32 %v5149, %v5204
    %v5223 = vmul.f32 %v5153, %v5203
    %v5224 = vmul.f32 %v5155, %v5204
    %v5225 = vmul.f32 %v5159, %v5203
    %v5226 = vmul.f32 %v5161, %v5204
    %v5227 = vmul.f32 %v5165, %v5203
    %v5228 = vmul.f32 %v5167, %v5204
    %v5229 = vmul.f32 %v5171, %v5203
    %v5230 = vmul.f32 %v5173, %v5204
    %vm5231 = vcmask 506880
    %v5232 = vsel %vm5231, %v5206, 0.0
    %v5233 = vadd.f32 %v5205, %v5232
    %5234 = vadd.xlane.f32.xlu0 %v5233
    %v5235 = vpop.xlane.xlu0 %5234
    %v5236 = vsel %vm5231, %v5208, 0.0
    %v5237 = vadd.f32 %v5207, %v5236
    %5238 = vadd.xlane.f32.xlu0 %v5237
    %v5239 = vpop.xlane.xlu0 %5238
    %v5240 = vsel %vm5231, %v5210, 0.0
    %v5241 = vadd.f32 %v5209, %v5240
    %5242 = vadd.xlane.f32.xlu0 %v5241
    %v5243 = vpop.xlane.xlu0 %5242
    %v5244 = vsel %vm5231, %v5212, 0.0
    %v5245 = vadd.f32 %v5211, %v5244
    %5246 = vadd.xlane.f32.xlu0 %v5245
    %v5247 = vpop.xlane.xlu0 %5246
    %v5248 = vsel %vm5231, %v5214, 0.0
    %v5249 = vadd.f32 %v5213, %v5248
    %5250 = vadd.xlane.f32.xlu0 %v5249
    %v5251 = vpop.xlane.xlu0 %5250
    %v5252 = vsel %vm5231, %v5216, 0.0
    %v5253 = vadd.f32 %v5215, %v5252
    %5254 = vadd.xlane.f32.xlu0 %v5253
    %v5255 = vpop.xlane.xlu0 %5254
    %v5256 = vsel %vm5231, %v5218, 0.0
    %v5257 = vadd.f32 %v5217, %v5256
    %5258 = vadd.xlane.f32.xlu0 %v5257
    %v5259 = vpop.xlane.xlu0 %5258
    %v5260 = vsel %vm5231, %v5220, 0.0
    %v5261 = vadd.f32 %v5219, %v5260
    %5262 = vadd.xlane.f32.xlu0 %v5261
    %v5263 = vpop.xlane.xlu0 %5262
    %v5264 = vsel %vm5231, %v5222, 0.0
    %v5265 = vadd.f32 %v5221, %v5264
    %5266 = vadd.xlane.f32.xlu0 %v5265
    %v5267 = vpop.xlane.xlu0 %5266
    %v5268 = vsel %vm5231, %v5224, 0.0
    %v5269 = vadd.f32 %v5223, %v5268
    %5270 = vadd.xlane.f32.xlu0 %v5269
    %v5271 = vpop.xlane.xlu0 %5270
    %v5272 = vsel %vm5231, %v5226, 0.0
    %v5273 = vadd.f32 %v5225, %v5272
    %5274 = vadd.xlane.f32.xlu0 %v5273
    %v5275 = vpop.xlane.xlu0 %5274
    %v5276 = vsel %vm5231, %v5228, 0.0
    %v5277 = vadd.f32 %v5227, %v5276
    %5278 = vadd.xlane.f32.xlu0 %v5277
    %v5279 = vpop.xlane.xlu0 %5278
    %v5280 = vsel %vm165, %v5229, 0.0
    %vm5281 = vcmask 502784
    %v5282 = vsel %vm5281, %v5230, 0.0
    %v5283 = vadd.f32 %v5280, %v5282
    %5284 = vadd.xlane.f32.xlu0 %v5283
    %v5285 = vpop.xlane.xlu0 %5284
    %v5286 = vmul.f32 %v5235, 0.005376344
    %v5287 = vmul.f32 %v5239, 0.005376344
    %v5288 = vmul.f32 %v5243, 0.005376344
    %v5289 = vmul.f32 %v5247, 0.005376344
    %v5290 = vmul.f32 %v5251, 0.005376344
    %v5291 = vmul.f32 %v5255, 0.005376344
    %v5292 = vmul.f32 %v5259, 0.005376344
    %v5293 = vmul.f32 %v5263, 0.005376344
    %v5294 = vmul.f32 %v5267, 0.005376344
    %v5295 = vmul.f32 %v5271, 0.005376344
    %v5296 = vmul.f32 %v5275, 0.005376344
    %v5297 = vmul.f32 %v5279, 0.005376344
    %v5298 = vmul.f32 %v5285, 0.005376344
    %v5299 = vsub.f32 %v5099, %v5286
    %v5300 = vsub.f32 %v5101, %v5286
    %v5301 = vsub.f32 %v5105, %v5287
    %v5302 = vsub.f32 %v5107, %v5287
    %v5303 = vsub.f32 %v5111, %v5288
    %v5304 = vsub.f32 %v5113, %v5288
    %v5305 = vsub.f32 %v5117, %v5289
    %v5306 = vsub.f32 %v5119, %v5289
    %v5307 = vsub.f32 %v5123, %v5290
    %v5308 = vsub.f32 %v5125, %v5290
    %v5309 = vsub.f32 %v5129, %v5291
    %v5310 = vsub.f32 %v5131, %v5291
    %v5311 = vsub.f32 %v5135, %v5292
    %v5312 = vsub.f32 %v5137, %v5292
    %v5313 = vsub.f32 %v5141, %v5293
    %v5314 = vsub.f32 %v5143, %v5293
    %v5315 = vsub.f32 %v5147, %v5294
    %v5316 = vsub.f32 %v5149, %v5294
    %v5317 = vsub.f32 %v5153, %v5295
    %v5318 = vsub.f32 %v5155, %v5295
    %v5319 = vsub.f32 %v5159, %v5296
    %v5320 = vsub.f32 %v5161, %v5296
    %v5321 = vsub.f32 %v5165, %v5297
    %v5322 = vsub.f32 %v5167, %v5297
    %v5323 = vsub.f32 %v5171, %v5298
    %v5324 = vsub.f32 %v5173, %v5298
    %v5325 = vmul.f32 %v5299, %v5203
    %v5326 = vmul.f32 %v5300, %v5204
    %v5327 = vmul.f32 %v5301, %v5203
    %v5328 = vmul.f32 %v5302, %v5204
    %v5329 = vmul.f32 %v5303, %v5203
    %v5330 = vmul.f32 %v5304, %v5204
    %v5331 = vmul.f32 %v5305, %v5203
    %v5332 = vmul.f32 %v5306, %v5204
    %v5333 = vmul.f32 %v5307, %v5203
    %v5334 = vmul.f32 %v5308, %v5204
    %v5335 = vmul.f32 %v5309, %v5203
    %v5336 = vmul.f32 %v5310, %v5204
    %v5337 = vmul.f32 %v5311, %v5203
    %v5338 = vmul.f32 %v5312, %v5204
    %v5339 = vmul.f32 %v5313, %v5203
    %v5340 = vmul.f32 %v5314, %v5204
    %v5341 = vmul.f32 %v5315, %v5203
    %v5342 = vmul.f32 %v5316, %v5204
    %v5343 = vmul.f32 %v5317, %v5203
    %v5344 = vmul.f32 %v5318, %v5204
    %v5345 = vmul.f32 %v5319, %v5203
    %v5346 = vmul.f32 %v5320, %v5204
    %v5347 = vmul.f32 %v5321, %v5203
    %v5348 = vmul.f32 %v5322, %v5204
    %v5349 = vmul.f32 %v5323, %v5203
    %v5350 = vmul.f32 %v5324, %v5204
    %v5351 = vmul.f32 %v5325, %v5325
    %v5352 = vmul.f32 %v5326, %v5326
    %v5353 = vmul.f32 %v5327, %v5327
    %v5354 = vmul.f32 %v5328, %v5328
    %v5355 = vmul.f32 %v5329, %v5329
    %v5356 = vmul.f32 %v5330, %v5330
    %v5357 = vmul.f32 %v5331, %v5331
    %v5358 = vmul.f32 %v5332, %v5332
    %v5359 = vmul.f32 %v5333, %v5333
    %v5360 = vmul.f32 %v5334, %v5334
    %v5361 = vmul.f32 %v5335, %v5335
    %v5362 = vmul.f32 %v5336, %v5336
    %v5363 = vmul.f32 %v5337, %v5337
    %v5364 = vmul.f32 %v5338, %v5338
    %v5365 = vmul.f32 %v5339, %v5339
    %v5366 = vmul.f32 %v5340, %v5340
    %v5367 = vmul.f32 %v5341, %v5341
    %v5368 = vmul.f32 %v5342, %v5342
    %v5369 = vmul.f32 %v5343, %v5343
    %v5370 = vmul.f32 %v5344, %v5344
    %v5371 = vmul.f32 %v5345, %v5345
    %v5372 = vmul.f32 %v5346, %v5346
    %v5373 = vmul.f32 %v5347, %v5347
    %v5374 = vmul.f32 %v5348, %v5348
    %v5375 = vmul.f32 %v5349, %v5349
    %v5376 = vmul.f32 %v5350, %v5350
    %v5377 = vsel %vm5231, %v5352, 0.0
    %v5378 = vadd.f32 %v5351, %v5377
    %5379 = vadd.xlane.f32.xlu0 %v5378
    %v5380 = vpop.xlane.xlu0 %5379
    %v5381 = vsel %vm5231, %v5354, 0.0
    %v5382 = vadd.f32 %v5353, %v5381
    %5383 = vadd.xlane.f32.xlu0 %v5382
    %v5384 = vpop.xlane.xlu0 %5383
    %v5385 = vsel %vm5231, %v5356, 0.0
    %v5386 = vadd.f32 %v5355, %v5385
    %5387 = vadd.xlane.f32.xlu0 %v5386
    %v5388 = vpop.xlane.xlu0 %5387
    %v5389 = vsel %vm5231, %v5358, 0.0
    %v5390 = vadd.f32 %v5357, %v5389
    %5391 = vadd.xlane.f32.xlu0 %v5390
    %v5392 = vpop.xlane.xlu0 %5391
    %v5393 = vsel %vm5231, %v5360, 0.0
    %v5394 = vadd.f32 %v5359, %v5393
    %5395 = vadd.xlane.f32.xlu0 %v5394
    %v5396 = vpop.xlane.xlu0 %5395
    %v5397 = vsel %vm5231, %v5362, 0.0
    %v5398 = vadd.f32 %v5361, %v5397
    %5399 = vadd.xlane.f32.xlu0 %v5398
    %v5400 = vpop.xlane.xlu0 %5399
    %v5401 = vsel %vm5231, %v5364, 0.0
    %v5402 = vadd.f32 %v5363, %v5401
    %5403 = vadd.xlane.f32.xlu0 %v5402
    %v5404 = vpop.xlane.xlu0 %5403
    %v5405 = vsel %vm5231, %v5366, 0.0
    %v5406 = vadd.f32 %v5365, %v5405
    %5407 = vadd.xlane.f32.xlu0 %v5406
    %v5408 = vpop.xlane.xlu0 %5407
    %v5409 = vsel %vm5231, %v5368, 0.0
    %v5410 = vadd.f32 %v5367, %v5409
    %5411 = vadd.xlane.f32.xlu0 %v5410
    %v5412 = vpop.xlane.xlu0 %5411
    %v5413 = vsel %vm5231, %v5370, 0.0
    %v5414 = vadd.f32 %v5369, %v5413
    %5415 = vadd.xlane.f32.xlu0 %v5414
    %v5416 = vpop.xlane.xlu0 %5415
    %v5417 = vsel %vm5231, %v5372, 0.0
    %v5418 = vadd.f32 %v5371, %v5417
    %5419 = vadd.xlane.f32.xlu0 %v5418
    %v5420 = vpop.xlane.xlu0 %5419
    %v5421 = vsel %vm5231, %v5374, 0.0
    %v5422 = vadd.f32 %v5373, %v5421
    %5423 = vadd.xlane.f32.xlu0 %v5422
    %v5424 = vpop.xlane.xlu0 %5423
    %v5425 = vsel %vm165, %v5375, 0.0
    %v5426 = vsel %vm5281, %v5376, 0.0
    %v5427 = vadd.f32 %v5425, %v5426
    %5428 = vadd.xlane.f32.xlu0 %v5427
    %v5429 = vpop.xlane.xlu0 %5428
    %v5430 = vmul.f32 %v5380, 0.005376344
    %v5431 = vmul.f32 %v5384, 0.005376344
    %v5432 = vmul.f32 %v5388, 0.005376344
    %v5433 = vmul.f32 %v5392, 0.005376344
    %v5434 = vmul.f32 %v5396, 0.005376344
    %v5435 = vmul.f32 %v5400, 0.005376344
    %v5436 = vmul.f32 %v5404, 0.005376344
    %v5437 = vmul.f32 %v5408, 0.005376344
    %v5438 = vmul.f32 %v5412, 0.005376344
    %v5439 = vmul.f32 %v5416, 0.005376344
    %v5440 = vmul.f32 %v5420, 0.005376344
    %v5441 = vmul.f32 %v5424, 0.005376344
    %v5442 = vmul.f32 %v5429, 0.005376344
    %v5443 = vrsqrt.pop %v5430
    %v5444 = vrsqrt.pop %v5431
    %v5445 = vrsqrt.pop %v5432
    %v5446 = vrsqrt.pop %v5433
    %v5447 = vrsqrt.pop %v5434
    %v5448 = vrsqrt.pop %v5435
    %v5449 = vrsqrt.pop %v5436
    %v5450 = vrsqrt.pop %v5437
    %v5451 = vrsqrt.pop %v5438
    %v5452 = vrsqrt.pop %v5439
    %v5453 = vrsqrt.pop %v5440
    %v5454 = vrsqrt.pop %v5441
    %v5455 = vrsqrt.pop %v5442
    %v5456 = vmul.f32 %v5443, %v5175
    %v5457 = vmul.f32 %v5444, %v5176
    %v5458 = vmul.f32 %v5445, %v5177
    %v5459 = vmul.f32 %v5446, %v5178
    %v5460 = vmul.f32 %v5447, %v5179
    %v5461 = vmul.f32 %v5448, %v5180
    %v5462 = vmul.f32 %v5449, %v5181
    %v5463 = vmul.f32 %v5450, %v5182
    %v5464 = vmul.f32 %v5451, %v5183
    %v5465 = vmul.f32 %v5452, %v5184
    %v5466 = vmul.f32 %v5453, %v5185
    %v5467 = vmul.f32 %v5454, %v5186
    %v5468 = vmul.f32 %v5455, %v5187
    %5470 = vset.pattern.permute.xlu0 0
    %5471 = vperm.xlu0 %5470, %v5456
    %v5472 = vpop.permute.xlu0 %5471
    %5475 = vset.pattern.permute.xlu0 0
    %5476 = vperm.xlu0 %5475, %v5457
    %v5477 = vpop.permute.xlu0 %5476
    %5480 = vset.pattern.permute.xlu0 0
    %5481 = vperm.xlu0 %5480, %v5458
    %v5482 = vpop.permute.xlu0 %5481
    %5485 = vset.pattern.permute.xlu0 0
    %5486 = vperm.xlu0 %5485, %v5459
    %v5487 = vpop.permute.xlu0 %5486
    %5490 = vset.pattern.permute.xlu0 0
    %5491 = vperm.xlu0 %5490, %v5460
    %v5492 = vpop.permute.xlu0 %5491
    %5495 = vset.pattern.permute.xlu0 0
    %5496 = vperm.xlu0 %5495, %v5461
    %v5497 = vpop.permute.xlu0 %5496
    %5500 = vset.pattern.permute.xlu0 0
    %5501 = vperm.xlu0 %5500, %v5462
    %v5502 = vpop.permute.xlu0 %5501
    %5505 = vset.pattern.permute.xlu0 0
    %5506 = vperm.xlu0 %5505, %v5463
    %v5507 = vpop.permute.xlu0 %5506
    %5510 = vset.pattern.permute.xlu0 0
    %5511 = vperm.xlu0 %5510, %v5464
    %v5512 = vpop.permute.xlu0 %5511
    %5515 = vset.pattern.permute.xlu0 0
    %5516 = vperm.xlu0 %5515, %v5465
    %v5517 = vpop.permute.xlu0 %5516
    %5520 = vset.pattern.permute.xlu0 0
    %5521 = vperm.xlu0 %5520, %v5466
    %v5522 = vpop.permute.xlu0 %5521
    %5525 = vset.pattern.permute.xlu0 0
    %5526 = vperm.xlu0 %5525, %v5467
    %v5527 = vpop.permute.xlu0 %5526
    %5530 = vset.pattern.permute.xlu0 0
    %5531 = vperm.xlu0 %5530, %v5468
    %v5532 = vpop.permute.xlu0 %5531
    %v5534 = vmul.f32 %v5299, %v5472
    %v5535 = vmul.f32 %v5300, %v5472
    %v5536 = vmul.f32 %v5301, %v5477
    %v5537 = vmul.f32 %v5302, %v5477
    %v5538 = vmul.f32 %v5303, %v5482
    %v5539 = vmul.f32 %v5304, %v5482
    %v5540 = vmul.f32 %v5305, %v5487
    %v5541 = vmul.f32 %v5306, %v5487
    %v5542 = vmul.f32 %v5307, %v5492
    %v5543 = vmul.f32 %v5308, %v5492
    %v5544 = vmul.f32 %v5309, %v5497
    %v5545 = vmul.f32 %v5310, %v5497
    %v5546 = vmul.f32 %v5311, %v5502
    %v5547 = vmul.f32 %v5312, %v5502
    %v5548 = vmul.f32 %v5313, %v5507
    %v5549 = vmul.f32 %v5314, %v5507
    %v5550 = vmul.f32 %v5315, %v5512
    %v5551 = vmul.f32 %v5316, %v5512
    %v5552 = vmul.f32 %v5317, %v5517
    %v5553 = vmul.f32 %v5318, %v5517
    %v5554 = vmul.f32 %v5319, %v5522
    %v5555 = vmul.f32 %v5320, %v5522
    %v5556 = vmul.f32 %v5321, %v5527
    %v5557 = vmul.f32 %v5322, %v5527
    %v5558 = vmul.f32 %v5323, %v5532
    %v5559 = vmul.f32 %v5324, %v5532
    %5561 = vset.pattern.permute.xlu0 0
    %5562 = vperm.xlu0 %5561, %v5188
    %v5563 = vpop.permute.xlu0 %5562
    %5566 = vset.pattern.permute.xlu0 0
    %5567 = vperm.xlu0 %5566, %v5189
    %v5568 = vpop.permute.xlu0 %5567
    %5571 = vset.pattern.permute.xlu0 0
    %5572 = vperm.xlu0 %5571, %v5190
    %v5573 = vpop.permute.xlu0 %5572
    %5576 = vset.pattern.permute.xlu0 0
    %5577 = vperm.xlu0 %5576, %v5191
    %v5578 = vpop.permute.xlu0 %5577
    %5581 = vset.pattern.permute.xlu0 0
    %5582 = vperm.xlu0 %5581, %v5192
    %v5583 = vpop.permute.xlu0 %5582
    %5586 = vset.pattern.permute.xlu0 0
    %5587 = vperm.xlu0 %5586, %v5193
    %v5588 = vpop.permute.xlu0 %5587
    %5591 = vset.pattern.permute.xlu0 0
    %5592 = vperm.xlu0 %5591, %v5194
    %v5593 = vpop.permute.xlu0 %5592
    %5596 = vset.pattern.permute.xlu0 0
    %5597 = vperm.xlu0 %5596, %v5195
    %v5598 = vpop.permute.xlu0 %5597
    %5601 = vset.pattern.permute.xlu0 0
    %5602 = vperm.xlu0 %5601, %v5196
    %v5603 = vpop.permute.xlu0 %5602
    %5606 = vset.pattern.permute.xlu0 0
    %5607 = vperm.xlu0 %5606, %v5197
    %v5608 = vpop.permute.xlu0 %5607
    %5611 = vset.pattern.permute.xlu0 0
    %5612 = vperm.xlu0 %5611, %v5198
    %v5613 = vpop.permute.xlu0 %5612
    %5616 = vset.pattern.permute.xlu0 0
    %5617 = vperm.xlu0 %5616, %v5199
    %v5618 = vpop.permute.xlu0 %5617
    %5621 = vset.pattern.permute.xlu0 0
    %5622 = vperm.xlu0 %5621, %v5200
    %v5623 = vpop.permute.xlu0 %5622
    %v5625 = vadd.f32 %v5534, %v5563
    %v5626 = vadd.f32 %v5535, %v5563
    %v5627 = vadd.f32 %v5536, %v5568
    %v5628 = vadd.f32 %v5537, %v5568
    %v5629 = vadd.f32 %v5538, %v5573
    %v5630 = vadd.f32 %v5539, %v5573
    %v5631 = vadd.f32 %v5540, %v5578
    %v5632 = vadd.f32 %v5541, %v5578
    %v5633 = vadd.f32 %v5542, %v5583
    %v5634 = vadd.f32 %v5543, %v5583
    %v5635 = vadd.f32 %v5544, %v5588
    %v5636 = vadd.f32 %v5545, %v5588
    %v5637 = vadd.f32 %v5546, %v5593
    %v5638 = vadd.f32 %v5547, %v5593
    %v5639 = vadd.f32 %v5548, %v5598
    %v5640 = vadd.f32 %v5549, %v5598
    %v5641 = vadd.f32 %v5550, %v5603
    %v5642 = vadd.f32 %v5551, %v5603
    %v5643 = vadd.f32 %v5552, %v5608
    %v5644 = vadd.f32 %v5553, %v5608
    %v5645 = vadd.f32 %v5554, %v5613
    %v5646 = vadd.f32 %v5555, %v5613
    %v5647 = vadd.f32 %v5556, %v5618
    %v5648 = vadd.f32 %v5557, %v5618
    %v5649 = vadd.f32 %v5558, %v5623
    %v5650 = vadd.f32 %v5559, %v5623
    %vm5651 = vcmp.gt.f32.partialorder %v5625, 0.0
    %vm5652 = vcmp.gt.f32.partialorder %v5626, 0.0
    %vm5653 = vcmp.gt.f32.partialorder %v5627, 0.0
    %vm5654 = vcmp.gt.f32.partialorder %v5628, 0.0
    %vm5655 = vcmp.gt.f32.partialorder %v5629, 0.0
    %vm5656 = vcmp.gt.f32.partialorder %v5630, 0.0
    %vm5657 = vcmp.gt.f32.partialorder %v5631, 0.0
    %vm5658 = vcmp.gt.f32.partialorder %v5632, 0.0
    %vm5659 = vcmp.gt.f32.partialorder %v5633, 0.0
    %vm5660 = vcmp.gt.f32.partialorder %v5634, 0.0
    %vm5661 = vcmp.gt.f32.partialorder %v5635, 0.0
    %vm5662 = vcmp.gt.f32.partialorder %v5636, 0.0
    %vm5663 = vcmp.gt.f32.partialorder %v5637, 0.0
    %vm5664 = vcmp.gt.f32.partialorder %v5638, 0.0
    %vm5665 = vcmp.gt.f32.partialorder %v5639, 0.0
    %vm5666 = vcmp.gt.f32.partialorder %v5640, 0.0
    %vm5667 = vcmp.gt.f32.partialorder %v5641, 0.0
    %vm5668 = vcmp.gt.f32.partialorder %v5642, 0.0
    %vm5669 = vcmp.gt.f32.partialorder %v5643, 0.0
    %vm5670 = vcmp.gt.f32.partialorder %v5644, 0.0
    %vm5671 = vcmp.gt.f32.partialorder %v5645, 0.0
    %vm5672 = vcmp.gt.f32.partialorder %v5646, 0.0
    %vm5673 = vcmp.gt.f32.partialorder %v5647, 0.0
    %vm5674 = vcmp.gt.f32.partialorder %v5648, 0.0
    %vm5675 = vcmp.gt.f32.partialorder %v5649, 0.0
    %vm5676 = vcmp.gt.f32.partialorder %v5650, 0.0
    %v5677 = vmul.f32 %v5625, 1.442695
    %v5678 = vpow.pop %v5677
    %v5679 = vmul.f32 %v5626, 1.442695
    %v5680 = vpow.pop %v5679
    %v5681 = vmul.f32 %v5627, 1.442695
    %v5682 = vpow.pop %v5681
    %v5683 = vmul.f32 %v5628, 1.442695
    %v5684 = vpow.pop %v5683
    %v5685 = vmul.f32 %v5629, 1.442695
    %v5686 = vpow.pop %v5685
    %v5687 = vmul.f32 %v5630, 1.442695
    %v5688 = vpow.pop %v5687
    %v5689 = vmul.f32 %v5631, 1.442695
    %v5690 = vpow.pop %v5689
    %v5691 = vmul.f32 %v5632, 1.442695
    %v5692 = vpow.pop %v5691
    %v5693 = vmul.f32 %v5633, 1.442695
    %v5694 = vpow.pop %v5693
    %v5695 = vmul.f32 %v5634, 1.442695
    %v5696 = vpow.pop %v5695
    %v5697 = vmul.f32 %v5635, 1.442695
    %v5698 = vpow.pop %v5697
    %v5699 = vmul.f32 %v5636, 1.442695
    %v5700 = vpow.pop %v5699
    %v5701 = vmul.f32 %v5637, 1.442695
    %v5702 = vpow.pop %v5701
    %v5703 = vmul.f32 %v5638, 1.442695
    %v5704 = vpow.pop %v5703
    %v5705 = vmul.f32 %v5639, 1.442695
    %v5706 = vpow.pop %v5705
    %v5707 = vmul.f32 %v5640, 1.442695
    %v5708 = vpow.pop %v5707
    %v5709 = vmul.f32 %v5641, 1.442695
    %v5710 = vpow.pop %v5709
    %v5711 = vmul.f32 %v5642, 1.442695
    %v5712 = vpow.pop %v5711
    %v5713 = vmul.f32 %v5643, 1.442695
    %v5714 = vpow.pop %v5713
    %v5715 = vmul.f32 %v5644, 1.442695
    %v5716 = vpow.pop %v5715
    %v5717 = vmul.f32 %v5645, 1.442695
    %v5718 = vpow.pop %v5717
    %v5719 = vmul.f32 %v5646, 1.442695
    %v5720 = vpow.pop %v5719
    %v5721 = vmul.f32 %v5647, 1.442695
    %v5722 = vpow.pop %v5721
    %v5723 = vmul.f32 %v5648, 1.442695
    %v5724 = vpow.pop %v5723
    %v5725 = vmul.f32 %v5649, 1.442695
    %v5726 = vpow.pop %v5725
    %v5727 = vmul.f32 %v5650, 1.442695
    %v5728 = vpow.pop %v5727
    %v5729 = vsub.f32 %v5678, 1.0
    %v5730 = vsub.f32 %v5680, 1.0
    %v5731 = vsub.f32 %v5682, 1.0
    %v5732 = vsub.f32 %v5684, 1.0
    %v5733 = vsub.f32 %v5686, 1.0
    %v5734 = vsub.f32 %v5688, 1.0
    %v5735 = vsub.f32 %v5690, 1.0
    %v5736 = vsub.f32 %v5692, 1.0
    %v5737 = vsub.f32 %v5694, 1.0
    %v5738 = vsub.f32 %v5696, 1.0
    %v5739 = vsub.f32 %v5698, 1.0
    %v5740 = vsub.f32 %v5700, 1.0
    %v5741 = vsub.f32 %v5702, 1.0
    %v5742 = vsub.f32 %v5704, 1.0
    %v5743 = vsub.f32 %v5706, 1.0
    %v5744 = vsub.f32 %v5708, 1.0
    %v5745 = vsub.f32 %v5710, 1.0
    %v5746 = vsub.f32 %v5712, 1.0
    %v5747 = vsub.f32 %v5714, 1.0
    %v5748 = vsub.f32 %v5716, 1.0
    %v5749 = vsub.f32 %v5718, 1.0
    %v5750 = vsub.f32 %v5720, 1.0
    %v5751 = vsub.f32 %v5722, 1.0
    %v5752 = vsub.f32 %v5724, 1.0
    %v5753 = vsub.f32 %v5726, 1.0
    %v5754 = vsub.f32 %v5728, 1.0
    %v5755 = vsel %vm5651, %v5625, %v5729
    %v5756 = vsel %vm5652, %v5626, %v5730
    %v5757 = vsel %vm5653, %v5627, %v5731
    %v5758 = vsel %vm5654, %v5628, %v5732
    %v5759 = vsel %vm5655, %v5629, %v5733
    %v5760 = vsel %vm5656, %v5630, %v5734
    %v5761 = vsel %vm5657, %v5631, %v5735
    %v5762 = vsel %vm5658, %v5632, %v5736
    %v5763 = vsel %vm5659, %v5633, %v5737
    %v5764 = vsel %vm5660, %v5634, %v5738
    %v5765 = vsel %vm5661, %v5635, %v5739
    %v5766 = vsel %vm5662, %v5636, %v5740
    %v5767 = vsel %vm5663, %v5637, %v5741
    %v5768 = vsel %vm5664, %v5638, %v5742
    %v5769 = vsel %vm5665, %v5639, %v5743
    %v5770 = vsel %vm5666, %v5640, %v5744
    %v5771 = vsel %vm5667, %v5641, %v5745
    %v5772 = vsel %vm5668, %v5642, %v5746
    %v5773 = vsel %vm5669, %v5643, %v5747
    %v5774 = vsel %vm5670, %v5644, %v5748
    %v5775 = vsel %vm5671, %v5645, %v5749
    %v5776 = vsel %vm5672, %v5646, %v5750
    %v5777 = vsel %vm5673, %v5647, %v5751
    %v5778 = vsel %vm5674, %v5648, %v5752
    %v5779 = vsel %vm5675, %v5649, %v5753
    %v5780 = vsel %vm5676, %v5650, %v5754
    %5807 = vrot.lane.b32.xlu0 %v5755, 127
    %v5808 = vpop.permute.xlu0 %5807
    %5809 = vrot.lane.b32.xlu0 %v5756, 127
    %v5810 = vpop.permute.xlu0 %5809
    %5811 = vrot.lane.b32.xlu0 %v5757, 127
    %v5812 = vpop.permute.xlu0 %5811
    %5813 = vrot.lane.b32.xlu0 %v5758, 127
    %v5814 = vpop.permute.xlu0 %5813
    %5815 = vrot.lane.b32.xlu0 %v5759, 127
    %v5816 = vpop.permute.xlu0 %5815
    %5817 = vrot.lane.b32.xlu0 %v5760, 127
    %v5818 = vpop.permute.xlu0 %5817
    %5819 = vrot.lane.b32.xlu0 %v5761, 127
    %v5820 = vpop.permute.xlu0 %5819
    %5821 = vrot.lane.b32.xlu0 %v5762, 127
    %v5822 = vpop.permute.xlu0 %5821
    %5823 = vrot.lane.b32.xlu0 %v5763, 127
    %v5824 = vpop.permute.xlu0 %5823
    %5825 = vrot.lane.b32.xlu0 %v5764, 127
    %v5826 = vpop.permute.xlu0 %5825
    %5827 = vrot.lane.b32.xlu0 %v5765, 127
    %v5828 = vpop.permute.xlu0 %5827
    %5829 = vrot.lane.b32.xlu0 %v5766, 127
    %v5830 = vpop.permute.xlu0 %5829
    %5831 = vrot.lane.b32.xlu0 %v5767, 127
    %v5832 = vpop.permute.xlu0 %5831
    %5833 = vrot.lane.b32.xlu0 %v5768, 127
    %v5834 = vpop.permute.xlu0 %5833
    %5835 = vrot.lane.b32.xlu0 %v5769, 127
    %v5836 = vpop.permute.xlu0 %5835
    %5837 = vrot.lane.b32.xlu0 %v5770, 127
    %v5838 = vpop.permute.xlu0 %5837
    %5839 = vrot.lane.b32.xlu0 %v5771, 127
    %v5840 = vpop.permute.xlu0 %5839
    %5841 = vrot.lane.b32.xlu0 %v5772, 127
    %v5842 = vpop.permute.xlu0 %5841
    %5843 = vrot.lane.b32.xlu0 %v5773, 127
    %v5844 = vpop.permute.xlu0 %5843
    %5845 = vrot.lane.b32.xlu0 %v5774, 127
    %v5846 = vpop.permute.xlu0 %5845
    %5847 = vrot.lane.b32.xlu0 %v5775, 127
    %v5848 = vpop.permute.xlu0 %5847
    %5849 = vrot.lane.b32.xlu0 %v5776, 127
    %v5850 = vpop.permute.xlu0 %5849
    %5851 = vrot.lane.b32.xlu0 %v5777, 127
    %v5852 = vpop.permute.xlu0 %5851
    %5853 = vrot.lane.b32.xlu0 %v5778, 127
    %v5854 = vpop.permute.xlu0 %5853
    %5855 = vrot.lane.b32.xlu0 %v5779, 127
    %v5856 = vpop.permute.xlu0 %5855
    %5857 = vrot.lane.b32.xlu0 %v5780, 127
    %v5858 = vpop.permute.xlu0 %5857
    %v5859 = vsel %vm74, %v5808, %v5810
    %v5860 = vsel %vm74, %v5812, %v5814
    %v5861 = vsel %vm74, %v5816, %v5818
    %v5862 = vsel %vm74, %v5820, %v5822
    %v5863 = vsel %vm74, %v5824, %v5826
    %v5864 = vsel %vm74, %v5828, %v5830
    %v5865 = vsel %vm74, %v5832, %v5834
    %v5866 = vsel %vm74, %v5836, %v5838
    %v5867 = vsel %vm74, %v5840, %v5842
    %v5868 = vsel %vm74, %v5844, %v5846
    %v5869 = vsel %vm74, %v5848, %v5850
    %v5870 = vsel %vm74, %v5852, %v5854
    %v5871 = vsel %vm74, %v5856, %v5858
    %v5898 = vmax.f32 %v5755, %v5859
    %v5899 = vmax.f32 %v5756, %v5810
    %v5900 = vmax.f32 %v5757, %v5860
    %v5901 = vmax.f32 %v5758, %v5814
    %v5902 = vmax.f32 %v5759, %v5861
    %v5903 = vmax.f32 %v5760, %v5818
    %v5904 = vmax.f32 %v5761, %v5862
    %v5905 = vmax.f32 %v5762, %v5822
    %v5906 = vmax.f32 %v5763, %v5863
    %v5907 = vmax.f32 %v5764, %v5826
    %v5908 = vmax.f32 %v5765, %v5864
    %v5909 = vmax.f32 %v5766, %v5830
    %v5910 = vmax.f32 %v5767, %v5865
    %v5911 = vmax.f32 %v5768, %v5834
    %v5912 = vmax.f32 %v5769, %v5866
    %v5913 = vmax.f32 %v5770, %v5838
    %v5914 = vmax.f32 %v5771, %v5867
    %v5915 = vmax.f32 %v5772, %v5842
    %v5916 = vmax.f32 %v5773, %v5868
    %v5917 = vmax.f32 %v5774, %v5846
    %v5918 = vmax.f32 %v5775, %v5869
    %v5919 = vmax.f32 %v5776, %v5850
    %v5920 = vmax.f32 %v5777, %v5870
    %v5921 = vmax.f32 %v5778, %v5854
    %v5922 = vmax.f32 %v5779, %v5871
    %v5923 = vmax.f32 %v5780, %v5858
    %vm5924 = vcmp.ge.s32.totalorder %v572, 46
    %v5925 = vsel %vm5924, 1, 0
    %v5926 = vmul.u32 %v5925, 97
    %v5927 = vmul.u32 %v5925, 46
    %v5928 = vsub.s32 %v572, %v5927
    %v5929 = vmul.u32 %v5928, 2
    %v5930 = vadd.s32 %v5926, %v5929
    %vm5931 = vcmp.eq.s32.totalorder %v1237, %v5930
    %vm5932 = vcmp.eq.s32.totalorder %v1238, %v5930
    %vm5933 = vcmp.eq.s32.totalorder %v1239, %v5930
    %vm5934 = vcmp.eq.s32.totalorder %v1240, %v5930
    %vm5935 = vcmp.eq.s32.totalorder %v1241, %v5930
    %vm5936 = vcmp.eq.s32.totalorder %v1242, %v5930
    %vm5937 = vcmp.eq.s32.totalorder %v1243, %v5930
    %vm5938 = vcmp.eq.s32.totalorder %v1244, %v5930
    %vm5939 = vcmp.eq.s32.totalorder %v1245, %v5930
    %vm5940 = vcmp.eq.s32.totalorder %v1246, %v5930
    %vm5941 = vcmp.eq.s32.totalorder %v1247, %v5930
    %vm5942 = vcmp.eq.s32.totalorder %v1248, %v5930
    %vm5943 = vcmp.eq.s32.totalorder %v1249, %v5930
    %vm5944 = vcmp.eq.s32.totalorder %v1250, %v5930
    %vm5945 = vcmp.eq.s32.totalorder %v1251, %v5930
    %vm5946 = vcmp.eq.s32.totalorder %v1252, %v5930
    %vm5947 = vcmp.eq.s32.totalorder %v1253, %v5930
    %vm5948 = vcmp.eq.s32.totalorder %v1254, %v5930
    %vm5949 = vcmp.eq.s32.totalorder %v1255, %v5930
    %vm5950 = vcmp.eq.s32.totalorder %v1256, %v5930
    %vm5951 = vcmp.eq.s32.totalorder %v1257, %v5930
    %vm5952 = vcmp.eq.s32.totalorder %v1258, %v5930
    %vm5953 = vcmp.eq.s32.totalorder %v1259, %v5930
    %vm5954 = vcmp.eq.s32.totalorder %v1260, %v5930
    %v5955 = vsel %vm5931, 1.0, 0.0
    %v5956 = vsel %vm5932, 1.0, 0.0
    %v5957 = vsel %vm5933, 1.0, 0.0
    %v5958 = vsel %vm5934, 1.0, 0.0
    %v5959 = vsel %vm5935, 1.0, 0.0
    %v5960 = vsel %vm5936, 1.0, 0.0
    %v5961 = vsel %vm5937, 1.0, 0.0
    %v5962 = vsel %vm5938, 1.0, 0.0
    %v5963 = vsel %vm5939, 1.0, 0.0
    %v5964 = vsel %vm5940, 1.0, 0.0
    %v5965 = vsel %vm5941, 1.0, 0.0
    %v5966 = vsel %vm5942, 1.0, 0.0
    %v5967 = vsel %vm5943, 1.0, 0.0
    %v5968 = vsel %vm5944, 1.0, 0.0
    %v5969 = vsel %vm5945, 1.0, 0.0
    %v5970 = vsel %vm5946, 1.0, 0.0
    %v5971 = vsel %vm5947, 1.0, 0.0
    %v5972 = vsel %vm5948, 1.0, 0.0
    %v5973 = vsel %vm5949, 1.0, 0.0
    %v5974 = vsel %vm5950, 1.0, 0.0
    %v5975 = vsel %vm5951, 1.0, 0.0
    %v5976 = vsel %vm5952, 1.0, 0.0
    %v5977 = vsel %vm5953, 1.0, 0.0
    %v5978 = vsel %vm5954, 1.0, 0.0
    %vm5979 = vcmask 498688
    %v5981 = vsel %vm5979, %v5899, 0
    %v5984 = vsel %vm5979, %v5901, 0
    %v5987 = vsel %vm5979, %v5903, 0
    %v5990 = vsel %vm5979, %v5905, 0
    %v5993 = vsel %vm5979, %v5907, 0
    %v5996 = vsel %vm5979, %v5909, 0
    %v5999 = vsel %vm5979, %v5911, 0
    %v6002 = vsel %vm5979, %v5913, 0
    %v6005 = vsel %vm5979, %v5915, 0
    %v6008 = vsel %vm5979, %v5917, 0
    %v6011 = vsel %vm5979, %v5919, 0
    %v6014 = vsel %vm5979, %v5921, 0
    %v6017 = vsel %vm5979, %v5923, 0
    %v6020 = vsel %vm3312, %v5978, 0
    %6022 = vmatprep.subr.mxu0 0.0
    %6023 = vmatpush1.msra.mxu0 %v5955
    %6024 = vmatprep.subr.mxu0 0.0
    %6025 = vmatpush1.msra.mxu0 %v5956
    %6026 = vmatprep.subr.mxu0 0.0
    %6027 = vmatpush1.msra.mxu0 %v5957
    %6028 = vmatprep.subr.mxu0 0.0
    %6029 = vmatpush1.msra.mxu0 %v5958
    %6030 = vmatprep.subr.mxu0 0.0
    %6031 = vmatpush1.msra.mxu0 %v5959
    %6032 = vmatprep.subr.mxu0 0.0
    %6033 = vmatpush1.msra.mxu0 %v5960
    %6034 = vmatprep.subr.mxu0 0.0
    %6035 = vmatpush1.msra.mxu0 %v5961
    %6036 = vmatprep.subr.mxu0 0.0
    %6037 = vmatpush1.msra.mxu0 %v5962
    %6038 = vmatprep.subr.mxu0 0.0
    %6039 = vmatpush1.msra.mxu0 %v5963
    %6040 = vmatprep.subr.mxu0 0.0
    %6041 = vmatpush1.msra.mxu0 %v5964
    %6042 = vmatprep.subr.mxu0 0.0
    %6043 = vmatpush1.msra.mxu0 %v5965
    %6044 = vmatprep.subr.mxu0 0.0
    %6045 = vmatpush1.msra.mxu0 %v5966
    %6046 = vmatprep.subr.mxu0 0.0
    %6047 = vmatpush1.msra.mxu0 %v5967
    %6048 = vmatprep.subr.mxu0 0.0
    %6049 = vmatpush1.msra.mxu0 %v5968
    %6050 = vmatprep.subr.mxu0 0.0
    %6051 = vmatpush1.msra.mxu0 %v5969
    %6052 = vmatprep.subr.mxu0 0.0
    %6053 = vmatpush1.msra.mxu0 %v5970
    %6054 = vmatprep.subr.mxu0 0.0
    %6055 = vmatpush1.msra.mxu0 %v5971
    %6056 = vmatprep.subr.mxu0 0.0
    %6057 = vmatpush1.msra.mxu0 %v5972
    %6058 = vmatprep.subr.mxu0 0.0
    %6059 = vmatpush1.msra.mxu0 %v5973
    %6060 = vmatprep.subr.mxu0 0.0
    %6061 = vmatpush1.msra.mxu0 %v5974
    %6062 = vmatprep.subr.mxu0 0.0
    %6063 = vmatpush1.msra.mxu0 %v5975
    %6064 = vmatprep.subr.mxu0 0.0
    %6065 = vmatpush1.msra.mxu0 %v5976
    %6066 = vmatprep.subr.mxu0 0.0
    %6067 = vmatpush1.msra.mxu0 %v5977
    %6068 = vmatprep.subr.mxu0 0.0
    %6069 = vmatpush1.msra.mxu0 %v6020
    %6070 = vmatprep.subr.mxu0 0.0
    %6071 = vmatpush1.msra.mxu0 0.0
    %6072 = vmatprep.subr.mxu0 0.0
    %6073 = vmatpush1.msra.mxu0 0.0
    %6074 = vmatprep.subr.mxu0 0.0
    %6075 = vmatpush1.msra.mxu0 0.0
    %6076 = vmatprep.subr.mxu0 0.0
    %6077 = vmatpush1.msra.mxu0 0.0
    %6078 = vmatprep.subr.mxu0 0.0
    %6079 = vmatpush1.msra.mxu0 0.0
    %6080 = vmatprep.subr.mxu0 0.0
    %6081 = vmatpush1.msra.mxu0 0.0
    %6082 = vmatprep.subr.mxu0 0.0
    %6083 = vmatpush1.msra.mxu0 0.0
    %6084 = vmatprep.subr.mxu0 0.0
    %6085 = vmatpush1.msra.mxu0 0.0
    %6086 = vmatprep.mubr.f32.mxu0 %v5981
    %6087 = vmatmul.mubr.f32.gmra.mrb[0].mxu0 %v5898
    %v6088 = vpop.f32.mrb[0].mxu0
    %v6089 = vadd.f32 0.0, %v6088
    %v6090 = vpop.f32.mrb[0].mxu0
    %6091 = vmatprep.mubr.f32.mxu0 %v5984
    %6092 = vmatmul.mubr.f32.gmra.mrb[0].mxu0 %v5900
    %v6093 = vpop.f32.mrb[0].mxu0
    %v6094 = vadd.f32 0.0, %v6093
    %v6095 = vpop.f32.mrb[0].mxu0
    %6096 = vmatprep.mubr.f32.mxu0 %v5987
    %6097 = vmatmul.mubr.f32.gmra.mrb[0].mxu0 %v5902
    %v6098 = vpop.f32.mrb[0].mxu0
    %v6099 = vadd.f32 0.0, %v6098
    %v6100 = vpop.f32.mrb[0].mxu0
    %6101 = vmatprep.mubr.f32.mxu0 %v5990
    %6102 = vmatmul.mubr.f32.gmra.mrb[0].mxu0 %v5904
    %v6103 = vpop.f32.mrb[0].mxu0
    %v6104 = vadd.f32 0.0, %v6103
    %v6105 = vpop.f32.mrb[0].mxu0
    %6106 = vmatprep.mubr.f32.mxu0 %v5993
    %6107 = vmatmul.mubr.f32.gmra.mrb[0].mxu0 %v5906
    %v6108 = vpop.f32.mrb[0].mxu0
    %v6109 = vadd.f32 0.0, %v6108
    %v6110 = vpop.f32.mrb[0].mxu0
    %6111 = vmatprep.mubr.f32.mxu0 %v5996
    %6112 = vmatmul.mubr.f32.gmra.mrb[0].mxu0 %v5908
    %v6113 = vpop.f32.mrb[0].mxu0
    %v6114 = vadd.f32 0.0, %v6113
    %v6115 = vpop.f32.mrb[0].mxu0
    %6116 = vmatprep.mubr.f32.mxu0 %v5999
    %6117 = vmatmul.mubr.f32.gmra.mrb[0].mxu0 %v5910
    %v6118 = vpop.f32.mrb[0].mxu0
    %v6119 = vadd.f32 0.0, %v6118
    %v6120 = vpop.f32.mrb[0].mxu0
    %6121 = vmatprep.mubr.f32.mxu0 %v6002
    %6122 = vmatmul.mubr.f32.gmra.mrb[0].mxu0 %v5912
    %v6123 = vpop.f32.mrb[0].mxu0
    %v6124 = vadd.f32 0.0, %v6123
    %v6125 = vpop.f32.mrb[0].mxu0
    %6126 = vmatprep.mubr.f32.mxu0 %v6005
    %6127 = vmatmul.mubr.f32.gmra.mrb[0].mxu0 %v5914
    %v6128 = vpop.f32.mrb[0].mxu0
    %v6129 = vadd.f32 0.0, %v6128
    %v6130 = vpop.f32.mrb[0].mxu0
    %6131 = vmatprep.mubr.f32.mxu0 %v6008
    %6132 = vmatmul.mubr.f32.gmra.mrb[0].mxu0 %v5916
    %v6133 = vpop.f32.mrb[0].mxu0
    %v6134 = vadd.f32 0.0, %v6133
    %v6135 = vpop.f32.mrb[0].mxu0
    %6136 = vmatprep.mubr.f32.mxu0 %v6011
    %6137 = vmatmul.mubr.f32.gmra.mrb[0].mxu0 %v5918
    %v6138 = vpop.f32.mrb[0].mxu0
    %v6139 = vadd.f32 0.0, %v6138
    %v6140 = vpop.f32.mrb[0].mxu0
    %6141 = vmatprep.mubr.f32.mxu0 %v6014
    %6142 = vmatmul.mubr.f32.gmra.mrb[0].mxu0 %v5920
    %v6143 = vpop.f32.mrb[0].mxu0
    %v6144 = vadd.f32 0.0, %v6143
    %v6145 = vpop.f32.mrb[0].mxu0
    %6146 = vmatprep.mubr.f32.mxu0 %v6017
    %6147 = vmatmul.mubr.f32.gmra.mrb[0].mxu0 %v5922
    %v6148 = vpop.f32.mrb[0].mxu0
    %v6149 = vadd.f32 0.0, %v6148
    %v6150 = vpop.f32.mrb[0].mxu0
    %6151 = vdwg.mxu0
    %v6152 = vld [vmem:[%s10] sm:$0xff]
    %v6153 = vld [vmem:[%s10 + $0x8] sm:$0xff]
    %v6154 = vld [vmem:[%s10 + $0x10] sm:$0xff]
    %v6155 = vld [vmem:[%s10 + $0x18] sm:$0xff]
    %v6156 = vld [vmem:[%s10 + $0x20] sm:$0xff]
    %v6157 = vld [vmem:[%s10 + $0x28] sm:$0xff]
    %v6158 = vld [vmem:[%s10 + $0x30] sm:$0xff]
    %v6159 = vld [vmem:[%s10 + $0x38] sm:$0xff]
    %v6160 = vld [vmem:[%s10 + $0x40] sm:$0xff]
    %v6161 = vld [vmem:[%s10 + $0x48] sm:$0xff]
    %v6162 = vld [vmem:[%s10 + $0x50] sm:$0xff]
    %v6163 = vld [vmem:[%s10 + $0x58] sm:$0xff]
    %v6164 = vld [vmem:[%s10 + $0x60] sm:$0xf]
    %v6165 = vld [vmem:[%s10 + $0x68] sm:$0xff]
    %v6166 = vld [vmem:[%s10 + $0x70] sm:$0xff]
    %v6167 = vld [vmem:[%s10 + $0x78] sm:$0xff]
    %v6168 = vld [vmem:[%s10 + $0x80] sm:$0xff]
    %v6169 = vld [vmem:[%s10 + $0x88] sm:$0xff]
    %v6170 = vld [vmem:[%s10 + $0x90] sm:$0xff]
    %v6171 = vld [vmem:[%s10 + $0x98] sm:$0xff]
    %v6172 = vld [vmem:[%s10 + $0xa0] sm:$0xff]
    %v6173 = vld [vmem:[%s10 + $0xa8] sm:$0xff]
    %v6174 = vld [vmem:[%s10 + $0xb0] sm:$0xff]
    %v6175 = vld [vmem:[%s10 + $0xb8] sm:$0xff]
    %v6176 = vld [vmem:[%s10 + $0xc0] sm:$0xff]
    %v6177 = vld [vmem:[%s10 + $0xc8] sm:$0xf]
    %v6178 = vld [vmem:[%s10 + $0xd0] sm:$0xff]
    %v6179 = vld [vmem:[%s10 + $0xd8] sm:$0xff]
    %v6180 = vld [vmem:[%s10 + $0xe0] sm:$0xff]
    %v6181 = vld [vmem:[%s10 + $0xe8] sm:$0xff]
    %v6182 = vld [vmem:[%s10 + $0xf0] sm:$0xff]
    %v6183 = vld [vmem:[%s10 + $0xf8] sm:$0xff]
    %v6184 = vld [vmem:[%s10 + $0x100] sm:$0xff]
    %v6185 = vld [vmem:[%s10 + $0x108] sm:$0xff]
    %v6186 = vld [vmem:[%s10 + $0x110] sm:$0xff]
    %v6187 = vld [vmem:[%s10 + $0x118] sm:$0xff]
    %v6188 = vld [vmem:[%s10 + $0x120] sm:$0xff]
    %v6189 = vld [vmem:[%s10 + $0x128] sm:$0xff]
    %v6190 = vld [vmem:[%s10 + $0x130] sm:$0xf]
    %v6191 = vld [vmem:[%s10 + $0x138] sm:$0xff]
    %v6192 = vld [vmem:[%s10 + $0x140] sm:$0xff]
    %v6193 = vld [vmem:[%s10 + $0x148] sm:$0xff]
    %v6194 = vld [vmem:[%s10 + $0x150] sm:$0xff]
    %v6195 = vld [vmem:[%s10 + $0x158] sm:$0xff]
    %v6196 = vld [vmem:[%s10 + $0x160] sm:$0xff]
    %v6197 = vld [vmem:[%s10 + $0x168] sm:$0xff]
    %v6198 = vld [vmem:[%s10 + $0x170] sm:$0xff]
    %v6199 = vld [vmem:[%s10 + $0x178] sm:$0xff]
    %v6200 = vld [vmem:[%s10 + $0x180] sm:$0xff]
    %v6201 = vld [vmem:[%s10 + $0x188] sm:$0xff]
    %v6202 = vld [vmem:[%s10 + $0x190] sm:$0xff]
    %v6203 = vld [vmem:[%s10 + $0x198] sm:$0xf]
    %v6204 = vmul.f32 %v6152, %v6089
    %v6205 = vmul.f32 %v6153, %v6094
    %v6206 = vmul.f32 %v6154, %v6099
    %v6207 = vmul.f32 %v6155, %v6104
    %v6208 = vmul.f32 %v6156, %v6109
    %v6209 = vmul.f32 %v6157, %v6114
    %v6210 = vmul.f32 %v6158, %v6119
    %v6211 = vmul.f32 %v6159, %v6124
    %v6212 = vmul.f32 %v6160, %v6129
    %v6213 = vmul.f32 %v6161, %v6134
    %v6214 = vmul.f32 %v6162, %v6139
    %v6215 = vmul.f32 %v6163, %v6144
    %v6216 = vmul.f32 %v6164, %v6149
    %v6217 = vmul.f32 %v6165, %v6089
    %v6218 = vmul.f32 %v6166, %v6094
    %v6219 = vmul.f32 %v6167, %v6099
    %v6220 = vmul.f32 %v6168, %v6104
    %v6221 = vmul.f32 %v6169, %v6109
    %v6222 = vmul.f32 %v6170, %v6114
    %v6223 = vmul.f32 %v6171, %v6119
    %v6224 = vmul.f32 %v6172, %v6124
    %v6225 = vmul.f32 %v6173, %v6129
    %v6226 = vmul.f32 %v6174, %v6134
    %v6227 = vmul.f32 %v6175, %v6139
    %v6228 = vmul.f32 %v6176, %v6144
    %v6229 = vmul.f32 %v6177, %v6149
    %v6230 = vmul.f32 %v6178, %v6089
    %v6231 = vmul.f32 %v6179, %v6094
    %v6232 = vmul.f32 %v6180, %v6099
    %v6233 = vmul.f32 %v6181, %v6104
    %v6234 = vmul.f32 %v6182, %v6109
    %v6235 = vmul.f32 %v6183, %v6114
    %v6236 = vmul.f32 %v6184, %v6119
    %v6237 = vmul.f32 %v6185, %v6124
    %v6238 = vmul.f32 %v6186, %v6129
    %v6239 = vmul.f32 %v6187, %v6134
    %v6240 = vmul.f32 %v6188, %v6139
    %v6241 = vmul.f32 %v6189, %v6144
    %v6242 = vmul.f32 %v6190, %v6149
    %v6243 = vmul.f32 %v6191, %v6089
    %v6244 = vmul.f32 %v6192, %v6094
    %v6245 = vmul.f32 %v6193, %v6099
    %v6246 = vmul.f32 %v6194, %v6104
    %v6247 = vmul.f32 %v6195, %v6109
    %v6248 = vmul.f32 %v6196, %v6114
    %v6249 = vmul.f32 %v6197, %v6119
    %v6250 = vmul.f32 %v6198, %v6124
    %v6251 = vmul.f32 %v6199, %v6129
    %v6252 = vmul.f32 %v6200, %v6134
    %v6253 = vmul.f32 %v6201, %v6139
    %v6254 = vmul.f32 %v6202, %v6144
    %v6255 = vmul.f32 %v6203, %v6149
    %vm6256 = vcmask 375808
    %v6257 = vsel %vm6256, %v6204, 0.0
    %6258 = vadd.xlane.f32.xlu0 %v6257
    %v6259 = vpop.xlane.xlu0 %6258
    %v6260 = vsel %vm6256, %v6205, 0.0
    %6261 = vadd.xlane.f32.xlu0 %v6260
    %v6262 = vpop.xlane.xlu0 %6261
    %v6263 = vsel %vm6256, %v6206, 0.0
    %6264 = vadd.xlane.f32.xlu0 %v6263
    %v6265 = vpop.xlane.xlu0 %6264
    %v6266 = vsel %vm6256, %v6207, 0.0
    %6267 = vadd.xlane.f32.xlu0 %v6266
    %v6268 = vpop.xlane.xlu0 %6267
    %v6269 = vsel %vm6256, %v6208, 0.0
    %6270 = vadd.xlane.f32.xlu0 %v6269
    %v6271 = vpop.xlane.xlu0 %6270
    %v6272 = vsel %vm6256, %v6209, 0.0
    %6273 = vadd.xlane.f32.xlu0 %v6272
    %v6274 = vpop.xlane.xlu0 %6273
    %v6275 = vsel %vm6256, %v6210, 0.0
    %6276 = vadd.xlane.f32.xlu0 %v6275
    %v6277 = vpop.xlane.xlu0 %6276
    %v6278 = vsel %vm6256, %v6211, 0.0
    %6279 = vadd.xlane.f32.xlu0 %v6278
    %v6280 = vpop.xlane.xlu0 %6279
    %v6281 = vsel %vm6256, %v6212, 0.0
    %6282 = vadd.xlane.f32.xlu0 %v6281
    %v6283 = vpop.xlane.xlu0 %6282
    %v6284 = vsel %vm6256, %v6213, 0.0
    %6285 = vadd.xlane.f32.xlu0 %v6284
    %v6286 = vpop.xlane.xlu0 %6285
    %v6287 = vsel %vm6256, %v6214, 0.0
    %6288 = vadd.xlane.f32.xlu0 %v6287
    %v6289 = vpop.xlane.xlu0 %6288
    %v6290 = vsel %vm6256, %v6215, 0.0
    %6291 = vadd.xlane.f32.xlu0 %v6290
    %v6292 = vpop.xlane.xlu0 %6291
    %vm6293 = vcmask 371712
    %v6294 = vsel %vm6293, %v6216, 0.0
    %6295 = vadd.xlane.f32.xlu0 %v6294
    %v6296 = vpop.xlane.xlu0 %6295
    %v6297 = vsel %vm6256, %v6217, 0.0
    %6298 = vadd.xlane.f32.xlu0 %v6297
    %v6299 = vpop.xlane.xlu0 %6298
    %v6300 = vsel %vm6256, %v6218, 0.0
    %6301 = vadd.xlane.f32.xlu0 %v6300
    %v6302 = vpop.xlane.xlu0 %6301
    %v6303 = vsel %vm6256, %v6219, 0.0
    %6304 = vadd.xlane.f32.xlu0 %v6303
    %v6305 = vpop.xlane.xlu0 %6304
    %v6306 = vsel %vm6256, %v6220, 0.0
    %6307 = vadd.xlane.f32.xlu0 %v6306
    %v6308 = vpop.xlane.xlu0 %6307
    %v6309 = vsel %vm6256, %v6221, 0.0
    %6310 = vadd.xlane.f32.xlu0 %v6309
    %v6311 = vpop.xlane.xlu0 %6310
    %v6312 = vsel %vm6256, %v6222, 0.0
    %6313 = vadd.xlane.f32.xlu0 %v6312
    %v6314 = vpop.xlane.xlu0 %6313
    %v6315 = vsel %vm6256, %v6223, 0.0
    %6316 = vadd.xlane.f32.xlu0 %v6315
    %v6317 = vpop.xlane.xlu0 %6316
    %v6318 = vsel %vm6256, %v6224, 0.0
    %6319 = vadd.xlane.f32.xlu0 %v6318
    %v6320 = vpop.xlane.xlu0 %6319
    %v6321 = vsel %vm6256, %v6225, 0.0
    %6322 = vadd.xlane.f32.xlu0 %v6321
    %v6323 = vpop.xlane.xlu0 %6322
    %v6324 = vsel %vm6256, %v6226, 0.0
    %6325 = vadd.xlane.f32.xlu0 %v6324
    %v6326 = vpop.xlane.xlu0 %6325
    %v6327 = vsel %vm6256, %v6227, 0.0
    %6328 = vadd.xlane.f32.xlu0 %v6327
    %v6329 = vpop.xlane.xlu0 %6328
    %v6330 = vsel %vm6256, %v6228, 0.0
    %6331 = vadd.xlane.f32.xlu0 %v6330
    %v6332 = vpop.xlane.xlu0 %6331
    %v6333 = vsel %vm6293, %v6229, 0.0
    %6334 = vadd.xlane.f32.xlu0 %v6333
    %v6335 = vpop.xlane.xlu0 %6334
    %v6336 = vsel %vm6256, %v6230, 0.0
    %6337 = vadd.xlane.f32.xlu0 %v6336
    %v6338 = vpop.xlane.xlu0 %6337
    %v6339 = vsel %vm6256, %v6231, 0.0
    %6340 = vadd.xlane.f32.xlu0 %v6339
    %v6341 = vpop.xlane.xlu0 %6340
    %v6342 = vsel %vm6256, %v6232, 0.0
    %6343 = vadd.xlane.f32.xlu0 %v6342
    %v6344 = vpop.xlane.xlu0 %6343
    %v6345 = vsel %vm6256, %v6233, 0.0
    %6346 = vadd.xlane.f32.xlu0 %v6345
    %v6347 = vpop.xlane.xlu0 %6346
    %v6348 = vsel %vm6256, %v6234, 0.0
    %6349 = vadd.xlane.f32.xlu0 %v6348
    %v6350 = vpop.xlane.xlu0 %6349
    %v6351 = vsel %vm6256, %v6235, 0.0
    %6352 = vadd.xlane.f32.xlu0 %v6351
    %v6353 = vpop.xlane.xlu0 %6352
    %v6354 = vsel %vm6256, %v6236, 0.0
    %6355 = vadd.xlane.f32.xlu0 %v6354
    %v6356 = vpop.xlane.xlu0 %6355
    %v6357 = vsel %vm6256, %v6237, 0.0
    %6358 = vadd.xlane.f32.xlu0 %v6357
    %v6359 = vpop.xlane.xlu0 %6358
    %v6360 = vsel %vm6256, %v6238, 0.0
    %6361 = vadd.xlane.f32.xlu0 %v6360
    %v6362 = vpop.xlane.xlu0 %6361
    %v6363 = vsel %vm6256, %v6239, 0.0
    %6364 = vadd.xlane.f32.xlu0 %v6363
    %v6365 = vpop.xlane.xlu0 %6364
    %v6366 = vsel %vm6256, %v6240, 0.0
    %6367 = vadd.xlane.f32.xlu0 %v6366
    %v6368 = vpop.xlane.xlu0 %6367
    %v6369 = vsel %vm6256, %v6241, 0.0
    %6370 = vadd.xlane.f32.xlu0 %v6369
    %v6371 = vpop.xlane.xlu0 %6370
    %v6372 = vsel %vm6293, %v6242, 0.0
    %6373 = vadd.xlane.f32.xlu0 %v6372
    %v6374 = vpop.xlane.xlu0 %6373
    %v6375 = vsel %vm6256, %v6243, 0.0
    %6376 = vadd.xlane.f32.xlu0 %v6375
    %v6377 = vpop.xlane.xlu0 %6376
    %v6378 = vsel %vm6256, %v6244, 0.0
    %6379 = vadd.xlane.f32.xlu0 %v6378
    %v6380 = vpop.xlane.xlu0 %6379
    %v6381 = vsel %vm6256, %v6245, 0.0
    %6382 = vadd.xlane.f32.xlu0 %v6381
    %v6383 = vpop.xlane.xlu0 %6382
    %v6384 = vsel %vm6256, %v6246, 0.0
    %6385 = vadd.xlane.f32.xlu0 %v6384
    %v6386 = vpop.xlane.xlu0 %6385
    %v6387 = vsel %vm6256, %v6247, 0.0
    %6388 = vadd.xlane.f32.xlu0 %v6387
    %v6389 = vpop.xlane.xlu0 %6388
    %v6390 = vsel %vm6256, %v6248, 0.0
    %6391 = vadd.xlane.f32.xlu0 %v6390
    %v6392 = vpop.xlane.xlu0 %6391
    %v6393 = vsel %vm6256, %v6249, 0.0
    %6394 = vadd.xlane.f32.xlu0 %v6393
    %v6395 = vpop.xlane.xlu0 %6394
    %v6396 = vsel %vm6256, %v6250, 0.0
    %6397 = vadd.xlane.f32.xlu0 %v6396
    %v6398 = vpop.xlane.xlu0 %6397
    %v6399 = vsel %vm6256, %v6251, 0.0
    %6400 = vadd.xlane.f32.xlu0 %v6399
    %v6401 = vpop.xlane.xlu0 %6400
    %v6402 = vsel %vm6256, %v6252, 0.0
    %6403 = vadd.xlane.f32.xlu0 %v6402
    %v6404 = vpop.xlane.xlu0 %6403
    %v6405 = vsel %vm6256, %v6253, 0.0
    %6406 = vadd.xlane.f32.xlu0 %v6405
    %v6407 = vpop.xlane.xlu0 %6406
    %v6408 = vsel %vm6256, %v6254, 0.0
    %6409 = vadd.xlane.f32.xlu0 %v6408
    %v6410 = vpop.xlane.xlu0 %6409
    %v6411 = vsel %vm6293, %v6255, 0.0
    %6412 = vadd.xlane.f32.xlu0 %v6411
    %v6413 = vpop.xlane.xlu0 %6412
    %v6466 = vlaneseq
    %v6467 = vshrl.u32 %v6466, 7
    %v6468 = vsub.s32 %v572, %v6467
    %v6469 = vrot.slane %v6259, %v6468
    %v6470 = vadd.s32 %v572, 4294967288
    %v6471 = vlaneseq
    %v6472 = vshrl.u32 %v6471, 7
    %v6473 = vsub.s32 %v6470, %v6472
    %v6474 = vrot.slane %v6262, %v6473
    %vm6475 = vcmask 130112
    %v6476 = vsel %vm6475, %v6474, %v6469
    %v6477 = vadd.s32 %v572, 4294967280
    %v6478 = vlaneseq
    %v6479 = vshrl.u32 %v6478, 7
    %v6480 = vsub.s32 %v6477, %v6479
    %v6481 = vrot.slane %v6265, %v6480
    %vm6482 = vcmask 195712
    %v6483 = vsel %vm6482, %v6481, %v6476
    %v6484 = vadd.s32 %v572, 4294967272
    %v6485 = vlaneseq
    %v6486 = vshrl.u32 %v6485, 7
    %v6487 = vsub.s32 %v6484, %v6486
    %v6488 = vrot.slane %v6268, %v6487
    %vm6489 = vcmask 261312
    %v6490 = vsel %vm6489, %v6488, %v6483
    %v6491 = vadd.s32 %v572, 4294967264
    %v6492 = vlaneseq
    %v6493 = vshrl.u32 %v6492, 7
    %v6494 = vsub.s32 %v6491, %v6493
    %v6495 = vrot.slane %v6271, %v6494
    %vm6496 = vcmask 326912
    %v6497 = vsel %vm6496, %v6495, %v6490
    %v6498 = vadd.s32 %v572, 4294967256
    %v6499 = vlaneseq
    %v6500 = vshrl.u32 %v6499, 7
    %v6501 = vsub.s32 %v6498, %v6500
    %v6502 = vrot.slane %v6274, %v6501
    %vm6503 = vcmask 392512
    %v6504 = vsel %vm6503, %v6502, %v6497
    %v6505 = vadd.s32 %v572, 4294967248
    %v6506 = vlaneseq
    %v6507 = vshrl.u32 %v6506, 7
    %v6508 = vsub.s32 %v6505, %v6507
    %v6509 = vrot.slane %v6277, %v6508
    %vm6510 = vcmask 458112
    %v6511 = vsel %vm6510, %v6509, %v6504
    %v6512 = vadd.s32 %v572, 4294967240
    %v6513 = vlaneseq
    %v6514 = vshrl.u32 %v6513, 7
    %v6515 = vsub.s32 %v6512, %v6514
    %v6516 = vrot.slane %v6280, %v6515
    %vm6517 = vcmask 523712
    %v6518 = vsel %vm6517, %v6516, %v6511
    %v6519 = vadd.s32 %v572, 4294967232
    %v6520 = vlaneseq
    %v6521 = vshrl.u32 %v6520, 7
    %v6522 = vsub.s32 %v6519, %v6521
    %v6523 = vrot.slane %v6283, %v6522
    %vm6524 = vcmask 589312
    %v6525 = vsel %vm6524, %v6523, %v6518
    %v6526 = vadd.s32 %v572, 4294967224
    %v6527 = vlaneseq
    %v6528 = vshrl.u32 %v6527, 7
    %v6529 = vsub.s32 %v6526, %v6528
    %v6530 = vrot.slane %v6286, %v6529
    %vm6531 = vcmask 654912
    %v6532 = vsel %vm6531, %v6530, %v6525
    %v6533 = vadd.s32 %v572, 4294967216
    %v6534 = vlaneseq
    %v6535 = vshrl.u32 %v6534, 7
    %v6536 = vsub.s32 %v6533, %v6535
    %v6537 = vrot.slane %v6289, %v6536
    %vm6538 = vcmask 720512
    %v6539 = vsel %vm6538, %v6537, %v6532
    %v6540 = vadd.s32 %v572, 4294967208
    %v6541 = vlaneseq
    %v6542 = vshrl.u32 %v6541, 7
    %v6543 = vsub.s32 %v6540, %v6542
    %v6544 = vrot.slane %v6292, %v6543
    %vm6545 = vcmask 786112
    %v6546 = vsel %vm6545, %v6544, %v6539
    %v6547 = vadd.s32 %v572, 4294967200
    %v6548 = vlaneseq
    %v6549 = vshrl.u32 %v6548, 7
    %v6550 = vsub.s32 %v6547, %v6549
    %v6551 = vrot.slane %v6296, %v6550
    %vm6552 = vcmask 851712
    %v6553 = vsel %vm6552, %v6551, %v6546
    %v6554 = vlaneseq
    %v6555 = vshrl.u32 %v6554, 7
    %v6556 = vsub.s32 %v572, %v6555
    %v6557 = vrot.slane %v6299, %v6556
    %v6558 = vlaneseq
    %v6559 = vshrl.u32 %v6558, 7
    %v6560 = vsub.s32 %v6470, %v6559
    %v6561 = vrot.slane %v6302, %v6560
    %v6562 = vsel %vm6475, %v6561, %v6557
    %v6563 = vlaneseq
    %v6564 = vshrl.u32 %v6563, 7
    %v6565 = vsub.s32 %v6477, %v6564
    %v6566 = vrot.slane %v6305, %v6565
    %v6567 = vsel %vm6482, %v6566, %v6562
    %v6568 = vlaneseq
    %v6569 = vshrl.u32 %v6568, 7
    %v6570 = vsub.s32 %v6484, %v6569
    %v6571 = vrot.slane %v6308, %v6570
    %v6572 = vsel %vm6489, %v6571, %v6567
    %v6573 = vlaneseq
    %v6574 = vshrl.u32 %v6573, 7
    %v6575 = vsub.s32 %v6491, %v6574
    %v6576 = vrot.slane %v6311, %v6575
    %v6577 = vsel %vm6496, %v6576, %v6572
    %v6578 = vlaneseq
    %v6579 = vshrl.u32 %v6578, 7
    %v6580 = vsub.s32 %v6498, %v6579
    %v6581 = vrot.slane %v6314, %v6580
    %v6582 = vsel %vm6503, %v6581, %v6577
    %v6583 = vlaneseq
    %v6584 = vshrl.u32 %v6583, 7
    %v6585 = vsub.s32 %v6505, %v6584
    %v6586 = vrot.slane %v6317, %v6585
    %v6587 = vsel %vm6510, %v6586, %v6582
    %v6588 = vlaneseq
    %v6589 = vshrl.u32 %v6588, 7
    %v6590 = vsub.s32 %v6512, %v6589
    %v6591 = vrot.slane %v6320, %v6590
    %v6592 = vsel %vm6517, %v6591, %v6587
    %v6593 = vlaneseq
    %v6594 = vshrl.u32 %v6593, 7
    %v6595 = vsub.s32 %v6519, %v6594
    %v6596 = vrot.slane %v6323, %v6595
    %v6597 = vsel %vm6524, %v6596, %v6592
    %v6598 = vlaneseq
    %v6599 = vshrl.u32 %v6598, 7
    %v6600 = vsub.s32 %v6526, %v6599
    %v6601 = vrot.slane %v6326, %v6600
    %v6602 = vsel %vm6531, %v6601, %v6597
    %v6603 = vlaneseq
    %v6604 = vshrl.u32 %v6603, 7
    %v6605 = vsub.s32 %v6533, %v6604
    %v6606 = vrot.slane %v6329, %v6605
    %v6607 = vsel %vm6538, %v6606, %v6602
    %v6608 = vlaneseq
    %v6609 = vshrl.u32 %v6608, 7
    %v6610 = vsub.s32 %v6540, %v6609
    %v6611 = vrot.slane %v6332, %v6610
    %v6612 = vsel %vm6545, %v6611, %v6607
    %v6613 = vlaneseq
    %v6614 = vshrl.u32 %v6613, 7
    %v6615 = vsub.s32 %v6547, %v6614
    %v6616 = vrot.slane %v6335, %v6615
    %v6617 = vsel %vm6552, %v6616, %v6612
    %v6618 = vlaneseq
    %v6619 = vshrl.u32 %v6618, 7
    %v6620 = vsub.s32 %v572, %v6619
    %v6621 = vrot.slane %v6338, %v6620
    %v6622 = vlaneseq
    %v6623 = vshrl.u32 %v6622, 7
    %v6624 = vsub.s32 %v6470, %v6623
    %v6625 = vrot.slane %v6341, %v6624
    %v6626 = vsel %vm6475, %v6625, %v6621
    %v6627 = vlaneseq
    %v6628 = vshrl.u32 %v6627, 7
    %v6629 = vsub.s32 %v6477, %v6628
    %v6630 = vrot.slane %v6344, %v6629
    %v6631 = vsel %vm6482, %v6630, %v6626
    %v6632 = vlaneseq
    %v6633 = vshrl.u32 %v6632, 7
    %v6634 = vsub.s32 %v6484, %v6633
    %v6635 = vrot.slane %v6347, %v6634
    %v6636 = vsel %vm6489, %v6635, %v6631
    %v6637 = vlaneseq
    %v6638 = vshrl.u32 %v6637, 7
    %v6639 = vsub.s32 %v6491, %v6638
    %v6640 = vrot.slane %v6350, %v6639
    %v6641 = vsel %vm6496, %v6640, %v6636
    %v6642 = vlaneseq
    %v6643 = vshrl.u32 %v6642, 7
    %v6644 = vsub.s32 %v6498, %v6643
    %v6645 = vrot.slane %v6353, %v6644
    %v6646 = vsel %vm6503, %v6645, %v6641
    %v6647 = vlaneseq
    %v6648 = vshrl.u32 %v6647, 7
    %v6649 = vsub.s32 %v6505, %v6648
    %v6650 = vrot.slane %v6356, %v6649
    %v6651 = vsel %vm6510, %v6650, %v6646
    %v6652 = vlaneseq
    %v6653 = vshrl.u32 %v6652, 7
    %v6654 = vsub.s32 %v6512, %v6653
    %v6655 = vrot.slane %v6359, %v6654
    %v6656 = vsel %vm6517, %v6655, %v6651
    %v6657 = vlaneseq
    %v6658 = vshrl.u32 %v6657, 7
    %v6659 = vsub.s32 %v6519, %v6658
    %v6660 = vrot.slane %v6362, %v6659
    %v6661 = vsel %vm6524, %v6660, %v6656
    %v6662 = vlaneseq
    %v6663 = vshrl.u32 %v6662, 7
    %v6664 = vsub.s32 %v6526, %v6663
    %v6665 = vrot.slane %v6365, %v6664
    %v6666 = vsel %vm6531, %v6665, %v6661
    %v6667 = vlaneseq
    %v6668 = vshrl.u32 %v6667, 7
    %v6669 = vsub.s32 %v6533, %v6668
    %v6670 = vrot.slane %v6368, %v6669
    %v6671 = vsel %vm6538, %v6670, %v6666
    %v6672 = vlaneseq
    %v6673 = vshrl.u32 %v6672, 7
    %v6674 = vsub.s32 %v6540, %v6673
    %v6675 = vrot.slane %v6371, %v6674
    %v6676 = vsel %vm6545, %v6675, %v6671
    %v6677 = vlaneseq
    %v6678 = vshrl.u32 %v6677, 7
    %v6679 = vsub.s32 %v6547, %v6678
    %v6680 = vrot.slane %v6374, %v6679
    %v6681 = vsel %vm6552, %v6680, %v6676
    %v6682 = vlaneseq
    %v6683 = vshrl.u32 %v6682, 7
    %v6684 = vsub.s32 %v572, %v6683
    %v6685 = vrot.slane %v6377, %v6684
    %v6686 = vlaneseq
    %v6687 = vshrl.u32 %v6686, 7
    %v6688 = vsub.s32 %v6470, %v6687
    %v6689 = vrot.slane %v6380, %v6688
    %v6690 = vsel %vm6475, %v6689, %v6685
    %v6691 = vlaneseq
    %v6692 = vshrl.u32 %v6691, 7
    %v6693 = vsub.s32 %v6477, %v6692
    %v6694 = vrot.slane %v6383, %v6693
    %v6695 = vsel %vm6482, %v6694, %v6690
    %v6696 = vlaneseq
    %v6697 = vshrl.u32 %v6696, 7
    %v6698 = vsub.s32 %v6484, %v6697
    %v6699 = vrot.slane %v6386, %v6698
    %v6700 = vsel %vm6489, %v6699, %v6695
    %v6701 = vlaneseq
    %v6702 = vshrl.u32 %v6701, 7
    %v6703 = vsub.s32 %v6491, %v6702
    %v6704 = vrot.slane %v6389, %v6703
    %v6705 = vsel %vm6496, %v6704, %v6700
    %v6706 = vlaneseq
    %v6707 = vshrl.u32 %v6706, 7
    %v6708 = vsub.s32 %v6498, %v6707
    %v6709 = vrot.slane %v6392, %v6708
    %v6710 = vsel %vm6503, %v6709, %v6705
    %v6711 = vlaneseq
    %v6712 = vshrl.u32 %v6711, 7
    %v6713 = vsub.s32 %v6505, %v6712
    %v6714 = vrot.slane %v6395, %v6713
    %v6715 = vsel %vm6510, %v6714, %v6710
    %v6716 = vlaneseq
    %v6717 = vshrl.u32 %v6716, 7
    %v6718 = vsub.s32 %v6512, %v6717
    %v6719 = vrot.slane %v6398, %v6718
    %v6720 = vsel %vm6517, %v6719, %v6715
    %v6721 = vlaneseq
    %v6722 = vshrl.u32 %v6721, 7
    %v6723 = vsub.s32 %v6519, %v6722
    %v6724 = vrot.slane %v6401, %v6723
    %v6725 = vsel %vm6524, %v6724, %v6720
    %v6726 = vlaneseq
    %v6727 = vshrl.u32 %v6726, 7
    %v6728 = vsub.s32 %v6526, %v6727
    %v6729 = vrot.slane %v6404, %v6728
    %v6730 = vsel %vm6531, %v6729, %v6725
    %v6731 = vlaneseq
    %v6732 = vshrl.u32 %v6731, 7
    %v6733 = vsub.s32 %v6533, %v6732
    %v6734 = vrot.slane %v6407, %v6733
    %v6735 = vsel %vm6538, %v6734, %v6730
    %v6736 = vlaneseq
    %v6737 = vshrl.u32 %v6736, 7
    %v6738 = vsub.s32 %v6540, %v6737
    %v6739 = vrot.slane %v6410, %v6738
    %v6740 = vsel %vm6545, %v6739, %v6735
    %v6741 = vlaneseq
    %v6742 = vshrl.u32 %v6741, 7
    %v6743 = vsub.s32 %v6547, %v6742
    %v6744 = vrot.slane %v6413, %v6743
    %v6745 = vsel %vm6552, %v6744, %v6740
    %vm6746 = vcmask 1041409
    %v6747 = vsel %vm6746, %v6617, %v6553
    %vm6748 = vcmask 1042434
    %v6749 = vsel %vm6748, %v6681, %v6747
    %vm6750 = vcmask 1043459
    %v6751 = vsel %vm6750, %v6745, %v6749
    %vm6753 = vcmask 814080
    %v6754 = vsel %vm6753, %v6751, 0.0
    %6755 = vadd.xlane.f32.xlu0 %v6754
    %v6756 = vpop.xlane.xlu0 %6755
    %6770 = vrot.lane.b32.xlu0 %v6089, 82
    %v6771 = vpop.permute.xlu0 %6770
    %6772 = vrot.lane.b32.xlu0 %v6094, 82
    %v6773 = vpop.permute.xlu0 %6772
    %6774 = vrot.lane.b32.xlu0 %v6099, 82
    %v6775 = vpop.permute.xlu0 %6774
    %6776 = vrot.lane.b32.xlu0 %v6104, 82
    %v6777 = vpop.permute.xlu0 %6776
    %6778 = vrot.lane.b32.xlu0 %v6109, 82
    %v6779 = vpop.permute.xlu0 %6778
    %6780 = vrot.lane.b32.xlu0 %v6114, 82
    %v6781 = vpop.permute.xlu0 %6780
    %6782 = vrot.lane.b32.xlu0 %v6119, 82
    %v6783 = vpop.permute.xlu0 %6782
    %6784 = vrot.lane.b32.xlu0 %v6124, 82
    %v6785 = vpop.permute.xlu0 %6784
    %6786 = vrot.lane.b32.xlu0 %v6129, 82
    %v6787 = vpop.permute.xlu0 %6786
    %6788 = vrot.lane.b32.xlu0 %v6134, 82
    %v6789 = vpop.permute.xlu0 %6788
    %6790 = vrot.lane.b32.xlu0 %v6139, 82
    %v6791 = vpop.permute.xlu0 %6790
    %6792 = vrot.lane.b32.xlu0 %v6144, 82
    %v6793 = vpop.permute.xlu0 %6792
    %6794 = vrot.lane.b32.xlu0 %v6149, 82
    %v6795 = vpop.permute.xlu0 %6794
    %v6809 = vmul.f32 %v6152, %v6771
    %v6810 = vmul.f32 %v6153, %v6773
    %v6811 = vmul.f32 %v6154, %v6775
    %v6812 = vmul.f32 %v6155, %v6777
    %v6813 = vmul.f32 %v6156, %v6779
    %v6814 = vmul.f32 %v6157, %v6781
    %v6815 = vmul.f32 %v6158, %v6783
    %v6816 = vmul.f32 %v6159, %v6785
    %v6817 = vmul.f32 %v6160, %v6787
    %v6818 = vmul.f32 %v6161, %v6789
    %v6819 = vmul.f32 %v6162, %v6791
    %v6820 = vmul.f32 %v6163, %v6793
    %v6821 = vmul.f32 %v6164, %v6795
    %v6822 = vmul.f32 %v6165, %v6771
    %v6823 = vmul.f32 %v6166, %v6773
    %v6824 = vmul.f32 %v6167, %v6775
    %v6825 = vmul.f32 %v6168, %v6777
    %v6826 = vmul.f32 %v6169, %v6779
    %v6827 = vmul.f32 %v6170, %v6781
    %v6828 = vmul.f32 %v6171, %v6783
    %v6829 = vmul.f32 %v6172, %v6785
    %v6830 = vmul.f32 %v6173, %v6787
    %v6831 = vmul.f32 %v6174, %v6789
    %v6832 = vmul.f32 %v6175, %v6791
    %v6833 = vmul.f32 %v6176, %v6793
    %v6834 = vmul.f32 %v6177, %v6795
    %v6835 = vmul.f32 %v6178, %v6771
    %v6836 = vmul.f32 %v6179, %v6773
    %v6837 = vmul.f32 %v6180, %v6775
    %v6838 = vmul.f32 %v6181, %v6777
    %v6839 = vmul.f32 %v6182, %v6779
    %v6840 = vmul.f32 %v6183, %v6781
    %v6841 = vmul.f32 %v6184, %v6783
    %v6842 = vmul.f32 %v6185, %v6785
    %v6843 = vmul.f32 %v6186, %v6787
    %v6844 = vmul.f32 %v6187, %v6789
    %v6845 = vmul.f32 %v6188, %v6791
    %v6846 = vmul.f32 %v6189, %v6793
    %v6847 = vmul.f32 %v6190, %v6795
    %v6848 = vmul.f32 %v6191, %v6771
    %v6849 = vmul.f32 %v6192, %v6773
    %v6850 = vmul.f32 %v6193, %v6775
    %v6851 = vmul.f32 %v6194, %v6777
    %v6852 = vmul.f32 %v6195, %v6779
    %v6853 = vmul.f32 %v6196, %v6781
    %v6854 = vmul.f32 %v6197, %v6783
    %v6855 = vmul.f32 %v6198, %v6785
    %v6856 = vmul.f32 %v6199, %v6787
    %v6857 = vmul.f32 %v6200, %v6789
    %v6858 = vmul.f32 %v6201, %v6791
    %v6859 = vmul.f32 %v6202, %v6793
    %v6860 = vmul.f32 %v6203, %v6795
    %v6861 = vsel %vm6256, %v6809, 0.0
    %6862 = vadd.xlane.f32.xlu0 %v6861
    %v6863 = vpop.xlane.xlu0 %6862
    %v6864 = vsel %vm6256, %v6810, 0.0
    %6865 = vadd.xlane.f32.xlu0 %v6864
    %v6866 = vpop.xlane.xlu0 %6865
    %v6867 = vsel %vm6256, %v6811, 0.0
    %6868 = vadd.xlane.f32.xlu0 %v6867
    %v6869 = vpop.xlane.xlu0 %6868
    %v6870 = vsel %vm6256, %v6812, 0.0
    %6871 = vadd.xlane.f32.xlu0 %v6870
    %v6872 = vpop.xlane.xlu0 %6871
    %v6873 = vsel %vm6256, %v6813, 0.0
    %6874 = vadd.xlane.f32.xlu0 %v6873
    %v6875 = vpop.xlane.xlu0 %6874
    %v6876 = vsel %vm6256, %v6814, 0.0
    %6877 = vadd.xlane.f32.xlu0 %v6876
    %v6878 = vpop.xlane.xlu0 %6877
    %v6879 = vsel %vm6256, %v6815, 0.0
    %6880 = vadd.xlane.f32.xlu0 %v6879
    %v6881 = vpop.xlane.xlu0 %6880
    %v6882 = vsel %vm6256, %v6816, 0.0
    %6883 = vadd.xlane.f32.xlu0 %v6882
    %v6884 = vpop.xlane.xlu0 %6883
    %v6885 = vsel %vm6256, %v6817, 0.0
    %6886 = vadd.xlane.f32.xlu0 %v6885
    %v6887 = vpop.xlane.xlu0 %6886
    %v6888 = vsel %vm6256, %v6818, 0.0
    %6889 = vadd.xlane.f32.xlu0 %v6888
    %v6890 = vpop.xlane.xlu0 %6889
    %v6891 = vsel %vm6256, %v6819, 0.0
    %6892 = vadd.xlane.f32.xlu0 %v6891
    %v6893 = vpop.xlane.xlu0 %6892
    %v6894 = vsel %vm6256, %v6820, 0.0
    %6895 = vadd.xlane.f32.xlu0 %v6894
    %v6896 = vpop.xlane.xlu0 %6895
    %v6897 = vsel %vm6293, %v6821, 0.0
    %6898 = vadd.xlane.f32.xlu0 %v6897
    %v6899 = vpop.xlane.xlu0 %6898
    %v6900 = vsel %vm6256, %v6822, 0.0
    %6901 = vadd.xlane.f32.xlu0 %v6900
    %v6902 = vpop.xlane.xlu0 %6901
    %v6903 = vsel %vm6256, %v6823, 0.0
    %6904 = vadd.xlane.f32.xlu0 %v6903
    %v6905 = vpop.xlane.xlu0 %6904
    %v6906 = vsel %vm6256, %v6824, 0.0
    %6907 = vadd.xlane.f32.xlu0 %v6906
    %v6908 = vpop.xlane.xlu0 %6907
    %v6909 = vsel %vm6256, %v6825, 0.0
    %6910 = vadd.xlane.f32.xlu0 %v6909
    %v6911 = vpop.xlane.xlu0 %6910
    %v6912 = vsel %vm6256, %v6826, 0.0
    %6913 = vadd.xlane.f32.xlu0 %v6912
    %v6914 = vpop.xlane.xlu0 %6913
    %v6915 = vsel %vm6256, %v6827, 0.0
    %6916 = vadd.xlane.f32.xlu0 %v6915
    %v6917 = vpop.xlane.xlu0 %6916
    %v6918 = vsel %vm6256, %v6828, 0.0
    %6919 = vadd.xlane.f32.xlu0 %v6918
    %v6920 = vpop.xlane.xlu0 %6919
    %v6921 = vsel %vm6256, %v6829, 0.0
    %6922 = vadd.xlane.f32.xlu0 %v6921
    %v6923 = vpop.xlane.xlu0 %6922
    %v6924 = vsel %vm6256, %v6830, 0.0
    %6925 = vadd.xlane.f32.xlu0 %v6924
    %v6926 = vpop.xlane.xlu0 %6925
    %v6927 = vsel %vm6256, %v6831, 0.0
    %6928 = vadd.xlane.f32.xlu0 %v6927
    %v6929 = vpop.xlane.xlu0 %6928
    %v6930 = vsel %vm6256, %v6832, 0.0
    %6931 = vadd.xlane.f32.xlu0 %v6930
    %v6932 = vpop.xlane.xlu0 %6931
    %v6933 = vsel %vm6256, %v6833, 0.0
    %6934 = vadd.xlane.f32.xlu0 %v6933
    %v6935 = vpop.xlane.xlu0 %6934
    %v6936 = vsel %vm6293, %v6834, 0.0
    %6937 = vadd.xlane.f32.xlu0 %v6936
    %v6938 = vpop.xlane.xlu0 %6937
    %v6939 = vsel %vm6256, %v6835, 0.0
    %6940 = vadd.xlane.f32.xlu0 %v6939
    %v6941 = vpop.xlane.xlu0 %6940
    %v6942 = vsel %vm6256, %v6836, 0.0
    %6943 = vadd.xlane.f32.xlu0 %v6942
    %v6944 = vpop.xlane.xlu0 %6943
    %v6945 = vsel %vm6256, %v6837, 0.0
    %6946 = vadd.xlane.f32.xlu0 %v6945
    %v6947 = vpop.xlane.xlu0 %6946
    %v6948 = vsel %vm6256, %v6838, 0.0
    %6949 = vadd.xlane.f32.xlu0 %v6948
    %v6950 = vpop.xlane.xlu0 %6949
    %v6951 = vsel %vm6256, %v6839, 0.0
    %6952 = vadd.xlane.f32.xlu0 %v6951
    %v6953 = vpop.xlane.xlu0 %6952
    %v6954 = vsel %vm6256, %v6840, 0.0
    %6955 = vadd.xlane.f32.xlu0 %v6954
    %v6956 = vpop.xlane.xlu0 %6955
    %v6957 = vsel %vm6256, %v6841, 0.0
    %6958 = vadd.xlane.f32.xlu0 %v6957
    %v6959 = vpop.xlane.xlu0 %6958
    %v6960 = vsel %vm6256, %v6842, 0.0
    %6961 = vadd.xlane.f32.xlu0 %v6960
    %v6962 = vpop.xlane.xlu0 %6961
    %v6963 = vsel %vm6256, %v6843, 0.0
    %6964 = vadd.xlane.f32.xlu0 %v6963
    %v6965 = vpop.xlane.xlu0 %6964
    %v6966 = vsel %vm6256, %v6844, 0.0
    %6967 = vadd.xlane.f32.xlu0 %v6966
    %v6968 = vpop.xlane.xlu0 %6967
    %v6969 = vsel %vm6256, %v6845, 0.0
    %6970 = vadd.xlane.f32.xlu0 %v6969
    %v6971 = vpop.xlane.xlu0 %6970
    %v6972 = vsel %vm6256, %v6846, 0.0
    %6973 = vadd.xlane.f32.xlu0 %v6972
    %v6974 = vpop.xlane.xlu0 %6973
    %v6975 = vsel %vm6293, %v6847, 0.0
    %6976 = vadd.xlane.f32.xlu0 %v6975
    %v6977 = vpop.xlane.xlu0 %6976
    %v6978 = vsel %vm6256, %v6848, 0.0
    %6979 = vadd.xlane.f32.xlu0 %v6978
    %v6980 = vpop.xlane.xlu0 %6979
    %v6981 = vsel %vm6256, %v6849, 0.0
    %6982 = vadd.xlane.f32.xlu0 %v6981
    %v6983 = vpop.xlane.xlu0 %6982
    %v6984 = vsel %vm6256, %v6850, 0.0
    %6985 = vadd.xlane.f32.xlu0 %v6984
    %v6986 = vpop.xlane.xlu0 %6985
    %v6987 = vsel %vm6256, %v6851, 0.0
    %6988 = vadd.xlane.f32.xlu0 %v6987
    %v6989 = vpop.xlane.xlu0 %6988
    %v6990 = vsel %vm6256, %v6852, 0.0
    %6991 = vadd.xlane.f32.xlu0 %v6990
    %v6992 = vpop.xlane.xlu0 %6991
    %v6993 = vsel %vm6256, %v6853, 0.0
    %6994 = vadd.xlane.f32.xlu0 %v6993
    %v6995 = vpop.xlane.xlu0 %6994
    %v6996 = vsel %vm6256, %v6854, 0.0
    %6997 = vadd.xlane.f32.xlu0 %v6996
    %v6998 = vpop.xlane.xlu0 %6997
    %v6999 = vsel %vm6256, %v6855, 0.0
    %7000 = vadd.xlane.f32.xlu0 %v6999
    %v7001 = vpop.xlane.xlu0 %7000
    %v7002 = vsel %vm6256, %v6856, 0.0
    %7003 = vadd.xlane.f32.xlu0 %v7002
    %v7004 = vpop.xlane.xlu0 %7003
    %v7005 = vsel %vm6256, %v6857, 0.0
    %7006 = vadd.xlane.f32.xlu0 %v7005
    %v7007 = vpop.xlane.xlu0 %7006
    %v7008 = vsel %vm6256, %v6858, 0.0
    %7009 = vadd.xlane.f32.xlu0 %v7008
    %v7010 = vpop.xlane.xlu0 %7009
    %v7011 = vsel %vm6256, %v6859, 0.0
    %7012 = vadd.xlane.f32.xlu0 %v7011
    %v7013 = vpop.xlane.xlu0 %7012
    %v7014 = vsel %vm6293, %v6860, 0.0
    %7015 = vadd.xlane.f32.xlu0 %v7014
    %v7016 = vpop.xlane.xlu0 %7015
    %v7069 = vlaneseq
    %v7070 = vshrl.u32 %v7069, 7
    %v7071 = vsub.s32 %v572, %v7070
    %v7072 = vrot.slane %v6863, %v7071
    %v7073 = vlaneseq
    %v7074 = vshrl.u32 %v7073, 7
    %v7075 = vsub.s32 %v6470, %v7074
    %v7076 = vrot.slane %v6866, %v7075
    %v7077 = vsel %vm6475, %v7076, %v7072
    %v7078 = vlaneseq
    %v7079 = vshrl.u32 %v7078, 7
    %v7080 = vsub.s32 %v6477, %v7079
    %v7081 = vrot.slane %v6869, %v7080
    %v7082 = vsel %vm6482, %v7081, %v7077
    %v7083 = vlaneseq
    %v7084 = vshrl.u32 %v7083, 7
    %v7085 = vsub.s32 %v6484, %v7084
    %v7086 = vrot.slane %v6872, %v7085
    %v7087 = vsel %vm6489, %v7086, %v7082
    %v7088 = vlaneseq
    %v7089 = vshrl.u32 %v7088, 7
    %v7090 = vsub.s32 %v6491, %v7089
    %v7091 = vrot.slane %v6875, %v7090
    %v7092 = vsel %vm6496, %v7091, %v7087
    %v7093 = vlaneseq
    %v7094 = vshrl.u32 %v7093, 7
    %v7095 = vsub.s32 %v6498, %v7094
    %v7096 = vrot.slane %v6878, %v7095
    %v7097 = vsel %vm6503, %v7096, %v7092
    %v7098 = vlaneseq
    %v7099 = vshrl.u32 %v7098, 7
    %v7100 = vsub.s32 %v6505, %v7099
    %v7101 = vrot.slane %v6881, %v7100
    %v7102 = vsel %vm6510, %v7101, %v7097
    %v7103 = vlaneseq
    %v7104 = vshrl.u32 %v7103, 7
    %v7105 = vsub.s32 %v6512, %v7104
    %v7106 = vrot.slane %v6884, %v7105
    %v7107 = vsel %vm6517, %v7106, %v7102
    %v7108 = vlaneseq
    %v7109 = vshrl.u32 %v7108, 7
    %v7110 = vsub.s32 %v6519, %v7109
    %v7111 = vrot.slane %v6887, %v7110
    %v7112 = vsel %vm6524, %v7111, %v7107
    %v7113 = vlaneseq
    %v7114 = vshrl.u32 %v7113, 7
    %v7115 = vsub.s32 %v6526, %v7114
    %v7116 = vrot.slane %v6890, %v7115
    %v7117 = vsel %vm6531, %v7116, %v7112
    %v7118 = vlaneseq
    %v7119 = vshrl.u32 %v7118, 7
    %v7120 = vsub.s32 %v6533, %v7119
    %v7121 = vrot.slane %v6893, %v7120
    %v7122 = vsel %vm6538, %v7121, %v7117
    %v7123 = vlaneseq
    %v7124 = vshrl.u32 %v7123, 7
    %v7125 = vsub.s32 %v6540, %v7124
    %v7126 = vrot.slane %v6896, %v7125
    %v7127 = vsel %vm6545, %v7126, %v7122
    %v7128 = vlaneseq
    %v7129 = vshrl.u32 %v7128, 7
    %v7130 = vsub.s32 %v6547, %v7129
    %v7131 = vrot.slane %v6899, %v7130
    %v7132 = vsel %vm6552, %v7131, %v7127
    %v7133 = vlaneseq
    %v7134 = vshrl.u32 %v7133, 7
    %v7135 = vsub.s32 %v572, %v7134
    %v7136 = vrot.slane %v6902, %v7135
    %v7137 = vlaneseq
    %v7138 = vshrl.u32 %v7137, 7
    %v7139 = vsub.s32 %v6470, %v7138
    %v7140 = vrot.slane %v6905, %v7139
    %v7141 = vsel %vm6475, %v7140, %v7136
    %v7142 = vlaneseq
    %v7143 = vshrl.u32 %v7142, 7
    %v7144 = vsub.s32 %v6477, %v7143
    %v7145 = vrot.slane %v6908, %v7144
    %v7146 = vsel %vm6482, %v7145, %v7141
    %v7147 = vlaneseq
    %v7148 = vshrl.u32 %v7147, 7
    %v7149 = vsub.s32 %v6484, %v7148
    %v7150 = vrot.slane %v6911, %v7149
    %v7151 = vsel %vm6489, %v7150, %v7146
    %v7152 = vlaneseq
    %v7153 = vshrl.u32 %v7152, 7
    %v7154 = vsub.s32 %v6491, %v7153
    %v7155 = vrot.slane %v6914, %v7154
    %v7156 = vsel %vm6496, %v7155, %v7151
    %v7157 = vlaneseq
    %v7158 = vshrl.u32 %v7157, 7
    %v7159 = vsub.s32 %v6498, %v7158
    %v7160 = vrot.slane %v6917, %v7159
    %v7161 = vsel %vm6503, %v7160, %v7156
    %v7162 = vlaneseq
    %v7163 = vshrl.u32 %v7162, 7
    %v7164 = vsub.s32 %v6505, %v7163
    %v7165 = vrot.slane %v6920, %v7164
    %v7166 = vsel %vm6510, %v7165, %v7161
    %v7167 = vlaneseq
    %v7168 = vshrl.u32 %v7167, 7
    %v7169 = vsub.s32 %v6512, %v7168
    %v7170 = vrot.slane %v6923, %v7169
    %v7171 = vsel %vm6517, %v7170, %v7166
    %v7172 = vlaneseq
    %v7173 = vshrl.u32 %v7172, 7
    %v7174 = vsub.s32 %v6519, %v7173
    %v7175 = vrot.slane %v6926, %v7174
    %v7176 = vsel %vm6524, %v7175, %v7171
    %v7177 = vlaneseq
    %v7178 = vshrl.u32 %v7177, 7
    %v7179 = vsub.s32 %v6526, %v7178
    %v7180 = vrot.slane %v6929, %v7179
    %v7181 = vsel %vm6531, %v7180, %v7176
    %v7182 = vlaneseq
    %v7183 = vshrl.u32 %v7182, 7
    %v7184 = vsub.s32 %v6533, %v7183
    %v7185 = vrot.slane %v6932, %v7184
    %v7186 = vsel %vm6538, %v7185, %v7181
    %v7187 = vlaneseq
    %v7188 = vshrl.u32 %v7187, 7
    %v7189 = vsub.s32 %v6540, %v7188
    %v7190 = vrot.slane %v6935, %v7189
    %v7191 = vsel %vm6545, %v7190, %v7186
    %v7192 = vlaneseq
    %v7193 = vshrl.u32 %v7192, 7
    %v7194 = vsub.s32 %v6547, %v7193
    %v7195 = vrot.slane %v6938, %v7194
    %v7196 = vsel %vm6552, %v7195, %v7191
    %v7197 = vlaneseq
    %v7198 = vshrl.u32 %v7197, 7
    %v7199 = vsub.s32 %v572, %v7198
    %v7200 = vrot.slane %v6941, %v7199
    %v7201 = vlaneseq
    %v7202 = vshrl.u32 %v7201, 7
    %v7203 = vsub.s32 %v6470, %v7202
    %v7204 = vrot.slane %v6944, %v7203
    %v7205 = vsel %vm6475, %v7204, %v7200
    %v7206 = vlaneseq
    %v7207 = vshrl.u32 %v7206, 7
    %v7208 = vsub.s32 %v6477, %v7207
    %v7209 = vrot.slane %v6947, %v7208
    %v7210 = vsel %vm6482, %v7209, %v7205
    %v7211 = vlaneseq
    %v7212 = vshrl.u32 %v7211, 7
    %v7213 = vsub.s32 %v6484, %v7212
    %v7214 = vrot.slane %v6950, %v7213
    %v7215 = vsel %vm6489, %v7214, %v7210
    %v7216 = vlaneseq
    %v7217 = vshrl.u32 %v7216, 7
    %v7218 = vsub.s32 %v6491, %v7217
    %v7219 = vrot.slane %v6953, %v7218
    %v7220 = vsel %vm6496, %v7219, %v7215
    %v7221 = vlaneseq
    %v7222 = vshrl.u32 %v7221, 7
    %v7223 = vsub.s32 %v6498, %v7222
    %v7224 = vrot.slane %v6956, %v7223
    %v7225 = vsel %vm6503, %v7224, %v7220
    %v7226 = vlaneseq
    %v7227 = vshrl.u32 %v7226, 7
    %v7228 = vsub.s32 %v6505, %v7227
    %v7229 = vrot.slane %v6959, %v7228
    %v7230 = vsel %vm6510, %v7229, %v7225
    %v7231 = vlaneseq
    %v7232 = vshrl.u32 %v7231, 7
    %v7233 = vsub.s32 %v6512, %v7232
    %v7234 = vrot.slane %v6962, %v7233
    %v7235 = vsel %vm6517, %v7234, %v7230
    %v7236 = vlaneseq
    %v7237 = vshrl.u32 %v7236, 7
    %v7238 = vsub.s32 %v6519, %v7237
    %v7239 = vrot.slane %v6965, %v7238
    %v7240 = vsel %vm6524, %v7239, %v7235
    %v7241 = vlaneseq
    %v7242 = vshrl.u32 %v7241, 7
    %v7243 = vsub.s32 %v6526, %v7242
    %v7244 = vrot.slane %v6968, %v7243
    %v7245 = vsel %vm6531, %v7244, %v7240
    %v7246 = vlaneseq
    %v7247 = vshrl.u32 %v7246, 7
    %v7248 = vsub.s32 %v6533, %v7247
    %v7249 = vrot.slane %v6971, %v7248
    %v7250 = vsel %vm6538, %v7249, %v7245
    %v7251 = vlaneseq
    %v7252 = vshrl.u32 %v7251, 7
    %v7253 = vsub.s32 %v6540, %v7252
    %v7254 = vrot.slane %v6974, %v7253
    %v7255 = vsel %vm6545, %v7254, %v7250
    %v7256 = vlaneseq
    %v7257 = vshrl.u32 %v7256, 7
    %v7258 = vsub.s32 %v6547, %v7257
    %v7259 = vrot.slane %v6977, %v7258
    %v7260 = vsel %vm6552, %v7259, %v7255
    %v7261 = vlaneseq
    %v7262 = vshrl.u32 %v7261, 7
    %v7263 = vsub.s32 %v572, %v7262
    %v7264 = vrot.slane %v6980, %v7263
    %v7265 = vlaneseq
    %v7266 = vshrl.u32 %v7265, 7
    %v7267 = vsub.s32 %v6470, %v7266
    %v7268 = vrot.slane %v6983, %v7267
    %v7269 = vsel %vm6475, %v7268, %v7264
    %v7270 = vlaneseq
    %v7271 = vshrl.u32 %v7270, 7
    %v7272 = vsub.s32 %v6477, %v7271
    %v7273 = vrot.slane %v6986, %v7272
    %v7274 = vsel %vm6482, %v7273, %v7269
    %v7275 = vlaneseq
    %v7276 = vshrl.u32 %v7275, 7
    %v7277 = vsub.s32 %v6484, %v7276
    %v7278 = vrot.slane %v6989, %v7277
    %v7279 = vsel %vm6489, %v7278, %v7274
    %v7280 = vlaneseq
    %v7281 = vshrl.u32 %v7280, 7
    %v7282 = vsub.s32 %v6491, %v7281
    %v7283 = vrot.slane %v6992, %v7282
    %v7284 = vsel %vm6496, %v7283, %v7279
    %v7285 = vlaneseq
    %v7286 = vshrl.u32 %v7285, 7
    %v7287 = vsub.s32 %v6498, %v7286
    %v7288 = vrot.slane %v6995, %v7287
    %v7289 = vsel %vm6503, %v7288, %v7284
    %v7290 = vlaneseq
    %v7291 = vshrl.u32 %v7290, 7
    %v7292 = vsub.s32 %v6505, %v7291
    %v7293 = vrot.slane %v6998, %v7292
    %v7294 = vsel %vm6510, %v7293, %v7289
    %v7295 = vlaneseq
    %v7296 = vshrl.u32 %v7295, 7
    %v7297 = vsub.s32 %v6512, %v7296
    %v7298 = vrot.slane %v7001, %v7297
    %v7299 = vsel %vm6517, %v7298, %v7294
    %v7300 = vlaneseq
    %v7301 = vshrl.u32 %v7300, 7
    %v7302 = vsub.s32 %v6519, %v7301
    %v7303 = vrot.slane %v7004, %v7302
    %v7304 = vsel %vm6524, %v7303, %v7299
    %v7305 = vlaneseq
    %v7306 = vshrl.u32 %v7305, 7
    %v7307 = vsub.s32 %v6526, %v7306
    %v7308 = vrot.slane %v7007, %v7307
    %v7309 = vsel %vm6531, %v7308, %v7304
    %v7310 = vlaneseq
    %v7311 = vshrl.u32 %v7310, 7
    %v7312 = vsub.s32 %v6533, %v7311
    %v7313 = vrot.slane %v7010, %v7312
    %v7314 = vsel %vm6538, %v7313, %v7309
    %v7315 = vlaneseq
    %v7316 = vshrl.u32 %v7315, 7
    %v7317 = vsub.s32 %v6540, %v7316
    %v7318 = vrot.slane %v7013, %v7317
    %v7319 = vsel %vm6545, %v7318, %v7314
    %v7320 = vlaneseq
    %v7321 = vshrl.u32 %v7320, 7
    %v7322 = vsub.s32 %v6547, %v7321
    %v7323 = vrot.slane %v7016, %v7322
    %v7324 = vsel %vm6552, %v7323, %v7319
    %v7325 = vsel %vm6746, %v7196, %v7132
    %v7326 = vsel %vm6748, %v7260, %v7325
    %v7327 = vsel %vm6750, %v7324, %v7326
    %v7329 = vsel %vm6753, %v7327, 0.0
    %7330 = vadd.xlane.f32.xlu0 %v7329
    %v7331 = vpop.xlane.xlu0 %7330
    %v7333 = vlaneseq
    %v7334 = vshrl.u32 %v7333, 7
    %v7335 = vsub.s32 %v572, %v7334
    %v7336 = vrot.slane %v6756, %v7335
    %v7339 = vlaneseq
    %v7340 = vshrl.u32 %v7339, 7
    %v7341 = vsub.s32 %v572, %v7340
    %v7342 = vrot.slane %v7331, %v7341
    %v7344 = vsel %vm677, %v7336, %v7342
    %v7345 = vld [vmem:[%s11] sm:$0x1]
    %v7347 = vlaneseq
    %v7348 = vshrl.u32 %v7347, 7
    %v7349 = vsub.s32 0, %v7348
    %v7350 = vrot.slane %v7345, %v7349
    %v7352 = vadd.f32 %v7344, %v7350
    %vm7353 = vcmask 25600
    %7354 = vst.msk [vmem:[#allocation2] sm:$0x3] %vm7353, %v7352
    // Predicated region
    $region50: #{tpu_custom_call.1} parent=1 // pred_check
      _
    $region51: #{tpu_custom_call.1} parent=1 // pred_check_branch
      %7356 = sbr.rel (0) target = $region53
    $region52: #{tpu_custom_call.1} parent=1 // pred_region
      %s7358 = ssub.s32 32, 32
      %7359 = vsyncadd [#allocation3], %s7358
      %s7361 = sshll.u32 [#allocation2], 4
      %s7362 = int_to_ptr.vmem [resolvable:$true] %s7361
      %7364 = dma.vmem_to_hbm [thread:$0]  %s7362, 32, %s12, [#allocation3]
    $region53: #{tpu_custom_call.1} parent=1 // pred_fallthru
      _
    // Predicated region
    $region54: #{tpu_custom_call.1} parent=1 // pred_check
      _
    $region55: #{tpu_custom_call.1} parent=1 // pred_check_branch
      %7366 = sbr.rel (0) target = $region57
    $region56: #{tpu_custom_call.1} parent=1 // pred_region
      %7367 = dma.done [#allocation3], 32
    $region57: #{tpu_custom_call.1} parent=1 // pred_fallthru
      _
    %7368 = vsyncpa [#allocation3], 1

</llo_original>
